<compile_context>
chip_gen: v7x
topology: tpu7x:2x2x1
jax: 0.10.0
libtpu: 0.0.40
codegen_flags: <defaults>
</compile_context>

<pallas_src>
import jax
import jax.numpy as jnp
from jax import lax
from jax.experimental import pallas as pl
from jax.experimental.pallas import tpu as pltpu


def _pick_batch_block(b):
    """Largest batch block <= 8 that still leaves >= 2 grid steps (megacore)."""
    for bt in (8, 4, 2, 1):
        if b % bt == 0 and b // bt >= 2:
            return bt
    return b


# -----------------------------------------------------------------------------
# Kernel 1: fused conv1 -> ReLU -> pool -> conv2 -> ReLU -> pool
# -----------------------------------------------------------------------------
def _conv_stack_kernel(xc_ref, w1_ref, b1_ref, w2_ref, b2_ref, o_ref, pad_ref):
    """One batch block of Bt images.

    xc_ref : [Bt, 784, 9]     bf16  conv1 im2col (tap order t = dy*3+dx)
    w1_ref : [9, 32]          bf16  conv1 weight, rows in (dy,dx) order
    b1_ref : [1, 32]          f32
    w2_ref : [288, 64]        bf16  conv2 weight, rows in (dy,dx,cin) order
    b2_ref : [1, 64]          f32
    o_ref  : [Bt, 49, 64]     bf16  pooled conv2 output, rows = h*7 + w (NHWC)
    pad_ref: [Bt, 16, 16, 32] bf16  VMEM scratch used for 'same' zero padding
    """
    Bt = xc_ref.shape[0]

    # ---- conv1: one MXU matmul, M = Bt*784, K = 9, N = 32 ----
    xc = xc_ref[...].reshape(Bt * 784, 9)
    h = jnp.dot(xc, w1_ref[...], preferred_element_type=jnp.float32)
    h = jnp.maximum(h + b1_ref[...], 0.0)                      # [Bt*784, 32]
    h = h.reshape(Bt, 28, 28, 32)

    # ---- 2x2 stride-2 max-pool (f32 on the VPU) -> [Bt, 14, 14, 32] ----
    h = h.reshape(Bt, 14, 2, 28, 32)
    h = jnp.maximum(h[:, :, 0], h[:, :, 1])                    # pool H
    h = h.reshape(Bt, 14, 14, 2, 32)
    h = jnp.maximum(h[:, :, :, 0], h[:, :, :, 1])              # pool W

    # ---- 'same' zero padding via a VMEM scratch (re-zeroed every step so the
    #      grid stays safely "parallel" across cores) ----
    pad_ref[...] = jnp.zeros_like(pad_ref)
    pad_ref[:, 1:15, 1:15, :] = h.astype(pad_ref.dtype)

    # ---- conv2: build im2col [Bt*196, 288] and do one MXU matmul (K=288) ----
    cols = [pad_ref[:, dy:dy + 14, dx:dx + 14, :]
            for dy in range(3) for dx in range(3)]
    xc2 = jnp.concatenate(cols, axis=-1).reshape(Bt * 196, 9 * 32)
    h2 = jnp.dot(xc2, w2_ref[...], preferred_element_type=jnp.float32)
    h2 = jnp.maximum(h2 + b2_ref[...], 0.0)                    # [Bt*196, 64]
    h2 = h2.reshape(Bt, 14, 14, 64)

    # ---- 2x2 stride-2 max-pool -> [Bt, 7, 7, 64] ----
    h2 = h2.reshape(Bt, 7, 2, 14, 64)
    h2 = jnp.maximum(h2[:, :, 0], h2[:, :, 1])
    h2 = h2.reshape(Bt, 7, 7, 2, 64)
    h2 = jnp.maximum(h2[:, :, :, 0], h2[:, :, :, 1])

    # NHWC flatten ([B,49,64] -> [B,3136]) is a free reshape in the wrapper;
    # fc1's weight rows were pre-permuted to match, so no transpose is needed.
    o_ref[...] = h2.astype(o_ref.dtype).reshape(Bt, 49, 64)


def conv_stack(x_col, w1, b1, w2, b2):
    B = x_col.shape[0]
    Bt = _pick_batch_block(B)
    return pl.pallas_call(
        _conv_stack_kernel,
        out_shape=jax.ShapeDtypeStruct((B, 49, 64), jnp.bfloat16),
        grid=(B // Bt,),
        in_specs=[
            pl.BlockSpec((Bt, 784, 9), lambda i: (i, 0, 0)),
            pl.BlockSpec((9, 32), lambda i: (0, 0)),
            pl.BlockSpec((1, 32), lambda i: (0, 0)),
            pl.BlockSpec((288, 64), lambda i: (0, 0)),
            pl.BlockSpec((1, 64), lambda i: (0, 0)),
        ],
        out_specs=pl.BlockSpec((Bt, 49, 64), lambda i: (i, 0, 0)),
        scratch_shapes=[pltpu.VMEM((Bt, 16, 16, 32), jnp.bfloat16)],
        compiler_params=pltpu.CompilerParams(
            dimension_semantics=("parallel",)),
    )(x_col, w1, b1, w2, b2)


# -----------------------------------------------------------------------------
# Kernel 2: fc1 + ReLU + (eval-mode dropout == identity) + fc2 (padded to 128)
# -----------------------------------------------------------------------------
def _mlp_kernel(x_ref, w1_ref, b1_ref, w2_ref, b2_ref, o_ref):
    h = jnp.dot(x_ref[...], w1_ref[...], preferred_element_type=jnp.float32)
    h = jnp.maximum(h + b1_ref[...], 0.0)
    # nn.Dropout(0.2) is the identity in eval/inference mode.
    o_ref[...] = jnp.dot(h.astype(w2_ref.dtype), w2_ref[...],
                         preferred_element_type=jnp.float32) + b2_ref[...]


def mlp_head(x, w1, b1, w2, b2):
    B, D = x.shape
    n_pad = w2.shape[-1]
    Bm = 128 if (B >= 256 and B % 128 == 0) else B
    return pl.pallas_call(
        _mlp_kernel,
        out_shape=jax.ShapeDtypeStruct((B, n_pad), jnp.float32),
        grid=(B // Bm,),
        in_specs=[
            pl.BlockSpec((Bm, D), lambda i: (i, 0)),
            pl.BlockSpec(w1.shape, lambda i: (0, 0)),
            pl.BlockSpec(b1.shape, lambda i: (0, 0)),
            pl.BlockSpec(w2.shape, lambda i: (0, 0)),
            pl.BlockSpec(b2.shape, lambda i: (0, 0)),
        ],
        out_specs=pl.BlockSpec((Bm, n_pad), lambda i: (i, 0)),
        compiler_params=pltpu.CompilerParams(
            dimension_semantics=("parallel",)),
    )(x, w1, b1, w2, b2)


# -----------------------------------------------------------------------------
# Parameters (PyTorch layout), forward wrapper, and pure-JAX reference
# -----------------------------------------------------------------------------
def init_params(key):
    """Deterministic PyTorch-layout parameters (uniform +-1/sqrt(fan_in))."""
    ks = jax.random.split(key, 8)

    def u(k, shape, fan_in):
        bound = 1.0 / jnp.sqrt(jnp.float32(fan_in))
        return jax.random.uniform(k, shape, jnp.float32, -bound, bound)

    return {
        "conv1_w": u(ks[0], (32, 1, 3, 3), 1 * 9),          # OIHW
        "conv1_b": u(ks[1], (32,), 1 * 9),
        "conv2_w": u(ks[2], (64, 32, 3, 3), 32 * 9),
        "conv2_b": u(ks[3], (64,), 32 * 9),
        "fc1_w": u(ks[4], (128, 64 * 7 * 7), 64 * 7 * 7),   # (out, in)
        "fc1_b": u(ks[5], (128,), 64 * 7 * 7),
        "fc2_w": u(ks[6], (10, 128), 128),
        "fc2_b": u(ks[7], (10,), 128),
    }


@jax.jit
def net_forward(x_nchw, p):
    B = x_nchw.shape[0]

    # conv1 im2col in the wrapper (Cin=1 never hits the kernel's lane dim).
    x = x_nchw[:, 0]                                        # [B, 28, 28]
    xp = jnp.pad(x, ((0, 0), (1, 1), (1, 1)))               # 'same' padding
    taps = [xp[:, dy:dy + 28, dx:dx + 28]
            for dy in range(3) for dx in range(3)]
    x_col = jnp.stack(taps, axis=-1).reshape(B, 784, 9).astype(jnp.bfloat16)

    # One-time weight/layout prep (tiny tensors, folded under jit).
    w1 = p["conv1_w"].reshape(32, 9).T.astype(jnp.bfloat16)            # [9,32]
    b1 = p["conv1_b"].reshape(1, 32).astype(jnp.float32)
    w2 = (p["conv2_w"].transpose(2, 3, 1, 0)                           # HWIO
          .reshape(288, 64).astype(jnp.bfloat16))
    b2 = p["conv2_b"].reshape(1, 64).astype(jnp.float32)
    # Fold torch's channel-major (c,h,w) flatten into fc1's rows -> (h,w,c).
    w3 = (p["fc1_w"].reshape(128, 64, 7, 7).transpose(2, 3, 1, 0)
          .reshape(3136, 128).astype(jnp.bfloat16))
    b3 = p["fc1_b"].reshape(1, 128).astype(jnp.float32)
    # Pad fc2's 10-wide output to a full 128-lane store (sliced back below).
    w4 = jnp.zeros((128, 128), jnp.float32).at[:, :10].set(p["fc2_w"].T)
    w4 = w4.astype(jnp.bfloat16)
    b4 = jnp.zeros((1, 128), jnp.float32).at[:, :10].set(p["fc2_b"][None, :])

    feat = conv_stack(x_col, w1, b1, w2, b2)                # [B, 49, 64] bf16
    feat = feat.reshape(B, 3136)                            # NHWC flatten, free
    logits = mlp_head(feat, w3, b3, w4, b4)                 # [B, 128] f32
    return logits[:, :10]


def reference_forward(x_nchw, p):
    """Pure-JAX (XLA, f32) reference matching the PyTorch forward."""
    dn = ("NCHW", "OIHW", "NCHW")
    y = lax.conv_general_dilated(x_nchw, p["conv1_w"], (1, 1),
                                 ((1, 1), (1, 1)), dimension_numbers=dn)
    y = jnp.maximum(y + p["conv1_b"][None, :, None, None], 0.0)
    y = lax.reduce_window(y, -jnp.inf, lax.max, (1, 1, 2, 2), (1, 1, 2, 2),
                          "VALID")
    y = lax.conv_general_dilated(y, p["conv2_w"], (1, 1),
                                 ((1, 1), (1, 1)), dimension_numbers=dn)
    y = jnp.maximum(y + p["conv2_b"][None, :, None, None], 0.0)
    y = lax.reduce_window(y, -jnp.inf, lax.max, (1, 1, 2, 2), (1, 1, 2, 2),
                          "VALID")
    y = y.reshape(y.shape[0], -1)
    y = jnp.maximum(y @ p["fc1_w"].T + p["fc1_b"], 0.0)
    y = y @ p["fc2_w"].T + p["fc2_b"]
    return y


if __name__ == "__main__":
    key = jax.random.PRNGKey(0)
    k_x, k_p = jax.random.split(key)
    # Input must be 1x28x28 per image so that flatten yields 64*7*7 = 3136.
    x = jax.random.normal(k_x, (2, 1, 28, 28), jnp.float32)
    params = init_params(k_p)

    out = jax.block_until_ready(net_forward(x, params))
    ref = reference_forward(x, params)

    assert out.shape == (2, 10)
    # bf16 MXU operands with f32 accumulation: measured error << 1e-2.
    assert jnp.allclose(out, ref, rtol=1e-2, atol=1e-2), (
        f"max abs diff {jnp.max(jnp.abs(out - ref))}")
    print("KERNEL_OK")
</pallas_src>

<mosaic_0001>
module attributes {stable_mosaic.version = 11 : i64} {
  func.func @_conv_stack_kernel(%arg0: i32, %arg1: memref<1x784x9xbf16, #tpu.memory_space<vmem>>, %arg2: memref<9x32xbf16, #tpu.memory_space<vmem>>, %arg3: memref<1x32xf32, #tpu.memory_space<vmem>>, %arg4: memref<288x64xbf16, #tpu.memory_space<vmem>>, %arg5: memref<1x64xf32, #tpu.memory_space<vmem>>, %arg6: memref<1x49x64xbf16, #tpu.memory_space<vmem>>, %arg7: memref<1x16x16x32xbf16, #tpu.memory_space<vmem>>) attributes {dimension_semantics = [#tpu.dimension_semantics<parallel>], iteration_bounds = array<i64: 2>, scalar_prefetch = 0 : i64, scratch_operands = 1 : i64, tpu.core_type = #tpu.core_type<tc>, window_params = [{transform_indices = @transform_0, window_bounds = array<i64: 1, 784, 9>}, {pipeline_mode = #tpu.pipeline_mode<synchronous>, transform_indices = @transform_1, window_bounds = array<i64: 9, 32>}, {pipeline_mode = #tpu.pipeline_mode<synchronous>, transform_indices = @transform_2, window_bounds = array<i64: 1, 32>}, {pipeline_mode = #tpu.pipeline_mode<synchronous>, transform_indices = @transform_3, window_bounds = array<i64: 288, 64>}, {pipeline_mode = #tpu.pipeline_mode<synchronous>, transform_indices = @transform_4, window_bounds = array<i64: 1, 64>}, {transform_indices = @transform_5, window_bounds = array<i64: 1, 49, 64>}]} {
    %c0 = arith.constant 0 : index
    %c0_0 = arith.constant 0 : index
    %c0_1 = arith.constant 0 : index
    %0 = vector.load %arg1[%c0, %c0_0, %c0_1] : memref<1x784x9xbf16, #tpu.memory_space<vmem>>, vector<1x784x9xbf16>
    %1 = vector.shape_cast %0 : vector<1x784x9xbf16> to vector<784x9xbf16>
    %c0_2 = arith.constant 0 : index
    %c0_3 = arith.constant 0 : index
    %2 = vector.load %arg2[%c0_2, %c0_3] : memref<9x32xbf16, #tpu.memory_space<vmem>>, vector<9x32xbf16>
    %cst = arith.constant dense<0.000000e+00> : vector<784x32xf32>
    %3 = tpu.matmul %1, %2, %cst {dimension_numbers = #tpu.dot_dimension_numbers<[1], [0], [0], [1], [0, 0, 1, 1], [], []>} : vector<784x9xbf16>, vector<9x32xbf16>, vector<784x32xf32> -> vector<784x32xf32>
    %c0_4 = arith.constant 0 : index
    %c0_5 = arith.constant 0 : index
    %4 = vector.load %arg3[%c0_4, %c0_5] : memref<1x32xf32, #tpu.memory_space<vmem>>, vector<1x32xf32>
    %5 = vector.broadcast %4 : vector<1x32xf32> to vector<784x32xf32>
    %6 = arith.addf %3, %5 : vector<784x32xf32>
    %cst_6 = arith.constant 0.000000e+00 : f32
    %7 = vector.broadcast %cst_6 : f32 to vector<784x32xf32>
    %8 = arith.maximumf %6, %7 : vector<784x32xf32>
    %9 = vector.shape_cast %8 : vector<784x32xf32> to vector<1x28x28x32xf32>
    %10 = vector.shape_cast %9 : vector<1x28x28x32xf32> to vector<1x14x2x28x32xf32>
    %11 = vector.extract_strided_slice %10 {offsets = [0, 0, 0, 0, 0], sizes = [1, 14, 1, 28, 32], strides = [1, 1, 1, 1, 1]} : vector<1x14x2x28x32xf32> to vector<1x14x1x28x32xf32>
    %12 = vector.shape_cast %11 : vector<1x14x1x28x32xf32> to vector<1x14x28x32xf32>
    %13 = vector.extract_strided_slice %10 {offsets = [0, 0, 1, 0, 0], sizes = [1, 14, 1, 28, 32], strides = [1, 1, 1, 1, 1]} : vector<1x14x2x28x32xf32> to vector<1x14x1x28x32xf32>
    %14 = vector.shape_cast %13 : vector<1x14x1x28x32xf32> to vector<1x14x28x32xf32>
    %15 = arith.maximumf %12, %14 : vector<1x14x28x32xf32>
    %16 = vector.shape_cast %15 : vector<1x14x28x32xf32> to vector<1x14x14x2x32xf32>
    %17 = vector.extract_strided_slice %16 {offsets = [0, 0, 0, 0, 0], sizes = [1, 14, 14, 1, 32], strides = [1, 1, 1, 1, 1]} : vector<1x14x14x2x32xf32> to vector<1x14x14x1x32xf32>
    %18 = vector.shape_cast %17 : vector<1x14x14x1x32xf32> to vector<1x14x14x32xf32>
    %19 = vector.extract_strided_slice %16 {offsets = [0, 0, 0, 1, 0], sizes = [1, 14, 14, 1, 32], strides = [1, 1, 1, 1, 1]} : vector<1x14x14x2x32xf32> to vector<1x14x14x1x32xf32>
    %20 = vector.shape_cast %19 : vector<1x14x14x1x32xf32> to vector<1x14x14x32xf32>
    %21 = arith.maximumf %18, %20 : vector<1x14x14x32xf32>
    %cst_7 = arith.constant 0.000000e+00 : bf16
    %22 = vector.broadcast %cst_7 : bf16 to vector<1x16x16x32xbf16>
    %c0_8 = arith.constant 0 : index
    %c0_9 = arith.constant 0 : index
    %c0_10 = arith.constant 0 : index
    %c0_11 = arith.constant 0 : index
    %23 = vector.load %arg7[%c0_8, %c0_9, %c0_10, %c0_11] : memref<1x16x16x32xbf16, #tpu.memory_space<vmem>>, vector<1x16x16x32xbf16>
    tpu.vector_store %arg7[%c0_8, %c0_9, %c0_10, %c0_11], %22 {strides = array<i32>} : memref<1x16x16x32xbf16, #tpu.memory_space<vmem>>, vector<1x16x16x32xbf16>,
    %24 = arith.truncf %21 : vector<1x14x14x32xf32> to vector<1x14x14x32xbf16>
    %c0_12 = arith.constant 0 : index
    %c1 = arith.constant 1 : index
    %c1_13 = arith.constant 1 : index
    %c0_14 = arith.constant 0 : index
    %25 = vector.load %arg7[%c0_12, %c1, %c1_13, %c0_14] : memref<1x16x16x32xbf16, #tpu.memory_space<vmem>>, vector<1x14x14x32xbf16>
    tpu.vector_store %arg7[%c0_12, %c1, %c1_13, %c0_14], %24 {strides = array<i32>} : memref<1x16x16x32xbf16, #tpu.memory_space<vmem>>, vector<1x14x14x32xbf16>,
    %c0_15 = arith.constant 0 : index
    %c0_16 = arith.constant 0 : index
    %c0_17 = arith.constant 0 : index
    %c0_18 = arith.constant 0 : index
    %26 = vector.load %arg7[%c0_15, %c0_16, %c0_17, %c0_18] : memref<1x16x16x32xbf16, #tpu.memory_space<vmem>>, vector<1x14x14x32xbf16>
    %c0_19 = arith.constant 0 : index
    %c0_20 = arith.constant 0 : index
    %c1_21 = arith.constant 1 : index
    %c0_22 = arith.constant 0 : index
    %27 = vector.load %arg7[%c0_19, %c0_20, %c1_21, %c0_22] : memref<1x16x16x32xbf16, #tpu.memory_space<vmem>>, vector<1x14x14x32xbf16>
    %c0_23 = arith.constant 0 : index
    %c0_24 = arith.constant 0 : index
    %c2 = arith.constant 2 : index
    %c0_25 = arith.constant 0 : index
    %28 = vector.load %arg7[%c0_23, %c0_24, %c2, %c0_25] : memref<1x16x16x32xbf16, #tpu.memory_space<vmem>>, vector<1x14x14x32xbf16>
    %c0_26 = arith.constant 0 : index
    %c1_27 = arith.constant 1 : index
    %c0_28 = arith.constant 0 : index
    %c0_29 = arith.constant 0 : index
    %29 = vector.load %arg7[%c0_26, %c1_27, %c0_28, %c0_29] : memref<1x16x16x32xbf16, #tpu.memory_space<vmem>>, vector<1x14x14x32xbf16>
    %c0_30 = arith.constant 0 : index
    %c1_31 = arith.constant 1 : index
    %c1_32 = arith.constant 1 : index
    %c0_33 = arith.constant 0 : index
    %30 = vector.load %arg7[%c0_30, %c1_31, %c1_32, %c0_33] : memref<1x16x16x32xbf16, #tpu.memory_space<vmem>>, vector<1x14x14x32xbf16>
    %c0_34 = arith.constant 0 : index
    %c1_35 = arith.constant 1 : index
    %c2_36 = arith.constant 2 : index
    %c0_37 = arith.constant 0 : index
    %31 = vector.load %arg7[%c0_34, %c1_35, %c2_36, %c0_37] : memref<1x16x16x32xbf16, #tpu.memory_space<vmem>>, vector<1x14x14x32xbf16>
    %c0_38 = arith.constant 0 : index
    %c2_39 = arith.constant 2 : index
    %c0_40 = arith.constant 0 : index
    %c0_41 = arith.constant 0 : index
    %32 = vector.load %arg7[%c0_38, %c2_39, %c0_40, %c0_41] : memref<1x16x16x32xbf16, #tpu.memory_space<vmem>>, vector<1x14x14x32xbf16>
    %c0_42 = arith.constant 0 : index
    %c2_43 = arith.constant 2 : index
    %c1_44 = arith.constant 1 : index
    %c0_45 = arith.constant 0 : index
    %33 = vector.load %arg7[%c0_42, %c2_43, %c1_44, %c0_45] : memref<1x16x16x32xbf16, #tpu.memory_space<vmem>>, vector<1x14x14x32xbf16>
    %c0_46 = arith.constant 0 : index
    %c2_47 = arith.constant 2 : index
    %c2_48 = arith.constant 2 : index
    %c0_49 = arith.constant 0 : index
    %34 = vector.load %arg7[%c0_46, %c2_47, %c2_48, %c0_49] : memref<1x16x16x32xbf16, #tpu.memory_space<vmem>>, vector<1x14x14x32xbf16>
    %35 = tpu.concatenate %26, %27, %28, %29, %30, %31, %32, %33, %34 in 3 : vector<1x14x14x32xbf16>, vector<1x14x14x32xbf16>, vector<1x14x14x32xbf16>, vector<1x14x14x32xbf16>, vector<1x14x14x32xbf16>, vector<1x14x14x32xbf16>, vector<1x14x14x32xbf16>, vector<1x14x14x32xbf16>, vector<1x14x14x32xbf16> -> vector<1x14x14x288xbf16>
    %36 = vector.shape_cast %35 : vector<1x14x14x288xbf16> to vector<196x288xbf16>
    %c0_50 = arith.constant 0 : index
    %c0_51 = arith.constant 0 : index
    %37 = vector.load %arg4[%c0_50, %c0_51] : memref<288x64xbf16, #tpu.memory_space<vmem>>, vector<288x64xbf16>
    %cst_52 = arith.constant dense<0.000000e+00> : vector<196x64xf32>
    %38 = tpu.matmul %36, %37, %cst_52 {dimension_numbers = #tpu.dot_dimension_numbers<[1], [0], [0], [1], [0, 0, 1, 1], [], []>} : vector<196x288xbf16>, vector<288x64xbf16>, vector<196x64xf32> -> vector<196x64xf32>
    %c0_53 = arith.constant 0 : index
    %c0_54 = arith.constant 0 : index
    %39 = vector.load %arg5[%c0_53, %c0_54] : memref<1x64xf32, #tpu.memory_space<vmem>>, vector<1x64xf32>
    %40 = vector.broadcast %39 : vector<1x64xf32> to vector<196x64xf32>
    %41 = arith.addf %38, %40 : vector<196x64xf32>
    %cst_55 = arith.constant 0.000000e+00 : f32
    %42 = vector.broadcast %cst_55 : f32 to vector<196x64xf32>
    %43 = arith.maximumf %41, %42 : vector<196x64xf32>
    %44 = vector.shape_cast %43 : vector<196x64xf32> to vector<1x14x14x64xf32>
    %45 = vector.shape_cast %44 : vector<1x14x14x64xf32> to vector<1x7x2x14x64xf32>
    %46 = vector.extract_strided_slice %45 {offsets = [0, 0, 0, 0, 0], sizes = [1, 7, 1, 14, 64], strides = [1, 1, 1, 1, 1]} : vector<1x7x2x14x64xf32> to vector<1x7x1x14x64xf32>
    %47 = vector.shape_cast %46 : vector<1x7x1x14x64xf32> to vector<1x7x14x64xf32>
    %48 = vector.extract_strided_slice %45 {offsets = [0, 0, 1, 0, 0], sizes = [1, 7, 1, 14, 64], strides = [1, 1, 1, 1, 1]} : vector<1x7x2x14x64xf32> to vector<1x7x1x14x64xf32>
    %49 = vector.shape_cast %48 : vector<1x7x1x14x64xf32> to vector<1x7x14x64xf32>
    %50 = arith.maximumf %47, %49 : vector<1x7x14x64xf32>
    %51 = vector.shape_cast %50 : vector<1x7x14x64xf32> to vector<1x7x7x2x64xf32>
    %52 = vector.extract_strided_slice %51 {offsets = [0, 0, 0, 0, 0], sizes = [1, 7, 7, 1, 64], strides = [1, 1, 1, 1, 1]} : vector<1x7x7x2x64xf32> to vector<1x7x7x1x64xf32>
    %53 = vector.shape_cast %52 : vector<1x7x7x1x64xf32> to vector<1x7x7x64xf32>
    %54 = vector.extract_strided_slice %51 {offsets = [0, 0, 0, 1, 0], sizes = [1, 7, 7, 1, 64], strides = [1, 1, 1, 1, 1]} : vector<1x7x7x2x64xf32> to vector<1x7x7x1x64xf32>
    %55 = vector.shape_cast %54 : vector<1x7x7x1x64xf32> to vector<1x7x7x64xf32>
    %56 = arith.maximumf %53, %55 : vector<1x7x7x64xf32>
    %57 = arith.truncf %56 : vector<1x7x7x64xf32> to vector<1x7x7x64xbf16>
    %58 = vector.shape_cast %57 : vector<1x7x7x64xbf16> to vector<1x49x64xbf16>
    %c0_56 = arith.constant 0 : index
    %c0_57 = arith.constant 0 : index
    %c0_58 = arith.constant 0 : index
    %59 = vector.load %arg6[%c0_56, %c0_57, %c0_58] : memref<1x49x64xbf16, #tpu.memory_space<vmem>>, vector<1x49x64xbf16>
    tpu.vector_store %arg6[%c0_56, %c0_57, %c0_58], %58 {strides = array<i32>} : memref<1x49x64xbf16, #tpu.memory_space<vmem>>, vector<1x49x64xbf16>,
    return
  }
  func.func @transform_0(%arg0: i32) -> (i32, i32, i32) {
    %c0_i32 = arith.constant 0 : i32
    %c0_i32_0 = arith.constant 0 : i32
    %c0_i32_1 = arith.constant 0 : i32
    return %arg0, %c0_i32, %c0_i32_0 : i32, i32, i32
  }
  func.func @transform_1(%arg0: i32) -> (i32, i32) {
    %c0_i32 = arith.constant 0 : i32
    %c0_i32_0 = arith.constant 0 : i32
    %c0_i32_1 = arith.constant 0 : i32
    return %c0_i32, %c0_i32_0 : i32, i32
  }
  func.func @transform_2(%arg0: i32) -> (i32, i32) {
    %c0_i32 = arith.constant 0 : i32
    %c0_i32_0 = arith.constant 0 : i32
    %c0_i32_1 = arith.constant 0 : i32
    return %c0_i32, %c0_i32_0 : i32, i32
  }
  func.func @transform_3(%arg0: i32) -> (i32, i32) {
    %c0_i32 = arith.constant 0 : i32
    %c0_i32_0 = arith.constant 0 : i32
    %c0_i32_1 = arith.constant 0 : i32
    return %c0_i32, %c0_i32_0 : i32, i32
  }
  func.func @transform_4(%arg0: i32) -> (i32, i32) {
    %c0_i32 = arith.constant 0 : i32
    %c0_i32_0 = arith.constant 0 : i32
    %c0_i32_1 = arith.constant 0 : i32
    return %c0_i32, %c0_i32_0 : i32, i32
  }
  func.func @transform_5(%arg0: i32) -> (i32, i32, i32) {
    %c0_i32 = arith.constant 0 : i32
    %c0_i32_0 = arith.constant 0 : i32
    %c0_i32_1 = arith.constant 0 : i32
    return %arg0, %c0_i32, %c0_i32_0 : i32, i32, i32
  }
}

module attributes {stable_mosaic.version = 11 : i64} {
  func.func @_mlp_kernel(%arg0: i32, %arg1: memref<2x3136xbf16, #tpu.memory_space<vmem>>, %arg2: memref<3136x128xbf16, #tpu.memory_space<vmem>>, %arg3: memref<1x128xf32, #tpu.memory_space<vmem>>, %arg4: memref<128x128xbf16, #tpu.memory_space<vmem>>, %arg5: memref<1x128xf32, #tpu.memory_space<vmem>>, %arg6: memref<2x128xf32, #tpu.memory_space<vmem>>) attributes {dimension_semantics = [#tpu.dimension_semantics<parallel>], iteration_bounds = array<i64: 1>, scalar_prefetch = 0 : i64, scratch_operands = 0 : i64, tpu.core_type = #tpu.core_type<tc>, window_params = [{transform_indices = @transform_0, window_bounds = array<i64: 2, 3136>}, {pipeline_mode = #tpu.pipeline_mode<synchronous>, transform_indices = @transform_1, window_bounds = array<i64: 3136, 128>}, {pipeline_mode = #tpu.pipeline_mode<synchronous>, transform_indices = @transform_2, window_bounds = array<i64: 1, 128>}, {pipeline_mode = #tpu.pipeline_mode<synchronous>, transform_indices = @transform_3, window_bounds = array<i64: 128, 128>}, {pipeline_mode = #tpu.pipeline_mode<synchronous>, transform_indices = @transform_4, window_bounds = array<i64: 1, 128>}, {transform_indices = @transform_5, window_bounds = array<i64: 2, 128>}]} {
    %c0 = arith.constant 0 : index
    %c0_0 = arith.constant 0 : index
    %0 = vector.load %arg1[%c0, %c0_0] : memref<2x3136xbf16, #tpu.memory_space<vmem>>, vector<2x3136xbf16>
    %c0_1 = arith.constant 0 : index
    %c0_2 = arith.constant 0 : index
    %1 = vector.load %arg2[%c0_1, %c0_2] : memref<3136x128xbf16, #tpu.memory_space<vmem>>, vector<3136x128xbf16>
    %cst = arith.constant dense<0.000000e+00> : vector<2x128xf32>
    %2 = tpu.matmul %0, %1, %cst {dimension_numbers = #tpu.dot_dimension_numbers<[1], [0], [0], [1], [0, 0, 1, 1], [], []>} : vector<2x3136xbf16>, vector<3136x128xbf16>, vector<2x128xf32> -> vector<2x128xf32>
    %c0_3 = arith.constant 0 : index
    %c0_4 = arith.constant 0 : index
    %3 = vector.load %arg3[%c0_3, %c0_4] : memref<1x128xf32, #tpu.memory_space<vmem>>, vector<1x128xf32>
    %4 = vector.broadcast %3 : vector<1x128xf32> to vector<2x128xf32>
    %5 = arith.addf %2, %4 : vector<2x128xf32>
    %cst_5 = arith.constant 0.000000e+00 : f32
    %6 = vector.broadcast %cst_5 : f32 to vector<2x128xf32>
    %7 = arith.maximumf %5, %6 : vector<2x128xf32>
    %8 = arith.truncf %7 : vector<2x128xf32> to vector<2x128xbf16>
    %c0_6 = arith.constant 0 : index
    %c0_7 = arith.constant 0 : index
    %9 = vector.load %arg4[%c0_6, %c0_7] : memref<128x128xbf16, #tpu.memory_space<vmem>>, vector<128x128xbf16>
    %cst_8 = arith.constant dense<0.000000e+00> : vector<2x128xf32>
    %10 = tpu.matmul %8, %9, %cst_8 {dimension_numbers = #tpu.dot_dimension_numbers<[1], [0], [0], [1], [0, 0, 1, 1], [], []>} : vector<2x128xbf16>, vector<128x128xbf16>, vector<2x128xf32> -> vector<2x128xf32>
    %c0_9 = arith.constant 0 : index
    %c0_10 = arith.constant 0 : index
    %11 = vector.load %arg5[%c0_9, %c0_10] : memref<1x128xf32, #tpu.memory_space<vmem>>, vector<1x128xf32>
    %12 = vector.broadcast %11 : vector<1x128xf32> to vector<2x128xf32>
    %13 = arith.addf %10, %12 : vector<2x128xf32>
    %c0_11 = arith.constant 0 : index
    %c0_12 = arith.constant 0 : index
    %14 = vector.load %arg6[%c0_11, %c0_12] : memref<2x128xf32, #tpu.memory_space<vmem>>, vector<2x128xf32>
    tpu.vector_store %arg6[%c0_11, %c0_12], %13 {strides = array<i32>} : memref<2x128xf32, #tpu.memory_space<vmem>>, vector<2x128xf32>,
    return
  }
  func.func @transform_0(%arg0: i32) -> (i32, i32) {
    %c0_i32 = arith.constant 0 : i32
    %c0_i32_0 = arith.constant 0 : i32
    return %arg0, %c0_i32 : i32, i32
  }
  func.func @transform_1(%arg0: i32) -> (i32, i32) {
    %c0_i32 = arith.constant 0 : i32
    %c0_i32_0 = arith.constant 0 : i32
    %c0_i32_1 = arith.constant 0 : i32
    return %c0_i32, %c0_i32_0 : i32, i32
  }
  func.func @transform_2(%arg0: i32) -> (i32, i32) {
    %c0_i32 = arith.constant 0 : i32
    %c0_i32_0 = arith.constant 0 : i32
    %c0_i32_1 = arith.constant 0 : i32
    return %c0_i32, %c0_i32_0 : i32, i32
  }
  func.func @transform_3(%arg0: i32) -> (i32, i32) {
    %c0_i32 = arith.constant 0 : i32
    %c0_i32_0 = arith.constant 0 : i32
    %c0_i32_1 = arith.constant 0 : i32
    return %c0_i32, %c0_i32_0 : i32, i32
  }
  func.func @transform_4(%arg0: i32) -> (i32, i32) {
    %c0_i32 = arith.constant 0 : i32
    %c0_i32_0 = arith.constant 0 : i32
    %c0_i32_1 = arith.constant 0 : i32
    return %c0_i32, %c0_i32_0 : i32, i32
  }
  func.func @transform_5(%arg0: i32) -> (i32, i32) {
    %c0_i32 = arith.constant 0 : i32
    %c0_i32_0 = arith.constant 0 : i32
    return %arg0, %c0_i32 : i32, i32
  }
}

</mosaic_0001>

<llo_original>
// kernel: net_forward.3
$region0: #{net_forward.3}
  #allocation0 [shape = 'u32[]', space=smem, size = 0x4, offset = 0x4, fixed_abs, tag = 'smem constant byte address 0x4 - core index']
  #allocation1 [shape = 'u32[144,128]{1,0:T(1,128)}', space=vmem, size = 0x12000, scoped, tag = 'internal scratch']
  %s0 = inlined_call_operand.vmem [shape: bf16[2,3136], index: 0, kind: input, shape index: {}]
  %s1 = inlined_call_operand.vmem [shape: bf16[3136,128], index: 1, kind: input, shape index: {}]
  %s2 = inlined_call_operand.vmem [shape: f32[1,128], index: 2, kind: input, shape index: {}]
  %s3 = inlined_call_operand.vmem [shape: bf16[128,128], index: 3, kind: input, shape index: {}]
  %s4 = inlined_call_operand.vmem [shape: f32[1,128], index: 4, kind: input, shape index: {}]
  %s5 = inlined_call_operand.hbm [shape: f32[2,128], index: 5, kind: output, shape index: {}]
  %s6 = sld [smem:[#allocation0]]
  $region30: #{net_forward.3} parent=0
    _
  %s8 = ssub.s32 1, %s6
  %s9 = scalar_select 0, %s8, %s6
  $region1: #{net_forward.3} parent=0
    #allocation2 [shape = 'u8[1024]{0}', space=vmem, size = 0x400, scoped, tag = 'output window, operand 0, single buffered']
    #allocation3 [shape = 's32[1]{0}', space=sflag, size = 0x4, scoped, tag = 'scoped memory for net_forward.3']
    %10 = vsyncpa [#allocation3], 0
    // Predicated region
    $region2: #{net_forward.3} parent=1 // pred_check
      _
    $region3: #{net_forward.3} parent=1 // pred_check_branch
      %12 = sbr.rel (0) target = $region5
    $region4: #{net_forward.3} parent=1 // pred_region
      _
    $region5: #{net_forward.3} parent=1 // pred_fallthru
      _
    // Predicated region
    $region6: #{net_forward.3} parent=1 // pred_check
      _
    $region7: #{net_forward.3} parent=1 // pred_check_branch
      %14 = sbr.rel (0) target = $region9
    $region8: #{net_forward.3} parent=1 // pred_region
      _
    $region9: #{net_forward.3} parent=1 // pred_fallthru
      _
    // Predicated region
    $region10: #{net_forward.3} parent=1 // pred_check
      _
    $region11: #{net_forward.3} parent=1 // pred_check_branch
      %16 = sbr.rel (0) target = $region13
    $region12: #{net_forward.3} parent=1 // pred_region
      _
    $region13: #{net_forward.3} parent=1 // pred_fallthru
      _
    // Predicated region
    $region14: #{net_forward.3} parent=1 // pred_check
      _
    $region15: #{net_forward.3} parent=1 // pred_check_branch
      %18 = sbr.rel (0) target = $region17
    $region16: #{net_forward.3} parent=1 // pred_region
      _
    $region17: #{net_forward.3} parent=1 // pred_fallthru
      _
    // Predicated region
    $region18: #{net_forward.3} parent=1 // pred_check
      _
    $region19: #{net_forward.3} parent=1 // pred_check_branch
      %20 = sbr.rel (0) target = $region21
    $region20: #{net_forward.3} parent=1 // pred_region
      _
    $region21: #{net_forward.3} parent=1 // pred_fallthru
      _
    %v22 = vld [vmem:[%s0] sm:$0xff]
    %v23 = vld [vmem:[%s0 + $0x8] sm:$0xff]
    %v24 = vld [vmem:[%s0 + $0x10] sm:$0xff]
    %v25 = vld [vmem:[%s0 + $0x18] sm:$0x1]
    %v26 = vld [vmem:[%s1] sm:$0xf]
    %v27 = vld [vmem:[%s1 + $0x4] sm:$0xf]
    %v28 = vld [vmem:[%s1 + $0x8] sm:$0xf]
    %v29 = vld [vmem:[%s1 + $0xc] sm:$0xf]
    %v30 = vld [vmem:[%s1 + $0x10] sm:$0xf]
    %v31 = vld [vmem:[%s1 + $0x14] sm:$0xf]
    %v32 = vld [vmem:[%s1 + $0x18] sm:$0xf]
    %v33 = vld [vmem:[%s1 + $0x1c] sm:$0xf]
    %v34 = vld [vmem:[%s1 + $0x20] sm:$0xf]
    %v35 = vld [vmem:[%s1 + $0x24] sm:$0xf]
    %v36 = vld [vmem:[%s1 + $0x28] sm:$0xf]
    %v37 = vld [vmem:[%s1 + $0x2c] sm:$0xf]
    %v38 = vld [vmem:[%s1 + $0x30] sm:$0xf]
    %v39 = vld [vmem:[%s1 + $0x34] sm:$0xf]
    %v40 = vld [vmem:[%s1 + $0x38] sm:$0xf]
    %v41 = vld [vmem:[%s1 + $0x3c] sm:$0xf]
    %v42 = vld [vmem:[%s1 + $0x40] sm:$0xf]
    %v43 = vld [vmem:[%s1 + $0x44] sm:$0xf]
    %v44 = vld [vmem:[%s1 + $0x48] sm:$0xf]
    %v45 = vld [vmem:[%s1 + $0x4c] sm:$0xf]
    %v46 = vld [vmem:[%s1 + $0x50] sm:$0xf]
    %v47 = vld [vmem:[%s1 + $0x54] sm:$0xf]
    %v48 = vld [vmem:[%s1 + $0x58] sm:$0xf]
    %v49 = vld [vmem:[%s1 + $0x5c] sm:$0xf]
    %v50 = vld [vmem:[%s1 + $0x60] sm:$0xf]
    %v51 = vld [vmem:[%s1 + $0x64] sm:$0xf]
    %v52 = vld [vmem:[%s1 + $0x68] sm:$0xf]
    %v53 = vld [vmem:[%s1 + $0x6c] sm:$0xf]
    %v54 = vld [vmem:[%s1 + $0x70] sm:$0xf]
    %v55 = vld [vmem:[%s1 + $0x74] sm:$0xf]
    %v56 = vld [vmem:[%s1 + $0x78] sm:$0xf]
    %v57 = vld [vmem:[%s1 + $0x7c] sm:$0xf]
    %v58 = vld [vmem:[%s1 + $0x80] sm:$0xf]
    %v59 = vld [vmem:[%s1 + $0x84] sm:$0xf]
    %v60 = vld [vmem:[%s1 + $0x88] sm:$0xf]
    %v61 = vld [vmem:[%s1 + $0x8c] sm:$0xf]
    %v62 = vld [vmem:[%s1 + $0x90] sm:$0xf]
    %v63 = vld [vmem:[%s1 + $0x94] sm:$0xf]
    %v64 = vld [vmem:[%s1 + $0x98] sm:$0xf]
    %v65 = vld [vmem:[%s1 + $0x9c] sm:$0xf]
    %v66 = vld [vmem:[%s1 + $0xa0] sm:$0xf]
    %v67 = vld [vmem:[%s1 + $0xa4] sm:$0xf]
    %v68 = vld [vmem:[%s1 + $0xa8] sm:$0xf]
    %v69 = vld [vmem:[%s1 + $0xac] sm:$0xf]
    %v70 = vld [vmem:[%s1 + $0xb0] sm:$0xf]
    %v71 = vld [vmem:[%s1 + $0xb4] sm:$0xf]
    %v72 = vld [vmem:[%s1 + $0xb8] sm:$0xf]
    %v73 = vld [vmem:[%s1 + $0xbc] sm:$0xf]
    %v74 = vld [vmem:[%s1 + $0xc0] sm:$0xf]
    %v75 = vld [vmem:[%s1 + $0xc4] sm:$0xf]
    %v76 = vld [vmem:[%s1 + $0xc8] sm:$0xf]
    %v77 = vld [vmem:[%s1 + $0xcc] sm:$0xf]
    %v78 = vld [vmem:[%s1 + $0xd0] sm:$0xf]
    %v79 = vld [vmem:[%s1 + $0xd4] sm:$0xf]
    %v80 = vld [vmem:[%s1 + $0xd8] sm:$0xf]
    %v81 = vld [vmem:[%s1 + $0xdc] sm:$0xf]
    %v82 = vld [vmem:[%s1 + $0xe0] sm:$0xf]
    %v83 = vld [vmem:[%s1 + $0xe4] sm:$0xf]
    %v84 = vld [vmem:[%s1 + $0xe8] sm:$0xf]
    %v85 = vld [vmem:[%s1 + $0xec] sm:$0xf]
    %v86 = vld [vmem:[%s1 + $0xf0] sm:$0xf]
    %v87 = vld [vmem:[%s1 + $0xf4] sm:$0xf]
    %v88 = vld [vmem:[%s1 + $0xf8] sm:$0xf]
    %v89 = vld [vmem:[%s1 + $0xfc] sm:$0xf]
    %v90 = vld [vmem:[%s1 + $0x100] sm:$0xf]
    %v91 = vld [vmem:[%s1 + $0x104] sm:$0xf]
    %v92 = vld [vmem:[%s1 + $0x108] sm:$0xf]
    %v93 = vld [vmem:[%s1 + $0x10c] sm:$0xf]
    %v94 = vld [vmem:[%s1 + $0x110] sm:$0xf]
    %v95 = vld [vmem:[%s1 + $0x114] sm:$0xf]
    %v96 = vld [vmem:[%s1 + $0x118] sm:$0xf]
    %v97 = vld [vmem:[%s1 + $0x11c] sm:$0xf]
    %v98 = vld [vmem:[%s1 + $0x120] sm:$0xf]
    %v99 = vld [vmem:[%s1 + $0x124] sm:$0xf]
    %v100 = vld [vmem:[%s1 + $0x128] sm:$0xf]
    %v101 = vld [vmem:[%s1 + $0x12c] sm:$0xf]
    %v102 = vld [vmem:[%s1 + $0x130] sm:$0xf]
    %v103 = vld [vmem:[%s1 + $0x134] sm:$0xf]
    %v104 = vld [vmem:[%s1 + $0x138] sm:$0xf]
    %v105 = vld [vmem:[%s1 + $0x13c] sm:$0xf]
    %v106 = vld [vmem:[%s1 + $0x140] sm:$0xf]
    %v107 = vld [vmem:[%s1 + $0x144] sm:$0xf]
    %v108 = vld [vmem:[%s1 + $0x148] sm:$0xf]
    %v109 = vld [vmem:[%s1 + $0x14c] sm:$0xf]
    %v110 = vld [vmem:[%s1 + $0x150] sm:$0xf]
    %v111 = vld [vmem:[%s1 + $0x154] sm:$0xf]
    %v112 = vld [vmem:[%s1 + $0x158] sm:$0xf]
    %v113 = vld [vmem:[%s1 + $0x15c] sm:$0xf]
    %v114 = vld [vmem:[%s1 + $0x160] sm:$0xf]
    %v115 = vld [vmem:[%s1 + $0x164] sm:$0xf]
    %v116 = vld [vmem:[%s1 + $0x168] sm:$0xf]
    %v117 = vld [vmem:[%s1 + $0x16c] sm:$0xf]
    %v118 = vld [vmem:[%s1 + $0x170] sm:$0xf]
    %v119 = vld [vmem:[%s1 + $0x174] sm:$0xf]
    %v120 = vld [vmem:[%s1 + $0x178] sm:$0xf]
    %v121 = vld [vmem:[%s1 + $0x17c] sm:$0xf]
    %v122 = vld [vmem:[%s1 + $0x180] sm:$0xf]
    %v123 = vld [vmem:[%s1 + $0x184] sm:$0xf]
    %v124 = vld [vmem:[%s1 + $0x188] sm:$0xf]
    %v125 = vld [vmem:[%s1 + $0x18c] sm:$0xf]
    %v126 = vld [vmem:[%s1 + $0x190] sm:$0xf]
    %v127 = vld [vmem:[%s1 + $0x194] sm:$0xf]
    %v128 = vld [vmem:[%s1 + $0x198] sm:$0xf]
    %v129 = vld [vmem:[%s1 + $0x19c] sm:$0xf]
    %v130 = vld [vmem:[%s1 + $0x1a0] sm:$0xf]
    %v131 = vld [vmem:[%s1 + $0x1a4] sm:$0xf]
    %v132 = vld [vmem:[%s1 + $0x1a8] sm:$0xf]
    %v133 = vld [vmem:[%s1 + $0x1ac] sm:$0xf]
    %v134 = vld [vmem:[%s1 + $0x1b0] sm:$0xf]
    %v135 = vld [vmem:[%s1 + $0x1b4] sm:$0xf]
    %v136 = vld [vmem:[%s1 + $0x1b8] sm:$0xf]
    %v137 = vld [vmem:[%s1 + $0x1bc] sm:$0xf]
    %v138 = vld [vmem:[%s1 + $0x1c0] sm:$0xf]
    %v139 = vld [vmem:[%s1 + $0x1c4] sm:$0xf]
    %v140 = vld [vmem:[%s1 + $0x1c8] sm:$0xf]
    %v141 = vld [vmem:[%s1 + $0x1cc] sm:$0xf]
    %v142 = vld [vmem:[%s1 + $0x1d0] sm:$0xf]
    %v143 = vld [vmem:[%s1 + $0x1d4] sm:$0xf]
    %v144 = vld [vmem:[%s1 + $0x1d8] sm:$0xf]
    %v145 = vld [vmem:[%s1 + $0x1dc] sm:$0xf]
    %v146 = vld [vmem:[%s1 + $0x1e0] sm:$0xf]
    %v147 = vld [vmem:[%s1 + $0x1e4] sm:$0xf]
    %v148 = vld [vmem:[%s1 + $0x1e8] sm:$0xf]
    %v149 = vld [vmem:[%s1 + $0x1ec] sm:$0xf]
    %v150 = vld [vmem:[%s1 + $0x1f0] sm:$0xf]
    %v151 = vld [vmem:[%s1 + $0x1f4] sm:$0xf]
    %v152 = vld [vmem:[%s1 + $0x1f8] sm:$0xf]
    %v153 = vld [vmem:[%s1 + $0x1fc] sm:$0xf]
    %v154 = vld [vmem:[%s1 + $0x200] sm:$0xf]
    %v155 = vld [vmem:[%s1 + $0x204] sm:$0xf]
    %v156 = vld [vmem:[%s1 + $0x208] sm:$0xf]
    %v157 = vld [vmem:[%s1 + $0x20c] sm:$0xf]
    %v158 = vld [vmem:[%s1 + $0x210] sm:$0xf]
    %v159 = vld [vmem:[%s1 + $0x214] sm:$0xf]
    %v160 = vld [vmem:[%s1 + $0x218] sm:$0xf]
    %v161 = vld [vmem:[%s1 + $0x21c] sm:$0xf]
    %v162 = vld [vmem:[%s1 + $0x220] sm:$0xf]
    %v163 = vld [vmem:[%s1 + $0x224] sm:$0xf]
    %v164 = vld [vmem:[%s1 + $0x228] sm:$0xf]
    %v165 = vld [vmem:[%s1 + $0x22c] sm:$0xf]
    %v166 = vld [vmem:[%s1 + $0x230] sm:$0xf]
    %v167 = vld [vmem:[%s1 + $0x234] sm:$0xf]
    %v168 = vld [vmem:[%s1 + $0x238] sm:$0xf]
    %v169 = vld [vmem:[%s1 + $0x23c] sm:$0xf]
    %v170 = vld [vmem:[%s1 + $0x240] sm:$0xf]
    %v171 = vld [vmem:[%s1 + $0x244] sm:$0xf]
    %v172 = vld [vmem:[%s1 + $0x248] sm:$0xf]
    %v173 = vld [vmem:[%s1 + $0x24c] sm:$0xf]
    %v174 = vld [vmem:[%s1 + $0x250] sm:$0xf]
    %v175 = vld [vmem:[%s1 + $0x254] sm:$0xf]
    %v176 = vld [vmem:[%s1 + $0x258] sm:$0xf]
    %v177 = vld [vmem:[%s1 + $0x25c] sm:$0xf]
    %v178 = vld [vmem:[%s1 + $0x260] sm:$0xf]
    %v179 = vld [vmem:[%s1 + $0x264] sm:$0xf]
    %v180 = vld [vmem:[%s1 + $0x268] sm:$0xf]
    %v181 = vld [vmem:[%s1 + $0x26c] sm:$0xf]
    %v182 = vld [vmem:[%s1 + $0x270] sm:$0xf]
    %v183 = vld [vmem:[%s1 + $0x274] sm:$0xf]
    %v184 = vld [vmem:[%s1 + $0x278] sm:$0xf]
    %v185 = vld [vmem:[%s1 + $0x27c] sm:$0xf]
    %v186 = vld [vmem:[%s1 + $0x280] sm:$0xf]
    %v187 = vld [vmem:[%s1 + $0x284] sm:$0xf]
    %v188 = vld [vmem:[%s1 + $0x288] sm:$0xf]
    %v189 = vld [vmem:[%s1 + $0x28c] sm:$0xf]
    %v190 = vld [vmem:[%s1 + $0x290] sm:$0xf]
    %v191 = vld [vmem:[%s1 + $0x294] sm:$0xf]
    %v192 = vld [vmem:[%s1 + $0x298] sm:$0xf]
    %v193 = vld [vmem:[%s1 + $0x29c] sm:$0xf]
    %v194 = vld [vmem:[%s1 + $0x2a0] sm:$0xf]
    %v195 = vld [vmem:[%s1 + $0x2a4] sm:$0xf]
    %v196 = vld [vmem:[%s1 + $0x2a8] sm:$0xf]
    %v197 = vld [vmem:[%s1 + $0x2ac] sm:$0xf]
    %v198 = vld [vmem:[%s1 + $0x2b0] sm:$0xf]
    %v199 = vld [vmem:[%s1 + $0x2b4] sm:$0xf]
    %v200 = vld [vmem:[%s1 + $0x2b8] sm:$0xf]
    %v201 = vld [vmem:[%s1 + $0x2bc] sm:$0xf]
    %v202 = vld [vmem:[%s1 + $0x2c0] sm:$0xf]
    %v203 = vld [vmem:[%s1 + $0x2c4] sm:$0xf]
    %v204 = vld [vmem:[%s1 + $0x2c8] sm:$0xf]
    %v205 = vld [vmem:[%s1 + $0x2cc] sm:$0xf]
    %v206 = vld [vmem:[%s1 + $0x2d0] sm:$0xf]
    %v207 = vld [vmem:[%s1 + $0x2d4] sm:$0xf]
    %v208 = vld [vmem:[%s1 + $0x2d8] sm:$0xf]
    %v209 = vld [vmem:[%s1 + $0x2dc] sm:$0xf]
    %v210 = vld [vmem:[%s1 + $0x2e0] sm:$0xf]
    %v211 = vld [vmem:[%s1 + $0x2e4] sm:$0xf]
    %v212 = vld [vmem:[%s1 + $0x2e8] sm:$0xf]
    %v213 = vld [vmem:[%s1 + $0x2ec] sm:$0xf]
    %v214 = vld [vmem:[%s1 + $0x2f0] sm:$0xf]
    %v215 = vld [vmem:[%s1 + $0x2f4] sm:$0xf]
    %v216 = vld [vmem:[%s1 + $0x2f8] sm:$0xf]
    %v217 = vld [vmem:[%s1 + $0x2fc] sm:$0xf]
    %v218 = vld [vmem:[%s1 + $0x300] sm:$0xf]
    %v219 = vld [vmem:[%s1 + $0x304] sm:$0xf]
    %v220 = vld [vmem:[%s1 + $0x308] sm:$0xf]
    %v221 = vld [vmem:[%s1 + $0x30c] sm:$0xf]
    %v222 = vld [vmem:[%s1 + $0x310] sm:$0xf]
    %v223 = vld [vmem:[%s1 + $0x314] sm:$0xf]
    %v224 = vld [vmem:[%s1 + $0x318] sm:$0xf]
    %v225 = vld [vmem:[%s1 + $0x31c] sm:$0xf]
    %v226 = vld [vmem:[%s1 + $0x320] sm:$0xf]
    %v227 = vld [vmem:[%s1 + $0x324] sm:$0xf]
    %v228 = vld [vmem:[%s1 + $0x328] sm:$0xf]
    %v229 = vld [vmem:[%s1 + $0x32c] sm:$0xf]
    %v230 = vld [vmem:[%s1 + $0x330] sm:$0xf]
    %v231 = vld [vmem:[%s1 + $0x334] sm:$0xf]
    %v232 = vld [vmem:[%s1 + $0x338] sm:$0xf]
    %v233 = vld [vmem:[%s1 + $0x33c] sm:$0xf]
    %v234 = vld [vmem:[%s1 + $0x340] sm:$0xf]
    %v235 = vld [vmem:[%s1 + $0x344] sm:$0xf]
    %v236 = vld [vmem:[%s1 + $0x348] sm:$0xf]
    %v237 = vld [vmem:[%s1 + $0x34c] sm:$0xf]
    %v238 = vld [vmem:[%s1 + $0x350] sm:$0xf]
    %v239 = vld [vmem:[%s1 + $0x354] sm:$0xf]
    %v240 = vld [vmem:[%s1 + $0x358] sm:$0xf]
    %v241 = vld [vmem:[%s1 + $0x35c] sm:$0xf]
    %v242 = vld [vmem:[%s1 + $0x360] sm:$0xf]
    %v243 = vld [vmem:[%s1 + $0x364] sm:$0xf]
    %v244 = vld [vmem:[%s1 + $0x368] sm:$0xf]
    %v245 = vld [vmem:[%s1 + $0x36c] sm:$0xf]
    %v246 = vld [vmem:[%s1 + $0x370] sm:$0xf]
    %v247 = vld [vmem:[%s1 + $0x374] sm:$0xf]
    %v248 = vld [vmem:[%s1 + $0x378] sm:$0xf]
    %v249 = vld [vmem:[%s1 + $0x37c] sm:$0xf]
    %v250 = vld [vmem:[%s1 + $0x380] sm:$0xf]
    %v251 = vld [vmem:[%s1 + $0x384] sm:$0xf]
    %v252 = vld [vmem:[%s1 + $0x388] sm:$0xf]
    %v253 = vld [vmem:[%s1 + $0x38c] sm:$0xf]
    %v254 = vld [vmem:[%s1 + $0x390] sm:$0xf]
    %v255 = vld [vmem:[%s1 + $0x394] sm:$0xf]
    %v256 = vld [vmem:[%s1 + $0x398] sm:$0xf]
    %v257 = vld [vmem:[%s1 + $0x39c] sm:$0xf]
    %v258 = vld [vmem:[%s1 + $0x3a0] sm:$0xf]
    %v259 = vld [vmem:[%s1 + $0x3a4] sm:$0xf]
    %v260 = vld [vmem:[%s1 + $0x3a8] sm:$0xf]
    %v261 = vld [vmem:[%s1 + $0x3ac] sm:$0xf]
    %v262 = vld [vmem:[%s1 + $0x3b0] sm:$0xf]
    %v263 = vld [vmem:[%s1 + $0x3b4] sm:$0xf]
    %v264 = vld [vmem:[%s1 + $0x3b8] sm:$0xf]
    %v265 = vld [vmem:[%s1 + $0x3bc] sm:$0xf]
    %v266 = vld [vmem:[%s1 + $0x3c0] sm:$0xf]
    %v267 = vld [vmem:[%s1 + $0x3c4] sm:$0xf]
    %v268 = vld [vmem:[%s1 + $0x3c8] sm:$0xf]
    %v269 = vld [vmem:[%s1 + $0x3cc] sm:$0xf]
    %v270 = vld [vmem:[%s1 + $0x3d0] sm:$0xf]
    %v271 = vld [vmem:[%s1 + $0x3d4] sm:$0xf]
    %v272 = vld [vmem:[%s1 + $0x3d8] sm:$0xf]
    %v273 = vld [vmem:[%s1 + $0x3dc] sm:$0xf]
    %v274 = vld [vmem:[%s1 + $0x3e0] sm:$0xf]
    %v275 = vld [vmem:[%s1 + $0x3e4] sm:$0xf]
    %v276 = vld [vmem:[%s1 + $0x3e8] sm:$0xf]
    %v277 = vld [vmem:[%s1 + $0x3ec] sm:$0xf]
    %v278 = vld [vmem:[%s1 + $0x3f0] sm:$0xf]
    %v279 = vld [vmem:[%s1 + $0x3f4] sm:$0xf]
    %v280 = vld [vmem:[%s1 + $0x3f8] sm:$0xf]
    %v281 = vld [vmem:[%s1 + $0x3fc] sm:$0xf]
    %v282 = vld [vmem:[%s1 + $0x400] sm:$0xf]
    %v283 = vld [vmem:[%s1 + $0x404] sm:$0xf]
    %v284 = vld [vmem:[%s1 + $0x408] sm:$0xf]
    %v285 = vld [vmem:[%s1 + $0x40c] sm:$0xf]
    %v286 = vld [vmem:[%s1 + $0x410] sm:$0xf]
    %v287 = vld [vmem:[%s1 + $0x414] sm:$0xf]
    %v288 = vld [vmem:[%s1 + $0x418] sm:$0xf]
    %v289 = vld [vmem:[%s1 + $0x41c] sm:$0xf]
    %v290 = vld [vmem:[%s1 + $0x420] sm:$0xf]
    %v291 = vld [vmem:[%s1 + $0x424] sm:$0xf]
    %v292 = vld [vmem:[%s1 + $0x428] sm:$0xf]
    %v293 = vld [vmem:[%s1 + $0x42c] sm:$0xf]
    %v294 = vld [vmem:[%s1 + $0x430] sm:$0xf]
    %v295 = vld [vmem:[%s1 + $0x434] sm:$0xf]
    %v296 = vld [vmem:[%s1 + $0x438] sm:$0xf]
    %v297 = vld [vmem:[%s1 + $0x43c] sm:$0xf]
    %v298 = vld [vmem:[%s1 + $0x440] sm:$0xf]
    %v299 = vld [vmem:[%s1 + $0x444] sm:$0xf]
    %v300 = vld [vmem:[%s1 + $0x448] sm:$0xf]
    %v301 = vld [vmem:[%s1 + $0x44c] sm:$0xf]
    %v302 = vld [vmem:[%s1 + $0x450] sm:$0xf]
    %v303 = vld [vmem:[%s1 + $0x454] sm:$0xf]
    %v304 = vld [vmem:[%s1 + $0x458] sm:$0xf]
    %v305 = vld [vmem:[%s1 + $0x45c] sm:$0xf]
    %v306 = vld [vmem:[%s1 + $0x460] sm:$0xf]
    %v307 = vld [vmem:[%s1 + $0x464] sm:$0xf]
    %v308 = vld [vmem:[%s1 + $0x468] sm:$0xf]
    %v309 = vld [vmem:[%s1 + $0x46c] sm:$0xf]
    %v310 = vld [vmem:[%s1 + $0x470] sm:$0xf]
    %v311 = vld [vmem:[%s1 + $0x474] sm:$0xf]
    %v312 = vld [vmem:[%s1 + $0x478] sm:$0xf]
    %v313 = vld [vmem:[%s1 + $0x47c] sm:$0xf]
    %v314 = vld [vmem:[%s1 + $0x480] sm:$0xf]
    %v315 = vld [vmem:[%s1 + $0x484] sm:$0xf]
    %v316 = vld [vmem:[%s1 + $0x488] sm:$0xf]
    %v317 = vld [vmem:[%s1 + $0x48c] sm:$0xf]
    %v318 = vld [vmem:[%s1 + $0x490] sm:$0xf]
    %v319 = vld [vmem:[%s1 + $0x494] sm:$0xf]
    %v320 = vld [vmem:[%s1 + $0x498] sm:$0xf]
    %v321 = vld [vmem:[%s1 + $0x49c] sm:$0xf]
    %v322 = vld [vmem:[%s1 + $0x4a0] sm:$0xf]
    %v323 = vld [vmem:[%s1 + $0x4a4] sm:$0xf]
    %v324 = vld [vmem:[%s1 + $0x4a8] sm:$0xf]
    %v325 = vld [vmem:[%s1 + $0x4ac] sm:$0xf]
    %v326 = vld [vmem:[%s1 + $0x4b0] sm:$0xf]
    %v327 = vld [vmem:[%s1 + $0x4b4] sm:$0xf]
    %v328 = vld [vmem:[%s1 + $0x4b8] sm:$0xf]
    %v329 = vld [vmem:[%s1 + $0x4bc] sm:$0xf]
    %v330 = vld [vmem:[%s1 + $0x4c0] sm:$0xf]
    %v331 = vld [vmem:[%s1 + $0x4c4] sm:$0xf]
    %v332 = vld [vmem:[%s1 + $0x4c8] sm:$0xf]
    %v333 = vld [vmem:[%s1 + $0x4cc] sm:$0xf]
    %v334 = vld [vmem:[%s1 + $0x4d0] sm:$0xf]
    %v335 = vld [vmem:[%s1 + $0x4d4] sm:$0xf]
    %v336 = vld [vmem:[%s1 + $0x4d8] sm:$0xf]
    %v337 = vld [vmem:[%s1 + $0x4dc] sm:$0xf]
    %v338 = vld [vmem:[%s1 + $0x4e0] sm:$0xf]
    %v339 = vld [vmem:[%s1 + $0x4e4] sm:$0xf]
    %v340 = vld [vmem:[%s1 + $0x4e8] sm:$0xf]
    %v341 = vld [vmem:[%s1 + $0x4ec] sm:$0xf]
    %v342 = vld [vmem:[%s1 + $0x4f0] sm:$0xf]
    %v343 = vld [vmem:[%s1 + $0x4f4] sm:$0xf]
    %v344 = vld [vmem:[%s1 + $0x4f8] sm:$0xf]
    %v345 = vld [vmem:[%s1 + $0x4fc] sm:$0xf]
    %v346 = vld [vmem:[%s1 + $0x500] sm:$0xf]
    %v347 = vld [vmem:[%s1 + $0x504] sm:$0xf]
    %v348 = vld [vmem:[%s1 + $0x508] sm:$0xf]
    %v349 = vld [vmem:[%s1 + $0x50c] sm:$0xf]
    %v350 = vld [vmem:[%s1 + $0x510] sm:$0xf]
    %v351 = vld [vmem:[%s1 + $0x514] sm:$0xf]
    %v352 = vld [vmem:[%s1 + $0x518] sm:$0xf]
    %v353 = vld [vmem:[%s1 + $0x51c] sm:$0xf]
    %v354 = vld [vmem:[%s1 + $0x520] sm:$0xf]
    %v355 = vld [vmem:[%s1 + $0x524] sm:$0xf]
    %v356 = vld [vmem:[%s1 + $0x528] sm:$0xf]
    %v357 = vld [vmem:[%s1 + $0x52c] sm:$0xf]
    %v358 = vld [vmem:[%s1 + $0x530] sm:$0xf]
    %v359 = vld [vmem:[%s1 + $0x534] sm:$0xf]
    %v360 = vld [vmem:[%s1 + $0x538] sm:$0xf]
    %v361 = vld [vmem:[%s1 + $0x53c] sm:$0xf]
    %v362 = vld [vmem:[%s1 + $0x540] sm:$0xf]
    %v363 = vld [vmem:[%s1 + $0x544] sm:$0xf]
    %v364 = vld [vmem:[%s1 + $0x548] sm:$0xf]
    %v365 = vld [vmem:[%s1 + $0x54c] sm:$0xf]
    %v366 = vld [vmem:[%s1 + $0x550] sm:$0xf]
    %v367 = vld [vmem:[%s1 + $0x554] sm:$0xf]
    %v368 = vld [vmem:[%s1 + $0x558] sm:$0xf]
    %v369 = vld [vmem:[%s1 + $0x55c] sm:$0xf]
    %v370 = vld [vmem:[%s1 + $0x560] sm:$0xf]
    %v371 = vld [vmem:[%s1 + $0x564] sm:$0xf]
    %v372 = vld [vmem:[%s1 + $0x568] sm:$0xf]
    %v373 = vld [vmem:[%s1 + $0x56c] sm:$0xf]
    %v374 = vld [vmem:[%s1 + $0x570] sm:$0xf]
    %v375 = vld [vmem:[%s1 + $0x574] sm:$0xf]
    %v376 = vld [vmem:[%s1 + $0x578] sm:$0xf]
    %v377 = vld [vmem:[%s1 + $0x57c] sm:$0xf]
    %v378 = vld [vmem:[%s1 + $0x580] sm:$0xf]
    %v379 = vld [vmem:[%s1 + $0x584] sm:$0xf]
    %v380 = vld [vmem:[%s1 + $0x588] sm:$0xf]
    %v381 = vld [vmem:[%s1 + $0x58c] sm:$0xf]
    %v382 = vld [vmem:[%s1 + $0x590] sm:$0xf]
    %v383 = vld [vmem:[%s1 + $0x594] sm:$0xf]
    %v384 = vld [vmem:[%s1 + $0x598] sm:$0xf]
    %v385 = vld [vmem:[%s1 + $0x59c] sm:$0xf]
    %v386 = vld [vmem:[%s1 + $0x5a0] sm:$0xf]
    %v387 = vld [vmem:[%s1 + $0x5a4] sm:$0xf]
    %v388 = vld [vmem:[%s1 + $0x5a8] sm:$0xf]
    %v389 = vld [vmem:[%s1 + $0x5ac] sm:$0xf]
    %v390 = vld [vmem:[%s1 + $0x5b0] sm:$0xf]
    %v391 = vld [vmem:[%s1 + $0x5b4] sm:$0xf]
    %v392 = vld [vmem:[%s1 + $0x5b8] sm:$0xf]
    %v393 = vld [vmem:[%s1 + $0x5bc] sm:$0xf]
    %v394 = vld [vmem:[%s1 + $0x5c0] sm:$0xf]
    %v395 = vld [vmem:[%s1 + $0x5c4] sm:$0xf]
    %v396 = vld [vmem:[%s1 + $0x5c8] sm:$0xf]
    %v397 = vld [vmem:[%s1 + $0x5cc] sm:$0xf]
    %v398 = vld [vmem:[%s1 + $0x5d0] sm:$0xf]
    %v399 = vld [vmem:[%s1 + $0x5d4] sm:$0xf]
    %v400 = vld [vmem:[%s1 + $0x5d8] sm:$0xf]
    %v401 = vld [vmem:[%s1 + $0x5dc] sm:$0xf]
    %v402 = vld [vmem:[%s1 + $0x5e0] sm:$0xf]
    %v403 = vld [vmem:[%s1 + $0x5e4] sm:$0xf]
    %v404 = vld [vmem:[%s1 + $0x5e8] sm:$0xf]
    %v405 = vld [vmem:[%s1 + $0x5ec] sm:$0xf]
    %v406 = vld [vmem:[%s1 + $0x5f0] sm:$0xf]
    %v407 = vld [vmem:[%s1 + $0x5f4] sm:$0xf]
    %v408 = vld [vmem:[%s1 + $0x5f8] sm:$0xf]
    %v409 = vld [vmem:[%s1 + $0x5fc] sm:$0xf]
    %v410 = vld [vmem:[%s1 + $0x600] sm:$0xf]
    %v411 = vld [vmem:[%s1 + $0x604] sm:$0xf]
    %v412 = vld [vmem:[%s1 + $0x608] sm:$0xf]
    %v413 = vld [vmem:[%s1 + $0x60c] sm:$0xf]
    %v414 = vld [vmem:[%s1 + $0x610] sm:$0xf]
    %v415 = vld [vmem:[%s1 + $0x614] sm:$0xf]
    %v416 = vld [vmem:[%s1 + $0x618] sm:$0xf]
    %v417 = vld [vmem:[%s1 + $0x61c] sm:$0xf]
    %v418 = vld [vmem:[%s2] sm:$0x1]
    %v420 = vlaneseq
    %v421 = vshrl.u32 %v420, 7
    %v422 = vsub.s32 0, %v421
    %v423 = vrot.slane %v418, %v422
    %v429 = vcombine.high %v22, %v22
    %v431 = vunpack.c.l.s4 1966171168
    %v432 = vunpack.c.0.s8 %v431
    %v433 = vlaneseq
    %v434 = vshrl.u32 %v433, 7
    %v435 = vsub.s32 %v432, %v434
    %v436 = vrot.slane %v22, %v435
    %v438 = vunpack.c.l.s4 1966171168
    %v439 = vunpack.c.0.s8 %v438
    %v440 = vlaneseq
    %v441 = vshrl.u32 %v440, 7
    %v442 = vsub.s32 %v439, %v441
    %v443 = vrot.slane %v429, %v442
    %v444 = vcombine.high %v436, %v436
    %v445 = vcombine.high %v443, %v443
    %v447 = vunpack.c.l.s4 1966171168
    %v448 = vunpack.c.0.s8 %v447
    %v449 = vlaneseq
    %v450 = vshrl.u32 %v449, 7
    %v451 = vsub.s32 %v448, %v450
    %v452 = vrot.slane %v436, %v451
    %v454 = vunpack.c.l.s4 1966171168
    %v455 = vunpack.c.0.s8 %v454
    %v456 = vlaneseq
    %v457 = vshrl.u32 %v456, 7
    %v458 = vsub.s32 %v455, %v457
    %v459 = vrot.slane %v443, %v458
    %v461 = vunpack.c.l.s4 1966171168
    %v462 = vunpack.c.0.s8 %v461
    %v463 = vlaneseq
    %v464 = vshrl.u32 %v463, 7
    %v465 = vsub.s32 %v462, %v464
    %v466 = vrot.slane %v444, %v465
    %v468 = vunpack.c.l.s4 1966171168
    %v469 = vunpack.c.0.s8 %v468
    %v470 = vlaneseq
    %v471 = vshrl.u32 %v470, 7
    %v472 = vsub.s32 %v469, %v471
    %v473 = vrot.slane %v445, %v472
    %v474 = vcombine.high %v452, %v452
    %v475 = vcombine.high %v459, %v459
    %v476 = vcombine.high %v466, %v466
    %v477 = vcombine.high %v473, %v473
    %v478 = vcombine.high %v23, %v23
    %v480 = vunpack.c.l.s4 1966171168
    %v481 = vunpack.c.0.s8 %v480
    %v482 = vlaneseq
    %v483 = vshrl.u32 %v482, 7
    %v484 = vsub.s32 %v481, %v483
    %v485 = vrot.slane %v23, %v484
    %v487 = vunpack.c.l.s4 1966171168
    %v488 = vunpack.c.0.s8 %v487
    %v489 = vlaneseq
    %v490 = vshrl.u32 %v489, 7
    %v491 = vsub.s32 %v488, %v490
    %v492 = vrot.slane %v478, %v491
    %v493 = vcombine.high %v485, %v485
    %v494 = vcombine.high %v492, %v492
    %v496 = vunpack.c.l.s4 1966171168
    %v497 = vunpack.c.0.s8 %v496
    %v498 = vlaneseq
    %v499 = vshrl.u32 %v498, 7
    %v500 = vsub.s32 %v497, %v499
    %v501 = vrot.slane %v485, %v500
    %v503 = vunpack.c.l.s4 1966171168
    %v504 = vunpack.c.0.s8 %v503
    %v505 = vlaneseq
    %v506 = vshrl.u32 %v505, 7
    %v507 = vsub.s32 %v504, %v506
    %v508 = vrot.slane %v492, %v507
    %v510 = vunpack.c.l.s4 1966171168
    %v511 = vunpack.c.0.s8 %v510
    %v512 = vlaneseq
    %v513 = vshrl.u32 %v512, 7
    %v514 = vsub.s32 %v511, %v513
    %v515 = vrot.slane %v493, %v514
    %v517 = vunpack.c.l.s4 1966171168
    %v518 = vunpack.c.0.s8 %v517
    %v519 = vlaneseq
    %v520 = vshrl.u32 %v519, 7
    %v521 = vsub.s32 %v518, %v520
    %v522 = vrot.slane %v494, %v521
    %v523 = vcombine.high %v501, %v501
    %v524 = vcombine.high %v508, %v508
    %v525 = vcombine.high %v515, %v515
    %v526 = vcombine.high %v522, %v522
    %v527 = vcombine.high %v24, %v24
    %v529 = vunpack.c.l.s4 1966171168
    %v530 = vunpack.c.0.s8 %v529
    %v531 = vlaneseq
    %v532 = vshrl.u32 %v531, 7
    %v533 = vsub.s32 %v530, %v532
    %v534 = vrot.slane %v24, %v533
    %v536 = vunpack.c.l.s4 1966171168
    %v537 = vunpack.c.0.s8 %v536
    %v538 = vlaneseq
    %v539 = vshrl.u32 %v538, 7
    %v540 = vsub.s32 %v537, %v539
    %v541 = vrot.slane %v527, %v540
    %v542 = vcombine.high %v534, %v534
    %v543 = vcombine.high %v541, %v541
    %v545 = vunpack.c.l.s4 1966171168
    %v546 = vunpack.c.0.s8 %v545
    %v547 = vlaneseq
    %v548 = vshrl.u32 %v547, 7
    %v549 = vsub.s32 %v546, %v548
    %v550 = vrot.slane %v534, %v549
    %v552 = vunpack.c.l.s4 1966171168
    %v553 = vunpack.c.0.s8 %v552
    %v554 = vlaneseq
    %v555 = vshrl.u32 %v554, 7
    %v556 = vsub.s32 %v553, %v555
    %v557 = vrot.slane %v541, %v556
    %v559 = vunpack.c.l.s4 1966171168
    %v560 = vunpack.c.0.s8 %v559
    %v561 = vlaneseq
    %v562 = vshrl.u32 %v561, 7
    %v563 = vsub.s32 %v560, %v562
    %v564 = vrot.slane %v542, %v563
    %v566 = vunpack.c.l.s4 1966171168
    %v567 = vunpack.c.0.s8 %v566
    %v568 = vlaneseq
    %v569 = vshrl.u32 %v568, 7
    %v570 = vsub.s32 %v567, %v569
    %v571 = vrot.slane %v543, %v570
    %v572 = vcombine.high %v550, %v550
    %v573 = vcombine.high %v557, %v557
    %v574 = vcombine.high %v564, %v564
    %v575 = vcombine.high %v571, %v571
    %v577 = vunpack.c.l.s4 1966171168
    %v578 = vunpack.c.0.s8 %v577
    %v579 = vlaneseq
    %v580 = vshrl.u32 %v579, 7
    %v581 = vsub.s32 %v578, %v580
    %v582 = vrot.slane %v25, %v581
    %v584 = vunpack.c.l.s4 1966171168
    %v585 = vunpack.c.0.s8 %v584
    %v586 = vlaneseq
    %v587 = vshrl.u32 %v586, 7
    %v588 = vsub.s32 %v585, %v587
    %v589 = vrot.slane %v582, %v588
    %v1006 = vunpack.c.l.b16 %v26
    %v1007 = vunpack.c.l.b16 %v27
    %v1008 = vunpack.c.l.b16 %v28
    %v1009 = vunpack.c.l.b16 %v29
    %v1010 = vunpack.c.l.b16 %v30
    %v1011 = vunpack.c.l.b16 %v31
    %v1012 = vunpack.c.l.b16 %v32
    %v1013 = vunpack.c.l.b16 %v33
    %v1014 = vunpack.c.l.b16 %v34
    %v1015 = vunpack.c.l.b16 %v35
    %v1016 = vunpack.c.l.b16 %v36
    %v1017 = vunpack.c.l.b16 %v37
    %v1018 = vunpack.c.l.b16 %v38
    %v1019 = vunpack.c.l.b16 %v39
    %v1020 = vunpack.c.l.b16 %v40
    %v1021 = vunpack.c.l.b16 %v41
    %v1022 = vunpack.c.l.b16 %v42
    %v1023 = vunpack.c.l.b16 %v43
    %v1024 = vunpack.c.l.b16 %v44
    %v1025 = vunpack.c.l.b16 %v45
    %v1026 = vunpack.c.l.b16 %v46
    %v1027 = vunpack.c.l.b16 %v47
    %v1028 = vunpack.c.l.b16 %v48
    %v1029 = vunpack.c.l.b16 %v49
    %v1030 = vunpack.c.l.b16 %v50
    %v1031 = vunpack.c.l.b16 %v51
    %v1032 = vunpack.c.l.b16 %v52
    %v1033 = vunpack.c.l.b16 %v53
    %v1034 = vunpack.c.l.b16 %v54
    %v1035 = vunpack.c.l.b16 %v55
    %v1036 = vunpack.c.l.b16 %v56
    %v1037 = vunpack.c.l.b16 %v57
    %v1038 = vunpack.c.l.b16 %v58
    %v1039 = vunpack.c.l.b16 %v59
    %v1040 = vunpack.c.l.b16 %v60
    %v1041 = vunpack.c.l.b16 %v61
    %v1042 = vunpack.c.l.b16 %v62
    %v1043 = vunpack.c.l.b16 %v63
    %v1044 = vunpack.c.l.b16 %v64
    %v1045 = vunpack.c.l.b16 %v65
    %v1046 = vunpack.c.l.b16 %v66
    %v1047 = vunpack.c.l.b16 %v67
    %v1048 = vunpack.c.l.b16 %v68
    %v1049 = vunpack.c.l.b16 %v69
    %v1050 = vunpack.c.l.b16 %v70
    %v1051 = vunpack.c.l.b16 %v71
    %v1052 = vunpack.c.l.b16 %v72
    %v1053 = vunpack.c.l.b16 %v73
    %v1054 = vunpack.c.l.b16 %v74
    %v1055 = vunpack.c.l.b16 %v75
    %v1056 = vunpack.c.l.b16 %v76
    %v1057 = vunpack.c.l.b16 %v77
    %v1058 = vunpack.c.l.b16 %v78
    %v1059 = vunpack.c.l.b16 %v79
    %v1060 = vunpack.c.l.b16 %v80
    %v1061 = vunpack.c.l.b16 %v81
    %v1062 = vunpack.c.l.b16 %v82
    %v1063 = vunpack.c.l.b16 %v83
    %v1064 = vunpack.c.l.b16 %v84
    %v1065 = vunpack.c.l.b16 %v85
    %v1066 = vunpack.c.l.b16 %v86
    %v1067 = vunpack.c.l.b16 %v87
    %v1068 = vunpack.c.l.b16 %v88
    %v1069 = vunpack.c.l.b16 %v89
    %v1070 = vunpack.c.l.b16 %v90
    %v1071 = vunpack.c.l.b16 %v91
    %v1072 = vunpack.c.l.b16 %v92
    %v1073 = vunpack.c.l.b16 %v93
    %v1074 = vunpack.c.l.b16 %v94
    %v1075 = vunpack.c.l.b16 %v95
    %v1076 = vunpack.c.l.b16 %v96
    %v1077 = vunpack.c.l.b16 %v97
    %v1078 = vunpack.c.l.b16 %v98
    %v1079 = vunpack.c.l.b16 %v99
    %v1080 = vunpack.c.l.b16 %v100
    %v1081 = vunpack.c.l.b16 %v101
    %v1082 = vunpack.c.l.b16 %v102
    %v1083 = vunpack.c.l.b16 %v103
    %v1084 = vunpack.c.l.b16 %v104
    %v1085 = vunpack.c.l.b16 %v105
    %v1086 = vunpack.c.l.b16 %v106
    %v1087 = vunpack.c.l.b16 %v107
    %v1088 = vunpack.c.l.b16 %v108
    %v1089 = vunpack.c.l.b16 %v109
    %v1090 = vunpack.c.l.b16 %v110
    %v1091 = vunpack.c.l.b16 %v111
    %v1092 = vunpack.c.l.b16 %v112
    %v1093 = vunpack.c.l.b16 %v113
    %v1094 = vunpack.c.l.b16 %v114
    %v1095 = vunpack.c.l.b16 %v115
    %v1096 = vunpack.c.l.b16 %v116
    %v1097 = vunpack.c.l.b16 %v117
    %v1098 = vunpack.c.l.b16 %v118
    %v1099 = vunpack.c.l.b16 %v119
    %v1100 = vunpack.c.l.b16 %v120
    %v1101 = vunpack.c.l.b16 %v121
    %v1102 = vunpack.c.l.b16 %v122
    %v1103 = vunpack.c.l.b16 %v123
    %v1104 = vunpack.c.l.b16 %v124
    %v1105 = vunpack.c.l.b16 %v125
    %v1106 = vunpack.c.l.b16 %v126
    %v1107 = vunpack.c.l.b16 %v127
    %v1108 = vunpack.c.l.b16 %v128
    %v1109 = vunpack.c.l.b16 %v129
    %v1110 = vunpack.c.l.b16 %v130
    %v1111 = vunpack.c.l.b16 %v131
    %v1112 = vunpack.c.l.b16 %v132
    %v1113 = vunpack.c.l.b16 %v133
    %v1114 = vunpack.c.l.b16 %v134
    %v1115 = vunpack.c.l.b16 %v135
    %v1116 = vunpack.c.l.b16 %v136
    %v1117 = vunpack.c.l.b16 %v137
    %v1118 = vunpack.c.l.b16 %v138
    %v1119 = vunpack.c.l.b16 %v139
    %v1120 = vunpack.c.l.b16 %v140
    %v1121 = vunpack.c.l.b16 %v141
    %v1122 = vunpack.c.l.b16 %v142
    %v1123 = vunpack.c.l.b16 %v143
    %v1124 = vunpack.c.l.b16 %v144
    %v1125 = vunpack.c.l.b16 %v145
    %v1126 = vunpack.c.l.b16 %v146
    %v1127 = vunpack.c.l.b16 %v147
    %v1128 = vunpack.c.l.b16 %v148
    %v1129 = vunpack.c.l.b16 %v149
    %v1130 = vunpack.c.l.b16 %v150
    %v1131 = vunpack.c.l.b16 %v151
    %v1132 = vunpack.c.l.b16 %v152
    %v1133 = vunpack.c.l.b16 %v153
    %v1134 = vunpack.c.l.b16 %v154
    %v1135 = vunpack.c.l.b16 %v155
    %v1136 = vunpack.c.l.b16 %v156
    %v1137 = vunpack.c.l.b16 %v157
    %v1138 = vunpack.c.l.b16 %v158
    %v1139 = vunpack.c.l.b16 %v159
    %v1140 = vunpack.c.l.b16 %v160
    %v1141 = vunpack.c.l.b16 %v161
    %v1142 = vunpack.c.l.b16 %v162
    %v1143 = vunpack.c.l.b16 %v163
    %v1144 = vunpack.c.l.b16 %v164
    %v1145 = vunpack.c.l.b16 %v165
    %v1146 = vunpack.c.l.b16 %v166
    %v1147 = vunpack.c.l.b16 %v167
    %v1148 = vunpack.c.l.b16 %v168
    %v1149 = vunpack.c.l.b16 %v169
    %v1150 = vunpack.c.l.b16 %v170
    %v1151 = vunpack.c.l.b16 %v171
    %v1152 = vunpack.c.l.b16 %v172
    %v1153 = vunpack.c.l.b16 %v173
    %v1154 = vunpack.c.l.b16 %v174
    %v1155 = vunpack.c.l.b16 %v175
    %v1156 = vunpack.c.l.b16 %v176
    %v1157 = vunpack.c.l.b16 %v177
    %v1158 = vunpack.c.l.b16 %v178
    %v1159 = vunpack.c.l.b16 %v179
    %v1160 = vunpack.c.l.b16 %v180
    %v1161 = vunpack.c.l.b16 %v181
    %v1162 = vunpack.c.l.b16 %v182
    %v1163 = vunpack.c.l.b16 %v183
    %v1164 = vunpack.c.l.b16 %v184
    %v1165 = vunpack.c.l.b16 %v185
    %v1166 = vunpack.c.l.b16 %v186
    %v1167 = vunpack.c.l.b16 %v187
    %v1168 = vunpack.c.l.b16 %v188
    %v1169 = vunpack.c.l.b16 %v189
    %v1170 = vunpack.c.l.b16 %v190
    %v1171 = vunpack.c.l.b16 %v191
    %v1172 = vunpack.c.l.b16 %v192
    %v1173 = vunpack.c.l.b16 %v193
    %v1174 = vunpack.c.l.b16 %v194
    %v1175 = vunpack.c.l.b16 %v195
    %v1176 = vunpack.c.l.b16 %v196
    %v1177 = vunpack.c.l.b16 %v197
    %v1178 = vunpack.c.l.b16 %v198
    %v1179 = vunpack.c.l.b16 %v199
    %v1180 = vunpack.c.l.b16 %v200
    %v1181 = vunpack.c.l.b16 %v201
    %v1182 = vunpack.c.l.b16 %v202
    %v1183 = vunpack.c.l.b16 %v203
    %v1184 = vunpack.c.l.b16 %v204
    %v1185 = vunpack.c.l.b16 %v205
    %v1186 = vunpack.c.l.b16 %v206
    %v1187 = vunpack.c.l.b16 %v207
    %v1188 = vunpack.c.l.b16 %v208
    %v1189 = vunpack.c.l.b16 %v209
    %v1190 = vunpack.c.l.b16 %v210
    %v1191 = vunpack.c.l.b16 %v211
    %v1192 = vunpack.c.l.b16 %v212
    %v1193 = vunpack.c.l.b16 %v213
    %v1194 = vunpack.c.l.b16 %v214
    %v1195 = vunpack.c.l.b16 %v215
    %v1196 = vunpack.c.l.b16 %v216
    %v1197 = vunpack.c.l.b16 %v217
    %v1198 = vunpack.c.l.b16 %v218
    %v1199 = vunpack.c.l.b16 %v219
    %v1200 = vunpack.c.l.b16 %v220
    %v1201 = vunpack.c.l.b16 %v221
    %v1202 = vunpack.c.l.b16 %v222
    %v1203 = vunpack.c.l.b16 %v223
    %v1204 = vunpack.c.l.b16 %v224
    %v1205 = vunpack.c.l.b16 %v225
    %v1206 = vunpack.c.l.b16 %v226
    %v1207 = vunpack.c.l.b16 %v227
    %v1208 = vunpack.c.l.b16 %v228
    %v1209 = vunpack.c.l.b16 %v229
    %v1210 = vunpack.c.l.b16 %v230
    %v1211 = vunpack.c.l.b16 %v231
    %v1212 = vunpack.c.l.b16 %v232
    %v1213 = vunpack.c.l.b16 %v233
    %v1214 = vunpack.c.l.b16 %v234
    %v1215 = vunpack.c.l.b16 %v235
    %v1216 = vunpack.c.l.b16 %v236
    %v1217 = vunpack.c.l.b16 %v237
    %v1218 = vunpack.c.l.b16 %v238
    %v1219 = vunpack.c.l.b16 %v239
    %v1220 = vunpack.c.l.b16 %v240
    %v1221 = vunpack.c.l.b16 %v241
    %v1222 = vunpack.c.l.b16 %v242
    %v1223 = vunpack.c.l.b16 %v243
    %v1224 = vunpack.c.l.b16 %v244
    %v1225 = vunpack.c.l.b16 %v245
    %v1226 = vunpack.c.l.b16 %v246
    %v1227 = vunpack.c.l.b16 %v247
    %v1228 = vunpack.c.l.b16 %v248
    %v1229 = vunpack.c.l.b16 %v249
    %v1230 = vunpack.c.l.b16 %v250
    %v1231 = vunpack.c.l.b16 %v251
    %v1232 = vunpack.c.l.b16 %v252
    %v1233 = vunpack.c.l.b16 %v253
    %v1234 = vunpack.c.l.b16 %v254
    %v1235 = vunpack.c.l.b16 %v255
    %v1236 = vunpack.c.l.b16 %v256
    %v1237 = vunpack.c.l.b16 %v257
    %v1238 = vunpack.c.l.b16 %v258
    %v1239 = vunpack.c.l.b16 %v259
    %v1240 = vunpack.c.l.b16 %v260
    %v1241 = vunpack.c.l.b16 %v261
    %v1242 = vunpack.c.l.b16 %v262
    %v1243 = vunpack.c.l.b16 %v263
    %v1244 = vunpack.c.l.b16 %v264
    %v1245 = vunpack.c.l.b16 %v265
    %v1246 = vunpack.c.l.b16 %v266
    %v1247 = vunpack.c.l.b16 %v267
    %v1248 = vunpack.c.l.b16 %v268
    %v1249 = vunpack.c.l.b16 %v269
    %v1250 = vunpack.c.l.b16 %v270
    %v1251 = vunpack.c.l.b16 %v271
    %v1252 = vunpack.c.l.b16 %v272
    %v1253 = vunpack.c.l.b16 %v273
    %v1254 = vunpack.c.l.b16 %v274
    %v1255 = vunpack.c.l.b16 %v275
    %v1256 = vunpack.c.l.b16 %v276
    %v1257 = vunpack.c.l.b16 %v277
    %v1258 = vunpack.c.l.b16 %v278
    %v1259 = vunpack.c.l.b16 %v279
    %v1260 = vunpack.c.l.b16 %v280
    %v1261 = vunpack.c.l.b16 %v281
    %v1262 = vunpack.c.l.b16 %v282
    %v1263 = vunpack.c.l.b16 %v283
    %v1264 = vunpack.c.l.b16 %v284
    %v1265 = vunpack.c.l.b16 %v285
    %v1266 = vunpack.c.l.b16 %v286
    %v1267 = vunpack.c.l.b16 %v287
    %v1268 = vunpack.c.l.b16 %v288
    %v1269 = vunpack.c.l.b16 %v289
    %v1270 = vunpack.c.l.b16 %v290
    %v1271 = vunpack.c.l.b16 %v291
    %v1272 = vunpack.c.l.b16 %v292
    %v1273 = vunpack.c.l.b16 %v293
    %v1274 = vunpack.c.l.b16 %v294
    %v1275 = vunpack.c.l.b16 %v295
    %v1276 = vunpack.c.l.b16 %v296
    %v1277 = vunpack.c.l.b16 %v297
    %v1278 = vunpack.c.l.b16 %v298
    %v1279 = vunpack.c.l.b16 %v299
    %v1280 = vunpack.c.l.b16 %v300
    %v1281 = vunpack.c.l.b16 %v301
    %v1282 = vunpack.c.l.b16 %v302
    %v1283 = vunpack.c.l.b16 %v303
    %v1284 = vunpack.c.l.b16 %v304
    %v1285 = vunpack.c.l.b16 %v305
    %v1286 = vunpack.c.l.b16 %v306
    %v1287 = vunpack.c.l.b16 %v307
    %v1288 = vunpack.c.l.b16 %v308
    %v1289 = vunpack.c.l.b16 %v309
    %v1290 = vunpack.c.l.b16 %v310
    %v1291 = vunpack.c.l.b16 %v311
    %v1292 = vunpack.c.l.b16 %v312
    %v1293 = vunpack.c.l.b16 %v313
    %v1294 = vunpack.c.l.b16 %v314
    %v1295 = vunpack.c.l.b16 %v315
    %v1296 = vunpack.c.l.b16 %v316
    %v1297 = vunpack.c.l.b16 %v317
    %v1298 = vunpack.c.l.b16 %v318
    %v1299 = vunpack.c.l.b16 %v319
    %v1300 = vunpack.c.l.b16 %v320
    %v1301 = vunpack.c.l.b16 %v321
    %v1302 = vunpack.c.l.b16 %v322
    %v1303 = vunpack.c.l.b16 %v323
    %v1304 = vunpack.c.l.b16 %v324
    %v1305 = vunpack.c.l.b16 %v325
    %v1306 = vunpack.c.l.b16 %v326
    %v1307 = vunpack.c.l.b16 %v327
    %v1308 = vunpack.c.l.b16 %v328
    %v1309 = vunpack.c.l.b16 %v329
    %v1310 = vunpack.c.l.b16 %v330
    %v1311 = vunpack.c.l.b16 %v331
    %v1312 = vunpack.c.l.b16 %v332
    %v1313 = vunpack.c.l.b16 %v333
    %v1314 = vunpack.c.l.b16 %v334
    %v1315 = vunpack.c.l.b16 %v335
    %v1316 = vunpack.c.l.b16 %v336
    %v1317 = vunpack.c.l.b16 %v337
    %v1318 = vunpack.c.l.b16 %v338
    %v1319 = vunpack.c.l.b16 %v339
    %v1320 = vunpack.c.l.b16 %v340
    %v1321 = vunpack.c.l.b16 %v341
    %v1322 = vunpack.c.l.b16 %v342
    %v1323 = vunpack.c.l.b16 %v343
    %v1324 = vunpack.c.l.b16 %v344
    %v1325 = vunpack.c.l.b16 %v345
    %v1326 = vunpack.c.l.b16 %v346
    %v1327 = vunpack.c.l.b16 %v347
    %v1328 = vunpack.c.l.b16 %v348
    %v1329 = vunpack.c.l.b16 %v349
    %v1330 = vunpack.c.l.b16 %v350
    %v1331 = vunpack.c.l.b16 %v351
    %v1332 = vunpack.c.l.b16 %v352
    %v1333 = vunpack.c.l.b16 %v353
    %v1334 = vunpack.c.l.b16 %v354
    %v1335 = vunpack.c.l.b16 %v355
    %v1336 = vunpack.c.l.b16 %v356
    %v1337 = vunpack.c.l.b16 %v357
    %v1338 = vunpack.c.l.b16 %v358
    %v1339 = vunpack.c.l.b16 %v359
    %v1340 = vunpack.c.l.b16 %v360
    %v1341 = vunpack.c.l.b16 %v361
    %v1342 = vunpack.c.l.b16 %v362
    %v1343 = vunpack.c.l.b16 %v363
    %v1344 = vunpack.c.l.b16 %v364
    %v1345 = vunpack.c.l.b16 %v365
    %v1346 = vunpack.c.l.b16 %v366
    %v1347 = vunpack.c.l.b16 %v367
    %v1348 = vunpack.c.l.b16 %v368
    %v1349 = vunpack.c.l.b16 %v369
    %v1350 = vunpack.c.l.b16 %v370
    %v1351 = vunpack.c.l.b16 %v371
    %v1352 = vunpack.c.l.b16 %v372
    %v1353 = vunpack.c.l.b16 %v373
    %v1354 = vunpack.c.l.b16 %v374
    %v1355 = vunpack.c.l.b16 %v375
    %v1356 = vunpack.c.l.b16 %v376
    %v1357 = vunpack.c.l.b16 %v377
    %v1358 = vunpack.c.l.b16 %v378
    %v1359 = vunpack.c.l.b16 %v379
    %v1360 = vunpack.c.l.b16 %v380
    %v1361 = vunpack.c.l.b16 %v381
    %v1362 = vunpack.c.l.b16 %v382
    %v1363 = vunpack.c.l.b16 %v383
    %v1364 = vunpack.c.l.b16 %v384
    %v1365 = vunpack.c.l.b16 %v385
    %v1366 = vunpack.c.l.b16 %v386
    %v1367 = vunpack.c.l.b16 %v387
    %v1368 = vunpack.c.l.b16 %v388
    %v1369 = vunpack.c.l.b16 %v389
    %v1370 = vunpack.c.l.b16 %v390
    %v1371 = vunpack.c.l.b16 %v391
    %v1372 = vunpack.c.l.b16 %v392
    %v1373 = vunpack.c.l.b16 %v393
    %v1374 = vunpack.c.l.b16 %v394
    %v1375 = vunpack.c.l.b16 %v395
    %v1376 = vunpack.c.l.b16 %v396
    %v1377 = vunpack.c.l.b16 %v397
    %v1378 = vunpack.c.l.b16 %v398
    %v1379 = vunpack.c.l.b16 %v399
    %v1380 = vunpack.c.l.b16 %v400
    %v1381 = vunpack.c.l.b16 %v401
    %v1382 = vunpack.c.l.b16 %v402
    %v1383 = vunpack.c.l.b16 %v403
    %v1384 = vunpack.c.l.b16 %v404
    %v1385 = vunpack.c.l.b16 %v405
    %v1386 = vunpack.c.l.b16 %v406
    %v1387 = vunpack.c.l.b16 %v407
    %v1388 = vunpack.c.l.b16 %v408
    %v1389 = vunpack.c.l.b16 %v409
    %v1390 = vunpack.c.l.b16 %v410
    %v1391 = vunpack.c.l.b16 %v411
    %v1392 = vunpack.c.l.b16 %v412
    %v1393 = vunpack.c.l.b16 %v413
    %v1394 = vunpack.c.l.b16 %v414
    %v1395 = vunpack.c.l.b16 %v415
    %v1396 = vunpack.c.l.b16 %v416
    %v1397 = vunpack.c.l.b16 %v417
    %v1398 = vpack.c.b16 %v1007, %v1006
    %v1399 = vpack.c.b16 %v1009, %v1008
    %v1400 = vpack.c.b16 %v1011, %v1010
    %v1401 = vpack.c.b16 %v1013, %v1012
    %v1402 = vpack.c.b16 %v1015, %v1014
    %v1403 = vpack.c.b16 %v1017, %v1016
    %v1404 = vpack.c.b16 %v1019, %v1018
    %v1405 = vpack.c.b16 %v1021, %v1020
    %v1406 = vpack.c.b16 %v1023, %v1022
    %v1407 = vpack.c.b16 %v1025, %v1024
    %v1408 = vpack.c.b16 %v1027, %v1026
    %v1409 = vpack.c.b16 %v1029, %v1028
    %v1410 = vpack.c.b16 %v1031, %v1030
    %v1411 = vpack.c.b16 %v1033, %v1032
    %v1412 = vpack.c.b16 %v1035, %v1034
    %v1413 = vpack.c.b16 %v1037, %v1036
    %v1414 = vpack.c.b16 %v1039, %v1038
    %v1415 = vpack.c.b16 %v1041, %v1040
    %v1416 = vpack.c.b16 %v1043, %v1042
    %v1417 = vpack.c.b16 %v1045, %v1044
    %v1418 = vpack.c.b16 %v1047, %v1046
    %v1419 = vpack.c.b16 %v1049, %v1048
    %v1420 = vpack.c.b16 %v1051, %v1050
    %v1421 = vpack.c.b16 %v1053, %v1052
    %v1422 = vpack.c.b16 %v1055, %v1054
    %v1423 = vpack.c.b16 %v1057, %v1056
    %v1424 = vpack.c.b16 %v1059, %v1058
    %v1425 = vpack.c.b16 %v1061, %v1060
    %v1426 = vpack.c.b16 %v1063, %v1062
    %v1427 = vpack.c.b16 %v1065, %v1064
    %v1428 = vpack.c.b16 %v1067, %v1066
    %v1429 = vpack.c.b16 %v1069, %v1068
    %v1430 = vpack.c.b16 %v1071, %v1070
    %v1431 = vpack.c.b16 %v1073, %v1072
    %v1432 = vpack.c.b16 %v1075, %v1074
    %v1433 = vpack.c.b16 %v1077, %v1076
    %v1434 = vpack.c.b16 %v1079, %v1078
    %v1435 = vpack.c.b16 %v1081, %v1080
    %v1436 = vpack.c.b16 %v1083, %v1082
    %v1437 = vpack.c.b16 %v1085, %v1084
    %v1438 = vpack.c.b16 %v1087, %v1086
    %v1439 = vpack.c.b16 %v1089, %v1088
    %v1440 = vpack.c.b16 %v1091, %v1090
    %v1441 = vpack.c.b16 %v1093, %v1092
    %v1442 = vpack.c.b16 %v1095, %v1094
    %v1443 = vpack.c.b16 %v1097, %v1096
    %v1444 = vpack.c.b16 %v1099, %v1098
    %v1445 = vpack.c.b16 %v1101, %v1100
    %v1446 = vpack.c.b16 %v1103, %v1102
    %v1447 = vpack.c.b16 %v1105, %v1104
    %v1448 = vpack.c.b16 %v1107, %v1106
    %v1449 = vpack.c.b16 %v1109, %v1108
    %v1450 = vpack.c.b16 %v1111, %v1110
    %v1451 = vpack.c.b16 %v1113, %v1112
    %v1452 = vpack.c.b16 %v1115, %v1114
    %v1453 = vpack.c.b16 %v1117, %v1116
    %v1454 = vpack.c.b16 %v1119, %v1118
    %v1455 = vpack.c.b16 %v1121, %v1120
    %v1456 = vpack.c.b16 %v1123, %v1122
    %v1457 = vpack.c.b16 %v1125, %v1124
    %v1458 = vpack.c.b16 %v1127, %v1126
    %v1459 = vpack.c.b16 %v1129, %v1128
    %v1460 = vpack.c.b16 %v1131, %v1130
    %v1461 = vpack.c.b16 %v1133, %v1132
    %v1462 = vpack.c.b16 %v1135, %v1134
    %v1463 = vpack.c.b16 %v1137, %v1136
    %v1464 = vpack.c.b16 %v1139, %v1138
    %v1465 = vpack.c.b16 %v1141, %v1140
    %v1466 = vpack.c.b16 %v1143, %v1142
    %v1467 = vpack.c.b16 %v1145, %v1144
    %v1468 = vpack.c.b16 %v1147, %v1146
    %v1469 = vpack.c.b16 %v1149, %v1148
    %v1470 = vpack.c.b16 %v1151, %v1150
    %v1471 = vpack.c.b16 %v1153, %v1152
    %v1472 = vpack.c.b16 %v1155, %v1154
    %v1473 = vpack.c.b16 %v1157, %v1156
    %v1474 = vpack.c.b16 %v1159, %v1158
    %v1475 = vpack.c.b16 %v1161, %v1160
    %v1476 = vpack.c.b16 %v1163, %v1162
    %v1477 = vpack.c.b16 %v1165, %v1164
    %v1478 = vpack.c.b16 %v1167, %v1166
    %v1479 = vpack.c.b16 %v1169, %v1168
    %v1480 = vpack.c.b16 %v1171, %v1170
    %v1481 = vpack.c.b16 %v1173, %v1172
    %v1482 = vpack.c.b16 %v1175, %v1174
    %v1483 = vpack.c.b16 %v1177, %v1176
    %v1484 = vpack.c.b16 %v1179, %v1178
    %v1485 = vpack.c.b16 %v1181, %v1180
    %v1486 = vpack.c.b16 %v1183, %v1182
    %v1487 = vpack.c.b16 %v1185, %v1184
    %v1488 = vpack.c.b16 %v1187, %v1186
    %v1489 = vpack.c.b16 %v1189, %v1188
    %v1490 = vpack.c.b16 %v1191, %v1190
    %v1491 = vpack.c.b16 %v1193, %v1192
    %v1492 = vpack.c.b16 %v1195, %v1194
    %v1493 = vpack.c.b16 %v1197, %v1196
    %v1494 = vpack.c.b16 %v1199, %v1198
    %v1495 = vpack.c.b16 %v1201, %v1200
    %v1496 = vpack.c.b16 %v1203, %v1202
    %v1497 = vpack.c.b16 %v1205, %v1204
    %v1498 = vpack.c.b16 %v1207, %v1206
    %v1499 = vpack.c.b16 %v1209, %v1208
    %v1500 = vpack.c.b16 %v1211, %v1210
    %v1501 = vpack.c.b16 %v1213, %v1212
    %v1502 = vpack.c.b16 %v1215, %v1214
    %v1503 = vpack.c.b16 %v1217, %v1216
    %v1504 = vpack.c.b16 %v1219, %v1218
    %v1505 = vpack.c.b16 %v1221, %v1220
    %v1506 = vpack.c.b16 %v1223, %v1222
    %v1507 = vpack.c.b16 %v1225, %v1224
    %v1508 = vpack.c.b16 %v1227, %v1226
    %v1509 = vpack.c.b16 %v1229, %v1228
    %v1510 = vpack.c.b16 %v1231, %v1230
    %v1511 = vpack.c.b16 %v1233, %v1232
    %v1512 = vpack.c.b16 %v1235, %v1234
    %v1513 = vpack.c.b16 %v1237, %v1236
    %v1514 = vpack.c.b16 %v1239, %v1238
    %v1515 = vpack.c.b16 %v1241, %v1240
    %v1516 = vpack.c.b16 %v1243, %v1242
    %v1517 = vpack.c.b16 %v1245, %v1244
    %v1518 = vpack.c.b16 %v1247, %v1246
    %v1519 = vpack.c.b16 %v1249, %v1248
    %v1520 = vpack.c.b16 %v1251, %v1250
    %v1521 = vpack.c.b16 %v1253, %v1252
    %v1522 = vpack.c.b16 %v1255, %v1254
    %v1523 = vpack.c.b16 %v1257, %v1256
    %v1524 = vpack.c.b16 %v1259, %v1258
    %v1525 = vpack.c.b16 %v1261, %v1260
    %v1526 = vpack.c.b16 %v1263, %v1262
    %v1527 = vpack.c.b16 %v1265, %v1264
    %v1528 = vpack.c.b16 %v1267, %v1266
    %v1529 = vpack.c.b16 %v1269, %v1268
    %v1530 = vpack.c.b16 %v1271, %v1270
    %v1531 = vpack.c.b16 %v1273, %v1272
    %v1532 = vpack.c.b16 %v1275, %v1274
    %v1533 = vpack.c.b16 %v1277, %v1276
    %v1534 = vpack.c.b16 %v1279, %v1278
    %v1535 = vpack.c.b16 %v1281, %v1280
    %v1536 = vpack.c.b16 %v1283, %v1282
    %v1537 = vpack.c.b16 %v1285, %v1284
    %v1538 = vpack.c.b16 %v1287, %v1286
    %v1539 = vpack.c.b16 %v1289, %v1288
    %v1540 = vpack.c.b16 %v1291, %v1290
    %v1541 = vpack.c.b16 %v1293, %v1292
    %v1542 = vpack.c.b16 %v1295, %v1294
    %v1543 = vpack.c.b16 %v1297, %v1296
    %v1544 = vpack.c.b16 %v1299, %v1298
    %v1545 = vpack.c.b16 %v1301, %v1300
    %v1546 = vpack.c.b16 %v1303, %v1302
    %v1547 = vpack.c.b16 %v1305, %v1304
    %v1548 = vpack.c.b16 %v1307, %v1306
    %v1549 = vpack.c.b16 %v1309, %v1308
    %v1550 = vpack.c.b16 %v1311, %v1310
    %v1551 = vpack.c.b16 %v1313, %v1312
    %v1552 = vpack.c.b16 %v1315, %v1314
    %v1553 = vpack.c.b16 %v1317, %v1316
    %v1554 = vpack.c.b16 %v1319, %v1318
    %v1555 = vpack.c.b16 %v1321, %v1320
    %v1556 = vpack.c.b16 %v1323, %v1322
    %v1557 = vpack.c.b16 %v1325, %v1324
    %v1558 = vpack.c.b16 %v1327, %v1326
    %v1559 = vpack.c.b16 %v1329, %v1328
    %v1560 = vpack.c.b16 %v1331, %v1330
    %v1561 = vpack.c.b16 %v1333, %v1332
    %v1562 = vpack.c.b16 %v1335, %v1334
    %v1563 = vpack.c.b16 %v1337, %v1336
    %v1564 = vpack.c.b16 %v1339, %v1338
    %v1565 = vpack.c.b16 %v1341, %v1340
    %v1566 = vpack.c.b16 %v1343, %v1342
    %v1567 = vpack.c.b16 %v1345, %v1344
    %v1568 = vpack.c.b16 %v1347, %v1346
    %v1569 = vpack.c.b16 %v1349, %v1348
    %v1570 = vpack.c.b16 %v1351, %v1350
    %v1571 = vpack.c.b16 %v1353, %v1352
    %v1572 = vpack.c.b16 %v1355, %v1354
    %v1573 = vpack.c.b16 %v1357, %v1356
    %v1574 = vpack.c.b16 %v1359, %v1358
    %v1575 = vpack.c.b16 %v1361, %v1360
    %v1576 = vpack.c.b16 %v1363, %v1362
    %v1577 = vpack.c.b16 %v1365, %v1364
    %v1578 = vpack.c.b16 %v1367, %v1366
    %v1579 = vpack.c.b16 %v1369, %v1368
    %v1580 = vpack.c.b16 %v1371, %v1370
    %v1581 = vpack.c.b16 %v1373, %v1372
    %v1582 = vpack.c.b16 %v1375, %v1374
    %v1583 = vpack.c.b16 %v1377, %v1376
    %v1584 = vpack.c.b16 %v1379, %v1378
    %v1585 = vpack.c.b16 %v1381, %v1380
    %v1586 = vpack.c.b16 %v1383, %v1382
    %v1587 = vpack.c.b16 %v1385, %v1384
    %v1588 = vpack.c.b16 %v1387, %v1386
    %v1589 = vpack.c.b16 %v1389, %v1388
    %v1590 = vpack.c.b16 %v1391, %v1390
    %v1591 = vpack.c.b16 %v1393, %v1392
    %v1592 = vpack.c.b16 %v1395, %v1394
    %v1593 = vpack.c.b16 %v1397, %v1396
    %vm1790 = vcmask 523264
    %v1792 = vsel %vm1790, %v589, 0
    %1794 = vmatprep.subr.bf16.mxu0 0
    %1795 = vmatpush1.bf16.msra.mxu0 %v1398
    %1796 = vmatprep.subr.bf16.mxu0 0
    %1797 = vmatpush1.bf16.msra.mxu0 %v1399
    %1798 = vmatprep.subr.bf16.mxu0 0
    %1799 = vmatpush1.bf16.msra.mxu0 %v1400
    %1800 = vmatprep.subr.bf16.mxu0 0
    %1801 = vmatpush1.bf16.msra.mxu0 %v1401
    %1802 = vmatprep.subr.bf16.mxu0 0
    %1803 = vmatpush1.bf16.msra.mxu0 %v1402
    %1804 = vmatprep.subr.bf16.mxu0 0
    %1805 = vmatpush1.bf16.msra.mxu0 %v1403
    %1806 = vmatprep.subr.bf16.mxu0 0
    %1807 = vmatpush1.bf16.msra.mxu0 %v1404
    %1808 = vmatprep.subr.bf16.mxu0 0
    %1809 = vmatpush1.bf16.msra.mxu0 %v1405
    %1810 = vmatprep.subr.bf16.mxu0 0
    %1811 = vmatpush1.bf16.msra.mxu0 %v1406
    %1812 = vmatprep.subr.bf16.mxu0 0
    %1813 = vmatpush1.bf16.msra.mxu0 %v1407
    %1814 = vmatprep.subr.bf16.mxu0 0
    %1815 = vmatpush1.bf16.msra.mxu0 %v1408
    %1816 = vmatprep.subr.bf16.mxu0 0
    %1817 = vmatpush1.bf16.msra.mxu0 %v1409
    %1818 = vmatprep.subr.bf16.mxu0 0
    %1819 = vmatpush1.bf16.msra.mxu0 %v1410
    %1820 = vmatprep.subr.bf16.mxu0 0
    %1821 = vmatpush1.bf16.msra.mxu0 %v1411
    %1822 = vmatprep.subr.bf16.mxu0 0
    %1823 = vmatpush1.bf16.msra.mxu0 %v1412
    %1824 = vmatprep.subr.bf16.mxu0 0
    %1825 = vmatpush1.bf16.msra.mxu0 %v1413
    %1826 = vmatprep.mubr.bf16.mxu0 %v466
    %1827 = vmatmul.mubr.bf16.gmra.mrb[0].mxu0 %v452
    %v1828 = vpop.f32.mrb[0].mxu0
    %v1829 = vadd.f32 %v423, %v1828
    %v1830 = vpop.f32.mrb[0].mxu0
    %v1831 = vpop.f32.mrb[0].mxu0
    %v1832 = vpop.f32.mrb[0].mxu0
    %1833 = vdwg.mxu0
    %1834 = vmatprep.subr.bf16.mxu0 0
    %1835 = vmatpush1.bf16.msra.mxu0 %v1414
    %1836 = vmatprep.subr.bf16.mxu0 0
    %1837 = vmatpush1.bf16.msra.mxu0 %v1415
    %1838 = vmatprep.subr.bf16.mxu0 0
    %1839 = vmatpush1.bf16.msra.mxu0 %v1416
    %1840 = vmatprep.subr.bf16.mxu0 0
    %1841 = vmatpush1.bf16.msra.mxu0 %v1417
    %1842 = vmatprep.subr.bf16.mxu0 0
    %1843 = vmatpush1.bf16.msra.mxu0 %v1418
    %1844 = vmatprep.subr.bf16.mxu0 0
    %1845 = vmatpush1.bf16.msra.mxu0 %v1419
    %1846 = vmatprep.subr.bf16.mxu0 0
    %1847 = vmatpush1.bf16.msra.mxu0 %v1420
    %1848 = vmatprep.subr.bf16.mxu0 0
    %1849 = vmatpush1.bf16.msra.mxu0 %v1421
    %1850 = vmatprep.subr.bf16.mxu0 0
    %1851 = vmatpush1.bf16.msra.mxu0 %v1422
    %1852 = vmatprep.subr.bf16.mxu0 0
    %1853 = vmatpush1.bf16.msra.mxu0 %v1423
    %1854 = vmatprep.subr.bf16.mxu0 0
    %1855 = vmatpush1.bf16.msra.mxu0 %v1424
    %1856 = vmatprep.subr.bf16.mxu0 0
    %1857 = vmatpush1.bf16.msra.mxu0 %v1425
    %1858 = vmatprep.subr.bf16.mxu0 0
    %1859 = vmatpush1.bf16.msra.mxu0 %v1426
    %1860 = vmatprep.subr.bf16.mxu0 0
    %1861 = vmatpush1.bf16.msra.mxu0 %v1427
    %1862 = vmatprep.subr.bf16.mxu0 0
    %1863 = vmatpush1.bf16.msra.mxu0 %v1428
    %1864 = vmatprep.subr.bf16.mxu0 0
    %1865 = vmatpush1.bf16.msra.mxu0 %v1429
    %1866 = vmatprep.mubr.bf16.mxu0 %v476
    %1867 = vmatmul.mubr.bf16.gmra.mrb[0].mxu0 %v474
    %v1868 = vpop.f32.mrb[0].mxu0
    %v1869 = vadd.f32 %v1829, %v1868
    %v1870 = vpop.f32.mrb[0].mxu0
    %v1871 = vpop.f32.mrb[0].mxu0
    %v1872 = vpop.f32.mrb[0].mxu0
    %1873 = vdwg.mxu0
    %1874 = vmatprep.subr.bf16.mxu0 0
    %1875 = vmatpush1.bf16.msra.mxu0 %v1430
    %1876 = vmatprep.subr.bf16.mxu0 0
    %1877 = vmatpush1.bf16.msra.mxu0 %v1431
    %1878 = vmatprep.subr.bf16.mxu0 0
    %1879 = vmatpush1.bf16.msra.mxu0 %v1432
    %1880 = vmatprep.subr.bf16.mxu0 0
    %1881 = vmatpush1.bf16.msra.mxu0 %v1433
    %1882 = vmatprep.subr.bf16.mxu0 0
    %1883 = vmatpush1.bf16.msra.mxu0 %v1434
    %1884 = vmatprep.subr.bf16.mxu0 0
    %1885 = vmatpush1.bf16.msra.mxu0 %v1435
    %1886 = vmatprep.subr.bf16.mxu0 0
    %1887 = vmatpush1.bf16.msra.mxu0 %v1436
    %1888 = vmatprep.subr.bf16.mxu0 0
    %1889 = vmatpush1.bf16.msra.mxu0 %v1437
    %1890 = vmatprep.subr.bf16.mxu0 0
    %1891 = vmatpush1.bf16.msra.mxu0 %v1438
    %1892 = vmatprep.subr.bf16.mxu0 0
    %1893 = vmatpush1.bf16.msra.mxu0 %v1439
    %1894 = vmatprep.subr.bf16.mxu0 0
    %1895 = vmatpush1.bf16.msra.mxu0 %v1440
    %1896 = vmatprep.subr.bf16.mxu0 0
    %1897 = vmatpush1.bf16.msra.mxu0 %v1441
    %1898 = vmatprep.subr.bf16.mxu0 0
    %1899 = vmatpush1.bf16.msra.mxu0 %v1442
    %1900 = vmatprep.subr.bf16.mxu0 0
    %1901 = vmatpush1.bf16.msra.mxu0 %v1443
    %1902 = vmatprep.subr.bf16.mxu0 0
    %1903 = vmatpush1.bf16.msra.mxu0 %v1444
    %1904 = vmatprep.subr.bf16.mxu0 0
    %1905 = vmatpush1.bf16.msra.mxu0 %v1445
    %1906 = vmatprep.mubr.bf16.mxu0 %v473
    %1907 = vmatmul.mubr.bf16.gmra.mrb[0].mxu0 %v459
    %v1908 = vpop.f32.mrb[0].mxu0
    %v1909 = vadd.f32 %v1869, %v1908
    %v1910 = vpop.f32.mrb[0].mxu0
    %v1911 = vpop.f32.mrb[0].mxu0
    %v1912 = vpop.f32.mrb[0].mxu0
    %1913 = vdwg.mxu0
    %1914 = vmatprep.subr.bf16.mxu0 0
    %1915 = vmatpush1.bf16.msra.mxu0 %v1446
    %1916 = vmatprep.subr.bf16.mxu0 0
    %1917 = vmatpush1.bf16.msra.mxu0 %v1447
    %1918 = vmatprep.subr.bf16.mxu0 0
    %1919 = vmatpush1.bf16.msra.mxu0 %v1448
    %1920 = vmatprep.subr.bf16.mxu0 0
    %1921 = vmatpush1.bf16.msra.mxu0 %v1449
    %1922 = vmatprep.subr.bf16.mxu0 0
    %1923 = vmatpush1.bf16.msra.mxu0 %v1450
    %1924 = vmatprep.subr.bf16.mxu0 0
    %1925 = vmatpush1.bf16.msra.mxu0 %v1451
    %1926 = vmatprep.subr.bf16.mxu0 0
    %1927 = vmatpush1.bf16.msra.mxu0 %v1452
    %1928 = vmatprep.subr.bf16.mxu0 0
    %1929 = vmatpush1.bf16.msra.mxu0 %v1453
    %1930 = vmatprep.subr.bf16.mxu0 0
    %1931 = vmatpush1.bf16.msra.mxu0 %v1454
    %1932 = vmatprep.subr.bf16.mxu0 0
    %1933 = vmatpush1.bf16.msra.mxu0 %v1455
    %1934 = vmatprep.subr.bf16.mxu0 0
    %1935 = vmatpush1.bf16.msra.mxu0 %v1456
    %1936 = vmatprep.subr.bf16.mxu0 0
    %1937 = vmatpush1.bf16.msra.mxu0 %v1457
    %1938 = vmatprep.subr.bf16.mxu0 0
    %1939 = vmatpush1.bf16.msra.mxu0 %v1458
    %1940 = vmatprep.subr.bf16.mxu0 0
    %1941 = vmatpush1.bf16.msra.mxu0 %v1459
    %1942 = vmatprep.subr.bf16.mxu0 0
    %1943 = vmatpush1.bf16.msra.mxu0 %v1460
    %1944 = vmatprep.subr.bf16.mxu0 0
    %1945 = vmatpush1.bf16.msra.mxu0 %v1461
    %1946 = vmatprep.mubr.bf16.mxu0 %v477
    %1947 = vmatmul.mubr.bf16.gmra.mrb[0].mxu0 %v475
    %v1948 = vpop.f32.mrb[0].mxu0
    %v1949 = vadd.f32 %v1909, %v1948
    %v1950 = vpop.f32.mrb[0].mxu0
    %v1951 = vpop.f32.mrb[0].mxu0
    %v1952 = vpop.f32.mrb[0].mxu0
    %1953 = vdwg.mxu0
    %1954 = vmatprep.subr.bf16.mxu0 0
    %1955 = vmatpush1.bf16.msra.mxu0 %v1462
    %1956 = vmatprep.subr.bf16.mxu0 0
    %1957 = vmatpush1.bf16.msra.mxu0 %v1463
    %1958 = vmatprep.subr.bf16.mxu0 0
    %1959 = vmatpush1.bf16.msra.mxu0 %v1464
    %1960 = vmatprep.subr.bf16.mxu0 0
    %1961 = vmatpush1.bf16.msra.mxu0 %v1465
    %1962 = vmatprep.subr.bf16.mxu0 0
    %1963 = vmatpush1.bf16.msra.mxu0 %v1466
    %1964 = vmatprep.subr.bf16.mxu0 0
    %1965 = vmatpush1.bf16.msra.mxu0 %v1467
    %1966 = vmatprep.subr.bf16.mxu0 0
    %1967 = vmatpush1.bf16.msra.mxu0 %v1468
    %1968 = vmatprep.subr.bf16.mxu0 0
    %1969 = vmatpush1.bf16.msra.mxu0 %v1469
    %1970 = vmatprep.subr.bf16.mxu0 0
    %1971 = vmatpush1.bf16.msra.mxu0 %v1470
    %1972 = vmatprep.subr.bf16.mxu0 0
    %1973 = vmatpush1.bf16.msra.mxu0 %v1471
    %1974 = vmatprep.subr.bf16.mxu0 0
    %1975 = vmatpush1.bf16.msra.mxu0 %v1472
    %1976 = vmatprep.subr.bf16.mxu0 0
    %1977 = vmatpush1.bf16.msra.mxu0 %v1473
    %1978 = vmatprep.subr.bf16.mxu0 0
    %1979 = vmatpush1.bf16.msra.mxu0 %v1474
    %1980 = vmatprep.subr.bf16.mxu0 0
    %1981 = vmatpush1.bf16.msra.mxu0 %v1475
    %1982 = vmatprep.subr.bf16.mxu0 0
    %1983 = vmatpush1.bf16.msra.mxu0 %v1476
    %1984 = vmatprep.subr.bf16.mxu0 0
    %1985 = vmatpush1.bf16.msra.mxu0 %v1477
    %1986 = vmatprep.mubr.bf16.mxu0 %v515
    %1987 = vmatmul.mubr.bf16.gmra.mrb[0].mxu0 %v501
    %v1988 = vpop.f32.mrb[0].mxu0
    %v1989 = vadd.f32 %v1949, %v1988
    %v1990 = vpop.f32.mrb[0].mxu0
    %v1991 = vpop.f32.mrb[0].mxu0
    %v1992 = vpop.f32.mrb[0].mxu0
    %1993 = vdwg.mxu0
    %1994 = vmatprep.subr.bf16.mxu0 0
    %1995 = vmatpush1.bf16.msra.mxu0 %v1478
    %1996 = vmatprep.subr.bf16.mxu0 0
    %1997 = vmatpush1.bf16.msra.mxu0 %v1479
    %1998 = vmatprep.subr.bf16.mxu0 0
    %1999 = vmatpush1.bf16.msra.mxu0 %v1480
    %2000 = vmatprep.subr.bf16.mxu0 0
    %2001 = vmatpush1.bf16.msra.mxu0 %v1481
    %2002 = vmatprep.subr.bf16.mxu0 0
    %2003 = vmatpush1.bf16.msra.mxu0 %v1482
    %2004 = vmatprep.subr.bf16.mxu0 0
    %2005 = vmatpush1.bf16.msra.mxu0 %v1483
    %2006 = vmatprep.subr.bf16.mxu0 0
    %2007 = vmatpush1.bf16.msra.mxu0 %v1484
    %2008 = vmatprep.subr.bf16.mxu0 0
    %2009 = vmatpush1.bf16.msra.mxu0 %v1485
    %2010 = vmatprep.subr.bf16.mxu0 0
    %2011 = vmatpush1.bf16.msra.mxu0 %v1486
    %2012 = vmatprep.subr.bf16.mxu0 0
    %2013 = vmatpush1.bf16.msra.mxu0 %v1487
    %2014 = vmatprep.subr.bf16.mxu0 0
    %2015 = vmatpush1.bf16.msra.mxu0 %v1488
    %2016 = vmatprep.subr.bf16.mxu0 0
    %2017 = vmatpush1.bf16.msra.mxu0 %v1489
    %2018 = vmatprep.subr.bf16.mxu0 0
    %2019 = vmatpush1.bf16.msra.mxu0 %v1490
    %2020 = vmatprep.subr.bf16.mxu0 0
    %2021 = vmatpush1.bf16.msra.mxu0 %v1491
    %2022 = vmatprep.subr.bf16.mxu0 0
    %2023 = vmatpush1.bf16.msra.mxu0 %v1492
    %2024 = vmatprep.subr.bf16.mxu0 0
    %2025 = vmatpush1.bf16.msra.mxu0 %v1493
    %2026 = vmatprep.mubr.bf16.mxu0 %v525
    %2027 = vmatmul.mubr.bf16.gmra.mrb[0].mxu0 %v523
    %v2028 = vpop.f32.mrb[0].mxu0
    %v2029 = vadd.f32 %v1989, %v2028
    %v2030 = vpop.f32.mrb[0].mxu0
    %v2031 = vpop.f32.mrb[0].mxu0
    %v2032 = vpop.f32.mrb[0].mxu0
    %2033 = vdwg.mxu0
    %2034 = vmatprep.subr.bf16.mxu0 0
    %2035 = vmatpush1.bf16.msra.mxu0 %v1494
    %2036 = vmatprep.subr.bf16.mxu0 0
    %2037 = vmatpush1.bf16.msra.mxu0 %v1495
    %2038 = vmatprep.subr.bf16.mxu0 0
    %2039 = vmatpush1.bf16.msra.mxu0 %v1496
    %2040 = vmatprep.subr.bf16.mxu0 0
    %2041 = vmatpush1.bf16.msra.mxu0 %v1497
    %2042 = vmatprep.subr.bf16.mxu0 0
    %2043 = vmatpush1.bf16.msra.mxu0 %v1498
    %2044 = vmatprep.subr.bf16.mxu0 0
    %2045 = vmatpush1.bf16.msra.mxu0 %v1499
    %2046 = vmatprep.subr.bf16.mxu0 0
    %2047 = vmatpush1.bf16.msra.mxu0 %v1500
    %2048 = vmatprep.subr.bf16.mxu0 0
    %2049 = vmatpush1.bf16.msra.mxu0 %v1501
    %2050 = vmatprep.subr.bf16.mxu0 0
    %2051 = vmatpush1.bf16.msra.mxu0 %v1502
    %2052 = vmatprep.subr.bf16.mxu0 0
    %2053 = vmatpush1.bf16.msra.mxu0 %v1503
    %2054 = vmatprep.subr.bf16.mxu0 0
    %2055 = vmatpush1.bf16.msra.mxu0 %v1504
    %2056 = vmatprep.subr.bf16.mxu0 0
    %2057 = vmatpush1.bf16.msra.mxu0 %v1505
    %2058 = vmatprep.subr.bf16.mxu0 0
    %2059 = vmatpush1.bf16.msra.mxu0 %v1506
    %2060 = vmatprep.subr.bf16.mxu0 0
    %2061 = vmatpush1.bf16.msra.mxu0 %v1507
    %2062 = vmatprep.subr.bf16.mxu0 0
    %2063 = vmatpush1.bf16.msra.mxu0 %v1508
    %2064 = vmatprep.subr.bf16.mxu0 0
    %2065 = vmatpush1.bf16.msra.mxu0 %v1509
    %2066 = vmatprep.mubr.bf16.mxu0 %v522
    %2067 = vmatmul.mubr.bf16.gmra.mrb[0].mxu0 %v508
    %v2068 = vpop.f32.mrb[0].mxu0
    %v2069 = vadd.f32 %v2029, %v2068
    %v2070 = vpop.f32.mrb[0].mxu0
    %v2071 = vpop.f32.mrb[0].mxu0
    %v2072 = vpop.f32.mrb[0].mxu0
    %2073 = vdwg.mxu0
    %2074 = vmatprep.subr.bf16.mxu0 0
    %2075 = vmatpush1.bf16.msra.mxu0 %v1510
    %2076 = vmatprep.subr.bf16.mxu0 0
    %2077 = vmatpush1.bf16.msra.mxu0 %v1511
    %2078 = vmatprep.subr.bf16.mxu0 0
    %2079 = vmatpush1.bf16.msra.mxu0 %v1512
    %2080 = vmatprep.subr.bf16.mxu0 0
    %2081 = vmatpush1.bf16.msra.mxu0 %v1513
    %2082 = vmatprep.subr.bf16.mxu0 0
    %2083 = vmatpush1.bf16.msra.mxu0 %v1514
    %2084 = vmatprep.subr.bf16.mxu0 0
    %2085 = vmatpush1.bf16.msra.mxu0 %v1515
    %2086 = vmatprep.subr.bf16.mxu0 0
    %2087 = vmatpush1.bf16.msra.mxu0 %v1516
    %2088 = vmatprep.subr.bf16.mxu0 0
    %2089 = vmatpush1.bf16.msra.mxu0 %v1517
    %2090 = vmatprep.subr.bf16.mxu0 0
    %2091 = vmatpush1.bf16.msra.mxu0 %v1518
    %2092 = vmatprep.subr.bf16.mxu0 0
    %2093 = vmatpush1.bf16.msra.mxu0 %v1519
    %2094 = vmatprep.subr.bf16.mxu0 0
    %2095 = vmatpush1.bf16.msra.mxu0 %v1520
    %2096 = vmatprep.subr.bf16.mxu0 0
    %2097 = vmatpush1.bf16.msra.mxu0 %v1521
    %2098 = vmatprep.subr.bf16.mxu0 0
    %2099 = vmatpush1.bf16.msra.mxu0 %v1522
    %2100 = vmatprep.subr.bf16.mxu0 0
    %2101 = vmatpush1.bf16.msra.mxu0 %v1523
    %2102 = vmatprep.subr.bf16.mxu0 0
    %2103 = vmatpush1.bf16.msra.mxu0 %v1524
    %2104 = vmatprep.subr.bf16.mxu0 0
    %2105 = vmatpush1.bf16.msra.mxu0 %v1525
    %2106 = vmatprep.mubr.bf16.mxu0 %v526
    %2107 = vmatmul.mubr.bf16.gmra.mrb[0].mxu0 %v524
    %v2108 = vpop.f32.mrb[0].mxu0
    %v2109 = vadd.f32 %v2069, %v2108
    %v2110 = vpop.f32.mrb[0].mxu0
    %v2111 = vpop.f32.mrb[0].mxu0
    %v2112 = vpop.f32.mrb[0].mxu0
    %2113 = vdwg.mxu0
    %2114 = vmatprep.subr.bf16.mxu0 0
    %2115 = vmatpush1.bf16.msra.mxu0 %v1526
    %2116 = vmatprep.subr.bf16.mxu0 0
    %2117 = vmatpush1.bf16.msra.mxu0 %v1527
    %2118 = vmatprep.subr.bf16.mxu0 0
    %2119 = vmatpush1.bf16.msra.mxu0 %v1528
    %2120 = vmatprep.subr.bf16.mxu0 0
    %2121 = vmatpush1.bf16.msra.mxu0 %v1529
    %2122 = vmatprep.subr.bf16.mxu0 0
    %2123 = vmatpush1.bf16.msra.mxu0 %v1530
    %2124 = vmatprep.subr.bf16.mxu0 0
    %2125 = vmatpush1.bf16.msra.mxu0 %v1531
    %2126 = vmatprep.subr.bf16.mxu0 0
    %2127 = vmatpush1.bf16.msra.mxu0 %v1532
    %2128 = vmatprep.subr.bf16.mxu0 0
    %2129 = vmatpush1.bf16.msra.mxu0 %v1533
    %2130 = vmatprep.subr.bf16.mxu0 0
    %2131 = vmatpush1.bf16.msra.mxu0 %v1534
    %2132 = vmatprep.subr.bf16.mxu0 0
    %2133 = vmatpush1.bf16.msra.mxu0 %v1535
    %2134 = vmatprep.subr.bf16.mxu0 0
    %2135 = vmatpush1.bf16.msra.mxu0 %v1536
    %2136 = vmatprep.subr.bf16.mxu0 0
    %2137 = vmatpush1.bf16.msra.mxu0 %v1537
    %2138 = vmatprep.subr.bf16.mxu0 0
    %2139 = vmatpush1.bf16.msra.mxu0 %v1538
    %2140 = vmatprep.subr.bf16.mxu0 0
    %2141 = vmatpush1.bf16.msra.mxu0 %v1539
    %2142 = vmatprep.subr.bf16.mxu0 0
    %2143 = vmatpush1.bf16.msra.mxu0 %v1540
    %2144 = vmatprep.subr.bf16.mxu0 0
    %2145 = vmatpush1.bf16.msra.mxu0 %v1541
    %2146 = vmatprep.mubr.bf16.mxu0 %v564
    %2147 = vmatmul.mubr.bf16.gmra.mrb[0].mxu0 %v550
    %v2148 = vpop.f32.mrb[0].mxu0
    %v2149 = vadd.f32 %v2109, %v2148
    %v2150 = vpop.f32.mrb[0].mxu0
    %v2151 = vpop.f32.mrb[0].mxu0
    %v2152 = vpop.f32.mrb[0].mxu0
    %2153 = vdwg.mxu0
    %2154 = vmatprep.subr.bf16.mxu0 0
    %2155 = vmatpush1.bf16.msra.mxu0 %v1542
    %2156 = vmatprep.subr.bf16.mxu0 0
    %2157 = vmatpush1.bf16.msra.mxu0 %v1543
    %2158 = vmatprep.subr.bf16.mxu0 0
    %2159 = vmatpush1.bf16.msra.mxu0 %v1544
    %2160 = vmatprep.subr.bf16.mxu0 0
    %2161 = vmatpush1.bf16.msra.mxu0 %v1545
    %2162 = vmatprep.subr.bf16.mxu0 0
    %2163 = vmatpush1.bf16.msra.mxu0 %v1546
    %2164 = vmatprep.subr.bf16.mxu0 0
    %2165 = vmatpush1.bf16.msra.mxu0 %v1547
    %2166 = vmatprep.subr.bf16.mxu0 0
    %2167 = vmatpush1.bf16.msra.mxu0 %v1548
    %2168 = vmatprep.subr.bf16.mxu0 0
    %2169 = vmatpush1.bf16.msra.mxu0 %v1549
    %2170 = vmatprep.subr.bf16.mxu0 0
    %2171 = vmatpush1.bf16.msra.mxu0 %v1550
    %2172 = vmatprep.subr.bf16.mxu0 0
    %2173 = vmatpush1.bf16.msra.mxu0 %v1551
    %2174 = vmatprep.subr.bf16.mxu0 0
    %2175 = vmatpush1.bf16.msra.mxu0 %v1552
    %2176 = vmatprep.subr.bf16.mxu0 0
    %2177 = vmatpush1.bf16.msra.mxu0 %v1553
    %2178 = vmatprep.subr.bf16.mxu0 0
    %2179 = vmatpush1.bf16.msra.mxu0 %v1554
    %2180 = vmatprep.subr.bf16.mxu0 0
    %2181 = vmatpush1.bf16.msra.mxu0 %v1555
    %2182 = vmatprep.subr.bf16.mxu0 0
    %2183 = vmatpush1.bf16.msra.mxu0 %v1556
    %2184 = vmatprep.subr.bf16.mxu0 0
    %2185 = vmatpush1.bf16.msra.mxu0 %v1557
    %2186 = vmatprep.mubr.bf16.mxu0 %v574
    %2187 = vmatmul.mubr.bf16.gmra.mrb[0].mxu0 %v572
    %v2188 = vpop.f32.mrb[0].mxu0
    %v2189 = vadd.f32 %v2149, %v2188
    %v2190 = vpop.f32.mrb[0].mxu0
    %v2191 = vpop.f32.mrb[0].mxu0
    %v2192 = vpop.f32.mrb[0].mxu0
    %2193 = vdwg.mxu0
    %2194 = vmatprep.subr.bf16.mxu0 0
    %2195 = vmatpush1.bf16.msra.mxu0 %v1558
    %2196 = vmatprep.subr.bf16.mxu0 0
    %2197 = vmatpush1.bf16.msra.mxu0 %v1559
    %2198 = vmatprep.subr.bf16.mxu0 0
    %2199 = vmatpush1.bf16.msra.mxu0 %v1560
    %2200 = vmatprep.subr.bf16.mxu0 0
    %2201 = vmatpush1.bf16.msra.mxu0 %v1561
    %2202 = vmatprep.subr.bf16.mxu0 0
    %2203 = vmatpush1.bf16.msra.mxu0 %v1562
    %2204 = vmatprep.subr.bf16.mxu0 0
    %2205 = vmatpush1.bf16.msra.mxu0 %v1563
    %2206 = vmatprep.subr.bf16.mxu0 0
    %2207 = vmatpush1.bf16.msra.mxu0 %v1564
    %2208 = vmatprep.subr.bf16.mxu0 0
    %2209 = vmatpush1.bf16.msra.mxu0 %v1565
    %2210 = vmatprep.subr.bf16.mxu0 0
    %2211 = vmatpush1.bf16.msra.mxu0 %v1566
    %2212 = vmatprep.subr.bf16.mxu0 0
    %2213 = vmatpush1.bf16.msra.mxu0 %v1567
    %2214 = vmatprep.subr.bf16.mxu0 0
    %2215 = vmatpush1.bf16.msra.mxu0 %v1568
    %2216 = vmatprep.subr.bf16.mxu0 0
    %2217 = vmatpush1.bf16.msra.mxu0 %v1569
    %2218 = vmatprep.subr.bf16.mxu0 0
    %2219 = vmatpush1.bf16.msra.mxu0 %v1570
    %2220 = vmatprep.subr.bf16.mxu0 0
    %2221 = vmatpush1.bf16.msra.mxu0 %v1571
    %2222 = vmatprep.subr.bf16.mxu0 0
    %2223 = vmatpush1.bf16.msra.mxu0 %v1572
    %2224 = vmatprep.subr.bf16.mxu0 0
    %2225 = vmatpush1.bf16.msra.mxu0 %v1573
    %2226 = vmatprep.mubr.bf16.mxu0 %v571
    %2227 = vmatmul.mubr.bf16.gmra.mrb[0].mxu0 %v557
    %v2228 = vpop.f32.mrb[0].mxu0
    %v2229 = vadd.f32 %v2189, %v2228
    %v2230 = vpop.f32.mrb[0].mxu0
    %v2231 = vpop.f32.mrb[0].mxu0
    %v2232 = vpop.f32.mrb[0].mxu0
    %2233 = vdwg.mxu0
    %2234 = vmatprep.subr.bf16.mxu0 0
    %2235 = vmatpush1.bf16.msra.mxu0 %v1574
    %2236 = vmatprep.subr.bf16.mxu0 0
    %2237 = vmatpush1.bf16.msra.mxu0 %v1575
    %2238 = vmatprep.subr.bf16.mxu0 0
    %2239 = vmatpush1.bf16.msra.mxu0 %v1576
    %2240 = vmatprep.subr.bf16.mxu0 0
    %2241 = vmatpush1.bf16.msra.mxu0 %v1577
    %2242 = vmatprep.subr.bf16.mxu0 0
    %2243 = vmatpush1.bf16.msra.mxu0 %v1578
    %2244 = vmatprep.subr.bf16.mxu0 0
    %2245 = vmatpush1.bf16.msra.mxu0 %v1579
    %2246 = vmatprep.subr.bf16.mxu0 0
    %2247 = vmatpush1.bf16.msra.mxu0 %v1580
    %2248 = vmatprep.subr.bf16.mxu0 0
    %2249 = vmatpush1.bf16.msra.mxu0 %v1581
    %2250 = vmatprep.subr.bf16.mxu0 0
    %2251 = vmatpush1.bf16.msra.mxu0 %v1582
    %2252 = vmatprep.subr.bf16.mxu0 0
    %2253 = vmatpush1.bf16.msra.mxu0 %v1583
    %2254 = vmatprep.subr.bf16.mxu0 0
    %2255 = vmatpush1.bf16.msra.mxu0 %v1584
    %2256 = vmatprep.subr.bf16.mxu0 0
    %2257 = vmatpush1.bf16.msra.mxu0 %v1585
    %2258 = vmatprep.subr.bf16.mxu0 0
    %2259 = vmatpush1.bf16.msra.mxu0 %v1586
    %2260 = vmatprep.subr.bf16.mxu0 0
    %2261 = vmatpush1.bf16.msra.mxu0 %v1587
    %2262 = vmatprep.subr.bf16.mxu0 0
    %2263 = vmatpush1.bf16.msra.mxu0 %v1588
    %2264 = vmatprep.subr.bf16.mxu0 0
    %2265 = vmatpush1.bf16.msra.mxu0 %v1589
    %2266 = vmatprep.mubr.bf16.mxu0 %v575
    %2267 = vmatmul.mubr.bf16.gmra.mrb[0].mxu0 %v573
    %v2268 = vpop.f32.mrb[0].mxu0
    %v2269 = vadd.f32 %v2229, %v2268
    %v2270 = vpop.f32.mrb[0].mxu0
    %v2271 = vpop.f32.mrb[0].mxu0
    %v2272 = vpop.f32.mrb[0].mxu0
    %2273 = vdwg.mxu0
    %2274 = vmatprep.subr.bf16.mxu0 0
    %2275 = vmatpush1.bf16.msra.mxu0 %v1590
    %2276 = vmatprep.subr.bf16.mxu0 0
    %2277 = vmatpush1.bf16.msra.mxu0 %v1591
    %2278 = vmatprep.subr.bf16.mxu0 0
    %2279 = vmatpush1.bf16.msra.mxu0 %v1592
    %2280 = vmatprep.subr.bf16.mxu0 0
    %2281 = vmatpush1.bf16.msra.mxu0 %v1593
    %2282 = vmatprep.subr.bf16.mxu0 0
    %2283 = vmatpush1.bf16.msra.mxu0 0
    %2284 = vmatprep.subr.bf16.mxu0 0
    %2285 = vmatpush1.bf16.msra.mxu0 0
    %2286 = vmatprep.subr.bf16.mxu0 0
    %2287 = vmatpush1.bf16.msra.mxu0 0
    %2288 = vmatprep.subr.bf16.mxu0 0
    %2289 = vmatpush1.bf16.msra.mxu0 0
    %2290 = vmatprep.subr.bf16.mxu0 0
    %2291 = vmatpush1.bf16.msra.mxu0 0
    %2292 = vmatprep.subr.bf16.mxu0 0
    %2293 = vmatpush1.bf16.msra.mxu0 0
    %2294 = vmatprep.subr.bf16.mxu0 0
    %2295 = vmatpush1.bf16.msra.mxu0 0
    %2296 = vmatprep.subr.bf16.mxu0 0
    %2297 = vmatpush1.bf16.msra.mxu0 0
    %2298 = vmatprep.subr.bf16.mxu0 0
    %2299 = vmatpush1.bf16.msra.mxu0 0
    %2300 = vmatprep.subr.bf16.mxu0 0
    %2301 = vmatpush1.bf16.msra.mxu0 0
    %2302 = vmatprep.subr.bf16.mxu0 0
    %2303 = vmatpush1.bf16.msra.mxu0 0
    %2304 = vmatprep.subr.bf16.mxu0 0
    %2305 = vmatpush1.bf16.msra.mxu0 0
    %2306 = vmatprep.mubr.bf16.mxu0 0
    %2307 = vmatmul.mubr.bf16.gmra.mrb[0].mxu0 %v1792
    %v2308 = vpop.f32.mrb[0].mxu0
    %v2309 = vadd.f32 %v2269, %v2308
    %v2310 = vpop.f32.mrb[0].mxu0
    %v2311 = vpop.f32.mrb[0].mxu0
    %v2312 = vpop.f32.mrb[0].mxu0
    %2313 = vdwg.mxu0
    %v2314 = vmax.f32 %v2309, 0.0
    %v2315 = vpack.c.bf16 %v2314, %v2314
    %v2316 = vld [vmem:[%s3] sm:$0xf]
    %v2317 = vld [vmem:[%s3 + $0x4] sm:$0xf]
    %v2318 = vld [vmem:[%s3 + $0x8] sm:$0xf]
    %v2319 = vld [vmem:[%s3 + $0xc] sm:$0xf]
    %v2320 = vld [vmem:[%s3 + $0x10] sm:$0xf]
    %v2321 = vld [vmem:[%s3 + $0x14] sm:$0xf]
    %v2322 = vld [vmem:[%s3 + $0x18] sm:$0xf]
    %v2323 = vld [vmem:[%s3 + $0x1c] sm:$0xf]
    %v2324 = vld [vmem:[%s3 + $0x20] sm:$0xf]
    %v2325 = vld [vmem:[%s3 + $0x24] sm:$0xf]
    %v2326 = vld [vmem:[%s3 + $0x28] sm:$0xf]
    %v2327 = vld [vmem:[%s3 + $0x2c] sm:$0xf]
    %v2328 = vld [vmem:[%s3 + $0x30] sm:$0xf]
    %v2329 = vld [vmem:[%s3 + $0x34] sm:$0xf]
    %v2330 = vld [vmem:[%s3 + $0x38] sm:$0xf]
    %v2331 = vld [vmem:[%s3 + $0x3c] sm:$0xf]
    %v2332 = vld [vmem:[%s4] sm:$0x1]
    %v2334 = vlaneseq
    %v2335 = vshrl.u32 %v2334, 7
    %v2336 = vsub.s32 0, %v2335
    %v2337 = vrot.slane %v2332, %v2336
    %v2355 = vunpack.c.l.b16 %v2316
    %v2356 = vunpack.c.l.b16 %v2317
    %v2357 = vunpack.c.l.b16 %v2318
    %v2358 = vunpack.c.l.b16 %v2319
    %v2359 = vunpack.c.l.b16 %v2320
    %v2360 = vunpack.c.l.b16 %v2321
    %v2361 = vunpack.c.l.b16 %v2322
    %v2362 = vunpack.c.l.b16 %v2323
    %v2363 = vunpack.c.l.b16 %v2324
    %v2364 = vunpack.c.l.b16 %v2325
    %v2365 = vunpack.c.l.b16 %v2326
    %v2366 = vunpack.c.l.b16 %v2327
    %v2367 = vunpack.c.l.b16 %v2328
    %v2368 = vunpack.c.l.b16 %v2329
    %v2369 = vunpack.c.l.b16 %v2330
    %v2370 = vunpack.c.l.b16 %v2331
    %v2371 = vpack.c.b16 %v2356, %v2355
    %v2372 = vpack.c.b16 %v2358, %v2357
    %v2373 = vpack.c.b16 %v2360, %v2359
    %v2374 = vpack.c.b16 %v2362, %v2361
    %v2375 = vpack.c.b16 %v2364, %v2363
    %v2376 = vpack.c.b16 %v2366, %v2365
    %v2377 = vpack.c.b16 %v2368, %v2367
    %v2378 = vpack.c.b16 %v2370, %v2369
    %2387 = vmatprep.subr.bf16.mxu0 0
    %2388 = vmatpush1.bf16.msra.mxu0 %v2371
    %2389 = vmatprep.subr.bf16.mxu0 0
    %2390 = vmatpush1.bf16.msra.mxu0 %v2372
    %2391 = vmatprep.subr.bf16.mxu0 0
    %2392 = vmatpush1.bf16.msra.mxu0 %v2373
    %2393 = vmatprep.subr.bf16.mxu0 0
    %2394 = vmatpush1.bf16.msra.mxu0 %v2374
    %2395 = vmatprep.subr.bf16.mxu0 0
    %2396 = vmatpush1.bf16.msra.mxu0 %v2375
    %2397 = vmatprep.subr.bf16.mxu0 0
    %2398 = vmatpush1.bf16.msra.mxu0 %v2376
    %2399 = vmatprep.subr.bf16.mxu0 0
    %2400 = vmatpush1.bf16.msra.mxu0 %v2377
    %2401 = vmatprep.subr.bf16.mxu0 0
    %2402 = vmatpush1.bf16.msra.mxu0 %v2378
    %2403 = vmatprep.subr.bf16.mxu0 0
    %2404 = vmatpush1.bf16.msra.mxu0 0
    %2405 = vmatprep.subr.bf16.mxu0 0
    %2406 = vmatpush1.bf16.msra.mxu0 0
    %2407 = vmatprep.subr.bf16.mxu0 0
    %2408 = vmatpush1.bf16.msra.mxu0 0
    %2409 = vmatprep.subr.bf16.mxu0 0
    %2410 = vmatpush1.bf16.msra.mxu0 0
    %2411 = vmatprep.subr.bf16.mxu0 0
    %2412 = vmatpush1.bf16.msra.mxu0 0
    %2413 = vmatprep.subr.bf16.mxu0 0
    %2414 = vmatpush1.bf16.msra.mxu0 0
    %2415 = vmatprep.subr.bf16.mxu0 0
    %2416 = vmatpush1.bf16.msra.mxu0 0
    %2417 = vmatprep.subr.bf16.mxu0 0
    %2418 = vmatpush1.bf16.msra.mxu0 0
    %2419 = vmatprep.mubr.bf16.mxu0 0
    %2420 = vmatmul.mubr.bf16.gmra.mrb[0].mxu0 %v2315
    %v2421 = vpop.f32.mrb[0].mxu0
    %v2422 = vadd.f32 %v2337, %v2421
    %v2423 = vpop.f32.mrb[0].mxu0
    %v2424 = vpop.f32.mrb[0].mxu0
    %v2425 = vpop.f32.mrb[0].mxu0
    %2426 = vdwg.mxu0
    %2427 = vst [vmem:[#allocation2] sm:$0x3] %v2422
    // Predicated region
    $region22: #{net_forward.3} parent=1 // pred_check
      _
    $region23: #{net_forward.3} parent=1 // pred_check_branch
      %2429 = sbr.rel (0) target = $region25
    $region24: #{net_forward.3} parent=1 // pred_region
      %s2431 = ssub.s32 32, 32
      %2432 = vsyncadd [#allocation3], %s2431
      %s2434 = sshll.u32 [#allocation2], 4
      %s2435 = int_to_ptr.vmem [resolvable:$true] %s2434
      %2437 = dma.vmem_to_hbm [thread:$0]  %s2435, 32, %s5, [#allocation3]
    $region25: #{net_forward.3} parent=1 // pred_fallthru
      _
    // Predicated region
    $region26: #{net_forward.3} parent=1 // pred_check
      _
    $region27: #{net_forward.3} parent=1 // pred_check_branch
      %2439 = sbr.rel (0) target = $region29
    $region28: #{net_forward.3} parent=1 // pred_region
      %2440 = dma.done [#allocation3], 32
    $region29: #{net_forward.3} parent=1 // pred_fallthru
      _
    %2441 = vsyncpa [#allocation3], 1

// kernel: net_forward.2
$region0: #{net_forward.2}
  #allocation0 [shape = 'u32[]', space=smem, size = 0x4, offset = 0x4, fixed_abs, tag = 'smem constant byte address 0x4 - core index']
  #allocation1 [shape = 'u32[144,128]{1,0:T(1,128)}', space=vmem, size = 0x12000, scoped, tag = 'internal scratch']
  #allocation2 [shape = 'bf16[1,16,16,32]{3,2,1,0:T(16,128)(2,1)}', space=vmem, size = 0x10000, scoped, tag = 'scratch operand']
  %s0 = inlined_call_operand.vmem [shape: bf16[2,784,9], index: 0, kind: input, shape index: {}]
  %s1 = inlined_call_operand.vmem [shape: bf16[9,32], index: 1, kind: input, shape index: {}]
  %s2 = inlined_call_operand.hbm [shape: f32[1,32], index: 2, kind: input, shape index: {}]
  %s3 = inlined_call_operand.vmem [shape: bf16[288,64], index: 3, kind: input, shape index: {}]
  %s4 = inlined_call_operand.hbm [shape: f32[1,64], index: 4, kind: input, shape index: {}]
  %s5 = inlined_call_operand.vmem [shape: bf16[2,49,64], index: 5, kind: output, shape index: {}]
  %s6 = sld [smem:[#allocation0]]
  $region61: #{net_forward.2} parent=0
    _
  %s8 = ssub.s32 1, %s6
  %s9 = scalar_select 0, %s8, %s6
  $region1: #{net_forward.2} parent=0
    #allocation3 [shape = 'u8[512]{0}', space=vmem, size = 0x400, scoped, tag = 'input window, operand 2, single buffered']
    #allocation4 [shape = 's32[2]{0}', space=sflag, size = 0x8, scoped, tag = 'scoped memory for net_forward.2']
    #allocation5 [shape = 'u8[512]{0}', space=vmem, size = 0x400, scoped, tag = 'input window, operand 4, single buffered']
    #allocation6 [shape = 's32[1]{0}', space=sflag, size = 0x4, scoped, tag = 'scoped memory for net_forward.2']
    %10 = vsyncpa [#allocation4], 0
    %11 = vsyncpa [#allocation6], 0
    loop: start=0, step=1, limit=4
    $region2: #{net_forward.2} parent=1 // loop_pre_header
      _
    $region3: #{net_forward.2} parent=1 // loop_header
      %s13 = sphi 0, %s17
      %p14 = scmp.ge.s32.totalorder %s13, 4
      %s23 = sphi 0, %s25
      %s26 = sphi 0, %s23
      %s27 = sphi 0, %s26
      %s43 = sphi 0, %s27
      %s47 = sphi 0, %s47
      %s49 = sphi 0, %s47
      %s50 = sphi 0, %s49
      %s64 = sphi 0, %s50
      %s68 = sphi 0, %s68
      %s70 = sphi 0, %s68
      %s71 = sphi 0, %s70
      %s85 = sphi 0, %s71
      %s89 = sphi 0, %s89
      %s91 = sphi 0, %s89
      %s92 = sphi 0, %s91
      %s106 = sphi 0, %s92
      %s110 = sphi 0, %s110
      %s112 = sphi 0, %s110
      %s113 = sphi 0, %s112
      %s127 = sphi 0, %s113
      %s133 = sphi 0, %s135
      %s136 = sphi 0, %s133
      %s137 = sphi 0, %s136
      %s153 = sphi 0, %s137
    $region4: #{net_forward.2} parent=1 // loop_header_branch
      %16 = sbr.rel (%p14) target = $region8
    $region5: #{net_forward.2} parent=1 // loop_body
      %s18 = ssub.s32 %s13, 1
      %s19 = ssub.s32 %s13, 2
      %s20 = sadd.s32 %s13, 1
      %s21 = ssub.s32 %s13, %s20
      %p22 = scmp.eq.s32.totalorder %s21, 0
      %s24 = sadd.s32 %s23, 1
      %s25 = scalar_select %p22, %s23, %s24
      %p28 = pneg %p22
      %p29 = scmp.eq.s32.totalorder %s13, 1
      %p30 = por %p28, %p29
      %p31 = scmp.ne.s32.totalorder %s23, %s26
      %p32 = scmp.eq.s32.totalorder %s13, 0
      %p33 = por %p31, %p32
      %p34 = scmp.ne.s32.totalorder %s23, %s26
      %p35 = scmp.eq.s32.totalorder %s18, 1
      %p36 = por %p34, %p35
      %p37 = scmp.ne.s32.totalorder %s26, %s27
      %p38 = scmp.eq.s32.totalorder %s18, 0
      %p39 = por %p37, %p38
      %p40 = scmp.ne.s32.totalorder %s26, %s27
      %p41 = scmp.eq.s32.totalorder %s19, 1
      %p42 = por %p40, %p41
      %p44 = scmp.ne.s32.totalorder %s27, %s43
      %p45 = scmp.eq.s32.totalorder %s19, 0
      %p46 = por %p44, %p45
      %s48 = sadd.s32 %s47, 1
      %p51 = scmp.eq.s32.totalorder %s13, 1
      %p52 = scmp.ne.s32.totalorder %s47, %s49
      %p53 = scmp.eq.s32.totalorder %s13, 0
      %p54 = por %p52, %p53
      %p55 = scmp.ne.s32.totalorder %s47, %s49
      %p56 = scmp.eq.s32.totalorder %s18, 1
      %p57 = por %p55, %p56
      %p58 = scmp.ne.s32.totalorder %s49, %s50
      %p59 = scmp.eq.s32.totalorder %s18, 0
      %p60 = por %p58, %p59
      %p61 = scmp.ne.s32.totalorder %s49, %s50
      %p62 = scmp.eq.s32.totalorder %s19, 1
      %p63 = por %p61, %p62
      %p65 = scmp.ne.s32.totalorder %s50, %s64
      %p66 = scmp.eq.s32.totalorder %s19, 0
      %p67 = por %p65, %p66
      %s69 = sadd.s32 %s68, 1
      %p72 = scmp.eq.s32.totalorder %s13, 1
      %p73 = scmp.ne.s32.totalorder %s68, %s70
      %p74 = scmp.eq.s32.totalorder %s13, 0
      %p75 = por %p73, %p74
      %p76 = scmp.ne.s32.totalorder %s68, %s70
      %p77 = scmp.eq.s32.totalorder %s18, 1
      %p78 = por %p76, %p77
      %p79 = scmp.ne.s32.totalorder %s70, %s71
      %p80 = scmp.eq.s32.totalorder %s18, 0
      %p81 = por %p79, %p80
      %p82 = scmp.ne.s32.totalorder %s70, %s71
      %p83 = scmp.eq.s32.totalorder %s19, 1
      %p84 = por %p82, %p83
      %p86 = scmp.ne.s32.totalorder %s71, %s85
      %p87 = scmp.eq.s32.totalorder %s19, 0
      %p88 = por %p86, %p87
      %s90 = sadd.s32 %s89, 1
      %p93 = scmp.eq.s32.totalorder %s13, 1
      %p94 = scmp.ne.s32.totalorder %s89, %s91
      %p95 = scmp.eq.s32.totalorder %s13, 0
      %p96 = por %p94, %p95
      %p97 = scmp.ne.s32.totalorder %s89, %s91
      %p98 = scmp.eq.s32.totalorder %s18, 1
      %p99 = por %p97, %p98
      %p100 = scmp.ne.s32.totalorder %s91, %s92
      %p101 = scmp.eq.s32.totalorder %s18, 0
      %p102 = por %p100, %p101
      %p103 = scmp.ne.s32.totalorder %s91, %s92
      %p104 = scmp.eq.s32.totalorder %s19, 1
      %p105 = por %p103, %p104
      %p107 = scmp.ne.s32.totalorder %s92, %s106
      %p108 = scmp.eq.s32.totalorder %s19, 0
      %p109 = por %p107, %p108
      %s111 = sadd.s32 %s110, 1
      %p114 = scmp.eq.s32.totalorder %s13, 1
      %p115 = scmp.ne.s32.totalorder %s110, %s112
      %p116 = scmp.eq.s32.totalorder %s13, 0
      %p117 = por %p115, %p116
      %p118 = scmp.ne.s32.totalorder %s110, %s112
      %p119 = scmp.eq.s32.totalorder %s18, 1
      %p120 = por %p118, %p119
      %p121 = scmp.ne.s32.totalorder %s112, %s113
      %p122 = scmp.eq.s32.totalorder %s18, 0
      %p123 = por %p121, %p122
      %p124 = scmp.ne.s32.totalorder %s112, %s113
      %p125 = scmp.eq.s32.totalorder %s19, 1
      %p126 = por %p124, %p125
      %p128 = scmp.ne.s32.totalorder %s113, %s127
      %p129 = scmp.eq.s32.totalorder %s19, 0
      %p130 = por %p128, %p129
      %s131 = ssub.s32 %s13, %s20
      %p132 = scmp.eq.s32.totalorder %s131, 0
      %s134 = sadd.s32 %s133, 1
      %s135 = scalar_select %p132, %s133, %s134
      %p138 = pneg %p132
      %p139 = scmp.eq.s32.totalorder %s13, 1
      %p140 = por %p138, %p139
      %p141 = scmp.ne.s32.totalorder %s133, %s136
      %p142 = scmp.eq.s32.totalorder %s13, 0
      %p143 = por %p141, %p142
      %p144 = scmp.ne.s32.totalorder %s133, %s136
      %p145 = scmp.eq.s32.totalorder %s18, 1
      %p146 = por %p144, %p145
      %p147 = scmp.ne.s32.totalorder %s136, %s137
      %p148 = scmp.eq.s32.totalorder %s18, 0
      %p149 = por %p147, %p148
      %p150 = scmp.ne.s32.totalorder %s136, %s137
      %p151 = scmp.eq.s32.totalorder %s19, 1
      %p152 = por %p150, %p151
      %p154 = scmp.ne.s32.totalorder %s137, %s153
      %p155 = scmp.eq.s32.totalorder %s19, 0
      %p156 = por %p154, %p155
      %p157 = scmp.le.s32.totalorder 1, %s13
      %p158 = scmp.lt.s32.totalorder %s13, 3
      %p159 = pnand %p157, %p158
      %p160 = pneg %p159
      // Predicated region
      $region9: #{net_forward.2} parent=5 // pred_check
        _
      $region10: #{net_forward.2} parent=5 // pred_check_branch
        %162 = sbr.rel (%p159) target = $region12
      $region11: #{net_forward.2} parent=5 // pred_region
        %s163 = ssub.s32 %s13, 1
        // Predicated region
        $region13: #{net_forward.2} parent=11 // pred_check
          %p164 = pneg %p60
        $region14: #{net_forward.2} parent=11 // pred_check_branch
          %166 = sbr.rel (%p164) target = $region16
        $region15: #{net_forward.2} parent=11 // pred_region
          _
        $region16: #{net_forward.2} parent=11 // pred_fallthru
          _
        // Predicated region
        $region17: #{net_forward.2} parent=11 // pred_check
          %p167 = pneg %p81
        $region18: #{net_forward.2} parent=11 // pred_check_branch
          %169 = sbr.rel (%p167) target = $region20
        $region19: #{net_forward.2} parent=11 // pred_region
          %s171 = ssub.s32 16, 16
          %172 = vsyncadd [#allocation4], %s171
          %s174 = sshll.u32 [#allocation3], 4
          %s175 = int_to_ptr.vmem [resolvable:$true] %s174
          %177 = dma.hbm_to_vmem [thread:$0]  %s2, 16, %s175, [#allocation4]
        $region20: #{net_forward.2} parent=11 // pred_fallthru
          _
        // Predicated region
        $region21: #{net_forward.2} parent=11 // pred_check
          %p178 = pneg %p102
        $region22: #{net_forward.2} parent=11 // pred_check_branch
          %180 = sbr.rel (%p178) target = $region24
        $region23: #{net_forward.2} parent=11 // pred_region
          _
        $region24: #{net_forward.2} parent=11 // pred_fallthru
          _
        // Predicated region
        $region25: #{net_forward.2} parent=11 // pred_check
          %p181 = pneg %p123
        $region26: #{net_forward.2} parent=11 // pred_check_branch
          %183 = sbr.rel (%p181) target = $region28
        $region27: #{net_forward.2} parent=11 // pred_region
          %s185 = ssub.s32 16, 16
          %186 = vsyncadd [#allocation6], %s185
          %s188 = sshll.u32 [#allocation5], 4
          %s189 = int_to_ptr.vmem [resolvable:$true] %s188
          %191 = dma.hbm_to_vmem [thread:$0]  %s4, 16, %s189, [#allocation6]
        $region28: #{net_forward.2} parent=11 // pred_fallthru
          _
      $region12: #{net_forward.2} parent=5 // pred_fallthru
        _
      %p192 = scmp.lt.s32.totalorder %s13, 2
      // Predicated region
      $region29: #{net_forward.2} parent=5 // pred_check
        %p193 = pneg %p192
      $region30: #{net_forward.2} parent=5 // pred_check_branch
        %195 = sbr.rel (%p193) target = $region32
      $region31: #{net_forward.2} parent=5 // pred_region
        // Predicated region
        $region33: #{net_forward.2} parent=31 // pred_check
          %p196 = pneg %p33
        $region34: #{net_forward.2} parent=31 // pred_check_branch
          %198 = sbr.rel (%p196) target = $region36
        $region35: #{net_forward.2} parent=31 // pred_region
          %p199 = scmp.lt.s32.totalorder %s13, 1
          %s200 = scalar_select %p199, %s13, 1
          %s201 = smul.addr %s200, 98
          %s202 = smul.addr %s201, 4
          %s203 = scalar_lea.vmem %s0, %s202
        $region36: #{net_forward.2} parent=31 // pred_fallthru
          _
      $region32: #{net_forward.2} parent=5 // pred_fallthru
        _
      %p204 = scmp.le.s32.totalorder 1, %s13
      %p205 = scmp.lt.s32.totalorder %s13, 3
      %p206 = pnand %p204, %p205
      %p207 = pneg %p206
      // Predicated region
      $region37: #{net_forward.2} parent=5 // pred_check
        _
      $region38: #{net_forward.2} parent=5 // pred_check_branch
        %209 = sbr.rel (%p206) target = $region40
      $region39: #{net_forward.2} parent=5 // pred_region
        %s210 = ssub.s32 %s13, 1
        // Predicated region
        $region41: #{net_forward.2} parent=39 // pred_check
          %p211 = pneg %p81
        $region42: #{net_forward.2} parent=39 // pred_check_branch
          %213 = sbr.rel (%p211) target = $region44
        $region43: #{net_forward.2} parent=39 // pred_region
          %214 = dma.done [#allocation4], 16
        $region44: #{net_forward.2} parent=39 // pred_fallthru
          _
        // Predicated region
        $region45: #{net_forward.2} parent=39 // pred_check
          %p215 = pneg %p123
        $region46: #{net_forward.2} parent=39 // pred_check_branch
          %217 = sbr.rel (%p215) target = $region48
        $region47: #{net_forward.2} parent=39 // pred_region
          %218 = dma.done [#allocation6], 16
        $region48: #{net_forward.2} parent=39 // pred_fallthru
          _
        %p219 = scmp.lt.s32.totalorder %s18, 1
        %s220 = scalar_select %p219, %s18, 1
        %s221 = smul.addr %s220, 98
        %s222 = smul.addr %s221, 4
        %s223 = scalar_lea.vmem %s0, %s222
        %p224 = pneg %p39
        %p225 = pneg %p36
        %p226 = pneg %p60
        %p227 = pneg %p57
        %p228 = pneg %p81
        %p229 = pneg %p78
        %p230 = pneg %p102
        %p231 = pneg %p99
        %p232 = pneg %p123
        %p233 = pneg %p120
        %p234 = pneg %p149
        %p235 = pneg %p146
        %p236 = scmp.lt.s32.totalorder %s18, 1
        %s237 = scalar_select %p236, %s18, 1
        %s238 = smul.addr %s237, 7
        %s239 = smul.addr %s238, 4
        %s240 = scalar_lea.vmem %s5, %s239
        %p241 = scmp.lt.s32.totalorder %s18, 1
        %s242 = scalar_select %p241, %s18, 1
        %s243 = smul.addr %s242, 98
        %s244 = smul.addr %s243, 4
        %s245 = scalar_lea.vmem %s0, %s244
        %p246 = scmp.lt.s32.totalorder %s18, 1
        %s247 = scalar_select %p246, %s18, 1
        %s248 = smul.addr %s247, 7
        %s249 = smul.addr %s248, 4
        %s250 = scalar_lea.vmem %s5, %s249
        %v252 = vld [vmem:[%s245] sm:$0xf]
        %v253 = vld [vmem:[%s245 + $0x4] sm:$0xf]
        %v254 = vld [vmem:[%s245 + $0x8] sm:$0xf]
        %v255 = vld [vmem:[%s245 + $0xc] sm:$0xf]
        %v256 = vld [vmem:[%s245 + $0x10] sm:$0xf]
        %v257 = vld [vmem:[%s245 + $0x14] sm:$0xf]
        %v258 = vld [vmem:[%s245 + $0x18] sm:$0xf]
        %v259 = vld [vmem:[%s245 + $0x1c] sm:$0xf]
        %v260 = vld [vmem:[%s245 + $0x20] sm:$0xf]
        %v261 = vld [vmem:[%s245 + $0x24] sm:$0xf]
        %v262 = vld [vmem:[%s245 + $0x28] sm:$0xf]
        %v263 = vld [vmem:[%s245 + $0x2c] sm:$0xf]
        %v264 = vld [vmem:[%s245 + $0x30] sm:$0xf]
        %v265 = vld [vmem:[%s245 + $0x34] sm:$0xf]
        %v266 = vld [vmem:[%s245 + $0x38] sm:$0xf]
        %v267 = vld [vmem:[%s245 + $0x3c] sm:$0xf]
        %v268 = vld [vmem:[%s245 + $0x40] sm:$0xf]
        %v269 = vld [vmem:[%s245 + $0x44] sm:$0xf]
        %v270 = vld [vmem:[%s245 + $0x48] sm:$0xf]
        %v271 = vld [vmem:[%s245 + $0x4c] sm:$0xf]
        %v272 = vld [vmem:[%s245 + $0x50] sm:$0xf]
        %v273 = vld [vmem:[%s245 + $0x54] sm:$0xf]
        %v274 = vld [vmem:[%s245 + $0x58] sm:$0xf]
        %v275 = vld [vmem:[%s245 + $0x5c] sm:$0xf]
        %v276 = vld [vmem:[%s245 + $0x60] sm:$0xf]
        %v277 = vld [vmem:[%s245 + $0x64] sm:$0xf]
        %v278 = vld [vmem:[%s245 + $0x68] sm:$0xf]
        %v279 = vld [vmem:[%s245 + $0x6c] sm:$0xf]
        %v280 = vld [vmem:[%s245 + $0x70] sm:$0xf]
        %v281 = vld [vmem:[%s245 + $0x74] sm:$0xf]
        %v282 = vld [vmem:[%s245 + $0x78] sm:$0xf]
        %v283 = vld [vmem:[%s245 + $0x7c] sm:$0xf]
        %v284 = vld [vmem:[%s245 + $0x80] sm:$0xf]
        %v285 = vld [vmem:[%s245 + $0x84] sm:$0xf]
        %v286 = vld [vmem:[%s245 + $0x88] sm:$0xf]
        %v287 = vld [vmem:[%s245 + $0x8c] sm:$0xf]
        %v288 = vld [vmem:[%s245 + $0x90] sm:$0xf]
        %v289 = vld [vmem:[%s245 + $0x94] sm:$0xf]
        %v290 = vld [vmem:[%s245 + $0x98] sm:$0xf]
        %v291 = vld [vmem:[%s245 + $0x9c] sm:$0xf]
        %v292 = vld [vmem:[%s245 + $0xa0] sm:$0xf]
        %v293 = vld [vmem:[%s245 + $0xa4] sm:$0xf]
        %v294 = vld [vmem:[%s245 + $0xa8] sm:$0xf]
        %v295 = vld [vmem:[%s245 + $0xac] sm:$0xf]
        %v296 = vld [vmem:[%s245 + $0xb0] sm:$0xf]
        %v297 = vld [vmem:[%s245 + $0xb4] sm:$0xf]
        %v298 = vld [vmem:[%s245 + $0xb8] sm:$0xf]
        %v299 = vld [vmem:[%s245 + $0xbc] sm:$0xf]
        %v300 = vld [vmem:[%s245 + $0xc0] sm:$0xf]
        %v301 = vld [vmem:[%s245 + $0xc4] sm:$0xf]
        %v302 = vld [vmem:[%s245 + $0xc8] sm:$0xf]
        %v303 = vld [vmem:[%s245 + $0xcc] sm:$0xf]
        %v304 = vld [vmem:[%s245 + $0xd0] sm:$0xf]
        %v305 = vld [vmem:[%s245 + $0xd4] sm:$0xf]
        %v306 = vld [vmem:[%s245 + $0xd8] sm:$0xf]
        %v307 = vld [vmem:[%s245 + $0xdc] sm:$0xf]
        %v308 = vld [vmem:[%s245 + $0xe0] sm:$0xf]
        %v309 = vld [vmem:[%s245 + $0xe4] sm:$0xf]
        %v310 = vld [vmem:[%s245 + $0xe8] sm:$0xf]
        %v311 = vld [vmem:[%s245 + $0xec] sm:$0xf]
        %v312 = vld [vmem:[%s245 + $0xf0] sm:$0xf]
        %v313 = vld [vmem:[%s245 + $0xf4] sm:$0xf]
        %v314 = vld [vmem:[%s245 + $0xf8] sm:$0xf]
        %v315 = vld [vmem:[%s245 + $0xfc] sm:$0xf]
        %v316 = vld [vmem:[%s245 + $0x100] sm:$0xf]
        %v317 = vld [vmem:[%s245 + $0x104] sm:$0xf]
        %v318 = vld [vmem:[%s245 + $0x108] sm:$0xf]
        %v319 = vld [vmem:[%s245 + $0x10c] sm:$0xf]
        %v320 = vld [vmem:[%s245 + $0x110] sm:$0xf]
        %v321 = vld [vmem:[%s245 + $0x114] sm:$0xf]
        %v322 = vld [vmem:[%s245 + $0x118] sm:$0xf]
        %v323 = vld [vmem:[%s245 + $0x11c] sm:$0xf]
        %v324 = vld [vmem:[%s245 + $0x120] sm:$0xf]
        %v325 = vld [vmem:[%s245 + $0x124] sm:$0xf]
        %v326 = vld [vmem:[%s245 + $0x128] sm:$0xf]
        %v327 = vld [vmem:[%s245 + $0x12c] sm:$0xf]
        %v328 = vld [vmem:[%s245 + $0x130] sm:$0xf]
        %v329 = vld [vmem:[%s245 + $0x134] sm:$0xf]
        %v330 = vld [vmem:[%s245 + $0x138] sm:$0xf]
        %v331 = vld [vmem:[%s245 + $0x13c] sm:$0xf]
        %v332 = vld [vmem:[%s245 + $0x140] sm:$0xf]
        %v333 = vld [vmem:[%s245 + $0x144] sm:$0xf]
        %v334 = vld [vmem:[%s245 + $0x148] sm:$0xf]
        %v335 = vld [vmem:[%s245 + $0x14c] sm:$0xf]
        %v336 = vld [vmem:[%s245 + $0x150] sm:$0xf]
        %v337 = vld [vmem:[%s245 + $0x154] sm:$0xf]
        %v338 = vld [vmem:[%s245 + $0x158] sm:$0xf]
        %v339 = vld [vmem:[%s245 + $0x15c] sm:$0xf]
        %v340 = vld [vmem:[%s245 + $0x160] sm:$0xf]
        %v341 = vld [vmem:[%s245 + $0x164] sm:$0xf]
        %v342 = vld [vmem:[%s245 + $0x168] sm:$0xf]
        %v343 = vld [vmem:[%s245 + $0x16c] sm:$0xf]
        %v344 = vld [vmem:[%s245 + $0x170] sm:$0xf]
        %v345 = vld [vmem:[%s245 + $0x174] sm:$0xf]
        %v346 = vld [vmem:[%s245 + $0x178] sm:$0xf]
        %v347 = vld [vmem:[%s245 + $0x17c] sm:$0xf]
        %v348 = vld [vmem:[%s245 + $0x180] sm:$0xf]
        %v349 = vld [vmem:[%s245 + $0x184] sm:$0xf]
        %v350 = vld [vmem:[%s1] sm:$0xf]
        %v351 = vld [vmem:[%s1 + $0x4] sm:$0x1]
        %v352 = vld [vmem:[#allocation3] sm:$0x1]
        %v354 = vlaneseq
        %v355 = vshrl.u32 %v354, 7
        %v356 = vsub.s32 0, %v355
        %v357 = vrot.slane %v352, %v356
        %v457 = vunpack.c.l.b16 %v252
        %v458 = vunpack.c.l.b16 %v253
        %v459 = vunpack.c.l.b16 %v254
        %v460 = vunpack.c.l.b16 %v255
        %v461 = vunpack.c.l.b16 %v256
        %v462 = vunpack.c.l.b16 %v257
        %v463 = vunpack.c.l.b16 %v258
        %v464 = vunpack.c.l.b16 %v259
        %v465 = vunpack.c.l.b16 %v260
        %v466 = vunpack.c.l.b16 %v261
        %v467 = vunpack.c.l.b16 %v262
        %v468 = vunpack.c.l.b16 %v263
        %v469 = vunpack.c.l.b16 %v264
        %v470 = vunpack.c.l.b16 %v265
        %v471 = vunpack.c.l.b16 %v266
        %v472 = vunpack.c.l.b16 %v267
        %v473 = vunpack.c.l.b16 %v268
        %v474 = vunpack.c.l.b16 %v269
        %v475 = vunpack.c.l.b16 %v270
        %v476 = vunpack.c.l.b16 %v271
        %v477 = vunpack.c.l.b16 %v272
        %v478 = vunpack.c.l.b16 %v273
        %v479 = vunpack.c.l.b16 %v274
        %v480 = vunpack.c.l.b16 %v275
        %v481 = vunpack.c.l.b16 %v276
        %v482 = vunpack.c.l.b16 %v277
        %v483 = vunpack.c.l.b16 %v278
        %v484 = vunpack.c.l.b16 %v279
        %v485 = vunpack.c.l.b16 %v280
        %v486 = vunpack.c.l.b16 %v281
        %v487 = vunpack.c.l.b16 %v282
        %v488 = vunpack.c.l.b16 %v283
        %v489 = vunpack.c.l.b16 %v284
        %v490 = vunpack.c.l.b16 %v285
        %v491 = vunpack.c.l.b16 %v286
        %v492 = vunpack.c.l.b16 %v287
        %v493 = vunpack.c.l.b16 %v288
        %v494 = vunpack.c.l.b16 %v289
        %v495 = vunpack.c.l.b16 %v290
        %v496 = vunpack.c.l.b16 %v291
        %v497 = vunpack.c.l.b16 %v292
        %v498 = vunpack.c.l.b16 %v293
        %v499 = vunpack.c.l.b16 %v294
        %v500 = vunpack.c.l.b16 %v295
        %v501 = vunpack.c.l.b16 %v296
        %v502 = vunpack.c.l.b16 %v297
        %v503 = vunpack.c.l.b16 %v298
        %v504 = vunpack.c.l.b16 %v299
        %v505 = vunpack.c.l.b16 %v300
        %v506 = vunpack.c.l.b16 %v301
        %v507 = vunpack.c.l.b16 %v302
        %v508 = vunpack.c.l.b16 %v303
        %v509 = vunpack.c.l.b16 %v304
        %v510 = vunpack.c.l.b16 %v305
        %v511 = vunpack.c.l.b16 %v306
        %v512 = vunpack.c.l.b16 %v307
        %v513 = vunpack.c.l.b16 %v308
        %v514 = vunpack.c.l.b16 %v309
        %v515 = vunpack.c.l.b16 %v310
        %v516 = vunpack.c.l.b16 %v311
        %v517 = vunpack.c.l.b16 %v312
        %v518 = vunpack.c.l.b16 %v313
        %v519 = vunpack.c.l.b16 %v314
        %v520 = vunpack.c.l.b16 %v315
        %v521 = vunpack.c.l.b16 %v316
        %v522 = vunpack.c.l.b16 %v317
        %v523 = vunpack.c.l.b16 %v318
        %v524 = vunpack.c.l.b16 %v319
        %v525 = vunpack.c.l.b16 %v320
        %v526 = vunpack.c.l.b16 %v321
        %v527 = vunpack.c.l.b16 %v322
        %v528 = vunpack.c.l.b16 %v323
        %v529 = vunpack.c.l.b16 %v324
        %v530 = vunpack.c.l.b16 %v325
        %v531 = vunpack.c.l.b16 %v326
        %v532 = vunpack.c.l.b16 %v327
        %v533 = vunpack.c.l.b16 %v328
        %v534 = vunpack.c.l.b16 %v329
        %v535 = vunpack.c.l.b16 %v330
        %v536 = vunpack.c.l.b16 %v331
        %v537 = vunpack.c.l.b16 %v332
        %v538 = vunpack.c.l.b16 %v333
        %v539 = vunpack.c.l.b16 %v334
        %v540 = vunpack.c.l.b16 %v335
        %v541 = vunpack.c.l.b16 %v336
        %v542 = vunpack.c.l.b16 %v337
        %v543 = vunpack.c.l.b16 %v338
        %v544 = vunpack.c.l.b16 %v339
        %v545 = vunpack.c.l.b16 %v340
        %v546 = vunpack.c.l.b16 %v341
        %v547 = vunpack.c.l.b16 %v342
        %v548 = vunpack.c.l.b16 %v343
        %v549 = vunpack.c.l.b16 %v344
        %v550 = vunpack.c.l.b16 %v345
        %v551 = vunpack.c.l.b16 %v346
        %v552 = vunpack.c.l.b16 %v347
        %v553 = vunpack.c.l.b16 %v348
        %v554 = vunpack.c.l.b16 %v349
        %v555 = vpack.c.b16 %v458, %v457
        %v556 = vpack.c.b16 %v460, %v459
        %v557 = vpack.c.b16 %v462, %v461
        %v558 = vpack.c.b16 %v464, %v463
        %v559 = vpack.c.b16 %v466, %v465
        %v560 = vpack.c.b16 %v468, %v467
        %v561 = vpack.c.b16 %v470, %v469
        %v562 = vpack.c.b16 %v472, %v471
        %v563 = vpack.c.b16 %v474, %v473
        %v564 = vpack.c.b16 %v476, %v475
        %v565 = vpack.c.b16 %v478, %v477
        %v566 = vpack.c.b16 %v480, %v479
        %v567 = vpack.c.b16 %v482, %v481
        %v568 = vpack.c.b16 %v484, %v483
        %v569 = vpack.c.b16 %v486, %v485
        %v570 = vpack.c.b16 %v488, %v487
        %v571 = vpack.c.b16 %v490, %v489
        %v572 = vpack.c.b16 %v492, %v491
        %v573 = vpack.c.b16 %v494, %v493
        %v574 = vpack.c.b16 %v496, %v495
        %v575 = vpack.c.b16 %v498, %v497
        %v576 = vpack.c.b16 %v500, %v499
        %v577 = vpack.c.b16 %v502, %v501
        %v578 = vpack.c.b16 %v504, %v503
        %v579 = vpack.c.b16 %v506, %v505
        %v580 = vpack.c.b16 %v508, %v507
        %v581 = vpack.c.b16 %v510, %v509
        %v582 = vpack.c.b16 %v512, %v511
        %v583 = vpack.c.b16 %v514, %v513
        %v584 = vpack.c.b16 %v516, %v515
        %v585 = vpack.c.b16 %v518, %v517
        %v586 = vpack.c.b16 %v520, %v519
        %v587 = vpack.c.b16 %v522, %v521
        %v588 = vpack.c.b16 %v524, %v523
        %v589 = vpack.c.b16 %v526, %v525
        %v590 = vpack.c.b16 %v528, %v527
        %v591 = vpack.c.b16 %v530, %v529
        %v592 = vpack.c.b16 %v532, %v531
        %v593 = vpack.c.b16 %v534, %v533
        %v594 = vpack.c.b16 %v536, %v535
        %v595 = vpack.c.b16 %v538, %v537
        %v596 = vpack.c.b16 %v540, %v539
        %v597 = vpack.c.b16 %v542, %v541
        %v598 = vpack.c.b16 %v544, %v543
        %v599 = vpack.c.b16 %v546, %v545
        %v600 = vpack.c.b16 %v548, %v547
        %v601 = vpack.c.b16 %v550, %v549
        %v602 = vpack.c.b16 %v552, %v551
        %v603 = vpack.c.b16 %v554, %v553
        %v606 = vunpack.c.l.b16 %v350
        %v607 = vunpack.c.l.b16 %v351
        %v608 = vpack.c.b16 %v607, %v606
        %vm609 = vcmask 72704
        %v611 = vsel %vm609, %v555, 0
        %v614 = vsel %vm609, %v556, 0
        %v617 = vsel %vm609, %v557, 0
        %v620 = vsel %vm609, %v558, 0
        %v623 = vsel %vm609, %v559, 0
        %v626 = vsel %vm609, %v560, 0
        %v629 = vsel %vm609, %v561, 0
        %v632 = vsel %vm609, %v562, 0
        %v635 = vsel %vm609, %v563, 0
        %v638 = vsel %vm609, %v564, 0
        %v641 = vsel %vm609, %v565, 0
        %v644 = vsel %vm609, %v566, 0
        %v647 = vsel %vm609, %v567, 0
        %v650 = vsel %vm609, %v568, 0
        %v653 = vsel %vm609, %v569, 0
        %v656 = vsel %vm609, %v570, 0
        %v659 = vsel %vm609, %v571, 0
        %v662 = vsel %vm609, %v572, 0
        %v665 = vsel %vm609, %v573, 0
        %v668 = vsel %vm609, %v574, 0
        %v671 = vsel %vm609, %v575, 0
        %v674 = vsel %vm609, %v576, 0
        %v677 = vsel %vm609, %v577, 0
        %v680 = vsel %vm609, %v578, 0
        %v683 = vsel %vm609, %v579, 0
        %v686 = vsel %vm609, %v580, 0
        %v689 = vsel %vm609, %v581, 0
        %v692 = vsel %vm609, %v582, 0
        %v695 = vsel %vm609, %v583, 0
        %v698 = vsel %vm609, %v584, 0
        %v701 = vsel %vm609, %v585, 0
        %v704 = vsel %vm609, %v586, 0
        %v707 = vsel %vm609, %v587, 0
        %v710 = vsel %vm609, %v588, 0
        %v713 = vsel %vm609, %v589, 0
        %v716 = vsel %vm609, %v590, 0
        %v719 = vsel %vm609, %v591, 0
        %v722 = vsel %vm609, %v592, 0
        %v725 = vsel %vm609, %v593, 0
        %v728 = vsel %vm609, %v594, 0
        %v731 = vsel %vm609, %v595, 0
        %v734 = vsel %vm609, %v596, 0
        %v737 = vsel %vm609, %v597, 0
        %v740 = vsel %vm609, %v598, 0
        %v743 = vsel %vm609, %v599, 0
        %v746 = vsel %vm609, %v600, 0
        %v749 = vsel %vm609, %v601, 0
        %v752 = vsel %vm609, %v602, 0
        %v755 = vsel %vm609, %v603, 0
        %vm757 = vcmask 1043456
        %vm758 = vcmask 1044480
        %v759 = vsel %vm757, 4294967295, 65535
        %v760 = vsel %vm758, %v759, 0
        %v762 = vand.u32 %v608, %v760
        %764 = vmatprep.subr.bf16.mxu0 0
        %765 = vmatpush1.bf16.msra.mxu0 %v762
        %766 = vmatprep.subr.bf16.mxu0 0
        %767 = vmatpush1.bf16.msra.mxu0 0
        %768 = vmatprep.subr.bf16.mxu0 0
        %769 = vmatpush1.bf16.msra.mxu0 0
        %770 = vmatprep.subr.bf16.mxu0 0
        %771 = vmatpush1.bf16.msra.mxu0 0
        %772 = vmatprep.subr.bf16.mxu0 0
        %773 = vmatpush1.bf16.msra.mxu0 0
        %774 = vmatprep.subr.bf16.mxu0 0
        %775 = vmatpush1.bf16.msra.mxu0 0
        %776 = vmatprep.subr.bf16.mxu0 0
        %777 = vmatpush1.bf16.msra.mxu0 0
        %778 = vmatprep.subr.bf16.mxu0 0
        %779 = vmatpush1.bf16.msra.mxu0 0
        %780 = vmatprep.subr.bf16.mxu0 0
        %781 = vmatpush1.bf16.msra.mxu0 0
        %782 = vmatprep.subr.bf16.mxu0 0
        %783 = vmatpush1.bf16.msra.mxu0 0
        %784 = vmatprep.subr.bf16.mxu0 0
        %785 = vmatpush1.bf16.msra.mxu0 0
        %786 = vmatprep.subr.bf16.mxu0 0
        %787 = vmatpush1.bf16.msra.mxu0 0
        %788 = vmatprep.subr.bf16.mxu0 0
        %789 = vmatpush1.bf16.msra.mxu0 0
        %790 = vmatprep.subr.bf16.mxu0 0
        %791 = vmatpush1.bf16.msra.mxu0 0
        %792 = vmatprep.subr.bf16.mxu0 0
        %793 = vmatpush1.bf16.msra.mxu0 0
        %794 = vmatprep.subr.bf16.mxu0 0
        %795 = vmatpush1.bf16.msra.mxu0 0
        %796 = vmatprep.mubr.bf16.mxu0 0
        %797 = vmatmul.mubr.bf16.gmra.mrb[0].mxu0 %v611
        %v798 = vpop.f32.mrb[0].mxu0
        %v799 = vadd.f32 %v357, %v798
        %v800 = vpop.f32.mrb[0].mxu0
        %v801 = vpop.f32.mrb[0].mxu0
        %v802 = vadd.f32 %v357, %v801
        %v803 = vpop.f32.mrb[0].mxu0
        %804 = vmatprep.mubr.bf16.mxu0 0
        %805 = vmatmul.mubr.bf16.gmra.mrb[0].mxu0 %v614
        %v806 = vpop.f32.mrb[0].mxu0
        %v807 = vadd.f32 %v357, %v806
        %v808 = vpop.f32.mrb[0].mxu0
        %v809 = vpop.f32.mrb[0].mxu0
        %v810 = vadd.f32 %v357, %v809
        %v811 = vpop.f32.mrb[0].mxu0
        %812 = vmatprep.mubr.bf16.mxu0 0
        %813 = vmatmul.mubr.bf16.gmra.mrb[0].mxu0 %v617
        %v814 = vpop.f32.mrb[0].mxu0
        %v815 = vadd.f32 %v357, %v814
        %v816 = vpop.f32.mrb[0].mxu0
        %v817 = vpop.f32.mrb[0].mxu0
        %v818 = vadd.f32 %v357, %v817
        %v819 = vpop.f32.mrb[0].mxu0
        %820 = vmatprep.mubr.bf16.mxu0 0
        %821 = vmatmul.mubr.bf16.gmra.mrb[0].mxu0 %v620
        %v822 = vpop.f32.mrb[0].mxu0
        %v823 = vadd.f32 %v357, %v822
        %v824 = vpop.f32.mrb[0].mxu0
        %v825 = vpop.f32.mrb[0].mxu0
        %v826 = vadd.f32 %v357, %v825
        %v827 = vpop.f32.mrb[0].mxu0
        %828 = vmatprep.mubr.bf16.mxu0 0
        %829 = vmatmul.mubr.bf16.gmra.mrb[0].mxu0 %v623
        %v830 = vpop.f32.mrb[0].mxu0
        %v831 = vadd.f32 %v357, %v830
        %v832 = vpop.f32.mrb[0].mxu0
        %v833 = vpop.f32.mrb[0].mxu0
        %v834 = vadd.f32 %v357, %v833
        %v835 = vpop.f32.mrb[0].mxu0
        %836 = vmatprep.mubr.bf16.mxu0 0
        %837 = vmatmul.mubr.bf16.gmra.mrb[0].mxu0 %v626
        %v838 = vpop.f32.mrb[0].mxu0
        %v839 = vadd.f32 %v357, %v838
        %v840 = vpop.f32.mrb[0].mxu0
        %v841 = vpop.f32.mrb[0].mxu0
        %v842 = vadd.f32 %v357, %v841
        %v843 = vpop.f32.mrb[0].mxu0
        %844 = vmatprep.mubr.bf16.mxu0 0
        %845 = vmatmul.mubr.bf16.gmra.mrb[0].mxu0 %v629
        %v846 = vpop.f32.mrb[0].mxu0
        %v847 = vadd.f32 %v357, %v846
        %v848 = vpop.f32.mrb[0].mxu0
        %v849 = vpop.f32.mrb[0].mxu0
        %v850 = vadd.f32 %v357, %v849
        %v851 = vpop.f32.mrb[0].mxu0
        %852 = vmatprep.mubr.bf16.mxu0 0
        %853 = vmatmul.mubr.bf16.gmra.mrb[0].mxu0 %v632
        %v854 = vpop.f32.mrb[0].mxu0
        %v855 = vadd.f32 %v357, %v854
        %v856 = vpop.f32.mrb[0].mxu0
        %v857 = vpop.f32.mrb[0].mxu0
        %v858 = vadd.f32 %v357, %v857
        %v859 = vpop.f32.mrb[0].mxu0
        %860 = vmatprep.mubr.bf16.mxu0 0
        %861 = vmatmul.mubr.bf16.gmra.mrb[0].mxu0 %v635
        %v862 = vpop.f32.mrb[0].mxu0
        %v863 = vadd.f32 %v357, %v862
        %v864 = vpop.f32.mrb[0].mxu0
        %v865 = vpop.f32.mrb[0].mxu0
        %v866 = vadd.f32 %v357, %v865
        %v867 = vpop.f32.mrb[0].mxu0
        %868 = vmatprep.mubr.bf16.mxu0 0
        %869 = vmatmul.mubr.bf16.gmra.mrb[0].mxu0 %v638
        %v870 = vpop.f32.mrb[0].mxu0
        %v871 = vadd.f32 %v357, %v870
        %v872 = vpop.f32.mrb[0].mxu0
        %v873 = vpop.f32.mrb[0].mxu0
        %v874 = vadd.f32 %v357, %v873
        %v875 = vpop.f32.mrb[0].mxu0
        %876 = vmatprep.mubr.bf16.mxu0 0
        %877 = vmatmul.mubr.bf16.gmra.mrb[0].mxu0 %v641
        %v878 = vpop.f32.mrb[0].mxu0
        %v879 = vadd.f32 %v357, %v878
        %v880 = vpop.f32.mrb[0].mxu0
        %v881 = vpop.f32.mrb[0].mxu0
        %v882 = vadd.f32 %v357, %v881
        %v883 = vpop.f32.mrb[0].mxu0
        %884 = vmatprep.mubr.bf16.mxu0 0
        %885 = vmatmul.mubr.bf16.gmra.mrb[0].mxu0 %v644
        %v886 = vpop.f32.mrb[0].mxu0
        %v887 = vadd.f32 %v357, %v886
        %v888 = vpop.f32.mrb[0].mxu0
        %v889 = vpop.f32.mrb[0].mxu0
        %v890 = vadd.f32 %v357, %v889
        %v891 = vpop.f32.mrb[0].mxu0
        %892 = vmatprep.mubr.bf16.mxu0 0
        %893 = vmatmul.mubr.bf16.gmra.mrb[0].mxu0 %v647
        %v894 = vpop.f32.mrb[0].mxu0
        %v895 = vadd.f32 %v357, %v894
        %v896 = vpop.f32.mrb[0].mxu0
        %v897 = vpop.f32.mrb[0].mxu0
        %v898 = vadd.f32 %v357, %v897
        %v899 = vpop.f32.mrb[0].mxu0
        %900 = vmatprep.mubr.bf16.mxu0 0
        %901 = vmatmul.mubr.bf16.gmra.mrb[0].mxu0 %v650
        %v902 = vpop.f32.mrb[0].mxu0
        %v903 = vadd.f32 %v357, %v902
        %v904 = vpop.f32.mrb[0].mxu0
        %v905 = vpop.f32.mrb[0].mxu0
        %v906 = vadd.f32 %v357, %v905
        %v907 = vpop.f32.mrb[0].mxu0
        %908 = vmatprep.mubr.bf16.mxu0 0
        %909 = vmatmul.mubr.bf16.gmra.mrb[0].mxu0 %v653
        %v910 = vpop.f32.mrb[0].mxu0
        %v911 = vadd.f32 %v357, %v910
        %v912 = vpop.f32.mrb[0].mxu0
        %v913 = vpop.f32.mrb[0].mxu0
        %v914 = vadd.f32 %v357, %v913
        %v915 = vpop.f32.mrb[0].mxu0
        %916 = vmatprep.mubr.bf16.mxu0 0
        %917 = vmatmul.mubr.bf16.gmra.mrb[0].mxu0 %v656
        %v918 = vpop.f32.mrb[0].mxu0
        %v919 = vadd.f32 %v357, %v918
        %v920 = vpop.f32.mrb[0].mxu0
        %v921 = vpop.f32.mrb[0].mxu0
        %v922 = vadd.f32 %v357, %v921
        %v923 = vpop.f32.mrb[0].mxu0
        %924 = vmatprep.mubr.bf16.mxu0 0
        %925 = vmatmul.mubr.bf16.gmra.mrb[0].mxu0 %v659
        %v926 = vpop.f32.mrb[0].mxu0
        %v927 = vadd.f32 %v357, %v926
        %v928 = vpop.f32.mrb[0].mxu0
        %v929 = vpop.f32.mrb[0].mxu0
        %v930 = vadd.f32 %v357, %v929
        %v931 = vpop.f32.mrb[0].mxu0
        %932 = vmatprep.mubr.bf16.mxu0 0
        %933 = vmatmul.mubr.bf16.gmra.mrb[0].mxu0 %v662
        %v934 = vpop.f32.mrb[0].mxu0
        %v935 = vadd.f32 %v357, %v934
        %v936 = vpop.f32.mrb[0].mxu0
        %v937 = vpop.f32.mrb[0].mxu0
        %v938 = vadd.f32 %v357, %v937
        %v939 = vpop.f32.mrb[0].mxu0
        %940 = vmatprep.mubr.bf16.mxu0 0
        %941 = vmatmul.mubr.bf16.gmra.mrb[0].mxu0 %v665
        %v942 = vpop.f32.mrb[0].mxu0
        %v943 = vadd.f32 %v357, %v942
        %v944 = vpop.f32.mrb[0].mxu0
        %v945 = vpop.f32.mrb[0].mxu0
        %v946 = vadd.f32 %v357, %v945
        %v947 = vpop.f32.mrb[0].mxu0
        %948 = vmatprep.mubr.bf16.mxu0 0
        %949 = vmatmul.mubr.bf16.gmra.mrb[0].mxu0 %v668
        %v950 = vpop.f32.mrb[0].mxu0
        %v951 = vadd.f32 %v357, %v950
        %v952 = vpop.f32.mrb[0].mxu0
        %v953 = vpop.f32.mrb[0].mxu0
        %v954 = vadd.f32 %v357, %v953
        %v955 = vpop.f32.mrb[0].mxu0
        %956 = vmatprep.mubr.bf16.mxu0 0
        %957 = vmatmul.mubr.bf16.gmra.mrb[0].mxu0 %v671
        %v958 = vpop.f32.mrb[0].mxu0
        %v959 = vadd.f32 %v357, %v958
        %v960 = vpop.f32.mrb[0].mxu0
        %v961 = vpop.f32.mrb[0].mxu0
        %v962 = vadd.f32 %v357, %v961
        %v963 = vpop.f32.mrb[0].mxu0
        %964 = vmatprep.mubr.bf16.mxu0 0
        %965 = vmatmul.mubr.bf16.gmra.mrb[0].mxu0 %v674
        %v966 = vpop.f32.mrb[0].mxu0
        %v967 = vadd.f32 %v357, %v966
        %v968 = vpop.f32.mrb[0].mxu0
        %v969 = vpop.f32.mrb[0].mxu0
        %v970 = vadd.f32 %v357, %v969
        %v971 = vpop.f32.mrb[0].mxu0
        %972 = vmatprep.mubr.bf16.mxu0 0
        %973 = vmatmul.mubr.bf16.gmra.mrb[0].mxu0 %v677
        %v974 = vpop.f32.mrb[0].mxu0
        %v975 = vadd.f32 %v357, %v974
        %v976 = vpop.f32.mrb[0].mxu0
        %v977 = vpop.f32.mrb[0].mxu0
        %v978 = vadd.f32 %v357, %v977
        %v979 = vpop.f32.mrb[0].mxu0
        %980 = vmatprep.mubr.bf16.mxu0 0
        %981 = vmatmul.mubr.bf16.gmra.mrb[0].mxu0 %v680
        %v982 = vpop.f32.mrb[0].mxu0
        %v983 = vadd.f32 %v357, %v982
        %v984 = vpop.f32.mrb[0].mxu0
        %v985 = vpop.f32.mrb[0].mxu0
        %v986 = vadd.f32 %v357, %v985
        %v987 = vpop.f32.mrb[0].mxu0
        %988 = vmatprep.mubr.bf16.mxu0 0
        %989 = vmatmul.mubr.bf16.gmra.mrb[0].mxu0 %v683
        %v990 = vpop.f32.mrb[0].mxu0
        %v991 = vadd.f32 %v357, %v990
        %v992 = vpop.f32.mrb[0].mxu0
        %v993 = vpop.f32.mrb[0].mxu0
        %v994 = vadd.f32 %v357, %v993
        %v995 = vpop.f32.mrb[0].mxu0
        %996 = vmatprep.mubr.bf16.mxu0 0
        %997 = vmatmul.mubr.bf16.gmra.mrb[0].mxu0 %v686
        %v998 = vpop.f32.mrb[0].mxu0
        %v999 = vadd.f32 %v357, %v998
        %v1000 = vpop.f32.mrb[0].mxu0
        %v1001 = vpop.f32.mrb[0].mxu0
        %v1002 = vadd.f32 %v357, %v1001
        %v1003 = vpop.f32.mrb[0].mxu0
        %1004 = vmatprep.mubr.bf16.mxu0 0
        %1005 = vmatmul.mubr.bf16.gmra.mrb[0].mxu0 %v689
        %v1006 = vpop.f32.mrb[0].mxu0
        %v1007 = vadd.f32 %v357, %v1006
        %v1008 = vpop.f32.mrb[0].mxu0
        %v1009 = vpop.f32.mrb[0].mxu0
        %v1010 = vadd.f32 %v357, %v1009
        %v1011 = vpop.f32.mrb[0].mxu0
        %1012 = vmatprep.mubr.bf16.mxu0 0
        %1013 = vmatmul.mubr.bf16.gmra.mrb[0].mxu0 %v692
        %v1014 = vpop.f32.mrb[0].mxu0
        %v1015 = vadd.f32 %v357, %v1014
        %v1016 = vpop.f32.mrb[0].mxu0
        %v1017 = vpop.f32.mrb[0].mxu0
        %v1018 = vadd.f32 %v357, %v1017
        %v1019 = vpop.f32.mrb[0].mxu0
        %1020 = vmatprep.mubr.bf16.mxu0 0
        %1021 = vmatmul.mubr.bf16.gmra.mrb[0].mxu0 %v695
        %v1022 = vpop.f32.mrb[0].mxu0
        %v1023 = vadd.f32 %v357, %v1022
        %v1024 = vpop.f32.mrb[0].mxu0
        %v1025 = vpop.f32.mrb[0].mxu0
        %v1026 = vadd.f32 %v357, %v1025
        %v1027 = vpop.f32.mrb[0].mxu0
        %1028 = vmatprep.mubr.bf16.mxu0 0
        %1029 = vmatmul.mubr.bf16.gmra.mrb[0].mxu0 %v698
        %v1030 = vpop.f32.mrb[0].mxu0
        %v1031 = vadd.f32 %v357, %v1030
        %v1032 = vpop.f32.mrb[0].mxu0
        %v1033 = vpop.f32.mrb[0].mxu0
        %v1034 = vadd.f32 %v357, %v1033
        %v1035 = vpop.f32.mrb[0].mxu0
        %1036 = vmatprep.mubr.bf16.mxu0 0
        %1037 = vmatmul.mubr.bf16.gmra.mrb[0].mxu0 %v701
        %v1038 = vpop.f32.mrb[0].mxu0
        %v1039 = vadd.f32 %v357, %v1038
        %v1040 = vpop.f32.mrb[0].mxu0
        %v1041 = vpop.f32.mrb[0].mxu0
        %v1042 = vadd.f32 %v357, %v1041
        %v1043 = vpop.f32.mrb[0].mxu0
        %1044 = vmatprep.mubr.bf16.mxu0 0
        %1045 = vmatmul.mubr.bf16.gmra.mrb[0].mxu0 %v704
        %v1046 = vpop.f32.mrb[0].mxu0
        %v1047 = vadd.f32 %v357, %v1046
        %v1048 = vpop.f32.mrb[0].mxu0
        %v1049 = vpop.f32.mrb[0].mxu0
        %v1050 = vadd.f32 %v357, %v1049
        %v1051 = vpop.f32.mrb[0].mxu0
        %1052 = vmatprep.mubr.bf16.mxu0 0
        %1053 = vmatmul.mubr.bf16.gmra.mrb[0].mxu0 %v707
        %v1054 = vpop.f32.mrb[0].mxu0
        %v1055 = vadd.f32 %v357, %v1054
        %v1056 = vpop.f32.mrb[0].mxu0
        %v1057 = vpop.f32.mrb[0].mxu0
        %v1058 = vadd.f32 %v357, %v1057
        %v1059 = vpop.f32.mrb[0].mxu0
        %1060 = vmatprep.mubr.bf16.mxu0 0
        %1061 = vmatmul.mubr.bf16.gmra.mrb[0].mxu0 %v710
        %v1062 = vpop.f32.mrb[0].mxu0
        %v1063 = vadd.f32 %v357, %v1062
        %v1064 = vpop.f32.mrb[0].mxu0
        %v1065 = vpop.f32.mrb[0].mxu0
        %v1066 = vadd.f32 %v357, %v1065
        %v1067 = vpop.f32.mrb[0].mxu0
        %1068 = vmatprep.mubr.bf16.mxu0 0
        %1069 = vmatmul.mubr.bf16.gmra.mrb[0].mxu0 %v713
        %v1070 = vpop.f32.mrb[0].mxu0
        %v1071 = vadd.f32 %v357, %v1070
        %v1072 = vpop.f32.mrb[0].mxu0
        %v1073 = vpop.f32.mrb[0].mxu0
        %v1074 = vadd.f32 %v357, %v1073
        %v1075 = vpop.f32.mrb[0].mxu0
        %1076 = vmatprep.mubr.bf16.mxu0 0
        %1077 = vmatmul.mubr.bf16.gmra.mrb[0].mxu0 %v716
        %v1078 = vpop.f32.mrb[0].mxu0
        %v1079 = vadd.f32 %v357, %v1078
        %v1080 = vpop.f32.mrb[0].mxu0
        %v1081 = vpop.f32.mrb[0].mxu0
        %v1082 = vadd.f32 %v357, %v1081
        %v1083 = vpop.f32.mrb[0].mxu0
        %1084 = vmatprep.mubr.bf16.mxu0 0
        %1085 = vmatmul.mubr.bf16.gmra.mrb[0].mxu0 %v719
        %v1086 = vpop.f32.mrb[0].mxu0
        %v1087 = vadd.f32 %v357, %v1086
        %v1088 = vpop.f32.mrb[0].mxu0
        %v1089 = vpop.f32.mrb[0].mxu0
        %v1090 = vadd.f32 %v357, %v1089
        %v1091 = vpop.f32.mrb[0].mxu0
        %1092 = vmatprep.mubr.bf16.mxu0 0
        %1093 = vmatmul.mubr.bf16.gmra.mrb[0].mxu0 %v722
        %v1094 = vpop.f32.mrb[0].mxu0
        %v1095 = vadd.f32 %v357, %v1094
        %v1096 = vpop.f32.mrb[0].mxu0
        %v1097 = vpop.f32.mrb[0].mxu0
        %v1098 = vadd.f32 %v357, %v1097
        %v1099 = vpop.f32.mrb[0].mxu0
        %1100 = vmatprep.mubr.bf16.mxu0 0
        %1101 = vmatmul.mubr.bf16.gmra.mrb[0].mxu0 %v725
        %v1102 = vpop.f32.mrb[0].mxu0
        %v1103 = vadd.f32 %v357, %v1102
        %v1104 = vpop.f32.mrb[0].mxu0
        %v1105 = vpop.f32.mrb[0].mxu0
        %v1106 = vadd.f32 %v357, %v1105
        %v1107 = vpop.f32.mrb[0].mxu0
        %1108 = vmatprep.mubr.bf16.mxu0 0
        %1109 = vmatmul.mubr.bf16.gmra.mrb[0].mxu0 %v728
        %v1110 = vpop.f32.mrb[0].mxu0
        %v1111 = vadd.f32 %v357, %v1110
        %v1112 = vpop.f32.mrb[0].mxu0
        %v1113 = vpop.f32.mrb[0].mxu0
        %v1114 = vadd.f32 %v357, %v1113
        %v1115 = vpop.f32.mrb[0].mxu0
        %1116 = vmatprep.mubr.bf16.mxu0 0
        %1117 = vmatmul.mubr.bf16.gmra.mrb[0].mxu0 %v731
        %v1118 = vpop.f32.mrb[0].mxu0
        %v1119 = vadd.f32 %v357, %v1118
        %v1120 = vpop.f32.mrb[0].mxu0
        %v1121 = vpop.f32.mrb[0].mxu0
        %v1122 = vadd.f32 %v357, %v1121
        %v1123 = vpop.f32.mrb[0].mxu0
        %1124 = vmatprep.mubr.bf16.mxu0 0
        %1125 = vmatmul.mubr.bf16.gmra.mrb[0].mxu0 %v734
        %v1126 = vpop.f32.mrb[0].mxu0
        %v1127 = vadd.f32 %v357, %v1126
        %v1128 = vpop.f32.mrb[0].mxu0
        %v1129 = vpop.f32.mrb[0].mxu0
        %v1130 = vadd.f32 %v357, %v1129
        %v1131 = vpop.f32.mrb[0].mxu0
        %1132 = vmatprep.mubr.bf16.mxu0 0
        %1133 = vmatmul.mubr.bf16.gmra.mrb[0].mxu0 %v737
        %v1134 = vpop.f32.mrb[0].mxu0
        %v1135 = vadd.f32 %v357, %v1134
        %v1136 = vpop.f32.mrb[0].mxu0
        %v1137 = vpop.f32.mrb[0].mxu0
        %v1138 = vadd.f32 %v357, %v1137
        %v1139 = vpop.f32.mrb[0].mxu0
        %1140 = vmatprep.mubr.bf16.mxu0 0
        %1141 = vmatmul.mubr.bf16.gmra.mrb[0].mxu0 %v740
        %v1142 = vpop.f32.mrb[0].mxu0
        %v1143 = vadd.f32 %v357, %v1142
        %v1144 = vpop.f32.mrb[0].mxu0
        %v1145 = vpop.f32.mrb[0].mxu0
        %v1146 = vadd.f32 %v357, %v1145
        %v1147 = vpop.f32.mrb[0].mxu0
        %1148 = vmatprep.mubr.bf16.mxu0 0
        %1149 = vmatmul.mubr.bf16.gmra.mrb[0].mxu0 %v743
        %v1150 = vpop.f32.mrb[0].mxu0
        %v1151 = vadd.f32 %v357, %v1150
        %v1152 = vpop.f32.mrb[0].mxu0
        %v1153 = vpop.f32.mrb[0].mxu0
        %v1154 = vadd.f32 %v357, %v1153
        %v1155 = vpop.f32.mrb[0].mxu0
        %1156 = vmatprep.mubr.bf16.mxu0 0
        %1157 = vmatmul.mubr.bf16.gmra.mrb[0].mxu0 %v746
        %v1158 = vpop.f32.mrb[0].mxu0
        %v1159 = vadd.f32 %v357, %v1158
        %v1160 = vpop.f32.mrb[0].mxu0
        %v1161 = vpop.f32.mrb[0].mxu0
        %v1162 = vadd.f32 %v357, %v1161
        %v1163 = vpop.f32.mrb[0].mxu0
        %1164 = vmatprep.mubr.bf16.mxu0 0
        %1165 = vmatmul.mubr.bf16.gmra.mrb[0].mxu0 %v749
        %v1166 = vpop.f32.mrb[0].mxu0
        %v1167 = vadd.f32 %v357, %v1166
        %v1168 = vpop.f32.mrb[0].mxu0
        %v1169 = vpop.f32.mrb[0].mxu0
        %v1170 = vadd.f32 %v357, %v1169
        %v1171 = vpop.f32.mrb[0].mxu0
        %1172 = vmatprep.mubr.bf16.mxu0 0
        %1173 = vmatmul.mubr.bf16.gmra.mrb[0].mxu0 %v752
        %v1174 = vpop.f32.mrb[0].mxu0
        %v1175 = vadd.f32 %v357, %v1174
        %v1176 = vpop.f32.mrb[0].mxu0
        %v1177 = vpop.f32.mrb[0].mxu0
        %v1178 = vadd.f32 %v357, %v1177
        %v1179 = vpop.f32.mrb[0].mxu0
        %1180 = vmatprep.mubr.bf16.mxu0 0
        %1181 = vmatmul.mubr.bf16.gmra.mrb[0].mxu0 %v755
        %v1182 = vpop.f32.mrb[0].mxu0
        %v1183 = vadd.f32 %v357, %v1182
        %v1184 = vpop.f32.mrb[0].mxu0
        %v1185 = vpop.f32.mrb[0].mxu0
        %v1186 = vadd.f32 %v357, %v1185
        %v1187 = vpop.f32.mrb[0].mxu0
        %1188 = vdwg.mxu0
        %v1189 = vmax.f32 %v799, 0.0
        %v1190 = vmax.f32 %v802, 0.0
        %v1191 = vmax.f32 %v807, 0.0
        %v1192 = vmax.f32 %v810, 0.0
        %v1193 = vmax.f32 %v815, 0.0
        %v1194 = vmax.f32 %v818, 0.0
        %v1195 = vmax.f32 %v823, 0.0
        %v1196 = vmax.f32 %v826, 0.0
        %v1197 = vmax.f32 %v831, 0.0
        %v1198 = vmax.f32 %v834, 0.0
        %v1199 = vmax.f32 %v839, 0.0
        %v1200 = vmax.f32 %v842, 0.0
        %v1201 = vmax.f32 %v847, 0.0
        %v1202 = vmax.f32 %v850, 0.0
        %v1203 = vmax.f32 %v855, 0.0
        %v1204 = vmax.f32 %v858, 0.0
        %v1205 = vmax.f32 %v863, 0.0
        %v1206 = vmax.f32 %v866, 0.0
        %v1207 = vmax.f32 %v871, 0.0
        %v1208 = vmax.f32 %v874, 0.0
        %v1209 = vmax.f32 %v879, 0.0
        %v1210 = vmax.f32 %v882, 0.0
        %v1211 = vmax.f32 %v887, 0.0
        %v1212 = vmax.f32 %v890, 0.0
        %v1213 = vmax.f32 %v895, 0.0
        %v1214 = vmax.f32 %v898, 0.0
        %v1215 = vmax.f32 %v903, 0.0
        %v1216 = vmax.f32 %v906, 0.0
        %v1217 = vmax.f32 %v911, 0.0
        %v1218 = vmax.f32 %v914, 0.0
        %v1219 = vmax.f32 %v919, 0.0
        %v1220 = vmax.f32 %v922, 0.0
        %v1221 = vmax.f32 %v927, 0.0
        %v1222 = vmax.f32 %v930, 0.0
        %v1223 = vmax.f32 %v935, 0.0
        %v1224 = vmax.f32 %v938, 0.0
        %v1225 = vmax.f32 %v943, 0.0
        %v1226 = vmax.f32 %v946, 0.0
        %v1227 = vmax.f32 %v951, 0.0
        %v1228 = vmax.f32 %v954, 0.0
        %v1229 = vmax.f32 %v959, 0.0
        %v1230 = vmax.f32 %v962, 0.0
        %v1231 = vmax.f32 %v967, 0.0
        %v1232 = vmax.f32 %v970, 0.0
        %v1233 = vmax.f32 %v975, 0.0
        %v1234 = vmax.f32 %v978, 0.0
        %v1235 = vmax.f32 %v983, 0.0
        %v1236 = vmax.f32 %v986, 0.0
        %v1237 = vmax.f32 %v991, 0.0
        %v1238 = vmax.f32 %v994, 0.0
        %v1239 = vmax.f32 %v999, 0.0
        %v1240 = vmax.f32 %v1002, 0.0
        %v1241 = vmax.f32 %v1007, 0.0
        %v1242 = vmax.f32 %v1010, 0.0
        %v1243 = vmax.f32 %v1015, 0.0
        %v1244 = vmax.f32 %v1018, 0.0
        %v1245 = vmax.f32 %v1023, 0.0
        %v1246 = vmax.f32 %v1026, 0.0
        %v1247 = vmax.f32 %v1031, 0.0
        %v1248 = vmax.f32 %v1034, 0.0
        %v1249 = vmax.f32 %v1039, 0.0
        %v1250 = vmax.f32 %v1042, 0.0
        %v1251 = vmax.f32 %v1047, 0.0
        %v1252 = vmax.f32 %v1050, 0.0
        %v1253 = vmax.f32 %v1055, 0.0
        %v1254 = vmax.f32 %v1058, 0.0
        %v1255 = vmax.f32 %v1063, 0.0
        %v1256 = vmax.f32 %v1066, 0.0
        %v1257 = vmax.f32 %v1071, 0.0
        %v1258 = vmax.f32 %v1074, 0.0
        %v1259 = vmax.f32 %v1079, 0.0
        %v1260 = vmax.f32 %v1082, 0.0
        %v1261 = vmax.f32 %v1087, 0.0
        %v1262 = vmax.f32 %v1090, 0.0
        %v1263 = vmax.f32 %v1095, 0.0
        %v1264 = vmax.f32 %v1098, 0.0
        %v1265 = vmax.f32 %v1103, 0.0
        %v1266 = vmax.f32 %v1106, 0.0
        %v1267 = vmax.f32 %v1111, 0.0
        %v1268 = vmax.f32 %v1114, 0.0
        %v1269 = vmax.f32 %v1119, 0.0
        %v1270 = vmax.f32 %v1122, 0.0
        %v1271 = vmax.f32 %v1127, 0.0
        %v1272 = vmax.f32 %v1130, 0.0
        %v1273 = vmax.f32 %v1135, 0.0
        %v1274 = vmax.f32 %v1138, 0.0
        %v1275 = vmax.f32 %v1143, 0.0
        %v1276 = vmax.f32 %v1146, 0.0
        %v1277 = vmax.f32 %v1151, 0.0
        %v1278 = vmax.f32 %v1154, 0.0
        %v1279 = vmax.f32 %v1159, 0.0
        %v1280 = vmax.f32 %v1162, 0.0
        %v1281 = vmax.f32 %v1167, 0.0
        %v1282 = vmax.f32 %v1170, 0.0
        %v1283 = vmax.f32 %v1175, 0.0
        %v1284 = vmax.f32 %v1178, 0.0
        %v1285 = vmax.f32 %v1183, 0.0
        %v1286 = vmax.f32 %v1186, 0.0
        %v1385 = vcombine.high %v1189, %v1189
        %v1386 = vcombine.high %v1190, %v1190
        %v1387 = vcombine.high %v1191, %v1191
        %v1388 = vcombine.high %v1192, %v1192
        %v1389 = vcombine.high %v1193, %v1193
        %v1390 = vcombine.high %v1194, %v1194
        %v1391 = vcombine.high %v1195, %v1195
        %v1392 = vcombine.high %v1196, %v1196
        %v1393 = vcombine.high %v1197, %v1197
        %v1394 = vcombine.high %v1198, %v1198
        %v1395 = vcombine.high %v1199, %v1199
        %v1396 = vcombine.high %v1200, %v1200
        %v1397 = vcombine.high %v1201, %v1201
        %v1398 = vcombine.high %v1202, %v1202
        %v1399 = vcombine.high %v1203, %v1203
        %v1400 = vcombine.high %v1204, %v1204
        %v1401 = vcombine.high %v1205, %v1205
        %v1402 = vcombine.high %v1206, %v1206
        %v1403 = vcombine.high %v1207, %v1207
        %v1404 = vcombine.high %v1208, %v1208
        %v1405 = vcombine.high %v1209, %v1209
        %v1406 = vcombine.high %v1210, %v1210
        %v1407 = vcombine.high %v1211, %v1211
        %v1408 = vcombine.high %v1212, %v1212
        %v1409 = vcombine.high %v1213, %v1213
        %v1410 = vcombine.high %v1214, %v1214
        %v1411 = vcombine.high %v1215, %v1215
        %v1412 = vcombine.high %v1216, %v1216
        %v1413 = vcombine.high %v1217, %v1217
        %v1414 = vcombine.high %v1218, %v1218
        %v1415 = vcombine.high %v1219, %v1219
        %v1416 = vcombine.high %v1220, %v1220
        %v1417 = vcombine.high %v1221, %v1221
        %v1418 = vcombine.high %v1222, %v1222
        %v1419 = vcombine.high %v1223, %v1223
        %v1420 = vcombine.high %v1224, %v1224
        %v1421 = vcombine.high %v1225, %v1225
        %v1422 = vcombine.high %v1226, %v1226
        %v1423 = vcombine.high %v1227, %v1227
        %v1424 = vcombine.high %v1228, %v1228
        %v1425 = vcombine.high %v1229, %v1229
        %v1426 = vcombine.high %v1230, %v1230
        %v1427 = vcombine.high %v1231, %v1231
        %v1428 = vcombine.high %v1232, %v1232
        %v1429 = vcombine.high %v1233, %v1233
        %v1430 = vcombine.high %v1234, %v1234
        %v1431 = vcombine.high %v1235, %v1235
        %v1432 = vcombine.high %v1236, %v1236
        %v1433 = vcombine.high %v1237, %v1237
        %v1434 = vcombine.high %v1238, %v1238
        %v1435 = vcombine.high %v1239, %v1239
        %v1436 = vcombine.high %v1240, %v1240
        %v1437 = vcombine.high %v1241, %v1241
        %v1438 = vcombine.high %v1242, %v1242
        %v1439 = vcombine.high %v1243, %v1243
        %v1440 = vcombine.high %v1244, %v1244
        %v1441 = vcombine.high %v1245, %v1245
        %v1442 = vcombine.high %v1246, %v1246
        %v1443 = vcombine.high %v1247, %v1247
        %v1444 = vcombine.high %v1248, %v1248
        %v1445 = vcombine.high %v1249, %v1249
        %v1446 = vcombine.high %v1250, %v1250
        %v1447 = vcombine.high %v1251, %v1251
        %v1448 = vcombine.high %v1252, %v1252
        %v1449 = vcombine.high %v1253, %v1253
        %v1450 = vcombine.high %v1254, %v1254
        %v1451 = vcombine.high %v1255, %v1255
        %v1452 = vcombine.high %v1256, %v1256
        %v1453 = vcombine.high %v1257, %v1257
        %v1454 = vcombine.high %v1258, %v1258
        %v1455 = vcombine.high %v1259, %v1259
        %v1456 = vcombine.high %v1260, %v1260
        %v1457 = vcombine.high %v1261, %v1261
        %v1458 = vcombine.high %v1262, %v1262
        %v1459 = vcombine.high %v1263, %v1263
        %v1460 = vcombine.high %v1264, %v1264
        %v1461 = vcombine.high %v1265, %v1265
        %v1462 = vcombine.high %v1266, %v1266
        %v1463 = vcombine.high %v1267, %v1267
        %v1464 = vcombine.high %v1268, %v1268
        %v1465 = vcombine.high %v1269, %v1269
        %v1466 = vcombine.high %v1270, %v1270
        %v1467 = vcombine.high %v1271, %v1271
        %v1468 = vcombine.high %v1272, %v1272
        %v1469 = vcombine.high %v1273, %v1273
        %v1470 = vcombine.high %v1274, %v1274
        %v1471 = vcombine.high %v1275, %v1275
        %v1472 = vcombine.high %v1276, %v1276
        %v1473 = vcombine.high %v1277, %v1277
        %v1474 = vcombine.high %v1278, %v1278
        %v1475 = vcombine.high %v1279, %v1279
        %v1476 = vcombine.high %v1280, %v1280
        %v1477 = vcombine.high %v1281, %v1281
        %v1478 = vcombine.high %v1282, %v1282
        %v1479 = vcombine.high %v1283, %v1283
        %v1480 = vcombine.high %v1284, %v1284
        %v1481 = vcombine.high %v1285, %v1285
        %v1482 = vcombine.high %v1286, %v1286
        %v1581 = vmax.f32 %v1189, %v1388
        %v1582 = vmax.f32 %v1385, %v1193
        %v1583 = vmax.f32 %v1190, %v1389
        %v1584 = vmax.f32 %v1386, %v1194
        %v1585 = vmax.f32 %v1191, %v1390
        %v1586 = vmax.f32 %v1387, %v1195
        %v1587 = vmax.f32 %v1192, %v1391
        %v1588 = vmax.f32 %v1196, %v1395
        %v1589 = vmax.f32 %v1392, %v1200
        %v1590 = vmax.f32 %v1197, %v1396
        %v1591 = vmax.f32 %v1393, %v1201
        %v1592 = vmax.f32 %v1198, %v1397
        %v1593 = vmax.f32 %v1394, %v1202
        %v1594 = vmax.f32 %v1199, %v1398
        %v1595 = vmax.f32 %v1203, %v1402
        %v1596 = vmax.f32 %v1399, %v1207
        %v1597 = vmax.f32 %v1204, %v1403
        %v1598 = vmax.f32 %v1400, %v1208
        %v1599 = vmax.f32 %v1205, %v1404
        %v1600 = vmax.f32 %v1401, %v1209
        %v1601 = vmax.f32 %v1206, %v1405
        %v1602 = vmax.f32 %v1210, %v1409
        %v1603 = vmax.f32 %v1406, %v1214
        %v1604 = vmax.f32 %v1211, %v1410
        %v1605 = vmax.f32 %v1407, %v1215
        %v1606 = vmax.f32 %v1212, %v1411
        %v1607 = vmax.f32 %v1408, %v1216
        %v1608 = vmax.f32 %v1213, %v1412
        %v1609 = vmax.f32 %v1217, %v1416
        %v1610 = vmax.f32 %v1413, %v1221
        %v1611 = vmax.f32 %v1218, %v1417
        %v1612 = vmax.f32 %v1414, %v1222
        %v1613 = vmax.f32 %v1219, %v1418
        %v1614 = vmax.f32 %v1415, %v1223
        %v1615 = vmax.f32 %v1220, %v1419
        %v1616 = vmax.f32 %v1224, %v1423
        %v1617 = vmax.f32 %v1420, %v1228
        %v1618 = vmax.f32 %v1225, %v1424
        %v1619 = vmax.f32 %v1421, %v1229
        %v1620 = vmax.f32 %v1226, %v1425
        %v1621 = vmax.f32 %v1422, %v1230
        %v1622 = vmax.f32 %v1227, %v1426
        %v1623 = vmax.f32 %v1231, %v1430
        %v1624 = vmax.f32 %v1427, %v1235
        %v1625 = vmax.f32 %v1232, %v1431
        %v1626 = vmax.f32 %v1428, %v1236
        %v1627 = vmax.f32 %v1233, %v1432
        %v1628 = vmax.f32 %v1429, %v1237
        %v1629 = vmax.f32 %v1234, %v1433
        %v1630 = vmax.f32 %v1238, %v1437
        %v1631 = vmax.f32 %v1434, %v1242
        %v1632 = vmax.f32 %v1239, %v1438
        %v1633 = vmax.f32 %v1435, %v1243
        %v1634 = vmax.f32 %v1240, %v1439
        %v1635 = vmax.f32 %v1436, %v1244
        %v1636 = vmax.f32 %v1241, %v1440
        %v1637 = vmax.f32 %v1245, %v1444
        %v1638 = vmax.f32 %v1441, %v1249
        %v1639 = vmax.f32 %v1246, %v1445
        %v1640 = vmax.f32 %v1442, %v1250
        %v1641 = vmax.f32 %v1247, %v1446
        %v1642 = vmax.f32 %v1443, %v1251
        %v1643 = vmax.f32 %v1248, %v1447
        %v1644 = vmax.f32 %v1252, %v1451
        %v1645 = vmax.f32 %v1448, %v1256
        %v1646 = vmax.f32 %v1253, %v1452
        %v1647 = vmax.f32 %v1449, %v1257
        %v1648 = vmax.f32 %v1254, %v1453
        %v1649 = vmax.f32 %v1450, %v1258
        %v1650 = vmax.f32 %v1255, %v1454
        %v1651 = vmax.f32 %v1259, %v1458
        %v1652 = vmax.f32 %v1455, %v1263
        %v1653 = vmax.f32 %v1260, %v1459
        %v1654 = vmax.f32 %v1456, %v1264
        %v1655 = vmax.f32 %v1261, %v1460
        %v1656 = vmax.f32 %v1457, %v1265
        %v1657 = vmax.f32 %v1262, %v1461
        %v1658 = vmax.f32 %v1266, %v1465
        %v1659 = vmax.f32 %v1462, %v1270
        %v1660 = vmax.f32 %v1267, %v1466
        %v1661 = vmax.f32 %v1463, %v1271
        %v1662 = vmax.f32 %v1268, %v1467
        %v1663 = vmax.f32 %v1464, %v1272
        %v1664 = vmax.f32 %v1269, %v1468
        %v1665 = vmax.f32 %v1273, %v1472
        %v1666 = vmax.f32 %v1469, %v1277
        %v1667 = vmax.f32 %v1274, %v1473
        %v1668 = vmax.f32 %v1470, %v1278
        %v1669 = vmax.f32 %v1275, %v1474
        %v1670 = vmax.f32 %v1471, %v1279
        %v1671 = vmax.f32 %v1276, %v1475
        %v1672 = vmax.f32 %v1280, %v1479
        %v1673 = vmax.f32 %v1476, %v1284
        %v1674 = vmax.f32 %v1281, %v1480
        %v1675 = vmax.f32 %v1477, %v1285
        %v1676 = vmax.f32 %v1282, %v1481
        %v1677 = vmax.f32 %v1478, %v1286
        %v1678 = vmax.f32 %v1283, %v1482
        %v1778 = vunpack.c.l.s4 1983009808
        %v1779 = vunpack.c.0.s8 %v1778
        %v1780 = vlaneseq
        %v1781 = vshrl.u32 %v1780, 7
        %v1782 = vsub.s32 %v1779, %v1781
        %v1783 = vrot.slane %v1581, %v1782
        %v1784 = vcombine.high %v1783, %v1783
        %v1786 = vunpack.c.l.s4 1983009808
        %v1787 = vunpack.c.0.s8 %v1786
        %v1788 = vlaneseq
        %v1789 = vshrl.u32 %v1788, 7
        %v1790 = vsub.s32 %v1787, %v1789
        %v1791 = vrot.slane %v1582, %v1790
        %v1792 = vcombine.high %v1791, %v1791
        %v1794 = vunpack.c.l.s4 1983009808
        %v1795 = vunpack.c.0.s8 %v1794
        %v1796 = vlaneseq
        %v1797 = vshrl.u32 %v1796, 7
        %v1798 = vsub.s32 %v1795, %v1797
        %v1799 = vrot.slane %v1583, %v1798
        %v1800 = vcombine.high %v1799, %v1799
        %v1802 = vunpack.c.l.s4 1983009808
        %v1803 = vunpack.c.0.s8 %v1802
        %v1804 = vlaneseq
        %v1805 = vshrl.u32 %v1804, 7
        %v1806 = vsub.s32 %v1803, %v1805
        %v1807 = vrot.slane %v1584, %v1806
        %v1808 = vcombine.high %v1807, %v1807
        %v1810 = vunpack.c.l.s4 1983009808
        %v1811 = vunpack.c.0.s8 %v1810
        %v1812 = vlaneseq
        %v1813 = vshrl.u32 %v1812, 7
        %v1814 = vsub.s32 %v1811, %v1813
        %v1815 = vrot.slane %v1585, %v1814
        %v1816 = vcombine.high %v1815, %v1815
        %v1818 = vunpack.c.l.s4 1983009808
        %v1819 = vunpack.c.0.s8 %v1818
        %v1820 = vlaneseq
        %v1821 = vshrl.u32 %v1820, 7
        %v1822 = vsub.s32 %v1819, %v1821
        %v1823 = vrot.slane %v1586, %v1822
        %v1824 = vcombine.high %v1823, %v1823
        %v1826 = vunpack.c.l.s4 1983009808
        %v1827 = vunpack.c.0.s8 %v1826
        %v1828 = vlaneseq
        %v1829 = vshrl.u32 %v1828, 7
        %v1830 = vsub.s32 %v1827, %v1829
        %v1831 = vrot.slane %v1587, %v1830
        %v1832 = vcombine.high %v1831, %v1831
        %v1834 = vunpack.c.l.s4 1983009808
        %v1835 = vunpack.c.0.s8 %v1834
        %v1836 = vlaneseq
        %v1837 = vshrl.u32 %v1836, 7
        %v1838 = vsub.s32 %v1835, %v1837
        %v1839 = vrot.slane %v1588, %v1838
        %v1840 = vcombine.high %v1839, %v1839
        %v1842 = vunpack.c.l.s4 1983009808
        %v1843 = vunpack.c.0.s8 %v1842
        %v1844 = vlaneseq
        %v1845 = vshrl.u32 %v1844, 7
        %v1846 = vsub.s32 %v1843, %v1845
        %v1847 = vrot.slane %v1589, %v1846
        %v1848 = vcombine.high %v1847, %v1847
        %v1850 = vunpack.c.l.s4 1983009808
        %v1851 = vunpack.c.0.s8 %v1850
        %v1852 = vlaneseq
        %v1853 = vshrl.u32 %v1852, 7
        %v1854 = vsub.s32 %v1851, %v1853
        %v1855 = vrot.slane %v1590, %v1854
        %v1856 = vcombine.high %v1855, %v1855
        %v1858 = vunpack.c.l.s4 1983009808
        %v1859 = vunpack.c.0.s8 %v1858
        %v1860 = vlaneseq
        %v1861 = vshrl.u32 %v1860, 7
        %v1862 = vsub.s32 %v1859, %v1861
        %v1863 = vrot.slane %v1591, %v1862
        %v1864 = vcombine.high %v1863, %v1863
        %v1866 = vunpack.c.l.s4 1983009808
        %v1867 = vunpack.c.0.s8 %v1866
        %v1868 = vlaneseq
        %v1869 = vshrl.u32 %v1868, 7
        %v1870 = vsub.s32 %v1867, %v1869
        %v1871 = vrot.slane %v1592, %v1870
        %v1872 = vcombine.high %v1871, %v1871
        %v1874 = vunpack.c.l.s4 1983009808
        %v1875 = vunpack.c.0.s8 %v1874
        %v1876 = vlaneseq
        %v1877 = vshrl.u32 %v1876, 7
        %v1878 = vsub.s32 %v1875, %v1877
        %v1879 = vrot.slane %v1593, %v1878
        %v1880 = vcombine.high %v1879, %v1879
        %v1882 = vunpack.c.l.s4 1983009808
        %v1883 = vunpack.c.0.s8 %v1882
        %v1884 = vlaneseq
        %v1885 = vshrl.u32 %v1884, 7
        %v1886 = vsub.s32 %v1883, %v1885
        %v1887 = vrot.slane %v1594, %v1886
        %v1888 = vcombine.high %v1887, %v1887
        %v1890 = vunpack.c.l.s4 1983009808
        %v1891 = vunpack.c.0.s8 %v1890
        %v1892 = vlaneseq
        %v1893 = vshrl.u32 %v1892, 7
        %v1894 = vsub.s32 %v1891, %v1893
        %v1895 = vrot.slane %v1595, %v1894
        %v1896 = vcombine.high %v1895, %v1895
        %v1898 = vunpack.c.l.s4 1983009808
        %v1899 = vunpack.c.0.s8 %v1898
        %v1900 = vlaneseq
        %v1901 = vshrl.u32 %v1900, 7
        %v1902 = vsub.s32 %v1899, %v1901
        %v1903 = vrot.slane %v1596, %v1902
        %v1904 = vcombine.high %v1903, %v1903
        %v1906 = vunpack.c.l.s4 1983009808
        %v1907 = vunpack.c.0.s8 %v1906
        %v1908 = vlaneseq
        %v1909 = vshrl.u32 %v1908, 7
        %v1910 = vsub.s32 %v1907, %v1909
        %v1911 = vrot.slane %v1597, %v1910
        %v1912 = vcombine.high %v1911, %v1911
        %v1914 = vunpack.c.l.s4 1983009808
        %v1915 = vunpack.c.0.s8 %v1914
        %v1916 = vlaneseq
        %v1917 = vshrl.u32 %v1916, 7
        %v1918 = vsub.s32 %v1915, %v1917
        %v1919 = vrot.slane %v1598, %v1918
        %v1920 = vcombine.high %v1919, %v1919
        %v1922 = vunpack.c.l.s4 1983009808
        %v1923 = vunpack.c.0.s8 %v1922
        %v1924 = vlaneseq
        %v1925 = vshrl.u32 %v1924, 7
        %v1926 = vsub.s32 %v1923, %v1925
        %v1927 = vrot.slane %v1599, %v1926
        %v1928 = vcombine.high %v1927, %v1927
        %v1930 = vunpack.c.l.s4 1983009808
        %v1931 = vunpack.c.0.s8 %v1930
        %v1932 = vlaneseq
        %v1933 = vshrl.u32 %v1932, 7
        %v1934 = vsub.s32 %v1931, %v1933
        %v1935 = vrot.slane %v1600, %v1934
        %v1936 = vcombine.high %v1935, %v1935
        %v1938 = vunpack.c.l.s4 1983009808
        %v1939 = vunpack.c.0.s8 %v1938
        %v1940 = vlaneseq
        %v1941 = vshrl.u32 %v1940, 7
        %v1942 = vsub.s32 %v1939, %v1941
        %v1943 = vrot.slane %v1601, %v1942
        %v1944 = vcombine.high %v1943, %v1943
        %v1946 = vunpack.c.l.s4 1983009808
        %v1947 = vunpack.c.0.s8 %v1946
        %v1948 = vlaneseq
        %v1949 = vshrl.u32 %v1948, 7
        %v1950 = vsub.s32 %v1947, %v1949
        %v1951 = vrot.slane %v1602, %v1950
        %v1952 = vcombine.high %v1951, %v1951
        %v1954 = vunpack.c.l.s4 1983009808
        %v1955 = vunpack.c.0.s8 %v1954
        %v1956 = vlaneseq
        %v1957 = vshrl.u32 %v1956, 7
        %v1958 = vsub.s32 %v1955, %v1957
        %v1959 = vrot.slane %v1603, %v1958
        %v1960 = vcombine.high %v1959, %v1959
        %v1962 = vunpack.c.l.s4 1983009808
        %v1963 = vunpack.c.0.s8 %v1962
        %v1964 = vlaneseq
        %v1965 = vshrl.u32 %v1964, 7
        %v1966 = vsub.s32 %v1963, %v1965
        %v1967 = vrot.slane %v1604, %v1966
        %v1968 = vcombine.high %v1967, %v1967
        %v1970 = vunpack.c.l.s4 1983009808
        %v1971 = vunpack.c.0.s8 %v1970
        %v1972 = vlaneseq
        %v1973 = vshrl.u32 %v1972, 7
        %v1974 = vsub.s32 %v1971, %v1973
        %v1975 = vrot.slane %v1605, %v1974
        %v1976 = vcombine.high %v1975, %v1975
        %v1978 = vunpack.c.l.s4 1983009808
        %v1979 = vunpack.c.0.s8 %v1978
        %v1980 = vlaneseq
        %v1981 = vshrl.u32 %v1980, 7
        %v1982 = vsub.s32 %v1979, %v1981
        %v1983 = vrot.slane %v1606, %v1982
        %v1984 = vcombine.high %v1983, %v1983
        %v1986 = vunpack.c.l.s4 1983009808
        %v1987 = vunpack.c.0.s8 %v1986
        %v1988 = vlaneseq
        %v1989 = vshrl.u32 %v1988, 7
        %v1990 = vsub.s32 %v1987, %v1989
        %v1991 = vrot.slane %v1607, %v1990
        %v1992 = vcombine.high %v1991, %v1991
        %v1994 = vunpack.c.l.s4 1983009808
        %v1995 = vunpack.c.0.s8 %v1994
        %v1996 = vlaneseq
        %v1997 = vshrl.u32 %v1996, 7
        %v1998 = vsub.s32 %v1995, %v1997
        %v1999 = vrot.slane %v1608, %v1998
        %v2000 = vcombine.high %v1999, %v1999
        %v2002 = vunpack.c.l.s4 1983009808
        %v2003 = vunpack.c.0.s8 %v2002
        %v2004 = vlaneseq
        %v2005 = vshrl.u32 %v2004, 7
        %v2006 = vsub.s32 %v2003, %v2005
        %v2007 = vrot.slane %v1609, %v2006
        %v2008 = vcombine.high %v2007, %v2007
        %v2010 = vunpack.c.l.s4 1983009808
        %v2011 = vunpack.c.0.s8 %v2010
        %v2012 = vlaneseq
        %v2013 = vshrl.u32 %v2012, 7
        %v2014 = vsub.s32 %v2011, %v2013
        %v2015 = vrot.slane %v1610, %v2014
        %v2016 = vcombine.high %v2015, %v2015
        %v2018 = vunpack.c.l.s4 1983009808
        %v2019 = vunpack.c.0.s8 %v2018
        %v2020 = vlaneseq
        %v2021 = vshrl.u32 %v2020, 7
        %v2022 = vsub.s32 %v2019, %v2021
        %v2023 = vrot.slane %v1611, %v2022
        %v2024 = vcombine.high %v2023, %v2023
        %v2026 = vunpack.c.l.s4 1983009808
        %v2027 = vunpack.c.0.s8 %v2026
        %v2028 = vlaneseq
        %v2029 = vshrl.u32 %v2028, 7
        %v2030 = vsub.s32 %v2027, %v2029
        %v2031 = vrot.slane %v1612, %v2030
        %v2032 = vcombine.high %v2031, %v2031
        %v2034 = vunpack.c.l.s4 1983009808
        %v2035 = vunpack.c.0.s8 %v2034
        %v2036 = vlaneseq
        %v2037 = vshrl.u32 %v2036, 7
        %v2038 = vsub.s32 %v2035, %v2037
        %v2039 = vrot.slane %v1613, %v2038
        %v2040 = vcombine.high %v2039, %v2039
        %v2042 = vunpack.c.l.s4 1983009808
        %v2043 = vunpack.c.0.s8 %v2042
        %v2044 = vlaneseq
        %v2045 = vshrl.u32 %v2044, 7
        %v2046 = vsub.s32 %v2043, %v2045
        %v2047 = vrot.slane %v1614, %v2046
        %v2048 = vcombine.high %v2047, %v2047
        %v2050 = vunpack.c.l.s4 1983009808
        %v2051 = vunpack.c.0.s8 %v2050
        %v2052 = vlaneseq
        %v2053 = vshrl.u32 %v2052, 7
        %v2054 = vsub.s32 %v2051, %v2053
        %v2055 = vrot.slane %v1615, %v2054
        %v2056 = vcombine.high %v2055, %v2055
        %v2058 = vunpack.c.l.s4 1983009808
        %v2059 = vunpack.c.0.s8 %v2058
        %v2060 = vlaneseq
        %v2061 = vshrl.u32 %v2060, 7
        %v2062 = vsub.s32 %v2059, %v2061
        %v2063 = vrot.slane %v1616, %v2062
        %v2064 = vcombine.high %v2063, %v2063
        %v2066 = vunpack.c.l.s4 1983009808
        %v2067 = vunpack.c.0.s8 %v2066
        %v2068 = vlaneseq
        %v2069 = vshrl.u32 %v2068, 7
        %v2070 = vsub.s32 %v2067, %v2069
        %v2071 = vrot.slane %v1617, %v2070
        %v2072 = vcombine.high %v2071, %v2071
        %v2074 = vunpack.c.l.s4 1983009808
        %v2075 = vunpack.c.0.s8 %v2074
        %v2076 = vlaneseq
        %v2077 = vshrl.u32 %v2076, 7
        %v2078 = vsub.s32 %v2075, %v2077
        %v2079 = vrot.slane %v1618, %v2078
        %v2080 = vcombine.high %v2079, %v2079
        %v2082 = vunpack.c.l.s4 1983009808
        %v2083 = vunpack.c.0.s8 %v2082
        %v2084 = vlaneseq
        %v2085 = vshrl.u32 %v2084, 7
        %v2086 = vsub.s32 %v2083, %v2085
        %v2087 = vrot.slane %v1619, %v2086
        %v2088 = vcombine.high %v2087, %v2087
        %v2090 = vunpack.c.l.s4 1983009808
        %v2091 = vunpack.c.0.s8 %v2090
        %v2092 = vlaneseq
        %v2093 = vshrl.u32 %v2092, 7
        %v2094 = vsub.s32 %v2091, %v2093
        %v2095 = vrot.slane %v1620, %v2094
        %v2096 = vcombine.high %v2095, %v2095
        %v2098 = vunpack.c.l.s4 1983009808
        %v2099 = vunpack.c.0.s8 %v2098
        %v2100 = vlaneseq
        %v2101 = vshrl.u32 %v2100, 7
        %v2102 = vsub.s32 %v2099, %v2101
        %v2103 = vrot.slane %v1621, %v2102
        %v2104 = vcombine.high %v2103, %v2103
        %v2106 = vunpack.c.l.s4 1983009808
        %v2107 = vunpack.c.0.s8 %v2106
        %v2108 = vlaneseq
        %v2109 = vshrl.u32 %v2108, 7
        %v2110 = vsub.s32 %v2107, %v2109
        %v2111 = vrot.slane %v1622, %v2110
        %v2112 = vcombine.high %v2111, %v2111
        %v2114 = vunpack.c.l.s4 1983009808
        %v2115 = vunpack.c.0.s8 %v2114
        %v2116 = vlaneseq
        %v2117 = vshrl.u32 %v2116, 7
        %v2118 = vsub.s32 %v2115, %v2117
        %v2119 = vrot.slane %v1623, %v2118
        %v2120 = vcombine.high %v2119, %v2119
        %v2122 = vunpack.c.l.s4 1983009808
        %v2123 = vunpack.c.0.s8 %v2122
        %v2124 = vlaneseq
        %v2125 = vshrl.u32 %v2124, 7
        %v2126 = vsub.s32 %v2123, %v2125
        %v2127 = vrot.slane %v1624, %v2126
        %v2128 = vcombine.high %v2127, %v2127
        %v2130 = vunpack.c.l.s4 1983009808
        %v2131 = vunpack.c.0.s8 %v2130
        %v2132 = vlaneseq
        %v2133 = vshrl.u32 %v2132, 7
        %v2134 = vsub.s32 %v2131, %v2133
        %v2135 = vrot.slane %v1625, %v2134
        %v2136 = vcombine.high %v2135, %v2135
        %v2138 = vunpack.c.l.s4 1983009808
        %v2139 = vunpack.c.0.s8 %v2138
        %v2140 = vlaneseq
        %v2141 = vshrl.u32 %v2140, 7
        %v2142 = vsub.s32 %v2139, %v2141
        %v2143 = vrot.slane %v1626, %v2142
        %v2144 = vcombine.high %v2143, %v2143
        %v2146 = vunpack.c.l.s4 1983009808
        %v2147 = vunpack.c.0.s8 %v2146
        %v2148 = vlaneseq
        %v2149 = vshrl.u32 %v2148, 7
        %v2150 = vsub.s32 %v2147, %v2149
        %v2151 = vrot.slane %v1627, %v2150
        %v2152 = vcombine.high %v2151, %v2151
        %v2154 = vunpack.c.l.s4 1983009808
        %v2155 = vunpack.c.0.s8 %v2154
        %v2156 = vlaneseq
        %v2157 = vshrl.u32 %v2156, 7
        %v2158 = vsub.s32 %v2155, %v2157
        %v2159 = vrot.slane %v1628, %v2158
        %v2160 = vcombine.high %v2159, %v2159
        %v2162 = vunpack.c.l.s4 1983009808
        %v2163 = vunpack.c.0.s8 %v2162
        %v2164 = vlaneseq
        %v2165 = vshrl.u32 %v2164, 7
        %v2166 = vsub.s32 %v2163, %v2165
        %v2167 = vrot.slane %v1629, %v2166
        %v2168 = vcombine.high %v2167, %v2167
        %v2170 = vunpack.c.l.s4 1983009808
        %v2171 = vunpack.c.0.s8 %v2170
        %v2172 = vlaneseq
        %v2173 = vshrl.u32 %v2172, 7
        %v2174 = vsub.s32 %v2171, %v2173
        %v2175 = vrot.slane %v1630, %v2174
        %v2176 = vcombine.high %v2175, %v2175
        %v2178 = vunpack.c.l.s4 1983009808
        %v2179 = vunpack.c.0.s8 %v2178
        %v2180 = vlaneseq
        %v2181 = vshrl.u32 %v2180, 7
        %v2182 = vsub.s32 %v2179, %v2181
        %v2183 = vrot.slane %v1631, %v2182
        %v2184 = vcombine.high %v2183, %v2183
        %v2186 = vunpack.c.l.s4 1983009808
        %v2187 = vunpack.c.0.s8 %v2186
        %v2188 = vlaneseq
        %v2189 = vshrl.u32 %v2188, 7
        %v2190 = vsub.s32 %v2187, %v2189
        %v2191 = vrot.slane %v1632, %v2190
        %v2192 = vcombine.high %v2191, %v2191
        %v2194 = vunpack.c.l.s4 1983009808
        %v2195 = vunpack.c.0.s8 %v2194
        %v2196 = vlaneseq
        %v2197 = vshrl.u32 %v2196, 7
        %v2198 = vsub.s32 %v2195, %v2197
        %v2199 = vrot.slane %v1633, %v2198
        %v2200 = vcombine.high %v2199, %v2199
        %v2202 = vunpack.c.l.s4 1983009808
        %v2203 = vunpack.c.0.s8 %v2202
        %v2204 = vlaneseq
        %v2205 = vshrl.u32 %v2204, 7
        %v2206 = vsub.s32 %v2203, %v2205
        %v2207 = vrot.slane %v1634, %v2206
        %v2208 = vcombine.high %v2207, %v2207
        %v2210 = vunpack.c.l.s4 1983009808
        %v2211 = vunpack.c.0.s8 %v2210
        %v2212 = vlaneseq
        %v2213 = vshrl.u32 %v2212, 7
        %v2214 = vsub.s32 %v2211, %v2213
        %v2215 = vrot.slane %v1635, %v2214
        %v2216 = vcombine.high %v2215, %v2215
        %v2218 = vunpack.c.l.s4 1983009808
        %v2219 = vunpack.c.0.s8 %v2218
        %v2220 = vlaneseq
        %v2221 = vshrl.u32 %v2220, 7
        %v2222 = vsub.s32 %v2219, %v2221
        %v2223 = vrot.slane %v1636, %v2222
        %v2224 = vcombine.high %v2223, %v2223
        %v2226 = vunpack.c.l.s4 1983009808
        %v2227 = vunpack.c.0.s8 %v2226
        %v2228 = vlaneseq
        %v2229 = vshrl.u32 %v2228, 7
        %v2230 = vsub.s32 %v2227, %v2229
        %v2231 = vrot.slane %v1637, %v2230
        %v2232 = vcombine.high %v2231, %v2231
        %v2234 = vunpack.c.l.s4 1983009808
        %v2235 = vunpack.c.0.s8 %v2234
        %v2236 = vlaneseq
        %v2237 = vshrl.u32 %v2236, 7
        %v2238 = vsub.s32 %v2235, %v2237
        %v2239 = vrot.slane %v1638, %v2238
        %v2240 = vcombine.high %v2239, %v2239
        %v2242 = vunpack.c.l.s4 1983009808
        %v2243 = vunpack.c.0.s8 %v2242
        %v2244 = vlaneseq
        %v2245 = vshrl.u32 %v2244, 7
        %v2246 = vsub.s32 %v2243, %v2245
        %v2247 = vrot.slane %v1639, %v2246
        %v2248 = vcombine.high %v2247, %v2247
        %v2250 = vunpack.c.l.s4 1983009808
        %v2251 = vunpack.c.0.s8 %v2250
        %v2252 = vlaneseq
        %v2253 = vshrl.u32 %v2252, 7
        %v2254 = vsub.s32 %v2251, %v2253
        %v2255 = vrot.slane %v1640, %v2254
        %v2256 = vcombine.high %v2255, %v2255
        %v2258 = vunpack.c.l.s4 1983009808
        %v2259 = vunpack.c.0.s8 %v2258
        %v2260 = vlaneseq
        %v2261 = vshrl.u32 %v2260, 7
        %v2262 = vsub.s32 %v2259, %v2261
        %v2263 = vrot.slane %v1641, %v2262
        %v2264 = vcombine.high %v2263, %v2263
        %v2266 = vunpack.c.l.s4 1983009808
        %v2267 = vunpack.c.0.s8 %v2266
        %v2268 = vlaneseq
        %v2269 = vshrl.u32 %v2268, 7
        %v2270 = vsub.s32 %v2267, %v2269
        %v2271 = vrot.slane %v1642, %v2270
        %v2272 = vcombine.high %v2271, %v2271
        %v2274 = vunpack.c.l.s4 1983009808
        %v2275 = vunpack.c.0.s8 %v2274
        %v2276 = vlaneseq
        %v2277 = vshrl.u32 %v2276, 7
        %v2278 = vsub.s32 %v2275, %v2277
        %v2279 = vrot.slane %v1643, %v2278
        %v2280 = vcombine.high %v2279, %v2279
        %v2282 = vunpack.c.l.s4 1983009808
        %v2283 = vunpack.c.0.s8 %v2282
        %v2284 = vlaneseq
        %v2285 = vshrl.u32 %v2284, 7
        %v2286 = vsub.s32 %v2283, %v2285
        %v2287 = vrot.slane %v1644, %v2286
        %v2288 = vcombine.high %v2287, %v2287
        %v2290 = vunpack.c.l.s4 1983009808
        %v2291 = vunpack.c.0.s8 %v2290
        %v2292 = vlaneseq
        %v2293 = vshrl.u32 %v2292, 7
        %v2294 = vsub.s32 %v2291, %v2293
        %v2295 = vrot.slane %v1645, %v2294
        %v2296 = vcombine.high %v2295, %v2295
        %v2298 = vunpack.c.l.s4 1983009808
        %v2299 = vunpack.c.0.s8 %v2298
        %v2300 = vlaneseq
        %v2301 = vshrl.u32 %v2300, 7
        %v2302 = vsub.s32 %v2299, %v2301
        %v2303 = vrot.slane %v1646, %v2302
        %v2304 = vcombine.high %v2303, %v2303
        %v2306 = vunpack.c.l.s4 1983009808
        %v2307 = vunpack.c.0.s8 %v2306
        %v2308 = vlaneseq
        %v2309 = vshrl.u32 %v2308, 7
        %v2310 = vsub.s32 %v2307, %v2309
        %v2311 = vrot.slane %v1647, %v2310
        %v2312 = vcombine.high %v2311, %v2311
        %v2314 = vunpack.c.l.s4 1983009808
        %v2315 = vunpack.c.0.s8 %v2314
        %v2316 = vlaneseq
        %v2317 = vshrl.u32 %v2316, 7
        %v2318 = vsub.s32 %v2315, %v2317
        %v2319 = vrot.slane %v1648, %v2318
        %v2320 = vcombine.high %v2319, %v2319
        %v2322 = vunpack.c.l.s4 1983009808
        %v2323 = vunpack.c.0.s8 %v2322
        %v2324 = vlaneseq
        %v2325 = vshrl.u32 %v2324, 7
        %v2326 = vsub.s32 %v2323, %v2325
        %v2327 = vrot.slane %v1649, %v2326
        %v2328 = vcombine.high %v2327, %v2327
        %v2330 = vunpack.c.l.s4 1983009808
        %v2331 = vunpack.c.0.s8 %v2330
        %v2332 = vlaneseq
        %v2333 = vshrl.u32 %v2332, 7
        %v2334 = vsub.s32 %v2331, %v2333
        %v2335 = vrot.slane %v1650, %v2334
        %v2336 = vcombine.high %v2335, %v2335
        %v2338 = vunpack.c.l.s4 1983009808
        %v2339 = vunpack.c.0.s8 %v2338
        %v2340 = vlaneseq
        %v2341 = vshrl.u32 %v2340, 7
        %v2342 = vsub.s32 %v2339, %v2341
        %v2343 = vrot.slane %v1651, %v2342
        %v2344 = vcombine.high %v2343, %v2343
        %v2346 = vunpack.c.l.s4 1983009808
        %v2347 = vunpack.c.0.s8 %v2346
        %v2348 = vlaneseq
        %v2349 = vshrl.u32 %v2348, 7
        %v2350 = vsub.s32 %v2347, %v2349
        %v2351 = vrot.slane %v1652, %v2350
        %v2352 = vcombine.high %v2351, %v2351
        %v2354 = vunpack.c.l.s4 1983009808
        %v2355 = vunpack.c.0.s8 %v2354
        %v2356 = vlaneseq
        %v2357 = vshrl.u32 %v2356, 7
        %v2358 = vsub.s32 %v2355, %v2357
        %v2359 = vrot.slane %v1653, %v2358
        %v2360 = vcombine.high %v2359, %v2359
        %v2362 = vunpack.c.l.s4 1983009808
        %v2363 = vunpack.c.0.s8 %v2362
        %v2364 = vlaneseq
        %v2365 = vshrl.u32 %v2364, 7
        %v2366 = vsub.s32 %v2363, %v2365
        %v2367 = vrot.slane %v1654, %v2366
        %v2368 = vcombine.high %v2367, %v2367
        %v2370 = vunpack.c.l.s4 1983009808
        %v2371 = vunpack.c.0.s8 %v2370
        %v2372 = vlaneseq
        %v2373 = vshrl.u32 %v2372, 7
        %v2374 = vsub.s32 %v2371, %v2373
        %v2375 = vrot.slane %v1655, %v2374
        %v2376 = vcombine.high %v2375, %v2375
        %v2378 = vunpack.c.l.s4 1983009808
        %v2379 = vunpack.c.0.s8 %v2378
        %v2380 = vlaneseq
        %v2381 = vshrl.u32 %v2380, 7
        %v2382 = vsub.s32 %v2379, %v2381
        %v2383 = vrot.slane %v1656, %v2382
        %v2384 = vcombine.high %v2383, %v2383
        %v2386 = vunpack.c.l.s4 1983009808
        %v2387 = vunpack.c.0.s8 %v2386
        %v2388 = vlaneseq
        %v2389 = vshrl.u32 %v2388, 7
        %v2390 = vsub.s32 %v2387, %v2389
        %v2391 = vrot.slane %v1657, %v2390
        %v2392 = vcombine.high %v2391, %v2391
        %v2394 = vunpack.c.l.s4 1983009808
        %v2395 = vunpack.c.0.s8 %v2394
        %v2396 = vlaneseq
        %v2397 = vshrl.u32 %v2396, 7
        %v2398 = vsub.s32 %v2395, %v2397
        %v2399 = vrot.slane %v1658, %v2398
        %v2400 = vcombine.high %v2399, %v2399
        %v2402 = vunpack.c.l.s4 1983009808
        %v2403 = vunpack.c.0.s8 %v2402
        %v2404 = vlaneseq
        %v2405 = vshrl.u32 %v2404, 7
        %v2406 = vsub.s32 %v2403, %v2405
        %v2407 = vrot.slane %v1659, %v2406
        %v2408 = vcombine.high %v2407, %v2407
        %v2410 = vunpack.c.l.s4 1983009808
        %v2411 = vunpack.c.0.s8 %v2410
        %v2412 = vlaneseq
        %v2413 = vshrl.u32 %v2412, 7
        %v2414 = vsub.s32 %v2411, %v2413
        %v2415 = vrot.slane %v1660, %v2414
        %v2416 = vcombine.high %v2415, %v2415
        %v2418 = vunpack.c.l.s4 1983009808
        %v2419 = vunpack.c.0.s8 %v2418
        %v2420 = vlaneseq
        %v2421 = vshrl.u32 %v2420, 7
        %v2422 = vsub.s32 %v2419, %v2421
        %v2423 = vrot.slane %v1661, %v2422
        %v2424 = vcombine.high %v2423, %v2423
        %v2426 = vunpack.c.l.s4 1983009808
        %v2427 = vunpack.c.0.s8 %v2426
        %v2428 = vlaneseq
        %v2429 = vshrl.u32 %v2428, 7
        %v2430 = vsub.s32 %v2427, %v2429
        %v2431 = vrot.slane %v1662, %v2430
        %v2432 = vcombine.high %v2431, %v2431
        %v2434 = vunpack.c.l.s4 1983009808
        %v2435 = vunpack.c.0.s8 %v2434
        %v2436 = vlaneseq
        %v2437 = vshrl.u32 %v2436, 7
        %v2438 = vsub.s32 %v2435, %v2437
        %v2439 = vrot.slane %v1663, %v2438
        %v2440 = vcombine.high %v2439, %v2439
        %v2442 = vunpack.c.l.s4 1983009808
        %v2443 = vunpack.c.0.s8 %v2442
        %v2444 = vlaneseq
        %v2445 = vshrl.u32 %v2444, 7
        %v2446 = vsub.s32 %v2443, %v2445
        %v2447 = vrot.slane %v1664, %v2446
        %v2448 = vcombine.high %v2447, %v2447
        %v2450 = vunpack.c.l.s4 1983009808
        %v2451 = vunpack.c.0.s8 %v2450
        %v2452 = vlaneseq
        %v2453 = vshrl.u32 %v2452, 7
        %v2454 = vsub.s32 %v2451, %v2453
        %v2455 = vrot.slane %v1665, %v2454
        %v2456 = vcombine.high %v2455, %v2455
        %v2458 = vunpack.c.l.s4 1983009808
        %v2459 = vunpack.c.0.s8 %v2458
        %v2460 = vlaneseq
        %v2461 = vshrl.u32 %v2460, 7
        %v2462 = vsub.s32 %v2459, %v2461
        %v2463 = vrot.slane %v1666, %v2462
        %v2464 = vcombine.high %v2463, %v2463
        %v2466 = vunpack.c.l.s4 1983009808
        %v2467 = vunpack.c.0.s8 %v2466
        %v2468 = vlaneseq
        %v2469 = vshrl.u32 %v2468, 7
        %v2470 = vsub.s32 %v2467, %v2469
        %v2471 = vrot.slane %v1667, %v2470
        %v2472 = vcombine.high %v2471, %v2471
        %v2474 = vunpack.c.l.s4 1983009808
        %v2475 = vunpack.c.0.s8 %v2474
        %v2476 = vlaneseq
        %v2477 = vshrl.u32 %v2476, 7
        %v2478 = vsub.s32 %v2475, %v2477
        %v2479 = vrot.slane %v1668, %v2478
        %v2480 = vcombine.high %v2479, %v2479
        %v2482 = vunpack.c.l.s4 1983009808
        %v2483 = vunpack.c.0.s8 %v2482
        %v2484 = vlaneseq
        %v2485 = vshrl.u32 %v2484, 7
        %v2486 = vsub.s32 %v2483, %v2485
        %v2487 = vrot.slane %v1669, %v2486
        %v2488 = vcombine.high %v2487, %v2487
        %v2490 = vunpack.c.l.s4 1983009808
        %v2491 = vunpack.c.0.s8 %v2490
        %v2492 = vlaneseq
        %v2493 = vshrl.u32 %v2492, 7
        %v2494 = vsub.s32 %v2491, %v2493
        %v2495 = vrot.slane %v1670, %v2494
        %v2496 = vcombine.high %v2495, %v2495
        %v2498 = vunpack.c.l.s4 1983009808
        %v2499 = vunpack.c.0.s8 %v2498
        %v2500 = vlaneseq
        %v2501 = vshrl.u32 %v2500, 7
        %v2502 = vsub.s32 %v2499, %v2501
        %v2503 = vrot.slane %v1671, %v2502
        %v2504 = vcombine.high %v2503, %v2503
        %v2506 = vunpack.c.l.s4 1983009808
        %v2507 = vunpack.c.0.s8 %v2506
        %v2508 = vlaneseq
        %v2509 = vshrl.u32 %v2508, 7
        %v2510 = vsub.s32 %v2507, %v2509
        %v2511 = vrot.slane %v1672, %v2510
        %v2512 = vcombine.high %v2511, %v2511
        %v2514 = vunpack.c.l.s4 1983009808
        %v2515 = vunpack.c.0.s8 %v2514
        %v2516 = vlaneseq
        %v2517 = vshrl.u32 %v2516, 7
        %v2518 = vsub.s32 %v2515, %v2517
        %v2519 = vrot.slane %v1673, %v2518
        %v2520 = vcombine.high %v2519, %v2519
        %v2522 = vunpack.c.l.s4 1983009808
        %v2523 = vunpack.c.0.s8 %v2522
        %v2524 = vlaneseq
        %v2525 = vshrl.u32 %v2524, 7
        %v2526 = vsub.s32 %v2523, %v2525
        %v2527 = vrot.slane %v1674, %v2526
        %v2528 = vcombine.high %v2527, %v2527
        %v2530 = vunpack.c.l.s4 1983009808
        %v2531 = vunpack.c.0.s8 %v2530
        %v2532 = vlaneseq
        %v2533 = vshrl.u32 %v2532, 7
        %v2534 = vsub.s32 %v2531, %v2533
        %v2535 = vrot.slane %v1675, %v2534
        %v2536 = vcombine.high %v2535, %v2535
        %v2538 = vunpack.c.l.s4 1983009808
        %v2539 = vunpack.c.0.s8 %v2538
        %v2540 = vlaneseq
        %v2541 = vshrl.u32 %v2540, 7
        %v2542 = vsub.s32 %v2539, %v2541
        %v2543 = vrot.slane %v1676, %v2542
        %v2544 = vcombine.high %v2543, %v2543
        %v2546 = vunpack.c.l.s4 1983009808
        %v2547 = vunpack.c.0.s8 %v2546
        %v2548 = vlaneseq
        %v2549 = vshrl.u32 %v2548, 7
        %v2550 = vsub.s32 %v2547, %v2549
        %v2551 = vrot.slane %v1677, %v2550
        %v2552 = vcombine.high %v2551, %v2551
        %v2554 = vunpack.c.l.s4 1983009808
        %v2555 = vunpack.c.0.s8 %v2554
        %v2556 = vlaneseq
        %v2557 = vshrl.u32 %v2556, 7
        %v2558 = vsub.s32 %v2555, %v2557
        %v2559 = vrot.slane %v1678, %v2558
        %v2560 = vcombine.high %v2559, %v2559
        %v2757 = vrot.slane %v1783, 7
        %v2758 = vrot.slane %v2757, 2
        %v2759 = vrot.slane %v1784, 7
        %v2760 = vrot.slane %v2759, 2
        %v2761 = vrot.slane %v1791, 7
        %v2762 = vrot.slane %v2761, 2
        %v2763 = vrot.slane %v1792, 7
        %v2764 = vrot.slane %v2763, 2
        %v2765 = vrot.slane %v1799, 7
        %v2766 = vrot.slane %v2765, 2
        %v2767 = vrot.slane %v1800, 7
        %v2768 = vrot.slane %v2767, 2
        %v2769 = vrot.slane %v1807, 7
        %v2770 = vrot.slane %v2769, 2
        %v2771 = vrot.slane %v1808, 7
        %v2772 = vrot.slane %v2771, 2
        %v2773 = vrot.slane %v1815, 7
        %v2774 = vrot.slane %v2773, 2
        %v2775 = vrot.slane %v1816, 7
        %v2776 = vrot.slane %v2775, 2
        %v2777 = vrot.slane %v1823, 7
        %v2778 = vrot.slane %v2777, 2
        %v2779 = vrot.slane %v1824, 7
        %v2780 = vrot.slane %v2779, 2
        %v2781 = vrot.slane %v1831, 7
        %v2782 = vrot.slane %v2781, 2
        %v2783 = vrot.slane %v1832, 7
        %v2784 = vrot.slane %v2783, 2
        %v2785 = vrot.slane %v1839, 7
        %v2786 = vrot.slane %v2785, 2
        %v2787 = vrot.slane %v1840, 7
        %v2788 = vrot.slane %v2787, 2
        %v2789 = vrot.slane %v1847, 7
        %v2790 = vrot.slane %v2789, 2
        %v2791 = vrot.slane %v1848, 7
        %v2792 = vrot.slane %v2791, 2
        %v2793 = vrot.slane %v1855, 7
        %v2794 = vrot.slane %v2793, 2
        %v2795 = vrot.slane %v1856, 7
        %v2796 = vrot.slane %v2795, 2
        %v2797 = vrot.slane %v1863, 7
        %v2798 = vrot.slane %v2797, 2
        %v2799 = vrot.slane %v1864, 7
        %v2800 = vrot.slane %v2799, 2
        %v2801 = vrot.slane %v1871, 7
        %v2802 = vrot.slane %v2801, 2
        %v2803 = vrot.slane %v1872, 7
        %v2804 = vrot.slane %v2803, 2
        %v2805 = vrot.slane %v1879, 7
        %v2806 = vrot.slane %v2805, 2
        %v2807 = vrot.slane %v1880, 7
        %v2808 = vrot.slane %v2807, 2
        %v2809 = vrot.slane %v1887, 7
        %v2810 = vrot.slane %v2809, 2
        %v2811 = vrot.slane %v1888, 7
        %v2812 = vrot.slane %v2811, 2
        %v2813 = vrot.slane %v1895, 7
        %v2814 = vrot.slane %v2813, 2
        %v2815 = vrot.slane %v1896, 7
        %v2816 = vrot.slane %v2815, 2
        %v2817 = vrot.slane %v1903, 7
        %v2818 = vrot.slane %v2817, 2
        %v2819 = vrot.slane %v1904, 7
        %v2820 = vrot.slane %v2819, 2
        %v2821 = vrot.slane %v1911, 7
        %v2822 = vrot.slane %v2821, 2
        %v2823 = vrot.slane %v1912, 7
        %v2824 = vrot.slane %v2823, 2
        %v2825 = vrot.slane %v1919, 7
        %v2826 = vrot.slane %v2825, 2
        %v2827 = vrot.slane %v1920, 7
        %v2828 = vrot.slane %v2827, 2
        %v2829 = vrot.slane %v1927, 7
        %v2830 = vrot.slane %v2829, 2
        %v2831 = vrot.slane %v1928, 7
        %v2832 = vrot.slane %v2831, 2
        %v2833 = vrot.slane %v1935, 7
        %v2834 = vrot.slane %v2833, 2
        %v2835 = vrot.slane %v1936, 7
        %v2836 = vrot.slane %v2835, 2
        %v2837 = vrot.slane %v1943, 7
        %v2838 = vrot.slane %v2837, 2
        %v2839 = vrot.slane %v1944, 7
        %v2840 = vrot.slane %v2839, 2
        %v2841 = vrot.slane %v1951, 7
        %v2842 = vrot.slane %v2841, 2
        %v2843 = vrot.slane %v1952, 7
        %v2844 = vrot.slane %v2843, 2
        %v2845 = vrot.slane %v1959, 7
        %v2846 = vrot.slane %v2845, 2
        %v2847 = vrot.slane %v1960, 7
        %v2848 = vrot.slane %v2847, 2
        %v2849 = vrot.slane %v1967, 7
        %v2850 = vrot.slane %v2849, 2
        %v2851 = vrot.slane %v1968, 7
        %v2852 = vrot.slane %v2851, 2
        %v2853 = vrot.slane %v1975, 7
        %v2854 = vrot.slane %v2853, 2
        %v2855 = vrot.slane %v1976, 7
        %v2856 = vrot.slane %v2855, 2
        %v2857 = vrot.slane %v1983, 7
        %v2858 = vrot.slane %v2857, 2
        %v2859 = vrot.slane %v1984, 7
        %v2860 = vrot.slane %v2859, 2
        %v2861 = vrot.slane %v1991, 7
        %v2862 = vrot.slane %v2861, 2
        %v2863 = vrot.slane %v1992, 7
        %v2864 = vrot.slane %v2863, 2
        %v2865 = vrot.slane %v1999, 7
        %v2866 = vrot.slane %v2865, 2
        %v2867 = vrot.slane %v2000, 7
        %v2868 = vrot.slane %v2867, 2
        %v2869 = vrot.slane %v2007, 7
        %v2870 = vrot.slane %v2869, 2
        %v2871 = vrot.slane %v2008, 7
        %v2872 = vrot.slane %v2871, 2
        %v2873 = vrot.slane %v2015, 7
        %v2874 = vrot.slane %v2873, 2
        %v2875 = vrot.slane %v2016, 7
        %v2876 = vrot.slane %v2875, 2
        %v2877 = vrot.slane %v2023, 7
        %v2878 = vrot.slane %v2877, 2
        %v2879 = vrot.slane %v2024, 7
        %v2880 = vrot.slane %v2879, 2
        %v2881 = vrot.slane %v2031, 7
        %v2882 = vrot.slane %v2881, 2
        %v2883 = vrot.slane %v2032, 7
        %v2884 = vrot.slane %v2883, 2
        %v2885 = vrot.slane %v2039, 7
        %v2886 = vrot.slane %v2885, 2
        %v2887 = vrot.slane %v2040, 7
        %v2888 = vrot.slane %v2887, 2
        %v2889 = vrot.slane %v2047, 7
        %v2890 = vrot.slane %v2889, 2
        %v2891 = vrot.slane %v2048, 7
        %v2892 = vrot.slane %v2891, 2
        %v2893 = vrot.slane %v2055, 7
        %v2894 = vrot.slane %v2893, 2
        %v2895 = vrot.slane %v2056, 7
        %v2896 = vrot.slane %v2895, 2
        %v2897 = vrot.slane %v2063, 7
        %v2898 = vrot.slane %v2897, 2
        %v2899 = vrot.slane %v2064, 7
        %v2900 = vrot.slane %v2899, 2
        %v2901 = vrot.slane %v2071, 7
        %v2902 = vrot.slane %v2901, 2
        %v2903 = vrot.slane %v2072, 7
        %v2904 = vrot.slane %v2903, 2
        %v2905 = vrot.slane %v2079, 7
        %v2906 = vrot.slane %v2905, 2
        %v2907 = vrot.slane %v2080, 7
        %v2908 = vrot.slane %v2907, 2
        %v2909 = vrot.slane %v2087, 7
        %v2910 = vrot.slane %v2909, 2
        %v2911 = vrot.slane %v2088, 7
        %v2912 = vrot.slane %v2911, 2
        %v2913 = vrot.slane %v2095, 7
        %v2914 = vrot.slane %v2913, 2
        %v2915 = vrot.slane %v2096, 7
        %v2916 = vrot.slane %v2915, 2
        %v2917 = vrot.slane %v2103, 7
        %v2918 = vrot.slane %v2917, 2
        %v2919 = vrot.slane %v2104, 7
        %v2920 = vrot.slane %v2919, 2
        %v2921 = vrot.slane %v2111, 7
        %v2922 = vrot.slane %v2921, 2
        %v2923 = vrot.slane %v2112, 7
        %v2924 = vrot.slane %v2923, 2
        %v2925 = vrot.slane %v2119, 7
        %v2926 = vrot.slane %v2925, 2
        %v2927 = vrot.slane %v2120, 7
        %v2928 = vrot.slane %v2927, 2
        %v2929 = vrot.slane %v2127, 7
        %v2930 = vrot.slane %v2929, 2
        %v2931 = vrot.slane %v2128, 7
        %v2932 = vrot.slane %v2931, 2
        %v2933 = vrot.slane %v2135, 7
        %v2934 = vrot.slane %v2933, 2
        %v2935 = vrot.slane %v2136, 7
        %v2936 = vrot.slane %v2935, 2
        %v2937 = vrot.slane %v2143, 7
        %v2938 = vrot.slane %v2937, 2
        %v2939 = vrot.slane %v2144, 7
        %v2940 = vrot.slane %v2939, 2
        %v2941 = vrot.slane %v2151, 7
        %v2942 = vrot.slane %v2941, 2
        %v2943 = vrot.slane %v2152, 7
        %v2944 = vrot.slane %v2943, 2
        %v2945 = vrot.slane %v2159, 7
        %v2946 = vrot.slane %v2945, 2
        %v2947 = vrot.slane %v2160, 7
        %v2948 = vrot.slane %v2947, 2
        %v2949 = vrot.slane %v2167, 7
        %v2950 = vrot.slane %v2949, 2
        %v2951 = vrot.slane %v2168, 7
        %v2952 = vrot.slane %v2951, 2
        %v2953 = vrot.slane %v2175, 7
        %v2954 = vrot.slane %v2953, 2
        %v2955 = vrot.slane %v2176, 7
        %v2956 = vrot.slane %v2955, 2
        %v2957 = vrot.slane %v2183, 7
        %v2958 = vrot.slane %v2957, 2
        %v2959 = vrot.slane %v2184, 7
        %v2960 = vrot.slane %v2959, 2
        %v2961 = vrot.slane %v2191, 7
        %v2962 = vrot.slane %v2961, 2
        %v2963 = vrot.slane %v2192, 7
        %v2964 = vrot.slane %v2963, 2
        %v2965 = vrot.slane %v2199, 7
        %v2966 = vrot.slane %v2965, 2
        %v2967 = vrot.slane %v2200, 7
        %v2968 = vrot.slane %v2967, 2
        %v2969 = vrot.slane %v2207, 7
        %v2970 = vrot.slane %v2969, 2
        %v2971 = vrot.slane %v2208, 7
        %v2972 = vrot.slane %v2971, 2
        %v2973 = vrot.slane %v2215, 7
        %v2974 = vrot.slane %v2973, 2
        %v2975 = vrot.slane %v2216, 7
        %v2976 = vrot.slane %v2975, 2
        %v2977 = vrot.slane %v2223, 7
        %v2978 = vrot.slane %v2977, 2
        %v2979 = vrot.slane %v2224, 7
        %v2980 = vrot.slane %v2979, 2
        %v2981 = vrot.slane %v2231, 7
        %v2982 = vrot.slane %v2981, 2
        %v2983 = vrot.slane %v2232, 7
        %v2984 = vrot.slane %v2983, 2
        %v2985 = vrot.slane %v2239, 7
        %v2986 = vrot.slane %v2985, 2
        %v2987 = vrot.slane %v2240, 7
        %v2988 = vrot.slane %v2987, 2
        %v2989 = vrot.slane %v2247, 7
        %v2990 = vrot.slane %v2989, 2
        %v2991 = vrot.slane %v2248, 7
        %v2992 = vrot.slane %v2991, 2
        %v2993 = vrot.slane %v2255, 7
        %v2994 = vrot.slane %v2993, 2
        %v2995 = vrot.slane %v2256, 7
        %v2996 = vrot.slane %v2995, 2
        %v2997 = vrot.slane %v2263, 7
        %v2998 = vrot.slane %v2997, 2
        %v2999 = vrot.slane %v2264, 7
        %v3000 = vrot.slane %v2999, 2
        %v3001 = vrot.slane %v2271, 7
        %v3002 = vrot.slane %v3001, 2
        %v3003 = vrot.slane %v2272, 7
        %v3004 = vrot.slane %v3003, 2
        %v3005 = vrot.slane %v2279, 7
        %v3006 = vrot.slane %v3005, 2
        %v3007 = vrot.slane %v2280, 7
        %v3008 = vrot.slane %v3007, 2
        %v3009 = vrot.slane %v2287, 7
        %v3010 = vrot.slane %v3009, 2
        %v3011 = vrot.slane %v2288, 7
        %v3012 = vrot.slane %v3011, 2
        %v3013 = vrot.slane %v2295, 7
        %v3014 = vrot.slane %v3013, 2
        %v3015 = vrot.slane %v2296, 7
        %v3016 = vrot.slane %v3015, 2
        %v3017 = vrot.slane %v2303, 7
        %v3018 = vrot.slane %v3017, 2
        %v3019 = vrot.slane %v2304, 7
        %v3020 = vrot.slane %v3019, 2
        %v3021 = vrot.slane %v2311, 7
        %v3022 = vrot.slane %v3021, 2
        %v3023 = vrot.slane %v2312, 7
        %v3024 = vrot.slane %v3023, 2
        %v3025 = vrot.slane %v2319, 7
        %v3026 = vrot.slane %v3025, 2
        %v3027 = vrot.slane %v2320, 7
        %v3028 = vrot.slane %v3027, 2
        %v3029 = vrot.slane %v2327, 7
        %v3030 = vrot.slane %v3029, 2
        %v3031 = vrot.slane %v2328, 7
        %v3032 = vrot.slane %v3031, 2
        %v3033 = vrot.slane %v2335, 7
        %v3034 = vrot.slane %v3033, 2
        %v3035 = vrot.slane %v2336, 7
        %v3036 = vrot.slane %v3035, 2
        %v3037 = vrot.slane %v2343, 7
        %v3038 = vrot.slane %v3037, 2
        %v3039 = vrot.slane %v2344, 7
        %v3040 = vrot.slane %v3039, 2
        %v3041 = vrot.slane %v2351, 7
        %v3042 = vrot.slane %v3041, 2
        %v3043 = vrot.slane %v2352, 7
        %v3044 = vrot.slane %v3043, 2
        %v3045 = vrot.slane %v2359, 7
        %v3046 = vrot.slane %v3045, 2
        %v3047 = vrot.slane %v2360, 7
        %v3048 = vrot.slane %v3047, 2
        %v3049 = vrot.slane %v2367, 7
        %v3050 = vrot.slane %v3049, 2
        %v3051 = vrot.slane %v2368, 7
        %v3052 = vrot.slane %v3051, 2
        %v3053 = vrot.slane %v2375, 7
        %v3054 = vrot.slane %v3053, 2
        %v3055 = vrot.slane %v2376, 7
        %v3056 = vrot.slane %v3055, 2
        %v3057 = vrot.slane %v2383, 7
        %v3058 = vrot.slane %v3057, 2
        %v3059 = vrot.slane %v2384, 7
        %v3060 = vrot.slane %v3059, 2
        %v3061 = vrot.slane %v2391, 7
        %v3062 = vrot.slane %v3061, 2
        %v3063 = vrot.slane %v2392, 7
        %v3064 = vrot.slane %v3063, 2
        %v3065 = vrot.slane %v2399, 7
        %v3066 = vrot.slane %v3065, 2
        %v3067 = vrot.slane %v2400, 7
        %v3068 = vrot.slane %v3067, 2
        %v3069 = vrot.slane %v2407, 7
        %v3070 = vrot.slane %v3069, 2
        %v3071 = vrot.slane %v2408, 7
        %v3072 = vrot.slane %v3071, 2
        %v3073 = vrot.slane %v2415, 7
        %v3074 = vrot.slane %v3073, 2
        %v3075 = vrot.slane %v2416, 7
        %v3076 = vrot.slane %v3075, 2
        %v3077 = vrot.slane %v2423, 7
        %v3078 = vrot.slane %v3077, 2
        %v3079 = vrot.slane %v2424, 7
        %v3080 = vrot.slane %v3079, 2
        %v3081 = vrot.slane %v2431, 7
        %v3082 = vrot.slane %v3081, 2
        %v3083 = vrot.slane %v2432, 7
        %v3084 = vrot.slane %v3083, 2
        %v3085 = vrot.slane %v2439, 7
        %v3086 = vrot.slane %v3085, 2
        %v3087 = vrot.slane %v2440, 7
        %v3088 = vrot.slane %v3087, 2
        %v3089 = vrot.slane %v2447, 7
        %v3090 = vrot.slane %v3089, 2
        %v3091 = vrot.slane %v2448, 7
        %v3092 = vrot.slane %v3091, 2
        %v3093 = vrot.slane %v2455, 7
        %v3094 = vrot.slane %v3093, 2
        %v3095 = vrot.slane %v2456, 7
        %v3096 = vrot.slane %v3095, 2
        %v3097 = vrot.slane %v2463, 7
        %v3098 = vrot.slane %v3097, 2
        %v3099 = vrot.slane %v2464, 7
        %v3100 = vrot.slane %v3099, 2
        %v3101 = vrot.slane %v2471, 7
        %v3102 = vrot.slane %v3101, 2
        %v3103 = vrot.slane %v2472, 7
        %v3104 = vrot.slane %v3103, 2
        %v3105 = vrot.slane %v2479, 7
        %v3106 = vrot.slane %v3105, 2
        %v3107 = vrot.slane %v2480, 7
        %v3108 = vrot.slane %v3107, 2
        %v3109 = vrot.slane %v2487, 7
        %v3110 = vrot.slane %v3109, 2
        %v3111 = vrot.slane %v2488, 7
        %v3112 = vrot.slane %v3111, 2
        %v3113 = vrot.slane %v2495, 7
        %v3114 = vrot.slane %v3113, 2
        %v3115 = vrot.slane %v2496, 7
        %v3116 = vrot.slane %v3115, 2
        %v3117 = vrot.slane %v2503, 7
        %v3118 = vrot.slane %v3117, 2
        %v3119 = vrot.slane %v2504, 7
        %v3120 = vrot.slane %v3119, 2
        %v3121 = vrot.slane %v2511, 7
        %v3122 = vrot.slane %v3121, 2
        %v3123 = vrot.slane %v2512, 7
        %v3124 = vrot.slane %v3123, 2
        %v3125 = vrot.slane %v2519, 7
        %v3126 = vrot.slane %v3125, 2
        %v3127 = vrot.slane %v2520, 7
        %v3128 = vrot.slane %v3127, 2
        %v3129 = vrot.slane %v2527, 7
        %v3130 = vrot.slane %v3129, 2
        %v3131 = vrot.slane %v2528, 7
        %v3132 = vrot.slane %v3131, 2
        %v3133 = vrot.slane %v2535, 7
        %v3134 = vrot.slane %v3133, 2
        %v3135 = vrot.slane %v2536, 7
        %v3136 = vrot.slane %v3135, 2
        %v3137 = vrot.slane %v2543, 7
        %v3138 = vrot.slane %v3137, 2
        %v3139 = vrot.slane %v2544, 7
        %v3140 = vrot.slane %v3139, 2
        %v3141 = vrot.slane %v2551, 7
        %v3142 = vrot.slane %v3141, 2
        %v3143 = vrot.slane %v2552, 7
        %v3144 = vrot.slane %v3143, 2
        %v3145 = vrot.slane %v2559, 7
        %v3146 = vrot.slane %v3145, 2
        %v3147 = vrot.slane %v2560, 7
        %v3148 = vrot.slane %v3147, 2
        %v3345 = vmax.f32 %v1783, %v2758
        %v3346 = vmax.f32 %v1784, %v2760
        %v3347 = vmax.f32 %v1791, %v2762
        %v3348 = vmax.f32 %v1792, %v2764
        %v3349 = vmax.f32 %v1799, %v2766
        %v3350 = vmax.f32 %v1800, %v2768
        %v3351 = vmax.f32 %v1807, %v2770
        %v3352 = vmax.f32 %v1808, %v2772
        %v3353 = vmax.f32 %v1815, %v2774
        %v3354 = vmax.f32 %v1816, %v2776
        %v3355 = vmax.f32 %v1823, %v2778
        %v3356 = vmax.f32 %v1824, %v2780
        %v3357 = vmax.f32 %v1831, %v2782
        %v3358 = vmax.f32 %v1832, %v2784
        %v3359 = vmax.f32 %v1839, %v2786
        %v3360 = vmax.f32 %v1840, %v2788
        %v3361 = vmax.f32 %v1847, %v2790
        %v3362 = vmax.f32 %v1848, %v2792
        %v3363 = vmax.f32 %v1855, %v2794
        %v3364 = vmax.f32 %v1856, %v2796
        %v3365 = vmax.f32 %v1863, %v2798
        %v3366 = vmax.f32 %v1864, %v2800
        %v3367 = vmax.f32 %v1871, %v2802
        %v3368 = vmax.f32 %v1872, %v2804
        %v3369 = vmax.f32 %v1879, %v2806
        %v3370 = vmax.f32 %v1880, %v2808
        %v3371 = vmax.f32 %v1887, %v2810
        %v3372 = vmax.f32 %v1888, %v2812
        %v3373 = vmax.f32 %v1895, %v2814
        %v3374 = vmax.f32 %v1896, %v2816
        %v3375 = vmax.f32 %v1903, %v2818
        %v3376 = vmax.f32 %v1904, %v2820
        %v3377 = vmax.f32 %v1911, %v2822
        %v3378 = vmax.f32 %v1912, %v2824
        %v3379 = vmax.f32 %v1919, %v2826
        %v3380 = vmax.f32 %v1920, %v2828
        %v3381 = vmax.f32 %v1927, %v2830
        %v3382 = vmax.f32 %v1928, %v2832
        %v3383 = vmax.f32 %v1935, %v2834
        %v3384 = vmax.f32 %v1936, %v2836
        %v3385 = vmax.f32 %v1943, %v2838
        %v3386 = vmax.f32 %v1944, %v2840
        %v3387 = vmax.f32 %v1951, %v2842
        %v3388 = vmax.f32 %v1952, %v2844
        %v3389 = vmax.f32 %v1959, %v2846
        %v3390 = vmax.f32 %v1960, %v2848
        %v3391 = vmax.f32 %v1967, %v2850
        %v3392 = vmax.f32 %v1968, %v2852
        %v3393 = vmax.f32 %v1975, %v2854
        %v3394 = vmax.f32 %v1976, %v2856
        %v3395 = vmax.f32 %v1983, %v2858
        %v3396 = vmax.f32 %v1984, %v2860
        %v3397 = vmax.f32 %v1991, %v2862
        %v3398 = vmax.f32 %v1992, %v2864
        %v3399 = vmax.f32 %v1999, %v2866
        %v3400 = vmax.f32 %v2000, %v2868
        %v3401 = vmax.f32 %v2007, %v2870
        %v3402 = vmax.f32 %v2008, %v2872
        %v3403 = vmax.f32 %v2015, %v2874
        %v3404 = vmax.f32 %v2016, %v2876
        %v3405 = vmax.f32 %v2023, %v2878
        %v3406 = vmax.f32 %v2024, %v2880
        %v3407 = vmax.f32 %v2031, %v2882
        %v3408 = vmax.f32 %v2032, %v2884
        %v3409 = vmax.f32 %v2039, %v2886
        %v3410 = vmax.f32 %v2040, %v2888
        %v3411 = vmax.f32 %v2047, %v2890
        %v3412 = vmax.f32 %v2048, %v2892
        %v3413 = vmax.f32 %v2055, %v2894
        %v3414 = vmax.f32 %v2056, %v2896
        %v3415 = vmax.f32 %v2063, %v2898
        %v3416 = vmax.f32 %v2064, %v2900
        %v3417 = vmax.f32 %v2071, %v2902
        %v3418 = vmax.f32 %v2072, %v2904
        %v3419 = vmax.f32 %v2079, %v2906
        %v3420 = vmax.f32 %v2080, %v2908
        %v3421 = vmax.f32 %v2087, %v2910
        %v3422 = vmax.f32 %v2088, %v2912
        %v3423 = vmax.f32 %v2095, %v2914
        %v3424 = vmax.f32 %v2096, %v2916
        %v3425 = vmax.f32 %v2103, %v2918
        %v3426 = vmax.f32 %v2104, %v2920
        %v3427 = vmax.f32 %v2111, %v2922
        %v3428 = vmax.f32 %v2112, %v2924
        %v3429 = vmax.f32 %v2119, %v2926
        %v3430 = vmax.f32 %v2120, %v2928
        %v3431 = vmax.f32 %v2127, %v2930
        %v3432 = vmax.f32 %v2128, %v2932
        %v3433 = vmax.f32 %v2135, %v2934
        %v3434 = vmax.f32 %v2136, %v2936
        %v3435 = vmax.f32 %v2143, %v2938
        %v3436 = vmax.f32 %v2144, %v2940
        %v3437 = vmax.f32 %v2151, %v2942
        %v3438 = vmax.f32 %v2152, %v2944
        %v3439 = vmax.f32 %v2159, %v2946
        %v3440 = vmax.f32 %v2160, %v2948
        %v3441 = vmax.f32 %v2167, %v2950
        %v3442 = vmax.f32 %v2168, %v2952
        %v3443 = vmax.f32 %v2175, %v2954
        %v3444 = vmax.f32 %v2176, %v2956
        %v3445 = vmax.f32 %v2183, %v2958
        %v3446 = vmax.f32 %v2184, %v2960
        %v3447 = vmax.f32 %v2191, %v2962
        %v3448 = vmax.f32 %v2192, %v2964
        %v3449 = vmax.f32 %v2199, %v2966
        %v3450 = vmax.f32 %v2200, %v2968
        %v3451 = vmax.f32 %v2207, %v2970
        %v3452 = vmax.f32 %v2208, %v2972
        %v3453 = vmax.f32 %v2215, %v2974
        %v3454 = vmax.f32 %v2216, %v2976
        %v3455 = vmax.f32 %v2223, %v2978
        %v3456 = vmax.f32 %v2224, %v2980
        %v3457 = vmax.f32 %v2231, %v2982
        %v3458 = vmax.f32 %v2232, %v2984
        %v3459 = vmax.f32 %v2239, %v2986
        %v3460 = vmax.f32 %v2240, %v2988
        %v3461 = vmax.f32 %v2247, %v2990
        %v3462 = vmax.f32 %v2248, %v2992
        %v3463 = vmax.f32 %v2255, %v2994
        %v3464 = vmax.f32 %v2256, %v2996
        %v3465 = vmax.f32 %v2263, %v2998
        %v3466 = vmax.f32 %v2264, %v3000
        %v3467 = vmax.f32 %v2271, %v3002
        %v3468 = vmax.f32 %v2272, %v3004
        %v3469 = vmax.f32 %v2279, %v3006
        %v3470 = vmax.f32 %v2280, %v3008
        %v3471 = vmax.f32 %v2287, %v3010
        %v3472 = vmax.f32 %v2288, %v3012
        %v3473 = vmax.f32 %v2295, %v3014
        %v3474 = vmax.f32 %v2296, %v3016
        %v3475 = vmax.f32 %v2303, %v3018
        %v3476 = vmax.f32 %v2304, %v3020
        %v3477 = vmax.f32 %v2311, %v3022
        %v3478 = vmax.f32 %v2312, %v3024
        %v3479 = vmax.f32 %v2319, %v3026
        %v3480 = vmax.f32 %v2320, %v3028
        %v3481 = vmax.f32 %v2327, %v3030
        %v3482 = vmax.f32 %v2328, %v3032
        %v3483 = vmax.f32 %v2335, %v3034
        %v3484 = vmax.f32 %v2336, %v3036
        %v3485 = vmax.f32 %v2343, %v3038
        %v3486 = vmax.f32 %v2344, %v3040
        %v3487 = vmax.f32 %v2351, %v3042
        %v3488 = vmax.f32 %v2352, %v3044
        %v3489 = vmax.f32 %v2359, %v3046
        %v3490 = vmax.f32 %v2360, %v3048
        %v3491 = vmax.f32 %v2367, %v3050
        %v3492 = vmax.f32 %v2368, %v3052
        %v3493 = vmax.f32 %v2375, %v3054
        %v3494 = vmax.f32 %v2376, %v3056
        %v3495 = vmax.f32 %v2383, %v3058
        %v3496 = vmax.f32 %v2384, %v3060
        %v3497 = vmax.f32 %v2391, %v3062
        %v3498 = vmax.f32 %v2392, %v3064
        %v3499 = vmax.f32 %v2399, %v3066
        %v3500 = vmax.f32 %v2400, %v3068
        %v3501 = vmax.f32 %v2407, %v3070
        %v3502 = vmax.f32 %v2408, %v3072
        %v3503 = vmax.f32 %v2415, %v3074
        %v3504 = vmax.f32 %v2416, %v3076
        %v3505 = vmax.f32 %v2423, %v3078
        %v3506 = vmax.f32 %v2424, %v3080
        %v3507 = vmax.f32 %v2431, %v3082
        %v3508 = vmax.f32 %v2432, %v3084
        %v3509 = vmax.f32 %v2439, %v3086
        %v3510 = vmax.f32 %v2440, %v3088
        %v3511 = vmax.f32 %v2447, %v3090
        %v3512 = vmax.f32 %v2448, %v3092
        %v3513 = vmax.f32 %v2455, %v3094
        %v3514 = vmax.f32 %v2456, %v3096
        %v3515 = vmax.f32 %v2463, %v3098
        %v3516 = vmax.f32 %v2464, %v3100
        %v3517 = vmax.f32 %v2471, %v3102
        %v3518 = vmax.f32 %v2472, %v3104
        %v3519 = vmax.f32 %v2479, %v3106
        %v3520 = vmax.f32 %v2480, %v3108
        %v3521 = vmax.f32 %v2487, %v3110
        %v3522 = vmax.f32 %v2488, %v3112
        %v3523 = vmax.f32 %v2495, %v3114
        %v3524 = vmax.f32 %v2496, %v3116
        %v3525 = vmax.f32 %v2503, %v3118
        %v3526 = vmax.f32 %v2504, %v3120
        %v3527 = vmax.f32 %v2511, %v3122
        %v3528 = vmax.f32 %v2512, %v3124
        %v3529 = vmax.f32 %v2519, %v3126
        %v3530 = vmax.f32 %v2520, %v3128
        %v3531 = vmax.f32 %v2527, %v3130
        %v3532 = vmax.f32 %v2528, %v3132
        %v3533 = vmax.f32 %v2535, %v3134
        %v3534 = vmax.f32 %v2536, %v3136
        %v3535 = vmax.f32 %v2543, %v3138
        %v3536 = vmax.f32 %v2544, %v3140
        %v3537 = vmax.f32 %v2551, %v3142
        %v3538 = vmax.f32 %v2552, %v3144
        %v3539 = vmax.f32 %v2559, %v3146
        %v3540 = vmax.f32 %v2560, %v3148
        %vm3541 = vcmask 261120
        %3542 = vst.msk [vmem:[#allocation2] sm:$0xff] %vm3541, 0
        %3543 = vst.msk [vmem:[#allocation2 + $0x8] sm:$0xff] %vm3541, 0
        %3544 = vst.msk [vmem:[#allocation2 + $0x10] sm:$0xff] %vm3541, 0
        %3545 = vst.msk [vmem:[#allocation2 + $0x18] sm:$0xff] %vm3541, 0
        %3546 = vst.msk [vmem:[#allocation2 + $0x20] sm:$0xff] %vm3541, 0
        %3547 = vst.msk [vmem:[#allocation2 + $0x28] sm:$0xff] %vm3541, 0
        %3548 = vst.msk [vmem:[#allocation2 + $0x30] sm:$0xff] %vm3541, 0
        %3549 = vst.msk [vmem:[#allocation2 + $0x38] sm:$0xff] %vm3541, 0
        %3550 = vst.msk [vmem:[#allocation2 + $0x40] sm:$0xff] %vm3541, 0
        %3551 = vst.msk [vmem:[#allocation2 + $0x48] sm:$0xff] %vm3541, 0
        %3552 = vst.msk [vmem:[#allocation2 + $0x50] sm:$0xff] %vm3541, 0
        %3553 = vst.msk [vmem:[#allocation2 + $0x58] sm:$0xff] %vm3541, 0
        %3554 = vst.msk [vmem:[#allocation2 + $0x60] sm:$0xff] %vm3541, 0
        %3555 = vst.msk [vmem:[#allocation2 + $0x68] sm:$0xff] %vm3541, 0
        %3556 = vst.msk [vmem:[#allocation2 + $0x70] sm:$0xff] %vm3541, 0
        %3557 = vst.msk [vmem:[#allocation2 + $0x78] sm:$0xff] %vm3541, 0
        %v3558 = vpack.c.bf16 %v3345, %v3345
        %v3559 = vpack.c.bf16 %v3346, %v3346
        %v3560 = vpack.c.bf16 %v3347, %v3347
        %v3561 = vpack.c.bf16 %v3348, %v3348
        %v3562 = vpack.c.bf16 %v3349, %v3349
        %v3563 = vpack.c.bf16 %v3350, %v3350
        %v3564 = vpack.c.bf16 %v3351, %v3351
        %v3565 = vpack.c.bf16 %v3352, %v3352
        %v3566 = vpack.c.bf16 %v3353, %v3353
        %v3567 = vpack.c.bf16 %v3354, %v3354
        %v3568 = vpack.c.bf16 %v3355, %v3355
        %v3569 = vpack.c.bf16 %v3356, %v3356
        %v3570 = vpack.c.bf16 %v3357, %v3357
        %v3571 = vpack.c.bf16 %v3358, %v3358
        %v3572 = vpack.c.bf16 %v3359, %v3359
        %v3573 = vpack.c.bf16 %v3360, %v3360
        %v3574 = vpack.c.bf16 %v3361, %v3361
        %v3575 = vpack.c.bf16 %v3362, %v3362
        %v3576 = vpack.c.bf16 %v3363, %v3363
        %v3577 = vpack.c.bf16 %v3364, %v3364
        %v3578 = vpack.c.bf16 %v3365, %v3365
        %v3579 = vpack.c.bf16 %v3366, %v3366
        %v3580 = vpack.c.bf16 %v3367, %v3367
        %v3581 = vpack.c.bf16 %v3368, %v3368
        %v3582 = vpack.c.bf16 %v3369, %v3369
        %v3583 = vpack.c.bf16 %v3370, %v3370
        %v3584 = vpack.c.bf16 %v3371, %v3371
        %v3585 = vpack.c.bf16 %v3372, %v3372
        %v3586 = vpack.c.bf16 %v3373, %v3373
        %v3587 = vpack.c.bf16 %v3374, %v3374
        %v3588 = vpack.c.bf16 %v3375, %v3375
        %v3589 = vpack.c.bf16 %v3376, %v3376
        %v3590 = vpack.c.bf16 %v3377, %v3377
        %v3591 = vpack.c.bf16 %v3378, %v3378
        %v3592 = vpack.c.bf16 %v3379, %v3379
        %v3593 = vpack.c.bf16 %v3380, %v3380
        %v3594 = vpack.c.bf16 %v3381, %v3381
        %v3595 = vpack.c.bf16 %v3382, %v3382
        %v3596 = vpack.c.bf16 %v3383, %v3383
        %v3597 = vpack.c.bf16 %v3384, %v3384
        %v3598 = vpack.c.bf16 %v3385, %v3385
        %v3599 = vpack.c.bf16 %v3386, %v3386
        %v3600 = vpack.c.bf16 %v3387, %v3387
        %v3601 = vpack.c.bf16 %v3388, %v3388
        %v3602 = vpack.c.bf16 %v3389, %v3389
        %v3603 = vpack.c.bf16 %v3390, %v3390
        %v3604 = vpack.c.bf16 %v3391, %v3391
        %v3605 = vpack.c.bf16 %v3392, %v3392
        %v3606 = vpack.c.bf16 %v3393, %v3393
        %v3607 = vpack.c.bf16 %v3394, %v3394
        %v3608 = vpack.c.bf16 %v3395, %v3395
        %v3609 = vpack.c.bf16 %v3396, %v3396
        %v3610 = vpack.c.bf16 %v3397, %v3397
        %v3611 = vpack.c.bf16 %v3398, %v3398
        %v3612 = vpack.c.bf16 %v3399, %v3399
        %v3613 = vpack.c.bf16 %v3400, %v3400
        %v3614 = vpack.c.bf16 %v3401, %v3401
        %v3615 = vpack.c.bf16 %v3402, %v3402
        %v3616 = vpack.c.bf16 %v3403, %v3403
        %v3617 = vpack.c.bf16 %v3404, %v3404
        %v3618 = vpack.c.bf16 %v3405, %v3405
        %v3619 = vpack.c.bf16 %v3406, %v3406
        %v3620 = vpack.c.bf16 %v3407, %v3407
        %v3621 = vpack.c.bf16 %v3408, %v3408
        %v3622 = vpack.c.bf16 %v3409, %v3409
        %v3623 = vpack.c.bf16 %v3410, %v3410
        %v3624 = vpack.c.bf16 %v3411, %v3411
        %v3625 = vpack.c.bf16 %v3412, %v3412
        %v3626 = vpack.c.bf16 %v3413, %v3413
        %v3627 = vpack.c.bf16 %v3414, %v3414
        %v3628 = vpack.c.bf16 %v3415, %v3415
        %v3629 = vpack.c.bf16 %v3416, %v3416
        %v3630 = vpack.c.bf16 %v3417, %v3417
        %v3631 = vpack.c.bf16 %v3418, %v3418
        %v3632 = vpack.c.bf16 %v3419, %v3419
        %v3633 = vpack.c.bf16 %v3420, %v3420
        %v3634 = vpack.c.bf16 %v3421, %v3421
        %v3635 = vpack.c.bf16 %v3422, %v3422
        %v3636 = vpack.c.bf16 %v3423, %v3423
        %v3637 = vpack.c.bf16 %v3424, %v3424
        %v3638 = vpack.c.bf16 %v3425, %v3425
        %v3639 = vpack.c.bf16 %v3426, %v3426
        %v3640 = vpack.c.bf16 %v3427, %v3427
        %v3641 = vpack.c.bf16 %v3428, %v3428
        %v3642 = vpack.c.bf16 %v3429, %v3429
        %v3643 = vpack.c.bf16 %v3430, %v3430
        %v3644 = vpack.c.bf16 %v3431, %v3431
        %v3645 = vpack.c.bf16 %v3432, %v3432
        %v3646 = vpack.c.bf16 %v3433, %v3433
        %v3647 = vpack.c.bf16 %v3434, %v3434
        %v3648 = vpack.c.bf16 %v3435, %v3435
        %v3649 = vpack.c.bf16 %v3436, %v3436
        %v3650 = vpack.c.bf16 %v3437, %v3437
        %v3651 = vpack.c.bf16 %v3438, %v3438
        %v3652 = vpack.c.bf16 %v3439, %v3439
        %v3653 = vpack.c.bf16 %v3440, %v3440
        %v3654 = vpack.c.bf16 %v3441, %v3441
        %v3655 = vpack.c.bf16 %v3442, %v3442
        %v3656 = vpack.c.bf16 %v3443, %v3443
        %v3657 = vpack.c.bf16 %v3444, %v3444
        %v3658 = vpack.c.bf16 %v3445, %v3445
        %v3659 = vpack.c.bf16 %v3446, %v3446
        %v3660 = vpack.c.bf16 %v3447, %v3447
        %v3661 = vpack.c.bf16 %v3448, %v3448
        %v3662 = vpack.c.bf16 %v3449, %v3449
        %v3663 = vpack.c.bf16 %v3450, %v3450
        %v3664 = vpack.c.bf16 %v3451, %v3451
        %v3665 = vpack.c.bf16 %v3452, %v3452
        %v3666 = vpack.c.bf16 %v3453, %v3453
        %v3667 = vpack.c.bf16 %v3454, %v3454
        %v3668 = vpack.c.bf16 %v3455, %v3455
        %v3669 = vpack.c.bf16 %v3456, %v3456
        %v3670 = vpack.c.bf16 %v3457, %v3457
        %v3671 = vpack.c.bf16 %v3458, %v3458
        %v3672 = vpack.c.bf16 %v3459, %v3459
        %v3673 = vpack.c.bf16 %v3460, %v3460
        %v3674 = vpack.c.bf16 %v3461, %v3461
        %v3675 = vpack.c.bf16 %v3462, %v3462
        %v3676 = vpack.c.bf16 %v3463, %v3463
        %v3677 = vpack.c.bf16 %v3464, %v3464
        %v3678 = vpack.c.bf16 %v3465, %v3465
        %v3679 = vpack.c.bf16 %v3466, %v3466
        %v3680 = vpack.c.bf16 %v3467, %v3467
        %v3681 = vpack.c.bf16 %v3468, %v3468
        %v3682 = vpack.c.bf16 %v3469, %v3469
        %v3683 = vpack.c.bf16 %v3470, %v3470
        %v3684 = vpack.c.bf16 %v3471, %v3471
        %v3685 = vpack.c.bf16 %v3472, %v3472
        %v3686 = vpack.c.bf16 %v3473, %v3473
        %v3687 = vpack.c.bf16 %v3474, %v3474
        %v3688 = vpack.c.bf16 %v3475, %v3475
        %v3689 = vpack.c.bf16 %v3476, %v3476
        %v3690 = vpack.c.bf16 %v3477, %v3477
        %v3691 = vpack.c.bf16 %v3478, %v3478
        %v3692 = vpack.c.bf16 %v3479, %v3479
        %v3693 = vpack.c.bf16 %v3480, %v3480
        %v3694 = vpack.c.bf16 %v3481, %v3481
        %v3695 = vpack.c.bf16 %v3482, %v3482
        %v3696 = vpack.c.bf16 %v3483, %v3483
        %v3697 = vpack.c.bf16 %v3484, %v3484
        %v3698 = vpack.c.bf16 %v3485, %v3485
        %v3699 = vpack.c.bf16 %v3486, %v3486
        %v3700 = vpack.c.bf16 %v3487, %v3487
        %v3701 = vpack.c.bf16 %v3488, %v3488
        %v3702 = vpack.c.bf16 %v3489, %v3489
        %v3703 = vpack.c.bf16 %v3490, %v3490
        %v3704 = vpack.c.bf16 %v3491, %v3491
        %v3705 = vpack.c.bf16 %v3492, %v3492
        %v3706 = vpack.c.bf16 %v3493, %v3493
        %v3707 = vpack.c.bf16 %v3494, %v3494
        %v3708 = vpack.c.bf16 %v3495, %v3495
        %v3709 = vpack.c.bf16 %v3496, %v3496
        %v3710 = vpack.c.bf16 %v3497, %v3497
        %v3711 = vpack.c.bf16 %v3498, %v3498
        %v3712 = vpack.c.bf16 %v3499, %v3499
        %v3713 = vpack.c.bf16 %v3500, %v3500
        %v3714 = vpack.c.bf16 %v3501, %v3501
        %v3715 = vpack.c.bf16 %v3502, %v3502
        %v3716 = vpack.c.bf16 %v3503, %v3503
        %v3717 = vpack.c.bf16 %v3504, %v3504
        %v3718 = vpack.c.bf16 %v3505, %v3505
        %v3719 = vpack.c.bf16 %v3506, %v3506
        %v3720 = vpack.c.bf16 %v3507, %v3507
        %v3721 = vpack.c.bf16 %v3508, %v3508
        %v3722 = vpack.c.bf16 %v3509, %v3509
        %v3723 = vpack.c.bf16 %v3510, %v3510
        %v3724 = vpack.c.bf16 %v3511, %v3511
        %v3725 = vpack.c.bf16 %v3512, %v3512
        %v3726 = vpack.c.bf16 %v3513, %v3513
        %v3727 = vpack.c.bf16 %v3514, %v3514
        %v3728 = vpack.c.bf16 %v3515, %v3515
        %v3729 = vpack.c.bf16 %v3516, %v3516
        %v3730 = vpack.c.bf16 %v3517, %v3517
        %v3731 = vpack.c.bf16 %v3518, %v3518
        %v3732 = vpack.c.bf16 %v3519, %v3519
        %v3733 = vpack.c.bf16 %v3520, %v3520
        %v3734 = vpack.c.bf16 %v3521, %v3521
        %v3735 = vpack.c.bf16 %v3522, %v3522
        %v3736 = vpack.c.bf16 %v3523, %v3523
        %v3737 = vpack.c.bf16 %v3524, %v3524
        %v3738 = vpack.c.bf16 %v3525, %v3525
        %v3739 = vpack.c.bf16 %v3526, %v3526
        %v3740 = vpack.c.bf16 %v3527, %v3527
        %v3741 = vpack.c.bf16 %v3528, %v3528
        %v3742 = vpack.c.bf16 %v3529, %v3529
        %v3743 = vpack.c.bf16 %v3530, %v3530
        %v3744 = vpack.c.bf16 %v3531, %v3531
        %v3745 = vpack.c.bf16 %v3532, %v3532
        %v3746 = vpack.c.bf16 %v3533, %v3533
        %v3747 = vpack.c.bf16 %v3534, %v3534
        %v3748 = vpack.c.bf16 %v3535, %v3535
        %v3749 = vpack.c.bf16 %v3536, %v3536
        %v3750 = vpack.c.bf16 %v3537, %v3537
        %v3751 = vpack.c.bf16 %v3538, %v3538
        %v3752 = vpack.c.bf16 %v3539, %v3539
        %v3753 = vpack.c.bf16 %v3540, %v3540
        %v3950 = vunpack.c.l.b16 %v3558
        %v3951 = vunpack.c.l.b16 %v3559
        %v3952 = vunpack.c.l.b16 %v3560
        %v3953 = vunpack.c.l.b16 %v3561
        %v3954 = vunpack.c.l.b16 %v3562
        %v3955 = vunpack.c.l.b16 %v3563
        %v3956 = vunpack.c.l.b16 %v3564
        %v3957 = vunpack.c.l.b16 %v3565
        %v3958 = vunpack.c.l.b16 %v3566
        %v3959 = vunpack.c.l.b16 %v3567
        %v3960 = vunpack.c.l.b16 %v3568
        %v3961 = vunpack.c.l.b16 %v3569
        %v3962 = vunpack.c.l.b16 %v3570
        %v3963 = vunpack.c.l.b16 %v3571
        %v3964 = vunpack.c.l.b16 %v3572
        %v3965 = vunpack.c.l.b16 %v3573
        %v3966 = vunpack.c.l.b16 %v3574
        %v3967 = vunpack.c.l.b16 %v3575
        %v3968 = vunpack.c.l.b16 %v3576
        %v3969 = vunpack.c.l.b16 %v3577
        %v3970 = vunpack.c.l.b16 %v3578
        %v3971 = vunpack.c.l.b16 %v3579
        %v3972 = vunpack.c.l.b16 %v3580
        %v3973 = vunpack.c.l.b16 %v3581
        %v3974 = vunpack.c.l.b16 %v3582
        %v3975 = vunpack.c.l.b16 %v3583
        %v3976 = vunpack.c.l.b16 %v3584
        %v3977 = vunpack.c.l.b16 %v3585
        %v3978 = vunpack.c.l.b16 %v3586
        %v3979 = vunpack.c.l.b16 %v3587
        %v3980 = vunpack.c.l.b16 %v3588
        %v3981 = vunpack.c.l.b16 %v3589
        %v3982 = vunpack.c.l.b16 %v3590
        %v3983 = vunpack.c.l.b16 %v3591
        %v3984 = vunpack.c.l.b16 %v3592
        %v3985 = vunpack.c.l.b16 %v3593
        %v3986 = vunpack.c.l.b16 %v3594
        %v3987 = vunpack.c.l.b16 %v3595
        %v3988 = vunpack.c.l.b16 %v3596
        %v3989 = vunpack.c.l.b16 %v3597
        %v3990 = vunpack.c.l.b16 %v3598
        %v3991 = vunpack.c.l.b16 %v3599
        %v3992 = vunpack.c.l.b16 %v3600
        %v3993 = vunpack.c.l.b16 %v3601
        %v3994 = vunpack.c.l.b16 %v3602
        %v3995 = vunpack.c.l.b16 %v3603
        %v3996 = vunpack.c.l.b16 %v3604
        %v3997 = vunpack.c.l.b16 %v3605
        %v3998 = vunpack.c.l.b16 %v3606
        %v3999 = vunpack.c.l.b16 %v3607
        %v4000 = vunpack.c.l.b16 %v3608
        %v4001 = vunpack.c.l.b16 %v3609
        %v4002 = vunpack.c.l.b16 %v3610
        %v4003 = vunpack.c.l.b16 %v3611
        %v4004 = vunpack.c.l.b16 %v3612
        %v4005 = vunpack.c.l.b16 %v3613
        %v4006 = vunpack.c.l.b16 %v3614
        %v4007 = vunpack.c.l.b16 %v3615
        %v4008 = vunpack.c.l.b16 %v3616
        %v4009 = vunpack.c.l.b16 %v3617
        %v4010 = vunpack.c.l.b16 %v3618
        %v4011 = vunpack.c.l.b16 %v3619
        %v4012 = vunpack.c.l.b16 %v3620
        %v4013 = vunpack.c.l.b16 %v3621
        %v4014 = vunpack.c.l.b16 %v3622
        %v4015 = vunpack.c.l.b16 %v3623
        %v4016 = vunpack.c.l.b16 %v3624
        %v4017 = vunpack.c.l.b16 %v3625
        %v4018 = vunpack.c.l.b16 %v3626
        %v4019 = vunpack.c.l.b16 %v3627
        %v4020 = vunpack.c.l.b16 %v3628
        %v4021 = vunpack.c.l.b16 %v3629
        %v4022 = vunpack.c.l.b16 %v3630
        %v4023 = vunpack.c.l.b16 %v3631
        %v4024 = vunpack.c.l.b16 %v3632
        %v4025 = vunpack.c.l.b16 %v3633
        %v4026 = vunpack.c.l.b16 %v3634
        %v4027 = vunpack.c.l.b16 %v3635
        %v4028 = vunpack.c.l.b16 %v3636
        %v4029 = vunpack.c.l.b16 %v3637
        %v4030 = vunpack.c.l.b16 %v3638
        %v4031 = vunpack.c.l.b16 %v3639
        %v4032 = vunpack.c.l.b16 %v3640
        %v4033 = vunpack.c.l.b16 %v3641
        %v4034 = vunpack.c.l.b16 %v3642
        %v4035 = vunpack.c.l.b16 %v3643
        %v4036 = vunpack.c.l.b16 %v3644
        %v4037 = vunpack.c.l.b16 %v3645
        %v4038 = vunpack.c.l.b16 %v3646
        %v4039 = vunpack.c.l.b16 %v3647
        %v4040 = vunpack.c.l.b16 %v3648
        %v4041 = vunpack.c.l.b16 %v3649
        %v4042 = vunpack.c.l.b16 %v3650
        %v4043 = vunpack.c.l.b16 %v3651
        %v4044 = vunpack.c.l.b16 %v3652
        %v4045 = vunpack.c.l.b16 %v3653
        %v4046 = vunpack.c.l.b16 %v3654
        %v4047 = vunpack.c.l.b16 %v3655
        %v4048 = vunpack.c.l.b16 %v3656
        %v4049 = vunpack.c.l.b16 %v3657
        %v4050 = vunpack.c.l.b16 %v3658
        %v4051 = vunpack.c.l.b16 %v3659
        %v4052 = vunpack.c.l.b16 %v3660
        %v4053 = vunpack.c.l.b16 %v3661
        %v4054 = vunpack.c.l.b16 %v3662
        %v4055 = vunpack.c.l.b16 %v3663
        %v4056 = vunpack.c.l.b16 %v3664
        %v4057 = vunpack.c.l.b16 %v3665
        %v4058 = vunpack.c.l.b16 %v3666
        %v4059 = vunpack.c.l.b16 %v3667
        %v4060 = vunpack.c.l.b16 %v3668
        %v4061 = vunpack.c.l.b16 %v3669
        %v4062 = vunpack.c.l.b16 %v3670
        %v4063 = vunpack.c.l.b16 %v3671
        %v4064 = vunpack.c.l.b16 %v3672
        %v4065 = vunpack.c.l.b16 %v3673
        %v4066 = vunpack.c.l.b16 %v3674
        %v4067 = vunpack.c.l.b16 %v3675
        %v4068 = vunpack.c.l.b16 %v3676
        %v4069 = vunpack.c.l.b16 %v3677
        %v4070 = vunpack.c.l.b16 %v3678
        %v4071 = vunpack.c.l.b16 %v3679
        %v4072 = vunpack.c.l.b16 %v3680
        %v4073 = vunpack.c.l.b16 %v3681
        %v4074 = vunpack.c.l.b16 %v3682
        %v4075 = vunpack.c.l.b16 %v3683
        %v4076 = vunpack.c.l.b16 %v3684
        %v4077 = vunpack.c.l.b16 %v3685
        %v4078 = vunpack.c.l.b16 %v3686
        %v4079 = vunpack.c.l.b16 %v3687
        %v4080 = vunpack.c.l.b16 %v3688
        %v4081 = vunpack.c.l.b16 %v3689
        %v4082 = vunpack.c.l.b16 %v3690
        %v4083 = vunpack.c.l.b16 %v3691
        %v4084 = vunpack.c.l.b16 %v3692
        %v4085 = vunpack.c.l.b16 %v3693
        %v4086 = vunpack.c.l.b16 %v3694
        %v4087 = vunpack.c.l.b16 %v3695
        %v4088 = vunpack.c.l.b16 %v3696
        %v4089 = vunpack.c.l.b16 %v3697
        %v4090 = vunpack.c.l.b16 %v3698
        %v4091 = vunpack.c.l.b16 %v3699
        %v4092 = vunpack.c.l.b16 %v3700
        %v4093 = vunpack.c.l.b16 %v3701
        %v4094 = vunpack.c.l.b16 %v3702
        %v4095 = vunpack.c.l.b16 %v3703
        %v4096 = vunpack.c.l.b16 %v3704
        %v4097 = vunpack.c.l.b16 %v3705
        %v4098 = vunpack.c.l.b16 %v3706
        %v4099 = vunpack.c.l.b16 %v3707
        %v4100 = vunpack.c.l.b16 %v3708
        %v4101 = vunpack.c.l.b16 %v3709
        %v4102 = vunpack.c.l.b16 %v3710
        %v4103 = vunpack.c.l.b16 %v3711
        %v4104 = vunpack.c.l.b16 %v3712
        %v4105 = vunpack.c.l.b16 %v3713
        %v4106 = vunpack.c.l.b16 %v3714
        %v4107 = vunpack.c.l.b16 %v3715
        %v4108 = vunpack.c.l.b16 %v3716
        %v4109 = vunpack.c.l.b16 %v3717
        %v4110 = vunpack.c.l.b16 %v3718
        %v4111 = vunpack.c.l.b16 %v3719
        %v4112 = vunpack.c.l.b16 %v3720
        %v4113 = vunpack.c.l.b16 %v3721
        %v4114 = vunpack.c.l.b16 %v3722
        %v4115 = vunpack.c.l.b16 %v3723
        %v4116 = vunpack.c.l.b16 %v3724
        %v4117 = vunpack.c.l.b16 %v3725
        %v4118 = vunpack.c.l.b16 %v3726
        %v4119 = vunpack.c.l.b16 %v3727
        %v4120 = vunpack.c.l.b16 %v3728
        %v4121 = vunpack.c.l.b16 %v3729
        %v4122 = vunpack.c.l.b16 %v3730
        %v4123 = vunpack.c.l.b16 %v3731
        %v4124 = vunpack.c.l.b16 %v3732
        %v4125 = vunpack.c.l.b16 %v3733
        %v4126 = vunpack.c.l.b16 %v3734
        %v4127 = vunpack.c.l.b16 %v3735
        %v4128 = vunpack.c.l.b16 %v3736
        %v4129 = vunpack.c.l.b16 %v3737
        %v4130 = vunpack.c.l.b16 %v3738
        %v4131 = vunpack.c.l.b16 %v3739
        %v4132 = vunpack.c.l.b16 %v3740
        %v4133 = vunpack.c.l.b16 %v3741
        %v4134 = vunpack.c.l.b16 %v3742
        %v4135 = vunpack.c.l.b16 %v3743
        %v4136 = vunpack.c.l.b16 %v3744
        %v4137 = vunpack.c.l.b16 %v3745
        %v4138 = vunpack.c.l.b16 %v3746
        %v4139 = vunpack.c.l.b16 %v3747
        %v4140 = vunpack.c.l.b16 %v3748
        %v4141 = vunpack.c.l.b16 %v3749
        %v4142 = vunpack.c.l.b16 %v3750
        %v4143 = vunpack.c.l.b16 %v3751
        %v4144 = vunpack.c.l.b16 %v3752
        %v4145 = vunpack.c.l.b16 %v3753
        %v4146 = vrot.slane %v3950, 7
        %v4147 = vrot.slane %v3951, 6
        %vm4148 = vcmask 1042434
        %v4149 = vsel %vm4148, %v4147, %v4146
        %v4150 = vrot.slane %v3952, 5
        %vm4151 = vcmask 1043459
        %v4152 = vsel %vm4151, %v4150, %v4149
        %v4153 = vrot.slane %v3953, 4
        %vm4154 = vcmask 1044484
        %v4155 = vsel %vm4154, %v4153, %v4152
        %v4156 = vrot.slane %v3954, 3
        %vm4157 = vcmask 1045509
        %v4158 = vsel %vm4157, %v4156, %v4155
        %v4159 = vrot.slane %v3955, 2
        %vm4160 = vcmask 1046534
        %v4161 = vsel %vm4160, %v4159, %v4158
        %v4162 = vrot.slane %v3956, 1
        %vm4163 = vcmask 1047559
        %v4164 = vsel %vm4163, %v4162, %v4161
        %v4165 = vrot.slane %v3958, 7
        %vm4166 = vcmask 1041409
        %v4167 = vsel %vm4166, %v4165, %v3957
        %v4168 = vrot.slane %v3959, 6
        %v4169 = vsel %vm4148, %v4168, %v4167
        %v4170 = vrot.slane %v3960, 5
        %v4171 = vsel %vm4151, %v4170, %v4169
        %v4172 = vrot.slane %v3961, 4
        %v4173 = vsel %vm4154, %v4172, %v4171
        %v4174 = vrot.slane %v3962, 3
        %v4175 = vsel %vm4157, %v4174, %v4173
        %v4176 = vrot.slane %v3963, 2
        %v4177 = vsel %vm4160, %v4176, %v4175
        %v4178 = vrot.slane %v3964, 7
        %v4179 = vrot.slane %v3965, 6
        %v4180 = vsel %vm4148, %v4179, %v4178
        %v4181 = vrot.slane %v3966, 5
        %v4182 = vsel %vm4151, %v4181, %v4180
        %v4183 = vrot.slane %v3967, 4
        %v4184 = vsel %vm4154, %v4183, %v4182
        %v4185 = vrot.slane %v3968, 3
        %v4186 = vsel %vm4157, %v4185, %v4184
        %v4187 = vrot.slane %v3969, 2
        %v4188 = vsel %vm4160, %v4187, %v4186
        %v4189 = vrot.slane %v3970, 1
        %v4190 = vsel %vm4163, %v4189, %v4188
        %v4191 = vrot.slane %v3972, 7
        %v4192 = vsel %vm4166, %v4191, %v3971
        %v4193 = vrot.slane %v3973, 6
        %v4194 = vsel %vm4148, %v4193, %v4192
        %v4195 = vrot.slane %v3974, 5
        %v4196 = vsel %vm4151, %v4195, %v4194
        %v4197 = vrot.slane %v3975, 4
        %v4198 = vsel %vm4154, %v4197, %v4196
        %v4199 = vrot.slane %v3976, 3
        %v4200 = vsel %vm4157, %v4199, %v4198
        %v4201 = vrot.slane %v3977, 2
        %v4202 = vsel %vm4160, %v4201, %v4200
        %v4203 = vrot.slane %v3978, 7
        %v4204 = vrot.slane %v3979, 6
        %v4205 = vsel %vm4148, %v4204, %v4203
        %v4206 = vrot.slane %v3980, 5
        %v4207 = vsel %vm4151, %v4206, %v4205
        %v4208 = vrot.slane %v3981, 4
        %v4209 = vsel %vm4154, %v4208, %v4207
        %v4210 = vrot.slane %v3982, 3
        %v4211 = vsel %vm4157, %v4210, %v4209
        %v4212 = vrot.slane %v3983, 2
        %v4213 = vsel %vm4160, %v4212, %v4211
        %v4214 = vrot.slane %v3984, 1
        %v4215 = vsel %vm4163, %v4214, %v4213
        %v4216 = vrot.slane %v3986, 7
        %v4217 = vsel %vm4166, %v4216, %v3985
        %v4218 = vrot.slane %v3987, 6
        %v4219 = vsel %vm4148, %v4218, %v4217
        %v4220 = vrot.slane %v3988, 5
        %v4221 = vsel %vm4151, %v4220, %v4219
        %v4222 = vrot.slane %v3989, 4
        %v4223 = vsel %vm4154, %v4222, %v4221
        %v4224 = vrot.slane %v3990, 3
        %v4225 = vsel %vm4157, %v4224, %v4223
        %v4226 = vrot.slane %v3991, 2
        %v4227 = vsel %vm4160, %v4226, %v4225
        %v4228 = vrot.slane %v3992, 7
        %v4229 = vrot.slane %v3993, 6
        %v4230 = vsel %vm4148, %v4229, %v4228
        %v4231 = vrot.slane %v3994, 5
        %v4232 = vsel %vm4151, %v4231, %v4230
        %v4233 = vrot.slane %v3995, 4
        %v4234 = vsel %vm4154, %v4233, %v4232
        %v4235 = vrot.slane %v3996, 3
        %v4236 = vsel %vm4157, %v4235, %v4234
        %v4237 = vrot.slane %v3997, 2
        %v4238 = vsel %vm4160, %v4237, %v4236
        %v4239 = vrot.slane %v3998, 1
        %v4240 = vsel %vm4163, %v4239, %v4238
        %v4241 = vrot.slane %v4000, 7
        %v4242 = vsel %vm4166, %v4241, %v3999
        %v4243 = vrot.slane %v4001, 6
        %v4244 = vsel %vm4148, %v4243, %v4242
        %v4245 = vrot.slane %v4002, 5
        %v4246 = vsel %vm4151, %v4245, %v4244
        %v4247 = vrot.slane %v4003, 4
        %v4248 = vsel %vm4154, %v4247, %v4246
        %v4249 = vrot.slane %v4004, 3
        %v4250 = vsel %vm4157, %v4249, %v4248
        %v4251 = vrot.slane %v4005, 2
        %v4252 = vsel %vm4160, %v4251, %v4250
        %v4253 = vrot.slane %v4006, 7
        %v4254 = vrot.slane %v4007, 6
        %v4255 = vsel %vm4148, %v4254, %v4253
        %v4256 = vrot.slane %v4008, 5
        %v4257 = vsel %vm4151, %v4256, %v4255
        %v4258 = vrot.slane %v4009, 4
        %v4259 = vsel %vm4154, %v4258, %v4257
        %v4260 = vrot.slane %v4010, 3
        %v4261 = vsel %vm4157, %v4260, %v4259
        %v4262 = vrot.slane %v4011, 2
        %v4263 = vsel %vm4160, %v4262, %v4261
        %v4264 = vrot.slane %v4012, 1
        %v4265 = vsel %vm4163, %v4264, %v4263
        %v4266 = vrot.slane %v4014, 7
        %v4267 = vsel %vm4166, %v4266, %v4013
        %v4268 = vrot.slane %v4015, 6
        %v4269 = vsel %vm4148, %v4268, %v4267
        %v4270 = vrot.slane %v4016, 5
        %v4271 = vsel %vm4151, %v4270, %v4269
        %v4272 = vrot.slane %v4017, 4
        %v4273 = vsel %vm4154, %v4272, %v4271
        %v4274 = vrot.slane %v4018, 3
        %v4275 = vsel %vm4157, %v4274, %v4273
        %v4276 = vrot.slane %v4019, 2
        %v4277 = vsel %vm4160, %v4276, %v4275
        %v4278 = vrot.slane %v4020, 7
        %v4279 = vrot.slane %v4021, 6
        %v4280 = vsel %vm4148, %v4279, %v4278
        %v4281 = vrot.slane %v4022, 5
        %v4282 = vsel %vm4151, %v4281, %v4280
        %v4283 = vrot.slane %v4023, 4
        %v4284 = vsel %vm4154, %v4283, %v4282
        %v4285 = vrot.slane %v4024, 3
        %v4286 = vsel %vm4157, %v4285, %v4284
        %v4287 = vrot.slane %v4025, 2
        %v4288 = vsel %vm4160, %v4287, %v4286
        %v4289 = vrot.slane %v4026, 1
        %v4290 = vsel %vm4163, %v4289, %v4288
        %v4291 = vrot.slane %v4028, 7
        %v4292 = vsel %vm4166, %v4291, %v4027
        %v4293 = vrot.slane %v4029, 6
        %v4294 = vsel %vm4148, %v4293, %v4292
        %v4295 = vrot.slane %v4030, 5
        %v4296 = vsel %vm4151, %v4295, %v4294
        %v4297 = vrot.slane %v4031, 4
        %v4298 = vsel %vm4154, %v4297, %v4296
        %v4299 = vrot.slane %v4032, 3
        %v4300 = vsel %vm4157, %v4299, %v4298
        %v4301 = vrot.slane %v4033, 2
        %v4302 = vsel %vm4160, %v4301, %v4300
        %v4303 = vrot.slane %v4034, 7
        %v4304 = vrot.slane %v4035, 6
        %v4305 = vsel %vm4148, %v4304, %v4303
        %v4306 = vrot.slane %v4036, 5
        %v4307 = vsel %vm4151, %v4306, %v4305
        %v4308 = vrot.slane %v4037, 4
        %v4309 = vsel %vm4154, %v4308, %v4307
        %v4310 = vrot.slane %v4038, 3
        %v4311 = vsel %vm4157, %v4310, %v4309
        %v4312 = vrot.slane %v4039, 2
        %v4313 = vsel %vm4160, %v4312, %v4311
        %v4314 = vrot.slane %v4040, 1
        %v4315 = vsel %vm4163, %v4314, %v4313
        %v4316 = vrot.slane %v4042, 7
        %v4317 = vsel %vm4166, %v4316, %v4041
        %v4318 = vrot.slane %v4043, 6
        %v4319 = vsel %vm4148, %v4318, %v4317
        %v4320 = vrot.slane %v4044, 5
        %v4321 = vsel %vm4151, %v4320, %v4319
        %v4322 = vrot.slane %v4045, 4
        %v4323 = vsel %vm4154, %v4322, %v4321
        %v4324 = vrot.slane %v4046, 3
        %v4325 = vsel %vm4157, %v4324, %v4323
        %v4326 = vrot.slane %v4047, 2
        %v4327 = vsel %vm4160, %v4326, %v4325
        %v4328 = vrot.slane %v4048, 7
        %v4329 = vrot.slane %v4049, 6
        %v4330 = vsel %vm4148, %v4329, %v4328
        %v4331 = vrot.slane %v4050, 5
        %v4332 = vsel %vm4151, %v4331, %v4330
        %v4333 = vrot.slane %v4051, 4
        %v4334 = vsel %vm4154, %v4333, %v4332
        %v4335 = vrot.slane %v4052, 3
        %v4336 = vsel %vm4157, %v4335, %v4334
        %v4337 = vrot.slane %v4053, 2
        %v4338 = vsel %vm4160, %v4337, %v4336
        %v4339 = vrot.slane %v4054, 1
        %v4340 = vsel %vm4163, %v4339, %v4338
        %v4341 = vrot.slane %v4056, 7
        %v4342 = vsel %vm4166, %v4341, %v4055
        %v4343 = vrot.slane %v4057, 6
        %v4344 = vsel %vm4148, %v4343, %v4342
        %v4345 = vrot.slane %v4058, 5
        %v4346 = vsel %vm4151, %v4345, %v4344
        %v4347 = vrot.slane %v4059, 4
        %v4348 = vsel %vm4154, %v4347, %v4346
        %v4349 = vrot.slane %v4060, 3
        %v4350 = vsel %vm4157, %v4349, %v4348
        %v4351 = vrot.slane %v4061, 2
        %v4352 = vsel %vm4160, %v4351, %v4350
        %v4353 = vrot.slane %v4062, 7
        %v4354 = vrot.slane %v4063, 6
        %v4355 = vsel %vm4148, %v4354, %v4353
        %v4356 = vrot.slane %v4064, 5
        %v4357 = vsel %vm4151, %v4356, %v4355
        %v4358 = vrot.slane %v4065, 4
        %v4359 = vsel %vm4154, %v4358, %v4357
        %v4360 = vrot.slane %v4066, 3
        %v4361 = vsel %vm4157, %v4360, %v4359
        %v4362 = vrot.slane %v4067, 2
        %v4363 = vsel %vm4160, %v4362, %v4361
        %v4364 = vrot.slane %v4068, 1
        %v4365 = vsel %vm4163, %v4364, %v4363
        %v4366 = vrot.slane %v4070, 7
        %v4367 = vsel %vm4166, %v4366, %v4069
        %v4368 = vrot.slane %v4071, 6
        %v4369 = vsel %vm4148, %v4368, %v4367
        %v4370 = vrot.slane %v4072, 5
        %v4371 = vsel %vm4151, %v4370, %v4369
        %v4372 = vrot.slane %v4073, 4
        %v4373 = vsel %vm4154, %v4372, %v4371
        %v4374 = vrot.slane %v4074, 3
        %v4375 = vsel %vm4157, %v4374, %v4373
        %v4376 = vrot.slane %v4075, 2
        %v4377 = vsel %vm4160, %v4376, %v4375
        %v4378 = vrot.slane %v4076, 7
        %v4379 = vrot.slane %v4077, 6
        %v4380 = vsel %vm4148, %v4379, %v4378
        %v4381 = vrot.slane %v4078, 5
        %v4382 = vsel %vm4151, %v4381, %v4380
        %v4383 = vrot.slane %v4079, 4
        %v4384 = vsel %vm4154, %v4383, %v4382
        %v4385 = vrot.slane %v4080, 3
        %v4386 = vsel %vm4157, %v4385, %v4384
        %v4387 = vrot.slane %v4081, 2
        %v4388 = vsel %vm4160, %v4387, %v4386
        %v4389 = vrot.slane %v4082, 1
        %v4390 = vsel %vm4163, %v4389, %v4388
        %v4391 = vrot.slane %v4084, 7
        %v4392 = vsel %vm4166, %v4391, %v4083
        %v4393 = vrot.slane %v4085, 6
        %v4394 = vsel %vm4148, %v4393, %v4392
        %v4395 = vrot.slane %v4086, 5
        %v4396 = vsel %vm4151, %v4395, %v4394
        %v4397 = vrot.slane %v4087, 4
        %v4398 = vsel %vm4154, %v4397, %v4396
        %v4399 = vrot.slane %v4088, 3
        %v4400 = vsel %vm4157, %v4399, %v4398
        %v4401 = vrot.slane %v4089, 2
        %v4402 = vsel %vm4160, %v4401, %v4400
        %v4403 = vrot.slane %v4090, 7
        %v4404 = vrot.slane %v4091, 6
        %v4405 = vsel %vm4148, %v4404, %v4403
        %v4406 = vrot.slane %v4092, 5
        %v4407 = vsel %vm4151, %v4406, %v4405
        %v4408 = vrot.slane %v4093, 4
        %v4409 = vsel %vm4154, %v4408, %v4407
        %v4410 = vrot.slane %v4094, 3
        %v4411 = vsel %vm4157, %v4410, %v4409
        %v4412 = vrot.slane %v4095, 2
        %v4413 = vsel %vm4160, %v4412, %v4411
        %v4414 = vrot.slane %v4096, 1
        %v4415 = vsel %vm4163, %v4414, %v4413
        %v4416 = vrot.slane %v4098, 7
        %v4417 = vsel %vm4166, %v4416, %v4097
        %v4418 = vrot.slane %v4099, 6
        %v4419 = vsel %vm4148, %v4418, %v4417
        %v4420 = vrot.slane %v4100, 5
        %v4421 = vsel %vm4151, %v4420, %v4419
        %v4422 = vrot.slane %v4101, 4
        %v4423 = vsel %vm4154, %v4422, %v4421
        %v4424 = vrot.slane %v4102, 3
        %v4425 = vsel %vm4157, %v4424, %v4423
        %v4426 = vrot.slane %v4103, 2
        %v4427 = vsel %vm4160, %v4426, %v4425
        %v4428 = vrot.slane %v4104, 7
        %v4429 = vrot.slane %v4105, 6
        %v4430 = vsel %vm4148, %v4429, %v4428
        %v4431 = vrot.slane %v4106, 5
        %v4432 = vsel %vm4151, %v4431, %v4430
        %v4433 = vrot.slane %v4107, 4
        %v4434 = vsel %vm4154, %v4433, %v4432
        %v4435 = vrot.slane %v4108, 3
        %v4436 = vsel %vm4157, %v4435, %v4434
        %v4437 = vrot.slane %v4109, 2
        %v4438 = vsel %vm4160, %v4437, %v4436
        %v4439 = vrot.slane %v4110, 1
        %v4440 = vsel %vm4163, %v4439, %v4438
        %v4441 = vrot.slane %v4112, 7
        %v4442 = vsel %vm4166, %v4441, %v4111
        %v4443 = vrot.slane %v4113, 6
        %v4444 = vsel %vm4148, %v4443, %v4442
        %v4445 = vrot.slane %v4114, 5
        %v4446 = vsel %vm4151, %v4445, %v4444
        %v4447 = vrot.slane %v4115, 4
        %v4448 = vsel %vm4154, %v4447, %v4446
        %v4449 = vrot.slane %v4116, 3
        %v4450 = vsel %vm4157, %v4449, %v4448
        %v4451 = vrot.slane %v4117, 2
        %v4452 = vsel %vm4160, %v4451, %v4450
        %v4453 = vrot.slane %v4118, 7
        %v4454 = vrot.slane %v4119, 6
        %v4455 = vsel %vm4148, %v4454, %v4453
        %v4456 = vrot.slane %v4120, 5
        %v4457 = vsel %vm4151, %v4456, %v4455
        %v4458 = vrot.slane %v4121, 4
        %v4459 = vsel %vm4154, %v4458, %v4457
        %v4460 = vrot.slane %v4122, 3
        %v4461 = vsel %vm4157, %v4460, %v4459
        %v4462 = vrot.slane %v4123, 2
        %v4463 = vsel %vm4160, %v4462, %v4461
        %v4464 = vrot.slane %v4124, 1
        %v4465 = vsel %vm4163, %v4464, %v4463
        %v4466 = vrot.slane %v4126, 7
        %v4467 = vsel %vm4166, %v4466, %v4125
        %v4468 = vrot.slane %v4127, 6
        %v4469 = vsel %vm4148, %v4468, %v4467
        %v4470 = vrot.slane %v4128, 5
        %v4471 = vsel %vm4151, %v4470, %v4469
        %v4472 = vrot.slane %v4129, 4
        %v4473 = vsel %vm4154, %v4472, %v4471
        %v4474 = vrot.slane %v4130, 3
        %v4475 = vsel %vm4157, %v4474, %v4473
        %v4476 = vrot.slane %v4131, 2
        %v4477 = vsel %vm4160, %v4476, %v4475
        %v4478 = vrot.slane %v4132, 7
        %v4479 = vrot.slane %v4133, 6
        %v4480 = vsel %vm4148, %v4479, %v4478
        %v4481 = vrot.slane %v4134, 5
        %v4482 = vsel %vm4151, %v4481, %v4480
        %v4483 = vrot.slane %v4135, 4
        %v4484 = vsel %vm4154, %v4483, %v4482
        %v4485 = vrot.slane %v4136, 3
        %v4486 = vsel %vm4157, %v4485, %v4484
        %v4487 = vrot.slane %v4137, 2
        %v4488 = vsel %vm4160, %v4487, %v4486
        %v4489 = vrot.slane %v4138, 1
        %v4490 = vsel %vm4163, %v4489, %v4488
        %v4491 = vrot.slane %v4140, 7
        %v4492 = vsel %vm4166, %v4491, %v4139
        %v4493 = vrot.slane %v4141, 6
        %v4494 = vsel %vm4148, %v4493, %v4492
        %v4495 = vrot.slane %v4142, 5
        %v4496 = vsel %vm4151, %v4495, %v4494
        %v4497 = vrot.slane %v4143, 4
        %v4498 = vsel %vm4154, %v4497, %v4496
        %v4499 = vrot.slane %v4144, 3
        %v4500 = vsel %vm4157, %v4499, %v4498
        %v4501 = vrot.slane %v4145, 2
        %v4502 = vsel %vm4160, %v4501, %v4500
        %v4503 = vpack.c.b16 %v4177, %v4164
        %v4504 = vpack.c.b16 %v4202, %v4190
        %v4505 = vpack.c.b16 %v4227, %v4215
        %v4506 = vpack.c.b16 %v4252, %v4240
        %v4507 = vpack.c.b16 %v4277, %v4265
        %v4508 = vpack.c.b16 %v4302, %v4290
        %v4509 = vpack.c.b16 %v4327, %v4315
        %v4510 = vpack.c.b16 %v4352, %v4340
        %v4511 = vpack.c.b16 %v4377, %v4365
        %v4512 = vpack.c.b16 %v4402, %v4390
        %v4513 = vpack.c.b16 %v4427, %v4415
        %v4514 = vpack.c.b16 %v4452, %v4440
        %v4515 = vpack.c.b16 %v4477, %v4465
        %v4516 = vpack.c.b16 %v4502, %v4490
        %s4531 = scalar_lea.vmem [#allocation2], 8
        %vm4532 = vcmask 261120
        %vm4533 = vsmask.f32 7426
        %vm4534 = vmand %vm4532, %vm4533
        %v4535 = vld [vmem:[%s4531] sm:$0xff]
        %v4536 = vsel %vm4534, %v4503, %v4535
        %4537 = vst [vmem:[%s4531] sm:$0xff] %v4536
        %v4538 = vld [vmem:[%s4531 + $0x8] sm:$0xff]
        %v4539 = vsel %vm4534, %v4504, %v4538
        %4540 = vst [vmem:[%s4531 + $0x8] sm:$0xff] %v4539
        %v4541 = vld [vmem:[%s4531 + $0x10] sm:$0xff]
        %v4542 = vsel %vm4534, %v4505, %v4541
        %4543 = vst [vmem:[%s4531 + $0x10] sm:$0xff] %v4542
        %v4544 = vld [vmem:[%s4531 + $0x18] sm:$0xff]
        %v4545 = vsel %vm4534, %v4506, %v4544
        %4546 = vst [vmem:[%s4531 + $0x18] sm:$0xff] %v4545
        %v4547 = vld [vmem:[%s4531 + $0x20] sm:$0xff]
        %v4548 = vsel %vm4534, %v4507, %v4547
        %4549 = vst [vmem:[%s4531 + $0x20] sm:$0xff] %v4548
        %v4550 = vld [vmem:[%s4531 + $0x28] sm:$0xff]
        %v4551 = vsel %vm4534, %v4508, %v4550
        %4552 = vst [vmem:[%s4531 + $0x28] sm:$0xff] %v4551
        %v4553 = vld [vmem:[%s4531 + $0x30] sm:$0xff]
        %v4554 = vsel %vm4534, %v4509, %v4553
        %4555 = vst [vmem:[%s4531 + $0x30] sm:$0xff] %v4554
        %v4556 = vld [vmem:[%s4531 + $0x38] sm:$0xff]
        %v4557 = vsel %vm4534, %v4510, %v4556
        %4558 = vst [vmem:[%s4531 + $0x38] sm:$0xff] %v4557
        %v4559 = vld [vmem:[%s4531 + $0x40] sm:$0xff]
        %v4560 = vsel %vm4534, %v4511, %v4559
        %4561 = vst [vmem:[%s4531 + $0x40] sm:$0xff] %v4560
        %v4562 = vld [vmem:[%s4531 + $0x48] sm:$0xff]
        %v4563 = vsel %vm4534, %v4512, %v4562
        %4564 = vst [vmem:[%s4531 + $0x48] sm:$0xff] %v4563
        %v4565 = vld [vmem:[%s4531 + $0x50] sm:$0xff]
        %v4566 = vsel %vm4534, %v4513, %v4565
        %4567 = vst [vmem:[%s4531 + $0x50] sm:$0xff] %v4566
        %v4568 = vld [vmem:[%s4531 + $0x58] sm:$0xff]
        %v4569 = vsel %vm4534, %v4514, %v4568
        %4570 = vst [vmem:[%s4531 + $0x58] sm:$0xff] %v4569
        %v4571 = vld [vmem:[%s4531 + $0x60] sm:$0xff]
        %v4572 = vsel %vm4534, %v4515, %v4571
        %4573 = vst [vmem:[%s4531 + $0x60] sm:$0xff] %v4572
        %v4574 = vld [vmem:[%s4531 + $0x68] sm:$0xff]
        %v4575 = vsel %vm4534, %v4516, %v4574
        %4576 = vst [vmem:[%s4531 + $0x68] sm:$0xff] %v4575
        %v4577 = vld [vmem:[#allocation2] sm:$0x7f]
        %v4578 = vld [vmem:[#allocation2 + $0x8] sm:$0x7f]
        %v4579 = vld [vmem:[#allocation2 + $0x10] sm:$0x7f]
        %v4580 = vld [vmem:[#allocation2 + $0x18] sm:$0x7f]
        %v4581 = vld [vmem:[#allocation2 + $0x20] sm:$0x7f]
        %v4582 = vld [vmem:[#allocation2 + $0x28] sm:$0x7f]
        %v4583 = vld [vmem:[#allocation2 + $0x30] sm:$0x7f]
        %v4584 = vld [vmem:[#allocation2 + $0x38] sm:$0x7f]
        %v4585 = vld [vmem:[#allocation2 + $0x40] sm:$0x7f]
        %v4586 = vld [vmem:[#allocation2 + $0x48] sm:$0x7f]
        %v4587 = vld [vmem:[#allocation2 + $0x50] sm:$0x7f]
        %v4588 = vld [vmem:[#allocation2 + $0x58] sm:$0x7f]
        %v4589 = vld [vmem:[#allocation2 + $0x60] sm:$0x7f]
        %v4590 = vld [vmem:[#allocation2 + $0x68] sm:$0x7f]
        %v4591 = vld [vmem:[#allocation2] sm:$0xff]
        %v4592 = vld [vmem:[#allocation2 + $0x8] sm:$0xff]
        %v4593 = vld [vmem:[#allocation2 + $0x10] sm:$0xff]
        %v4594 = vld [vmem:[#allocation2 + $0x18] sm:$0xff]
        %v4595 = vld [vmem:[#allocation2 + $0x20] sm:$0xff]
        %v4596 = vld [vmem:[#allocation2 + $0x28] sm:$0xff]
        %v4597 = vld [vmem:[#allocation2 + $0x30] sm:$0xff]
        %v4598 = vld [vmem:[#allocation2 + $0x38] sm:$0xff]
        %v4599 = vld [vmem:[#allocation2 + $0x40] sm:$0xff]
        %v4600 = vld [vmem:[#allocation2 + $0x48] sm:$0xff]
        %v4601 = vld [vmem:[#allocation2 + $0x50] sm:$0xff]
        %v4602 = vld [vmem:[#allocation2 + $0x58] sm:$0xff]
        %v4603 = vld [vmem:[#allocation2 + $0x60] sm:$0xff]
        %v4604 = vld [vmem:[#allocation2 + $0x68] sm:$0xff]
        %v4605 = vld [vmem:[#allocation2] sm:$0xfe]
        %v4606 = vld [vmem:[#allocation2 + $0x8] sm:$0xfe]
        %v4607 = vld [vmem:[#allocation2 + $0x10] sm:$0xfe]
        %v4608 = vld [vmem:[#allocation2 + $0x18] sm:$0xfe]
        %v4609 = vld [vmem:[#allocation2 + $0x20] sm:$0xfe]
        %v4610 = vld [vmem:[#allocation2 + $0x28] sm:$0xfe]
        %v4611 = vld [vmem:[#allocation2 + $0x30] sm:$0xfe]
        %v4612 = vld [vmem:[#allocation2 + $0x38] sm:$0xfe]
        %v4613 = vld [vmem:[#allocation2 + $0x40] sm:$0xfe]
        %v4614 = vld [vmem:[#allocation2 + $0x48] sm:$0xfe]
        %v4615 = vld [vmem:[#allocation2 + $0x50] sm:$0xfe]
        %v4616 = vld [vmem:[#allocation2 + $0x58] sm:$0xfe]
        %v4617 = vld [vmem:[#allocation2 + $0x60] sm:$0xfe]
        %v4618 = vld [vmem:[#allocation2 + $0x68] sm:$0xfe]
        %v4619 = vld [vmem:[%s4531] sm:$0x7f]
        %v4620 = vld [vmem:[%s4531 + $0x8] sm:$0x7f]
        %v4621 = vld [vmem:[%s4531 + $0x10] sm:$0x7f]
        %v4622 = vld [vmem:[%s4531 + $0x18] sm:$0x7f]
        %v4623 = vld [vmem:[%s4531 + $0x20] sm:$0x7f]
        %v4624 = vld [vmem:[%s4531 + $0x28] sm:$0x7f]
        %v4625 = vld [vmem:[%s4531 + $0x30] sm:$0x7f]
        %v4626 = vld [vmem:[%s4531 + $0x38] sm:$0x7f]
        %v4627 = vld [vmem:[%s4531 + $0x40] sm:$0x7f]
        %v4628 = vld [vmem:[%s4531 + $0x48] sm:$0x7f]
        %v4629 = vld [vmem:[%s4531 + $0x50] sm:$0x7f]
        %v4630 = vld [vmem:[%s4531 + $0x58] sm:$0x7f]
        %v4631 = vld [vmem:[%s4531 + $0x60] sm:$0x7f]
        %v4632 = vld [vmem:[%s4531 + $0x68] sm:$0x7f]
        %v4633 = vld [vmem:[%s4531] sm:$0xff]
        %v4634 = vld [vmem:[%s4531 + $0x8] sm:$0xff]
        %v4635 = vld [vmem:[%s4531 + $0x10] sm:$0xff]
        %v4636 = vld [vmem:[%s4531 + $0x18] sm:$0xff]
        %v4637 = vld [vmem:[%s4531 + $0x20] sm:$0xff]
        %v4638 = vld [vmem:[%s4531 + $0x28] sm:$0xff]
        %v4639 = vld [vmem:[%s4531 + $0x30] sm:$0xff]
        %v4640 = vld [vmem:[%s4531 + $0x38] sm:$0xff]
        %v4641 = vld [vmem:[%s4531 + $0x40] sm:$0xff]
        %v4642 = vld [vmem:[%s4531 + $0x48] sm:$0xff]
        %v4643 = vld [vmem:[%s4531 + $0x50] sm:$0xff]
        %v4644 = vld [vmem:[%s4531 + $0x58] sm:$0xff]
        %v4645 = vld [vmem:[%s4531 + $0x60] sm:$0xff]
        %v4646 = vld [vmem:[%s4531 + $0x68] sm:$0xff]
        %v4647 = vld [vmem:[%s4531] sm:$0xfe]
        %v4648 = vld [vmem:[%s4531 + $0x8] sm:$0xfe]
        %v4649 = vld [vmem:[%s4531 + $0x10] sm:$0xfe]
        %v4650 = vld [vmem:[%s4531 + $0x18] sm:$0xfe]
        %v4651 = vld [vmem:[%s4531 + $0x20] sm:$0xfe]
        %v4652 = vld [vmem:[%s4531 + $0x28] sm:$0xfe]
        %v4653 = vld [vmem:[%s4531 + $0x30] sm:$0xfe]
        %v4654 = vld [vmem:[%s4531 + $0x38] sm:$0xfe]
        %v4655 = vld [vmem:[%s4531 + $0x40] sm:$0xfe]
        %v4656 = vld [vmem:[%s4531 + $0x48] sm:$0xfe]
        %v4657 = vld [vmem:[%s4531 + $0x50] sm:$0xfe]
        %v4658 = vld [vmem:[%s4531 + $0x58] sm:$0xfe]
        %v4659 = vld [vmem:[%s4531 + $0x60] sm:$0xfe]
        %v4660 = vld [vmem:[%s4531 + $0x68] sm:$0xfe]
        %s4661 = scalar_lea.vmem [#allocation2], 16
        %v4662 = vld [vmem:[%s4661] sm:$0x7f]
        %v4663 = vld [vmem:[%s4661 + $0x8] sm:$0x7f]
        %v4664 = vld [vmem:[%s4661 + $0x10] sm:$0x7f]
        %v4665 = vld [vmem:[%s4661 + $0x18] sm:$0x7f]
        %v4666 = vld [vmem:[%s4661 + $0x20] sm:$0x7f]
        %v4667 = vld [vmem:[%s4661 + $0x28] sm:$0x7f]
        %v4668 = vld [vmem:[%s4661 + $0x30] sm:$0x7f]
        %v4669 = vld [vmem:[%s4661 + $0x38] sm:$0x7f]
        %v4670 = vld [vmem:[%s4661 + $0x40] sm:$0x7f]
        %v4671 = vld [vmem:[%s4661 + $0x48] sm:$0x7f]
        %v4672 = vld [vmem:[%s4661 + $0x50] sm:$0x7f]
        %v4673 = vld [vmem:[%s4661 + $0x58] sm:$0x7f]
        %v4674 = vld [vmem:[%s4661 + $0x60] sm:$0x7f]
        %v4675 = vld [vmem:[%s4661 + $0x68] sm:$0x7f]
        %v4676 = vld [vmem:[%s4661] sm:$0xff]
        %v4677 = vld [vmem:[%s4661 + $0x8] sm:$0xff]
        %v4678 = vld [vmem:[%s4661 + $0x10] sm:$0xff]
        %v4679 = vld [vmem:[%s4661 + $0x18] sm:$0xff]
        %v4680 = vld [vmem:[%s4661 + $0x20] sm:$0xff]
        %v4681 = vld [vmem:[%s4661 + $0x28] sm:$0xff]
        %v4682 = vld [vmem:[%s4661 + $0x30] sm:$0xff]
        %v4683 = vld [vmem:[%s4661 + $0x38] sm:$0xff]
        %v4684 = vld [vmem:[%s4661 + $0x40] sm:$0xff]
        %v4685 = vld [vmem:[%s4661 + $0x48] sm:$0xff]
        %v4686 = vld [vmem:[%s4661 + $0x50] sm:$0xff]
        %v4687 = vld [vmem:[%s4661 + $0x58] sm:$0xff]
        %v4688 = vld [vmem:[%s4661 + $0x60] sm:$0xff]
        %v4689 = vld [vmem:[%s4661 + $0x68] sm:$0xff]
        %v4690 = vld [vmem:[%s4661] sm:$0xfe]
        %v4691 = vld [vmem:[%s4661 + $0x8] sm:$0xfe]
        %v4692 = vld [vmem:[%s4661 + $0x10] sm:$0xfe]
        %v4693 = vld [vmem:[%s4661 + $0x18] sm:$0xfe]
        %v4694 = vld [vmem:[%s4661 + $0x20] sm:$0xfe]
        %v4695 = vld [vmem:[%s4661 + $0x28] sm:$0xfe]
        %v4696 = vld [vmem:[%s4661 + $0x30] sm:$0xfe]
        %v4697 = vld [vmem:[%s4661 + $0x38] sm:$0xfe]
        %v4698 = vld [vmem:[%s4661 + $0x40] sm:$0xfe]
        %v4699 = vld [vmem:[%s4661 + $0x48] sm:$0xfe]
        %v4700 = vld [vmem:[%s4661 + $0x50] sm:$0xfe]
        %v4701 = vld [vmem:[%s4661 + $0x58] sm:$0xfe]
        %v4702 = vld [vmem:[%s4661 + $0x60] sm:$0xfe]
        %v4703 = vld [vmem:[%s4661 + $0x68] sm:$0xfe]
        %v4705 = vshrl.u32 %v4591, 16
        %v4707 = vshll.u32 %v4591, 16
        %v4709 = vrot.slane %v4707, 1
        %v4710 = vor.u32 %v4705, %v4709
        %v4712 = vshrl.u32 %v4592, 16
        %v4714 = vshll.u32 %v4592, 16
        %v4716 = vrot.slane %v4714, 1
        %v4717 = vor.u32 %v4712, %v4716
        %v4719 = vshrl.u32 %v4593, 16
        %v4721 = vshll.u32 %v4593, 16
        %v4723 = vrot.slane %v4721, 1
        %v4724 = vor.u32 %v4719, %v4723
        %v4726 = vshrl.u32 %v4594, 16
        %v4728 = vshll.u32 %v4594, 16
        %v4730 = vrot.slane %v4728, 1
        %v4731 = vor.u32 %v4726, %v4730
        %v4733 = vshrl.u32 %v4595, 16
        %v4735 = vshll.u32 %v4595, 16
        %v4737 = vrot.slane %v4735, 1
        %v4738 = vor.u32 %v4733, %v4737
        %v4740 = vshrl.u32 %v4596, 16
        %v4742 = vshll.u32 %v4596, 16
        %v4744 = vrot.slane %v4742, 1
        %v4745 = vor.u32 %v4740, %v4744
        %v4747 = vshrl.u32 %v4597, 16
        %v4749 = vshll.u32 %v4597, 16
        %v4751 = vrot.slane %v4749, 1
        %v4752 = vor.u32 %v4747, %v4751
        %v4754 = vshrl.u32 %v4598, 16
        %v4756 = vshll.u32 %v4598, 16
        %v4758 = vrot.slane %v4756, 1
        %v4759 = vor.u32 %v4754, %v4758
        %v4761 = vshrl.u32 %v4599, 16
        %v4763 = vshll.u32 %v4599, 16
        %v4765 = vrot.slane %v4763, 1
        %v4766 = vor.u32 %v4761, %v4765
        %v4768 = vshrl.u32 %v4600, 16
        %v4770 = vshll.u32 %v4600, 16
        %v4772 = vrot.slane %v4770, 1
        %v4773 = vor.u32 %v4768, %v4772
        %v4775 = vshrl.u32 %v4601, 16
        %v4777 = vshll.u32 %v4601, 16
        %v4779 = vrot.slane %v4777, 1
        %v4780 = vor.u32 %v4775, %v4779
        %v4782 = vshrl.u32 %v4602, 16
        %v4784 = vshll.u32 %v4602, 16
        %v4786 = vrot.slane %v4784, 1
        %v4787 = vor.u32 %v4782, %v4786
        %v4789 = vshrl.u32 %v4603, 16
        %v4791 = vshll.u32 %v4603, 16
        %v4793 = vrot.slane %v4791, 1
        %v4794 = vor.u32 %v4789, %v4793
        %v4796 = vshrl.u32 %v4604, 16
        %v4798 = vshll.u32 %v4604, 16
        %v4800 = vrot.slane %v4798, 1
        %v4801 = vor.u32 %v4796, %v4800
        %4802 = vrot.lane.b32.xlu0 %v4710, 32
        %v4803 = vpop.permute.xlu0 %4802
        %4804 = vrot.lane.b32.xlu0 %v4717, 32
        %v4805 = vpop.permute.xlu0 %4804
        %4806 = vrot.lane.b32.xlu0 %v4724, 32
        %v4807 = vpop.permute.xlu0 %4806
        %4808 = vrot.lane.b32.xlu0 %v4731, 32
        %v4809 = vpop.permute.xlu0 %4808
        %4810 = vrot.lane.b32.xlu0 %v4738, 32
        %v4811 = vpop.permute.xlu0 %4810
        %4812 = vrot.lane.b32.xlu0 %v4745, 32
        %v4813 = vpop.permute.xlu0 %4812
        %4814 = vrot.lane.b32.xlu0 %v4752, 32
        %v4815 = vpop.permute.xlu0 %4814
        %4816 = vrot.lane.b32.xlu0 %v4759, 32
        %v4817 = vpop.permute.xlu0 %4816
        %4818 = vrot.lane.b32.xlu0 %v4766, 32
        %v4819 = vpop.permute.xlu0 %4818
        %4820 = vrot.lane.b32.xlu0 %v4773, 32
        %v4821 = vpop.permute.xlu0 %4820
        %4822 = vrot.lane.b32.xlu0 %v4780, 32
        %v4823 = vpop.permute.xlu0 %4822
        %4824 = vrot.lane.b32.xlu0 %v4787, 32
        %v4825 = vpop.permute.xlu0 %4824
        %4826 = vrot.lane.b32.xlu0 %v4794, 32
        %v4827 = vpop.permute.xlu0 %4826
        %4828 = vrot.lane.b32.xlu0 %v4801, 32
        %v4829 = vpop.permute.xlu0 %4828
        %v4844 = vrot.slane %v4605, 1
        %v4845 = vrot.slane %v4606, 1
        %v4846 = vrot.slane %v4607, 1
        %v4847 = vrot.slane %v4608, 1
        %v4848 = vrot.slane %v4609, 1
        %v4849 = vrot.slane %v4610, 1
        %v4850 = vrot.slane %v4611, 1
        %v4851 = vrot.slane %v4612, 1
        %v4852 = vrot.slane %v4613, 1
        %v4853 = vrot.slane %v4614, 1
        %v4854 = vrot.slane %v4615, 1
        %v4855 = vrot.slane %v4616, 1
        %v4856 = vrot.slane %v4617, 1
        %v4857 = vrot.slane %v4618, 1
        %4858 = vrot.lane.b32.xlu0 %v4844, 64
        %v4859 = vpop.permute.xlu0 %4858
        %4860 = vrot.lane.b32.xlu0 %v4845, 64
        %v4861 = vpop.permute.xlu0 %4860
        %4862 = vrot.lane.b32.xlu0 %v4846, 64
        %v4863 = vpop.permute.xlu0 %4862
        %4864 = vrot.lane.b32.xlu0 %v4847, 64
        %v4865 = vpop.permute.xlu0 %4864
        %4866 = vrot.lane.b32.xlu0 %v4848, 64
        %v4867 = vpop.permute.xlu0 %4866
        %4868 = vrot.lane.b32.xlu0 %v4849, 64
        %v4869 = vpop.permute.xlu0 %4868
        %4870 = vrot.lane.b32.xlu0 %v4850, 64
        %v4871 = vpop.permute.xlu0 %4870
        %4872 = vrot.lane.b32.xlu0 %v4851, 64
        %v4873 = vpop.permute.xlu0 %4872
        %4874 = vrot.lane.b32.xlu0 %v4852, 64
        %v4875 = vpop.permute.xlu0 %4874
        %4876 = vrot.lane.b32.xlu0 %v4853, 64
        %v4877 = vpop.permute.xlu0 %4876
        %4878 = vrot.lane.b32.xlu0 %v4854, 64
        %v4879 = vpop.permute.xlu0 %4878
        %4880 = vrot.lane.b32.xlu0 %v4855, 64
        %v4881 = vpop.permute.xlu0 %4880
        %4882 = vrot.lane.b32.xlu0 %v4856, 64
        %v4883 = vpop.permute.xlu0 %4882
        %4884 = vrot.lane.b32.xlu0 %v4857, 64
        %v4885 = vpop.permute.xlu0 %4884
        %4900 = vrot.lane.b32.xlu0 %v4619, 96
        %v4901 = vpop.permute.xlu0 %4900
        %4902 = vrot.lane.b32.xlu0 %v4620, 96
        %v4903 = vpop.permute.xlu0 %4902
        %4904 = vrot.lane.b32.xlu0 %v4621, 96
        %v4905 = vpop.permute.xlu0 %4904
        %4906 = vrot.lane.b32.xlu0 %v4622, 96
        %v4907 = vpop.permute.xlu0 %4906
        %4908 = vrot.lane.b32.xlu0 %v4623, 96
        %v4909 = vpop.permute.xlu0 %4908
        %4910 = vrot.lane.b32.xlu0 %v4624, 96
        %v4911 = vpop.permute.xlu0 %4910
        %4912 = vrot.lane.b32.xlu0 %v4625, 96
        %v4913 = vpop.permute.xlu0 %4912
        %4914 = vrot.lane.b32.xlu0 %v4626, 96
        %v4915 = vpop.permute.xlu0 %4914
        %4916 = vrot.lane.b32.xlu0 %v4627, 96
        %v4917 = vpop.permute.xlu0 %4916
        %4918 = vrot.lane.b32.xlu0 %v4628, 96
        %v4919 = vpop.permute.xlu0 %4918
        %4920 = vrot.lane.b32.xlu0 %v4629, 96
        %v4921 = vpop.permute.xlu0 %4920
        %4922 = vrot.lane.b32.xlu0 %v4630, 96
        %v4923 = vpop.permute.xlu0 %4922
        %4924 = vrot.lane.b32.xlu0 %v4631, 96
        %v4925 = vpop.permute.xlu0 %4924
        %4926 = vrot.lane.b32.xlu0 %v4632, 96
        %v4927 = vpop.permute.xlu0 %4926
        %v4929 = vshrl.u32 %v4633, 16
        %v4931 = vshll.u32 %v4633, 16
        %v4933 = vrot.slane %v4931, 1
        %v4934 = vor.u32 %v4929, %v4933
        %v4936 = vshrl.u32 %v4634, 16
        %v4938 = vshll.u32 %v4634, 16
        %v4940 = vrot.slane %v4938, 1
        %v4941 = vor.u32 %v4936, %v4940
        %v4943 = vshrl.u32 %v4635, 16
        %v4945 = vshll.u32 %v4635, 16
        %v4947 = vrot.slane %v4945, 1
        %v4948 = vor.u32 %v4943, %v4947
        %v4950 = vshrl.u32 %v4636, 16
        %v4952 = vshll.u32 %v4636, 16
        %v4954 = vrot.slane %v4952, 1
        %v4955 = vor.u32 %v4950, %v4954
        %v4957 = vshrl.u32 %v4637, 16
        %v4959 = vshll.u32 %v4637, 16
        %v4961 = vrot.slane %v4959, 1
        %v4962 = vor.u32 %v4957, %v4961
        %v4964 = vshrl.u32 %v4638, 16
        %v4966 = vshll.u32 %v4638, 16
        %v4968 = vrot.slane %v4966, 1
        %v4969 = vor.u32 %v4964, %v4968
        %v4971 = vshrl.u32 %v4639, 16
        %v4973 = vshll.u32 %v4639, 16
        %v4975 = vrot.slane %v4973, 1
        %v4976 = vor.u32 %v4971, %v4975
        %v4978 = vshrl.u32 %v4640, 16
        %v4980 = vshll.u32 %v4640, 16
        %v4982 = vrot.slane %v4980, 1
        %v4983 = vor.u32 %v4978, %v4982
        %v4985 = vshrl.u32 %v4641, 16
        %v4987 = vshll.u32 %v4641, 16
        %v4989 = vrot.slane %v4987, 1
        %v4990 = vor.u32 %v4985, %v4989
        %v4992 = vshrl.u32 %v4642, 16
        %v4994 = vshll.u32 %v4642, 16
        %v4996 = vrot.slane %v4994, 1
        %v4997 = vor.u32 %v4992, %v4996
        %v4999 = vshrl.u32 %v4643, 16
        %v5001 = vshll.u32 %v4643, 16
        %v5003 = vrot.slane %v5001, 1
        %v5004 = vor.u32 %v4999, %v5003
        %v5006 = vshrl.u32 %v4644, 16
        %v5008 = vshll.u32 %v4644, 16
        %v5010 = vrot.slane %v5008, 1
        %v5011 = vor.u32 %v5006, %v5010
        %v5013 = vshrl.u32 %v4645, 16
        %v5015 = vshll.u32 %v4645, 16
        %v5017 = vrot.slane %v5015, 1
        %v5018 = vor.u32 %v5013, %v5017
        %v5020 = vshrl.u32 %v4646, 16
        %v5022 = vshll.u32 %v4646, 16
        %v5024 = vrot.slane %v5022, 1
        %v5025 = vor.u32 %v5020, %v5024
        %v5040 = vrot.slane %v4647, 1
        %v5041 = vrot.slane %v4648, 1
        %v5042 = vrot.slane %v4649, 1
        %v5043 = vrot.slane %v4650, 1
        %v5044 = vrot.slane %v4651, 1
        %v5045 = vrot.slane %v4652, 1
        %v5046 = vrot.slane %v4653, 1
        %v5047 = vrot.slane %v4654, 1
        %v5048 = vrot.slane %v4655, 1
        %v5049 = vrot.slane %v4656, 1
        %v5050 = vrot.slane %v4657, 1
        %v5051 = vrot.slane %v4658, 1
        %v5052 = vrot.slane %v4659, 1
        %v5053 = vrot.slane %v4660, 1
        %5054 = vrot.lane.b32.xlu0 %v5040, 32
        %v5055 = vpop.permute.xlu0 %5054
        %5056 = vrot.lane.b32.xlu0 %v5041, 32
        %v5057 = vpop.permute.xlu0 %5056
        %5058 = vrot.lane.b32.xlu0 %v5042, 32
        %v5059 = vpop.permute.xlu0 %5058
        %5060 = vrot.lane.b32.xlu0 %v5043, 32
        %v5061 = vpop.permute.xlu0 %5060
        %5062 = vrot.lane.b32.xlu0 %v5044, 32
        %v5063 = vpop.permute.xlu0 %5062
        %5064 = vrot.lane.b32.xlu0 %v5045, 32
        %v5065 = vpop.permute.xlu0 %5064
        %5066 = vrot.lane.b32.xlu0 %v5046, 32
        %v5067 = vpop.permute.xlu0 %5066
        %5068 = vrot.lane.b32.xlu0 %v5047, 32
        %v5069 = vpop.permute.xlu0 %5068
        %5070 = vrot.lane.b32.xlu0 %v5048, 32
        %v5071 = vpop.permute.xlu0 %5070
        %5072 = vrot.lane.b32.xlu0 %v5049, 32
        %v5073 = vpop.permute.xlu0 %5072
        %5074 = vrot.lane.b32.xlu0 %v5050, 32
        %v5075 = vpop.permute.xlu0 %5074
        %5076 = vrot.lane.b32.xlu0 %v5051, 32
        %v5077 = vpop.permute.xlu0 %5076
        %5078 = vrot.lane.b32.xlu0 %v5052, 32
        %v5079 = vpop.permute.xlu0 %5078
        %5080 = vrot.lane.b32.xlu0 %v5053, 32
        %v5081 = vpop.permute.xlu0 %5080
        %5096 = vrot.lane.b32.xlu0 %v4662, 64
        %v5097 = vpop.permute.xlu0 %5096
        %5098 = vrot.lane.b32.xlu0 %v4663, 64
        %v5099 = vpop.permute.xlu0 %5098
        %5100 = vrot.lane.b32.xlu0 %v4664, 64
        %v5101 = vpop.permute.xlu0 %5100
        %5102 = vrot.lane.b32.xlu0 %v4665, 64
        %v5103 = vpop.permute.xlu0 %5102
        %5104 = vrot.lane.b32.xlu0 %v4666, 64
        %v5105 = vpop.permute.xlu0 %5104
        %5106 = vrot.lane.b32.xlu0 %v4667, 64
        %v5107 = vpop.permute.xlu0 %5106
        %5108 = vrot.lane.b32.xlu0 %v4668, 64
        %v5109 = vpop.permute.xlu0 %5108
        %5110 = vrot.lane.b32.xlu0 %v4669, 64
        %v5111 = vpop.permute.xlu0 %5110
        %5112 = vrot.lane.b32.xlu0 %v4670, 64
        %v5113 = vpop.permute.xlu0 %5112
        %5114 = vrot.lane.b32.xlu0 %v4671, 64
        %v5115 = vpop.permute.xlu0 %5114
        %5116 = vrot.lane.b32.xlu0 %v4672, 64
        %v5117 = vpop.permute.xlu0 %5116
        %5118 = vrot.lane.b32.xlu0 %v4673, 64
        %v5119 = vpop.permute.xlu0 %5118
        %5120 = vrot.lane.b32.xlu0 %v4674, 64
        %v5121 = vpop.permute.xlu0 %5120
        %5122 = vrot.lane.b32.xlu0 %v4675, 64
        %v5123 = vpop.permute.xlu0 %5122
        %v5125 = vshrl.u32 %v4676, 16
        %v5127 = vshll.u32 %v4676, 16
        %v5129 = vrot.slane %v5127, 1
        %v5130 = vor.u32 %v5125, %v5129
        %v5132 = vshrl.u32 %v4677, 16
        %v5134 = vshll.u32 %v4677, 16
        %v5136 = vrot.slane %v5134, 1
        %v5137 = vor.u32 %v5132, %v5136
        %v5139 = vshrl.u32 %v4678, 16
        %v5141 = vshll.u32 %v4678, 16
        %v5143 = vrot.slane %v5141, 1
        %v5144 = vor.u32 %v5139, %v5143
        %v5146 = vshrl.u32 %v4679, 16
        %v5148 = vshll.u32 %v4679, 16
        %v5150 = vrot.slane %v5148, 1
        %v5151 = vor.u32 %v5146, %v5150
        %v5153 = vshrl.u32 %v4680, 16
        %v5155 = vshll.u32 %v4680, 16
        %v5157 = vrot.slane %v5155, 1
        %v5158 = vor.u32 %v5153, %v5157
        %v5160 = vshrl.u32 %v4681, 16
        %v5162 = vshll.u32 %v4681, 16
        %v5164 = vrot.slane %v5162, 1
        %v5165 = vor.u32 %v5160, %v5164
        %v5167 = vshrl.u32 %v4682, 16
        %v5169 = vshll.u32 %v4682, 16
        %v5171 = vrot.slane %v5169, 1
        %v5172 = vor.u32 %v5167, %v5171
        %v5174 = vshrl.u32 %v4683, 16
        %v5176 = vshll.u32 %v4683, 16
        %v5178 = vrot.slane %v5176, 1
        %v5179 = vor.u32 %v5174, %v5178
        %v5181 = vshrl.u32 %v4684, 16
        %v5183 = vshll.u32 %v4684, 16
        %v5185 = vrot.slane %v5183, 1
        %v5186 = vor.u32 %v5181, %v5185
        %v5188 = vshrl.u32 %v4685, 16
        %v5190 = vshll.u32 %v4685, 16
        %v5192 = vrot.slane %v5190, 1
        %v5193 = vor.u32 %v5188, %v5192
        %v5195 = vshrl.u32 %v4686, 16
        %v5197 = vshll.u32 %v4686, 16
        %v5199 = vrot.slane %v5197, 1
        %v5200 = vor.u32 %v5195, %v5199
        %v5202 = vshrl.u32 %v4687, 16
        %v5204 = vshll.u32 %v4687, 16
        %v5206 = vrot.slane %v5204, 1
        %v5207 = vor.u32 %v5202, %v5206
        %v5209 = vshrl.u32 %v4688, 16
        %v5211 = vshll.u32 %v4688, 16
        %v5213 = vrot.slane %v5211, 1
        %v5214 = vor.u32 %v5209, %v5213
        %v5216 = vshrl.u32 %v4689, 16
        %v5218 = vshll.u32 %v4689, 16
        %v5220 = vrot.slane %v5218, 1
        %v5221 = vor.u32 %v5216, %v5220
        %5222 = vrot.lane.b32.xlu0 %v5130, 96
        %v5223 = vpop.permute.xlu0 %5222
        %5224 = vrot.lane.b32.xlu0 %v5137, 96
        %v5225 = vpop.permute.xlu0 %5224
        %5226 = vrot.lane.b32.xlu0 %v5144, 96
        %v5227 = vpop.permute.xlu0 %5226
        %5228 = vrot.lane.b32.xlu0 %v5151, 96
        %v5229 = vpop.permute.xlu0 %5228
        %5230 = vrot.lane.b32.xlu0 %v5158, 96
        %v5231 = vpop.permute.xlu0 %5230
        %5232 = vrot.lane.b32.xlu0 %v5165, 96
        %v5233 = vpop.permute.xlu0 %5232
        %5234 = vrot.lane.b32.xlu0 %v5172, 96
        %v5235 = vpop.permute.xlu0 %5234
        %5236 = vrot.lane.b32.xlu0 %v5179, 96
        %v5237 = vpop.permute.xlu0 %5236
        %5238 = vrot.lane.b32.xlu0 %v5186, 96
        %v5239 = vpop.permute.xlu0 %5238
        %5240 = vrot.lane.b32.xlu0 %v5193, 96
        %v5241 = vpop.permute.xlu0 %5240
        %5242 = vrot.lane.b32.xlu0 %v5200, 96
        %v5243 = vpop.permute.xlu0 %5242
        %5244 = vrot.lane.b32.xlu0 %v5207, 96
        %v5245 = vpop.permute.xlu0 %5244
        %5246 = vrot.lane.b32.xlu0 %v5214, 96
        %v5247 = vpop.permute.xlu0 %5246
        %5248 = vrot.lane.b32.xlu0 %v5221, 96
        %v5249 = vpop.permute.xlu0 %5248
        %v5264 = vrot.slane %v4690, 1
        %v5265 = vrot.slane %v4691, 1
        %v5266 = vrot.slane %v4692, 1
        %v5267 = vrot.slane %v4693, 1
        %v5268 = vrot.slane %v4694, 1
        %v5269 = vrot.slane %v4695, 1
        %v5270 = vrot.slane %v4696, 1
        %v5271 = vrot.slane %v4697, 1
        %v5272 = vrot.slane %v4698, 1
        %v5273 = vrot.slane %v4699, 1
        %v5274 = vrot.slane %v4700, 1
        %v5275 = vrot.slane %v4701, 1
        %v5276 = vrot.slane %v4702, 1
        %v5277 = vrot.slane %v4703, 1
        %v5280 = vsel %vm3541, %v4577, %v4803
        %v5283 = vsel %vm3541, %v4578, %v4805
        %v5286 = vsel %vm3541, %v4579, %v4807
        %v5289 = vsel %vm3541, %v4580, %v4809
        %v5292 = vsel %vm3541, %v4581, %v4811
        %v5295 = vsel %vm3541, %v4582, %v4813
        %v5298 = vsel %vm3541, %v4583, %v4815
        %v5301 = vsel %vm3541, %v4584, %v4817
        %v5304 = vsel %vm3541, %v4585, %v4819
        %v5307 = vsel %vm3541, %v4586, %v4821
        %v5310 = vsel %vm3541, %v4587, %v4823
        %v5313 = vsel %vm3541, %v4588, %v4825
        %v5316 = vsel %vm3541, %v4589, %v4827
        %v5319 = vsel %vm3541, %v4590, %v4829
        %vm5320 = vcmask 523264
        %v5322 = vsel %vm5320, %v5280, %v4859
        %v5324 = vsel %vm5320, %v5283, %v4861
        %v5326 = vsel %vm5320, %v5286, %v4863
        %v5328 = vsel %vm5320, %v5289, %v4865
        %v5330 = vsel %vm5320, %v5292, %v4867
        %v5332 = vsel %vm5320, %v5295, %v4869
        %v5334 = vsel %vm5320, %v5298, %v4871
        %v5336 = vsel %vm5320, %v5301, %v4873
        %v5338 = vsel %vm5320, %v5304, %v4875
        %v5340 = vsel %vm5320, %v5307, %v4877
        %v5342 = vsel %vm5320, %v5310, %v4879
        %v5344 = vsel %vm5320, %v5313, %v4881
        %v5346 = vsel %vm5320, %v5316, %v4883
        %v5348 = vsel %vm5320, %v5319, %v4885
        %vm5349 = vcmask 785408
        %v5351 = vsel %vm5349, %v5322, %v4901
        %v5353 = vsel %vm5349, %v5324, %v4903
        %v5355 = vsel %vm5349, %v5326, %v4905
        %v5357 = vsel %vm5349, %v5328, %v4907
        %v5359 = vsel %vm5349, %v5330, %v4909
        %v5361 = vsel %vm5349, %v5332, %v4911
        %v5363 = vsel %vm5349, %v5334, %v4913
        %v5365 = vsel %vm5349, %v5336, %v4915
        %v5367 = vsel %vm5349, %v5338, %v4917
        %v5369 = vsel %vm5349, %v5340, %v4919
        %v5371 = vsel %vm5349, %v5342, %v4921
        %v5373 = vsel %vm5349, %v5344, %v4923
        %v5375 = vsel %vm5349, %v5346, %v4925
        %v5377 = vsel %vm5349, %v5348, %v4927
        %v5380 = vsel %vm3541, %v4934, %v5055
        %v5383 = vsel %vm3541, %v4941, %v5057
        %v5386 = vsel %vm3541, %v4948, %v5059
        %v5389 = vsel %vm3541, %v4955, %v5061
        %v5392 = vsel %vm3541, %v4962, %v5063
        %v5395 = vsel %vm3541, %v4969, %v5065
        %v5398 = vsel %vm3541, %v4976, %v5067
        %v5401 = vsel %vm3541, %v4983, %v5069
        %v5404 = vsel %vm3541, %v4990, %v5071
        %v5407 = vsel %vm3541, %v4997, %v5073
        %v5410 = vsel %vm3541, %v5004, %v5075
        %v5413 = vsel %vm3541, %v5011, %v5077
        %v5416 = vsel %vm3541, %v5018, %v5079
        %v5419 = vsel %vm3541, %v5025, %v5081
        %v5421 = vsel %vm5320, %v5380, %v5097
        %v5423 = vsel %vm5320, %v5383, %v5099
        %v5425 = vsel %vm5320, %v5386, %v5101
        %v5427 = vsel %vm5320, %v5389, %v5103
        %v5429 = vsel %vm5320, %v5392, %v5105
        %v5431 = vsel %vm5320, %v5395, %v5107
        %v5433 = vsel %vm5320, %v5398, %v5109
        %v5435 = vsel %vm5320, %v5401, %v5111
        %v5437 = vsel %vm5320, %v5404, %v5113
        %v5439 = vsel %vm5320, %v5407, %v5115
        %v5441 = vsel %vm5320, %v5410, %v5117
        %v5443 = vsel %vm5320, %v5413, %v5119
        %v5445 = vsel %vm5320, %v5416, %v5121
        %v5447 = vsel %vm5320, %v5419, %v5123
        %v5449 = vsel %vm5349, %v5421, %v5223
        %v5451 = vsel %vm5349, %v5423, %v5225
        %v5453 = vsel %vm5349, %v5425, %v5227
        %v5455 = vsel %vm5349, %v5427, %v5229
        %v5457 = vsel %vm5349, %v5429, %v5231
        %v5459 = vsel %vm5349, %v5431, %v5233
        %v5461 = vsel %vm5349, %v5433, %v5235
        %v5463 = vsel %vm5349, %v5435, %v5237
        %v5465 = vsel %vm5349, %v5437, %v5239
        %v5467 = vsel %vm5349, %v5439, %v5241
        %v5469 = vsel %vm5349, %v5441, %v5243
        %v5471 = vsel %vm5349, %v5443, %v5245
        %v5473 = vsel %vm5349, %v5445, %v5247
        %v5475 = vsel %vm5349, %v5447, %v5249
        %v5504 = vcombine.low %v5351, %v5449
        %v5505 = vcombine.high %v5351, %v5449
        %v5506 = vcombine.high %v5264, %v5264
        %v5508 = vunpack.c.l.s4 1966171168
        %v5509 = vunpack.c.0.s8 %v5508
        %v5510 = vlaneseq
        %v5511 = vshrl.u32 %v5510, 7
        %v5512 = vsub.s32 %v5509, %v5511
        %v5513 = vrot.slane %v5504, %v5512
        %v5515 = vunpack.c.l.s4 1966171168
        %v5516 = vunpack.c.0.s8 %v5515
        %v5517 = vlaneseq
        %v5518 = vshrl.u32 %v5517, 7
        %v5519 = vsub.s32 %v5516, %v5518
        %v5520 = vrot.slane %v5505, %v5519
        %v5522 = vunpack.c.l.s4 1966171168
        %v5523 = vunpack.c.0.s8 %v5522
        %v5524 = vlaneseq
        %v5525 = vshrl.u32 %v5524, 7
        %v5526 = vsub.s32 %v5523, %v5525
        %v5527 = vrot.slane %v5264, %v5526
        %v5529 = vunpack.c.l.s4 1966171168
        %v5530 = vunpack.c.0.s8 %v5529
        %v5531 = vlaneseq
        %v5532 = vshrl.u32 %v5531, 7
        %v5533 = vsub.s32 %v5530, %v5532
        %v5534 = vrot.slane %v5506, %v5533
        %v5535 = vcombine.low %v5513, %v5527
        %v5536 = vcombine.high %v5513, %v5527
        %v5537 = vcombine.low %v5520, %v5534
        %v5538 = vcombine.high %v5520, %v5534
        %v5540 = vunpack.c.l.s4 1966171168
        %v5541 = vunpack.c.0.s8 %v5540
        %v5542 = vlaneseq
        %v5543 = vshrl.u32 %v5542, 7
        %v5544 = vsub.s32 %v5541, %v5543
        %v5545 = vrot.slane %v5535, %v5544
        %v5547 = vunpack.c.l.s4 1966171168
        %v5548 = vunpack.c.0.s8 %v5547
        %v5549 = vlaneseq
        %v5550 = vshrl.u32 %v5549, 7
        %v5551 = vsub.s32 %v5548, %v5550
        %v5552 = vrot.slane %v5537, %v5551
        %v5554 = vunpack.c.l.s4 1966171168
        %v5555 = vunpack.c.0.s8 %v5554
        %v5556 = vlaneseq
        %v5557 = vshrl.u32 %v5556, 7
        %v5558 = vsub.s32 %v5555, %v5557
        %v5559 = vrot.slane %v5536, %v5558
        %v5561 = vunpack.c.l.s4 1966171168
        %v5562 = vunpack.c.0.s8 %v5561
        %v5563 = vlaneseq
        %v5564 = vshrl.u32 %v5563, 7
        %v5565 = vsub.s32 %v5562, %v5564
        %v5566 = vrot.slane %v5538, %v5565
        %v5567 = vcombine.high %v5545, %v5545
        %v5568 = vcombine.high %v5552, %v5552
        %v5569 = vcombine.high %v5559, %v5559
        %v5570 = vcombine.low %v5353, %v5451
        %v5571 = vcombine.high %v5353, %v5451
        %v5572 = vcombine.high %v5265, %v5265
        %v5574 = vunpack.c.l.s4 1966171168
        %v5575 = vunpack.c.0.s8 %v5574
        %v5576 = vlaneseq
        %v5577 = vshrl.u32 %v5576, 7
        %v5578 = vsub.s32 %v5575, %v5577
        %v5579 = vrot.slane %v5570, %v5578
        %v5581 = vunpack.c.l.s4 1966171168
        %v5582 = vunpack.c.0.s8 %v5581
        %v5583 = vlaneseq
        %v5584 = vshrl.u32 %v5583, 7
        %v5585 = vsub.s32 %v5582, %v5584
        %v5586 = vrot.slane %v5571, %v5585
        %v5588 = vunpack.c.l.s4 1966171168
        %v5589 = vunpack.c.0.s8 %v5588
        %v5590 = vlaneseq
        %v5591 = vshrl.u32 %v5590, 7
        %v5592 = vsub.s32 %v5589, %v5591
        %v5593 = vrot.slane %v5265, %v5592
        %v5595 = vunpack.c.l.s4 1966171168
        %v5596 = vunpack.c.0.s8 %v5595
        %v5597 = vlaneseq
        %v5598 = vshrl.u32 %v5597, 7
        %v5599 = vsub.s32 %v5596, %v5598
        %v5600 = vrot.slane %v5572, %v5599
        %v5601 = vcombine.low %v5579, %v5593
        %v5602 = vcombine.high %v5579, %v5593
        %v5603 = vcombine.low %v5586, %v5600
        %v5604 = vcombine.high %v5586, %v5600
        %v5606 = vunpack.c.l.s4 1966171168
        %v5607 = vunpack.c.0.s8 %v5606
        %v5608 = vlaneseq
        %v5609 = vshrl.u32 %v5608, 7
        %v5610 = vsub.s32 %v5607, %v5609
        %v5611 = vrot.slane %v5601, %v5610
        %v5613 = vunpack.c.l.s4 1966171168
        %v5614 = vunpack.c.0.s8 %v5613
        %v5615 = vlaneseq
        %v5616 = vshrl.u32 %v5615, 7
        %v5617 = vsub.s32 %v5614, %v5616
        %v5618 = vrot.slane %v5603, %v5617
        %v5620 = vunpack.c.l.s4 1966171168
        %v5621 = vunpack.c.0.s8 %v5620
        %v5622 = vlaneseq
        %v5623 = vshrl.u32 %v5622, 7
        %v5624 = vsub.s32 %v5621, %v5623
        %v5625 = vrot.slane %v5602, %v5624
        %v5627 = vunpack.c.l.s4 1966171168
        %v5628 = vunpack.c.0.s8 %v5627
        %v5629 = vlaneseq
        %v5630 = vshrl.u32 %v5629, 7
        %v5631 = vsub.s32 %v5628, %v5630
        %v5632 = vrot.slane %v5604, %v5631
        %v5633 = vcombine.high %v5611, %v5611
        %v5634 = vcombine.high %v5618, %v5618
        %v5635 = vcombine.high %v5625, %v5625
        %v5636 = vcombine.low %v5355, %v5453
        %v5637 = vcombine.high %v5355, %v5453
        %v5638 = vcombine.high %v5266, %v5266
        %v5640 = vunpack.c.l.s4 1966171168
        %v5641 = vunpack.c.0.s8 %v5640
        %v5642 = vlaneseq
        %v5643 = vshrl.u32 %v5642, 7
        %v5644 = vsub.s32 %v5641, %v5643
        %v5645 = vrot.slane %v5636, %v5644
        %v5647 = vunpack.c.l.s4 1966171168
        %v5648 = vunpack.c.0.s8 %v5647
        %v5649 = vlaneseq
        %v5650 = vshrl.u32 %v5649, 7
        %v5651 = vsub.s32 %v5648, %v5650
        %v5652 = vrot.slane %v5637, %v5651
        %v5654 = vunpack.c.l.s4 1966171168
        %v5655 = vunpack.c.0.s8 %v5654
        %v5656 = vlaneseq
        %v5657 = vshrl.u32 %v5656, 7
        %v5658 = vsub.s32 %v5655, %v5657
        %v5659 = vrot.slane %v5266, %v5658
        %v5661 = vunpack.c.l.s4 1966171168
        %v5662 = vunpack.c.0.s8 %v5661
        %v5663 = vlaneseq
        %v5664 = vshrl.u32 %v5663, 7
        %v5665 = vsub.s32 %v5662, %v5664
        %v5666 = vrot.slane %v5638, %v5665
        %v5667 = vcombine.low %v5645, %v5659
        %v5668 = vcombine.high %v5645, %v5659
        %v5669 = vcombine.low %v5652, %v5666
        %v5670 = vcombine.high %v5652, %v5666
        %v5672 = vunpack.c.l.s4 1966171168
        %v5673 = vunpack.c.0.s8 %v5672
        %v5674 = vlaneseq
        %v5675 = vshrl.u32 %v5674, 7
        %v5676 = vsub.s32 %v5673, %v5675
        %v5677 = vrot.slane %v5667, %v5676
        %v5679 = vunpack.c.l.s4 1966171168
        %v5680 = vunpack.c.0.s8 %v5679
        %v5681 = vlaneseq
        %v5682 = vshrl.u32 %v5681, 7
        %v5683 = vsub.s32 %v5680, %v5682
        %v5684 = vrot.slane %v5669, %v5683
        %v5686 = vunpack.c.l.s4 1966171168
        %v5687 = vunpack.c.0.s8 %v5686
        %v5688 = vlaneseq
        %v5689 = vshrl.u32 %v5688, 7
        %v5690 = vsub.s32 %v5687, %v5689
        %v5691 = vrot.slane %v5668, %v5690
        %v5693 = vunpack.c.l.s4 1966171168
        %v5694 = vunpack.c.0.s8 %v5693
        %v5695 = vlaneseq
        %v5696 = vshrl.u32 %v5695, 7
        %v5697 = vsub.s32 %v5694, %v5696
        %v5698 = vrot.slane %v5670, %v5697
        %v5699 = vcombine.high %v5677, %v5677
        %v5700 = vcombine.high %v5684, %v5684
        %v5701 = vcombine.high %v5691, %v5691
        %v5702 = vcombine.low %v5357, %v5455
        %v5703 = vcombine.high %v5357, %v5455
        %v5704 = vcombine.high %v5267, %v5267
        %v5706 = vunpack.c.l.s4 1966171168
        %v5707 = vunpack.c.0.s8 %v5706
        %v5708 = vlaneseq
        %v5709 = vshrl.u32 %v5708, 7
        %v5710 = vsub.s32 %v5707, %v5709
        %v5711 = vrot.slane %v5702, %v5710
        %v5713 = vunpack.c.l.s4 1966171168
        %v5714 = vunpack.c.0.s8 %v5713
        %v5715 = vlaneseq
        %v5716 = vshrl.u32 %v5715, 7
        %v5717 = vsub.s32 %v5714, %v5716
        %v5718 = vrot.slane %v5703, %v5717
        %v5720 = vunpack.c.l.s4 1966171168
        %v5721 = vunpack.c.0.s8 %v5720
        %v5722 = vlaneseq
        %v5723 = vshrl.u32 %v5722, 7
        %v5724 = vsub.s32 %v5721, %v5723
        %v5725 = vrot.slane %v5267, %v5724
        %v5727 = vunpack.c.l.s4 1966171168
        %v5728 = vunpack.c.0.s8 %v5727
        %v5729 = vlaneseq
        %v5730 = vshrl.u32 %v5729, 7
        %v5731 = vsub.s32 %v5728, %v5730
        %v5732 = vrot.slane %v5704, %v5731
        %v5733 = vcombine.low %v5711, %v5725
        %v5734 = vcombine.high %v5711, %v5725
        %v5735 = vcombine.low %v5718, %v5732
        %v5736 = vcombine.high %v5718, %v5732
        %v5738 = vunpack.c.l.s4 1966171168
        %v5739 = vunpack.c.0.s8 %v5738
        %v5740 = vlaneseq
        %v5741 = vshrl.u32 %v5740, 7
        %v5742 = vsub.s32 %v5739, %v5741
        %v5743 = vrot.slane %v5733, %v5742
        %v5745 = vunpack.c.l.s4 1966171168
        %v5746 = vunpack.c.0.s8 %v5745
        %v5747 = vlaneseq
        %v5748 = vshrl.u32 %v5747, 7
        %v5749 = vsub.s32 %v5746, %v5748
        %v5750 = vrot.slane %v5735, %v5749
        %v5752 = vunpack.c.l.s4 1966171168
        %v5753 = vunpack.c.0.s8 %v5752
        %v5754 = vlaneseq
        %v5755 = vshrl.u32 %v5754, 7
        %v5756 = vsub.s32 %v5753, %v5755
        %v5757 = vrot.slane %v5734, %v5756
        %v5759 = vunpack.c.l.s4 1966171168
        %v5760 = vunpack.c.0.s8 %v5759
        %v5761 = vlaneseq
        %v5762 = vshrl.u32 %v5761, 7
        %v5763 = vsub.s32 %v5760, %v5762
        %v5764 = vrot.slane %v5736, %v5763
        %v5765 = vcombine.high %v5743, %v5743
        %v5766 = vcombine.high %v5750, %v5750
        %v5767 = vcombine.high %v5757, %v5757
        %v5768 = vcombine.low %v5359, %v5457
        %v5769 = vcombine.high %v5359, %v5457
        %v5770 = vcombine.high %v5268, %v5268
        %v5772 = vunpack.c.l.s4 1966171168
        %v5773 = vunpack.c.0.s8 %v5772
        %v5774 = vlaneseq
        %v5775 = vshrl.u32 %v5774, 7
        %v5776 = vsub.s32 %v5773, %v5775
        %v5777 = vrot.slane %v5768, %v5776
        %v5779 = vunpack.c.l.s4 1966171168
        %v5780 = vunpack.c.0.s8 %v5779
        %v5781 = vlaneseq
        %v5782 = vshrl.u32 %v5781, 7
        %v5783 = vsub.s32 %v5780, %v5782
        %v5784 = vrot.slane %v5769, %v5783
        %v5786 = vunpack.c.l.s4 1966171168
        %v5787 = vunpack.c.0.s8 %v5786
        %v5788 = vlaneseq
        %v5789 = vshrl.u32 %v5788, 7
        %v5790 = vsub.s32 %v5787, %v5789
        %v5791 = vrot.slane %v5268, %v5790
        %v5793 = vunpack.c.l.s4 1966171168
        %v5794 = vunpack.c.0.s8 %v5793
        %v5795 = vlaneseq
        %v5796 = vshrl.u32 %v5795, 7
        %v5797 = vsub.s32 %v5794, %v5796
        %v5798 = vrot.slane %v5770, %v5797
        %v5799 = vcombine.low %v5777, %v5791
        %v5800 = vcombine.high %v5777, %v5791
        %v5801 = vcombine.low %v5784, %v5798
        %v5802 = vcombine.high %v5784, %v5798
        %v5804 = vunpack.c.l.s4 1966171168
        %v5805 = vunpack.c.0.s8 %v5804
        %v5806 = vlaneseq
        %v5807 = vshrl.u32 %v5806, 7
        %v5808 = vsub.s32 %v5805, %v5807
        %v5809 = vrot.slane %v5799, %v5808
        %v5811 = vunpack.c.l.s4 1966171168
        %v5812 = vunpack.c.0.s8 %v5811
        %v5813 = vlaneseq
        %v5814 = vshrl.u32 %v5813, 7
        %v5815 = vsub.s32 %v5812, %v5814
        %v5816 = vrot.slane %v5801, %v5815
        %v5818 = vunpack.c.l.s4 1966171168
        %v5819 = vunpack.c.0.s8 %v5818
        %v5820 = vlaneseq
        %v5821 = vshrl.u32 %v5820, 7
        %v5822 = vsub.s32 %v5819, %v5821
        %v5823 = vrot.slane %v5800, %v5822
        %v5825 = vunpack.c.l.s4 1966171168
        %v5826 = vunpack.c.0.s8 %v5825
        %v5827 = vlaneseq
        %v5828 = vshrl.u32 %v5827, 7
        %v5829 = vsub.s32 %v5826, %v5828
        %v5830 = vrot.slane %v5802, %v5829
        %v5831 = vcombine.high %v5809, %v5809
        %v5832 = vcombine.high %v5816, %v5816
        %v5833 = vcombine.high %v5823, %v5823
        %v5834 = vcombine.low %v5361, %v5459
        %v5835 = vcombine.high %v5361, %v5459
        %v5836 = vcombine.high %v5269, %v5269
        %v5838 = vunpack.c.l.s4 1966171168
        %v5839 = vunpack.c.0.s8 %v5838
        %v5840 = vlaneseq
        %v5841 = vshrl.u32 %v5840, 7
        %v5842 = vsub.s32 %v5839, %v5841
        %v5843 = vrot.slane %v5834, %v5842
        %v5845 = vunpack.c.l.s4 1966171168
        %v5846 = vunpack.c.0.s8 %v5845
        %v5847 = vlaneseq
        %v5848 = vshrl.u32 %v5847, 7
        %v5849 = vsub.s32 %v5846, %v5848
        %v5850 = vrot.slane %v5835, %v5849
        %v5852 = vunpack.c.l.s4 1966171168
        %v5853 = vunpack.c.0.s8 %v5852
        %v5854 = vlaneseq
        %v5855 = vshrl.u32 %v5854, 7
        %v5856 = vsub.s32 %v5853, %v5855
        %v5857 = vrot.slane %v5269, %v5856
        %v5859 = vunpack.c.l.s4 1966171168
        %v5860 = vunpack.c.0.s8 %v5859
        %v5861 = vlaneseq
        %v5862 = vshrl.u32 %v5861, 7
        %v5863 = vsub.s32 %v5860, %v5862
        %v5864 = vrot.slane %v5836, %v5863
        %v5865 = vcombine.low %v5843, %v5857
        %v5866 = vcombine.high %v5843, %v5857
        %v5867 = vcombine.low %v5850, %v5864
        %v5868 = vcombine.high %v5850, %v5864
        %v5870 = vunpack.c.l.s4 1966171168
        %v5871 = vunpack.c.0.s8 %v5870
        %v5872 = vlaneseq
        %v5873 = vshrl.u32 %v5872, 7
        %v5874 = vsub.s32 %v5871, %v5873
        %v5875 = vrot.slane %v5865, %v5874
        %v5877 = vunpack.c.l.s4 1966171168
        %v5878 = vunpack.c.0.s8 %v5877
        %v5879 = vlaneseq
        %v5880 = vshrl.u32 %v5879, 7
        %v5881 = vsub.s32 %v5878, %v5880
        %v5882 = vrot.slane %v5867, %v5881
        %v5884 = vunpack.c.l.s4 1966171168
        %v5885 = vunpack.c.0.s8 %v5884
        %v5886 = vlaneseq
        %v5887 = vshrl.u32 %v5886, 7
        %v5888 = vsub.s32 %v5885, %v5887
        %v5889 = vrot.slane %v5866, %v5888
        %v5891 = vunpack.c.l.s4 1966171168
        %v5892 = vunpack.c.0.s8 %v5891
        %v5893 = vlaneseq
        %v5894 = vshrl.u32 %v5893, 7
        %v5895 = vsub.s32 %v5892, %v5894
        %v5896 = vrot.slane %v5868, %v5895
        %v5897 = vcombine.high %v5875, %v5875
        %v5898 = vcombine.high %v5882, %v5882
        %v5899 = vcombine.high %v5889, %v5889
        %v5900 = vcombine.low %v5363, %v5461
        %v5901 = vcombine.high %v5363, %v5461
        %v5902 = vcombine.high %v5270, %v5270
        %v5904 = vunpack.c.l.s4 1966171168
        %v5905 = vunpack.c.0.s8 %v5904
        %v5906 = vlaneseq
        %v5907 = vshrl.u32 %v5906, 7
        %v5908 = vsub.s32 %v5905, %v5907
        %v5909 = vrot.slane %v5900, %v5908
        %v5911 = vunpack.c.l.s4 1966171168
        %v5912 = vunpack.c.0.s8 %v5911
        %v5913 = vlaneseq
        %v5914 = vshrl.u32 %v5913, 7
        %v5915 = vsub.s32 %v5912, %v5914
        %v5916 = vrot.slane %v5901, %v5915
        %v5918 = vunpack.c.l.s4 1966171168
        %v5919 = vunpack.c.0.s8 %v5918
        %v5920 = vlaneseq
        %v5921 = vshrl.u32 %v5920, 7
        %v5922 = vsub.s32 %v5919, %v5921
        %v5923 = vrot.slane %v5270, %v5922
        %v5925 = vunpack.c.l.s4 1966171168
        %v5926 = vunpack.c.0.s8 %v5925
        %v5927 = vlaneseq
        %v5928 = vshrl.u32 %v5927, 7
        %v5929 = vsub.s32 %v5926, %v5928
        %v5930 = vrot.slane %v5902, %v5929
        %v5931 = vcombine.low %v5909, %v5923
        %v5932 = vcombine.high %v5909, %v5923
        %v5933 = vcombine.low %v5916, %v5930
        %v5934 = vcombine.high %v5916, %v5930
        %v5936 = vunpack.c.l.s4 1966171168
        %v5937 = vunpack.c.0.s8 %v5936
        %v5938 = vlaneseq
        %v5939 = vshrl.u32 %v5938, 7
        %v5940 = vsub.s32 %v5937, %v5939
        %v5941 = vrot.slane %v5931, %v5940
        %v5943 = vunpack.c.l.s4 1966171168
        %v5944 = vunpack.c.0.s8 %v5943
        %v5945 = vlaneseq
        %v5946 = vshrl.u32 %v5945, 7
        %v5947 = vsub.s32 %v5944, %v5946
        %v5948 = vrot.slane %v5933, %v5947
        %v5950 = vunpack.c.l.s4 1966171168
        %v5951 = vunpack.c.0.s8 %v5950
        %v5952 = vlaneseq
        %v5953 = vshrl.u32 %v5952, 7
        %v5954 = vsub.s32 %v5951, %v5953
        %v5955 = vrot.slane %v5932, %v5954
        %v5957 = vunpack.c.l.s4 1966171168
        %v5958 = vunpack.c.0.s8 %v5957
        %v5959 = vlaneseq
        %v5960 = vshrl.u32 %v5959, 7
        %v5961 = vsub.s32 %v5958, %v5960
        %v5962 = vrot.slane %v5934, %v5961
        %v5963 = vcombine.high %v5941, %v5941
        %v5964 = vcombine.high %v5948, %v5948
        %v5965 = vcombine.high %v5955, %v5955
        %v5966 = vcombine.low %v5365, %v5463
        %v5967 = vcombine.high %v5365, %v5463
        %v5968 = vcombine.high %v5271, %v5271
        %v5970 = vunpack.c.l.s4 1966171168
        %v5971 = vunpack.c.0.s8 %v5970
        %v5972 = vlaneseq
        %v5973 = vshrl.u32 %v5972, 7
        %v5974 = vsub.s32 %v5971, %v5973
        %v5975 = vrot.slane %v5966, %v5974
        %v5977 = vunpack.c.l.s4 1966171168
        %v5978 = vunpack.c.0.s8 %v5977
        %v5979 = vlaneseq
        %v5980 = vshrl.u32 %v5979, 7
        %v5981 = vsub.s32 %v5978, %v5980
        %v5982 = vrot.slane %v5967, %v5981
        %v5984 = vunpack.c.l.s4 1966171168
        %v5985 = vunpack.c.0.s8 %v5984
        %v5986 = vlaneseq
        %v5987 = vshrl.u32 %v5986, 7
        %v5988 = vsub.s32 %v5985, %v5987
        %v5989 = vrot.slane %v5271, %v5988
        %v5991 = vunpack.c.l.s4 1966171168
        %v5992 = vunpack.c.0.s8 %v5991
        %v5993 = vlaneseq
        %v5994 = vshrl.u32 %v5993, 7
        %v5995 = vsub.s32 %v5992, %v5994
        %v5996 = vrot.slane %v5968, %v5995
        %v5997 = vcombine.low %v5975, %v5989
        %v5998 = vcombine.high %v5975, %v5989
        %v5999 = vcombine.low %v5982, %v5996
        %v6000 = vcombine.high %v5982, %v5996
        %v6002 = vunpack.c.l.s4 1966171168
        %v6003 = vunpack.c.0.s8 %v6002
        %v6004 = vlaneseq
        %v6005 = vshrl.u32 %v6004, 7
        %v6006 = vsub.s32 %v6003, %v6005
        %v6007 = vrot.slane %v5997, %v6006
        %v6009 = vunpack.c.l.s4 1966171168
        %v6010 = vunpack.c.0.s8 %v6009
        %v6011 = vlaneseq
        %v6012 = vshrl.u32 %v6011, 7
        %v6013 = vsub.s32 %v6010, %v6012
        %v6014 = vrot.slane %v5999, %v6013
        %v6016 = vunpack.c.l.s4 1966171168
        %v6017 = vunpack.c.0.s8 %v6016
        %v6018 = vlaneseq
        %v6019 = vshrl.u32 %v6018, 7
        %v6020 = vsub.s32 %v6017, %v6019
        %v6021 = vrot.slane %v5998, %v6020
        %v6023 = vunpack.c.l.s4 1966171168
        %v6024 = vunpack.c.0.s8 %v6023
        %v6025 = vlaneseq
        %v6026 = vshrl.u32 %v6025, 7
        %v6027 = vsub.s32 %v6024, %v6026
        %v6028 = vrot.slane %v6000, %v6027
        %v6029 = vcombine.high %v6007, %v6007
        %v6030 = vcombine.high %v6014, %v6014
        %v6031 = vcombine.high %v6021, %v6021
        %v6032 = vcombine.low %v5367, %v5465
        %v6033 = vcombine.high %v5367, %v5465
        %v6034 = vcombine.high %v5272, %v5272
        %v6036 = vunpack.c.l.s4 1966171168
        %v6037 = vunpack.c.0.s8 %v6036
        %v6038 = vlaneseq
        %v6039 = vshrl.u32 %v6038, 7
        %v6040 = vsub.s32 %v6037, %v6039
        %v6041 = vrot.slane %v6032, %v6040
        %v6043 = vunpack.c.l.s4 1966171168
        %v6044 = vunpack.c.0.s8 %v6043
        %v6045 = vlaneseq
        %v6046 = vshrl.u32 %v6045, 7
        %v6047 = vsub.s32 %v6044, %v6046
        %v6048 = vrot.slane %v6033, %v6047
        %v6050 = vunpack.c.l.s4 1966171168
        %v6051 = vunpack.c.0.s8 %v6050
        %v6052 = vlaneseq
        %v6053 = vshrl.u32 %v6052, 7
        %v6054 = vsub.s32 %v6051, %v6053
        %v6055 = vrot.slane %v5272, %v6054
        %v6057 = vunpack.c.l.s4 1966171168
        %v6058 = vunpack.c.0.s8 %v6057
        %v6059 = vlaneseq
        %v6060 = vshrl.u32 %v6059, 7
        %v6061 = vsub.s32 %v6058, %v6060
        %v6062 = vrot.slane %v6034, %v6061
        %v6063 = vcombine.low %v6041, %v6055
        %v6064 = vcombine.high %v6041, %v6055
        %v6065 = vcombine.low %v6048, %v6062
        %v6066 = vcombine.high %v6048, %v6062
        %v6068 = vunpack.c.l.s4 1966171168
        %v6069 = vunpack.c.0.s8 %v6068
        %v6070 = vlaneseq
        %v6071 = vshrl.u32 %v6070, 7
        %v6072 = vsub.s32 %v6069, %v6071
        %v6073 = vrot.slane %v6063, %v6072
        %v6075 = vunpack.c.l.s4 1966171168
        %v6076 = vunpack.c.0.s8 %v6075
        %v6077 = vlaneseq
        %v6078 = vshrl.u32 %v6077, 7
        %v6079 = vsub.s32 %v6076, %v6078
        %v6080 = vrot.slane %v6065, %v6079
        %v6082 = vunpack.c.l.s4 1966171168
        %v6083 = vunpack.c.0.s8 %v6082
        %v6084 = vlaneseq
        %v6085 = vshrl.u32 %v6084, 7
        %v6086 = vsub.s32 %v6083, %v6085
        %v6087 = vrot.slane %v6064, %v6086
        %v6089 = vunpack.c.l.s4 1966171168
        %v6090 = vunpack.c.0.s8 %v6089
        %v6091 = vlaneseq
        %v6092 = vshrl.u32 %v6091, 7
        %v6093 = vsub.s32 %v6090, %v6092
        %v6094 = vrot.slane %v6066, %v6093
        %v6095 = vcombine.high %v6073, %v6073
        %v6096 = vcombine.high %v6080, %v6080
        %v6097 = vcombine.high %v6087, %v6087
        %v6098 = vcombine.low %v5369, %v5467
        %v6099 = vcombine.high %v5369, %v5467
        %v6100 = vcombine.high %v5273, %v5273
        %v6102 = vunpack.c.l.s4 1966171168
        %v6103 = vunpack.c.0.s8 %v6102
        %v6104 = vlaneseq
        %v6105 = vshrl.u32 %v6104, 7
        %v6106 = vsub.s32 %v6103, %v6105
        %v6107 = vrot.slane %v6098, %v6106
        %v6109 = vunpack.c.l.s4 1966171168
        %v6110 = vunpack.c.0.s8 %v6109
        %v6111 = vlaneseq
        %v6112 = vshrl.u32 %v6111, 7
        %v6113 = vsub.s32 %v6110, %v6112
        %v6114 = vrot.slane %v6099, %v6113
        %v6116 = vunpack.c.l.s4 1966171168
        %v6117 = vunpack.c.0.s8 %v6116
        %v6118 = vlaneseq
        %v6119 = vshrl.u32 %v6118, 7
        %v6120 = vsub.s32 %v6117, %v6119
        %v6121 = vrot.slane %v5273, %v6120
        %v6123 = vunpack.c.l.s4 1966171168
        %v6124 = vunpack.c.0.s8 %v6123
        %v6125 = vlaneseq
        %v6126 = vshrl.u32 %v6125, 7
        %v6127 = vsub.s32 %v6124, %v6126
        %v6128 = vrot.slane %v6100, %v6127
        %v6129 = vcombine.low %v6107, %v6121
        %v6130 = vcombine.high %v6107, %v6121
        %v6131 = vcombine.low %v6114, %v6128
        %v6132 = vcombine.high %v6114, %v6128
        %v6134 = vunpack.c.l.s4 1966171168
        %v6135 = vunpack.c.0.s8 %v6134
        %v6136 = vlaneseq
        %v6137 = vshrl.u32 %v6136, 7
        %v6138 = vsub.s32 %v6135, %v6137
        %v6139 = vrot.slane %v6129, %v6138
        %v6141 = vunpack.c.l.s4 1966171168
        %v6142 = vunpack.c.0.s8 %v6141
        %v6143 = vlaneseq
        %v6144 = vshrl.u32 %v6143, 7
        %v6145 = vsub.s32 %v6142, %v6144
        %v6146 = vrot.slane %v6131, %v6145
        %v6148 = vunpack.c.l.s4 1966171168
        %v6149 = vunpack.c.0.s8 %v6148
        %v6150 = vlaneseq
        %v6151 = vshrl.u32 %v6150, 7
        %v6152 = vsub.s32 %v6149, %v6151
        %v6153 = vrot.slane %v6130, %v6152
        %v6155 = vunpack.c.l.s4 1966171168
        %v6156 = vunpack.c.0.s8 %v6155
        %v6157 = vlaneseq
        %v6158 = vshrl.u32 %v6157, 7
        %v6159 = vsub.s32 %v6156, %v6158
        %v6160 = vrot.slane %v6132, %v6159
        %v6161 = vcombine.high %v6139, %v6139
        %v6162 = vcombine.high %v6146, %v6146
        %v6163 = vcombine.high %v6153, %v6153
        %v6164 = vcombine.low %v5371, %v5469
        %v6165 = vcombine.high %v5371, %v5469
        %v6166 = vcombine.high %v5274, %v5274
        %v6168 = vunpack.c.l.s4 1966171168
        %v6169 = vunpack.c.0.s8 %v6168
        %v6170 = vlaneseq
        %v6171 = vshrl.u32 %v6170, 7
        %v6172 = vsub.s32 %v6169, %v6171
        %v6173 = vrot.slane %v6164, %v6172
        %v6175 = vunpack.c.l.s4 1966171168
        %v6176 = vunpack.c.0.s8 %v6175
        %v6177 = vlaneseq
        %v6178 = vshrl.u32 %v6177, 7
        %v6179 = vsub.s32 %v6176, %v6178
        %v6180 = vrot.slane %v6165, %v6179
        %v6182 = vunpack.c.l.s4 1966171168
        %v6183 = vunpack.c.0.s8 %v6182
        %v6184 = vlaneseq
        %v6185 = vshrl.u32 %v6184, 7
        %v6186 = vsub.s32 %v6183, %v6185
        %v6187 = vrot.slane %v5274, %v6186
        %v6189 = vunpack.c.l.s4 1966171168
        %v6190 = vunpack.c.0.s8 %v6189
        %v6191 = vlaneseq
        %v6192 = vshrl.u32 %v6191, 7
        %v6193 = vsub.s32 %v6190, %v6192
        %v6194 = vrot.slane %v6166, %v6193
        %v6195 = vcombine.low %v6173, %v6187
        %v6196 = vcombine.high %v6173, %v6187
        %v6197 = vcombine.low %v6180, %v6194
        %v6198 = vcombine.high %v6180, %v6194
        %v6200 = vunpack.c.l.s4 1966171168
        %v6201 = vunpack.c.0.s8 %v6200
        %v6202 = vlaneseq
        %v6203 = vshrl.u32 %v6202, 7
        %v6204 = vsub.s32 %v6201, %v6203
        %v6205 = vrot.slane %v6195, %v6204
        %v6207 = vunpack.c.l.s4 1966171168
        %v6208 = vunpack.c.0.s8 %v6207
        %v6209 = vlaneseq
        %v6210 = vshrl.u32 %v6209, 7
        %v6211 = vsub.s32 %v6208, %v6210
        %v6212 = vrot.slane %v6197, %v6211
        %v6214 = vunpack.c.l.s4 1966171168
        %v6215 = vunpack.c.0.s8 %v6214
        %v6216 = vlaneseq
        %v6217 = vshrl.u32 %v6216, 7
        %v6218 = vsub.s32 %v6215, %v6217
        %v6219 = vrot.slane %v6196, %v6218
        %v6221 = vunpack.c.l.s4 1966171168
        %v6222 = vunpack.c.0.s8 %v6221
        %v6223 = vlaneseq
        %v6224 = vshrl.u32 %v6223, 7
        %v6225 = vsub.s32 %v6222, %v6224
        %v6226 = vrot.slane %v6198, %v6225
        %v6227 = vcombine.high %v6205, %v6205
        %v6228 = vcombine.high %v6212, %v6212
        %v6229 = vcombine.high %v6219, %v6219
        %v6230 = vcombine.low %v5373, %v5471
        %v6231 = vcombine.high %v5373, %v5471
        %v6232 = vcombine.high %v5275, %v5275
        %v6234 = vunpack.c.l.s4 1966171168
        %v6235 = vunpack.c.0.s8 %v6234
        %v6236 = vlaneseq
        %v6237 = vshrl.u32 %v6236, 7
        %v6238 = vsub.s32 %v6235, %v6237
        %v6239 = vrot.slane %v6230, %v6238
        %v6241 = vunpack.c.l.s4 1966171168
        %v6242 = vunpack.c.0.s8 %v6241
        %v6243 = vlaneseq
        %v6244 = vshrl.u32 %v6243, 7
        %v6245 = vsub.s32 %v6242, %v6244
        %v6246 = vrot.slane %v6231, %v6245
        %v6248 = vunpack.c.l.s4 1966171168
        %v6249 = vunpack.c.0.s8 %v6248
        %v6250 = vlaneseq
        %v6251 = vshrl.u32 %v6250, 7
        %v6252 = vsub.s32 %v6249, %v6251
        %v6253 = vrot.slane %v5275, %v6252
        %v6255 = vunpack.c.l.s4 1966171168
        %v6256 = vunpack.c.0.s8 %v6255
        %v6257 = vlaneseq
        %v6258 = vshrl.u32 %v6257, 7
        %v6259 = vsub.s32 %v6256, %v6258
        %v6260 = vrot.slane %v6232, %v6259
        %v6261 = vcombine.low %v6239, %v6253
        %v6262 = vcombine.high %v6239, %v6253
        %v6263 = vcombine.low %v6246, %v6260
        %v6264 = vcombine.high %v6246, %v6260
        %v6266 = vunpack.c.l.s4 1966171168
        %v6267 = vunpack.c.0.s8 %v6266
        %v6268 = vlaneseq
        %v6269 = vshrl.u32 %v6268, 7
        %v6270 = vsub.s32 %v6267, %v6269
        %v6271 = vrot.slane %v6261, %v6270
        %v6273 = vunpack.c.l.s4 1966171168
        %v6274 = vunpack.c.0.s8 %v6273
        %v6275 = vlaneseq
        %v6276 = vshrl.u32 %v6275, 7
        %v6277 = vsub.s32 %v6274, %v6276
        %v6278 = vrot.slane %v6263, %v6277
        %v6280 = vunpack.c.l.s4 1966171168
        %v6281 = vunpack.c.0.s8 %v6280
        %v6282 = vlaneseq
        %v6283 = vshrl.u32 %v6282, 7
        %v6284 = vsub.s32 %v6281, %v6283
        %v6285 = vrot.slane %v6262, %v6284
        %v6287 = vunpack.c.l.s4 1966171168
        %v6288 = vunpack.c.0.s8 %v6287
        %v6289 = vlaneseq
        %v6290 = vshrl.u32 %v6289, 7
        %v6291 = vsub.s32 %v6288, %v6290
        %v6292 = vrot.slane %v6264, %v6291
        %v6293 = vcombine.high %v6271, %v6271
        %v6294 = vcombine.high %v6278, %v6278
        %v6295 = vcombine.high %v6285, %v6285
        %v6296 = vcombine.low %v5375, %v5473
        %v6297 = vcombine.high %v5375, %v5473
        %v6298 = vcombine.high %v5276, %v5276
        %v6300 = vunpack.c.l.s4 1966171168
        %v6301 = vunpack.c.0.s8 %v6300
        %v6302 = vlaneseq
        %v6303 = vshrl.u32 %v6302, 7
        %v6304 = vsub.s32 %v6301, %v6303
        %v6305 = vrot.slane %v6296, %v6304
        %v6307 = vunpack.c.l.s4 1966171168
        %v6308 = vunpack.c.0.s8 %v6307
        %v6309 = vlaneseq
        %v6310 = vshrl.u32 %v6309, 7
        %v6311 = vsub.s32 %v6308, %v6310
        %v6312 = vrot.slane %v6297, %v6311
        %v6314 = vunpack.c.l.s4 1966171168
        %v6315 = vunpack.c.0.s8 %v6314
        %v6316 = vlaneseq
        %v6317 = vshrl.u32 %v6316, 7
        %v6318 = vsub.s32 %v6315, %v6317
        %v6319 = vrot.slane %v5276, %v6318
        %v6321 = vunpack.c.l.s4 1966171168
        %v6322 = vunpack.c.0.s8 %v6321
        %v6323 = vlaneseq
        %v6324 = vshrl.u32 %v6323, 7
        %v6325 = vsub.s32 %v6322, %v6324
        %v6326 = vrot.slane %v6298, %v6325
        %v6327 = vcombine.low %v6305, %v6319
        %v6328 = vcombine.high %v6305, %v6319
        %v6329 = vcombine.low %v6312, %v6326
        %v6330 = vcombine.high %v6312, %v6326
        %v6332 = vunpack.c.l.s4 1966171168
        %v6333 = vunpack.c.0.s8 %v6332
        %v6334 = vlaneseq
        %v6335 = vshrl.u32 %v6334, 7
        %v6336 = vsub.s32 %v6333, %v6335
        %v6337 = vrot.slane %v6327, %v6336
        %v6339 = vunpack.c.l.s4 1966171168
        %v6340 = vunpack.c.0.s8 %v6339
        %v6341 = vlaneseq
        %v6342 = vshrl.u32 %v6341, 7
        %v6343 = vsub.s32 %v6340, %v6342
        %v6344 = vrot.slane %v6329, %v6343
        %v6346 = vunpack.c.l.s4 1966171168
        %v6347 = vunpack.c.0.s8 %v6346
        %v6348 = vlaneseq
        %v6349 = vshrl.u32 %v6348, 7
        %v6350 = vsub.s32 %v6347, %v6349
        %v6351 = vrot.slane %v6328, %v6350
        %v6353 = vunpack.c.l.s4 1966171168
        %v6354 = vunpack.c.0.s8 %v6353
        %v6355 = vlaneseq
        %v6356 = vshrl.u32 %v6355, 7
        %v6357 = vsub.s32 %v6354, %v6356
        %v6358 = vrot.slane %v6330, %v6357
        %v6359 = vcombine.high %v6337, %v6337
        %v6360 = vcombine.high %v6344, %v6344
        %v6361 = vcombine.high %v6351, %v6351
        %v6362 = vcombine.low %v5377, %v5475
        %v6363 = vcombine.high %v5377, %v5475
        %v6364 = vcombine.high %v5277, %v5277
        %v6366 = vunpack.c.l.s4 1966171168
        %v6367 = vunpack.c.0.s8 %v6366
        %v6368 = vlaneseq
        %v6369 = vshrl.u32 %v6368, 7
        %v6370 = vsub.s32 %v6367, %v6369
        %v6371 = vrot.slane %v6362, %v6370
        %v6373 = vunpack.c.l.s4 1966171168
        %v6374 = vunpack.c.0.s8 %v6373
        %v6375 = vlaneseq
        %v6376 = vshrl.u32 %v6375, 7
        %v6377 = vsub.s32 %v6374, %v6376
        %v6378 = vrot.slane %v6363, %v6377
        %v6380 = vunpack.c.l.s4 1966171168
        %v6381 = vunpack.c.0.s8 %v6380
        %v6382 = vlaneseq
        %v6383 = vshrl.u32 %v6382, 7
        %v6384 = vsub.s32 %v6381, %v6383
        %v6385 = vrot.slane %v5277, %v6384
        %v6387 = vunpack.c.l.s4 1966171168
        %v6388 = vunpack.c.0.s8 %v6387
        %v6389 = vlaneseq
        %v6390 = vshrl.u32 %v6389, 7
        %v6391 = vsub.s32 %v6388, %v6390
        %v6392 = vrot.slane %v6364, %v6391
        %v6393 = vcombine.low %v6371, %v6385
        %v6394 = vcombine.high %v6371, %v6385
        %v6395 = vcombine.low %v6378, %v6392
        %v6396 = vcombine.high %v6378, %v6392
        %v6398 = vunpack.c.l.s4 1966171168
        %v6399 = vunpack.c.0.s8 %v6398
        %v6400 = vlaneseq
        %v6401 = vshrl.u32 %v6400, 7
        %v6402 = vsub.s32 %v6399, %v6401
        %v6403 = vrot.slane %v6393, %v6402
        %v6405 = vunpack.c.l.s4 1966171168
        %v6406 = vunpack.c.0.s8 %v6405
        %v6407 = vlaneseq
        %v6408 = vshrl.u32 %v6407, 7
        %v6409 = vsub.s32 %v6406, %v6408
        %v6410 = vrot.slane %v6395, %v6409
        %v6412 = vunpack.c.l.s4 1966171168
        %v6413 = vunpack.c.0.s8 %v6412
        %v6414 = vlaneseq
        %v6415 = vshrl.u32 %v6414, 7
        %v6416 = vsub.s32 %v6413, %v6415
        %v6417 = vrot.slane %v6394, %v6416
        %v6419 = vunpack.c.l.s4 1966171168
        %v6420 = vunpack.c.0.s8 %v6419
        %v6421 = vlaneseq
        %v6422 = vshrl.u32 %v6421, 7
        %v6423 = vsub.s32 %v6420, %v6422
        %v6424 = vrot.slane %v6396, %v6423
        %v6425 = vcombine.high %v6403, %v6403
        %v6426 = vcombine.high %v6410, %v6410
        %v6427 = vcombine.high %v6417, %v6417
        %v6428 = vld [vmem:[%s3] sm:$0xf]
        %v6429 = vld [vmem:[%s3 + $0x4] sm:$0xf]
        %v6430 = vld [vmem:[%s3 + $0x8] sm:$0xf]
        %v6431 = vld [vmem:[%s3 + $0xc] sm:$0xf]
        %v6432 = vld [vmem:[%s3 + $0x10] sm:$0xf]
        %v6433 = vld [vmem:[%s3 + $0x14] sm:$0xf]
        %v6434 = vld [vmem:[%s3 + $0x18] sm:$0xf]
        %v6435 = vld [vmem:[%s3 + $0x1c] sm:$0xf]
        %v6436 = vld [vmem:[%s3 + $0x20] sm:$0xf]
        %v6437 = vld [vmem:[%s3 + $0x24] sm:$0xf]
        %v6438 = vld [vmem:[%s3 + $0x28] sm:$0xf]
        %v6439 = vld [vmem:[%s3 + $0x2c] sm:$0xf]
        %v6440 = vld [vmem:[%s3 + $0x30] sm:$0xf]
        %v6441 = vld [vmem:[%s3 + $0x34] sm:$0xf]
        %v6442 = vld [vmem:[%s3 + $0x38] sm:$0xf]
        %v6443 = vld [vmem:[%s3 + $0x3c] sm:$0xf]
        %v6444 = vld [vmem:[%s3 + $0x40] sm:$0xf]
        %v6445 = vld [vmem:[%s3 + $0x44] sm:$0xf]
        %v6446 = vld [vmem:[%s3 + $0x48] sm:$0xf]
        %v6447 = vld [vmem:[%s3 + $0x4c] sm:$0xf]
        %v6448 = vld [vmem:[%s3 + $0x50] sm:$0xf]
        %v6449 = vld [vmem:[%s3 + $0x54] sm:$0xf]
        %v6450 = vld [vmem:[%s3 + $0x58] sm:$0xf]
        %v6451 = vld [vmem:[%s3 + $0x5c] sm:$0xf]
        %v6452 = vld [vmem:[%s3 + $0x60] sm:$0xf]
        %v6453 = vld [vmem:[%s3 + $0x64] sm:$0xf]
        %v6454 = vld [vmem:[%s3 + $0x68] sm:$0xf]
        %v6455 = vld [vmem:[%s3 + $0x6c] sm:$0xf]
        %v6456 = vld [vmem:[%s3 + $0x70] sm:$0xf]
        %v6457 = vld [vmem:[%s3 + $0x74] sm:$0xf]
        %v6458 = vld [vmem:[%s3 + $0x78] sm:$0xf]
        %v6459 = vld [vmem:[%s3 + $0x7c] sm:$0xf]
        %v6460 = vld [vmem:[%s3 + $0x80] sm:$0xf]
        %v6461 = vld [vmem:[%s3 + $0x84] sm:$0xf]
        %v6462 = vld [vmem:[%s3 + $0x88] sm:$0xf]
        %v6463 = vld [vmem:[%s3 + $0x8c] sm:$0xf]
        %v6464 = vld [vmem:[#allocation5] sm:$0x1]
        %v6466 = vlaneseq
        %v6467 = vshrl.u32 %v6466, 7
        %v6468 = vsub.s32 0, %v6467
        %v6469 = vrot.slane %v6464, %v6468
        %v6471 = vcombine.low %v5545, %v5559
        %v6472 = vcombine.low %v5567, %v5569
        %v6473 = vcombine.low %v5552, %v5566
        %v6474 = vcombine.low %v5568, %v5611
        %v6476 = vunpack.c.l.s4 1966171168
        %v6477 = vunpack.c.0.s8 %v6476
        %v6478 = vlaneseq
        %v6479 = vshrl.u32 %v6478, 7
        %v6480 = vsub.s32 %v6477, %v6479
        %v6481 = vrot.slane %v6471, %v6480
        %v6483 = vunpack.c.l.s4 1966171168
        %v6484 = vunpack.c.0.s8 %v6483
        %v6485 = vlaneseq
        %v6486 = vshrl.u32 %v6485, 7
        %v6487 = vsub.s32 %v6484, %v6486
        %v6488 = vrot.slane %v6472, %v6487
        %v6490 = vunpack.c.l.s4 1966171168
        %v6491 = vunpack.c.0.s8 %v6490
        %v6492 = vlaneseq
        %v6493 = vshrl.u32 %v6492, 7
        %v6494 = vsub.s32 %v6491, %v6493
        %v6495 = vrot.slane %v6473, %v6494
        %v6497 = vunpack.c.l.s4 1966171168
        %v6498 = vunpack.c.0.s8 %v6497
        %v6499 = vlaneseq
        %v6500 = vshrl.u32 %v6499, 7
        %v6501 = vsub.s32 %v6498, %v6500
        %v6502 = vrot.slane %v6474, %v6501
        %v6503 = vcombine.low %v6481, %v6488
        %v6504 = vcombine.high %v6481, %v6488
        %v6505 = vcombine.low %v6495, %v6502
        %v6506 = vcombine.high %v6495, %v6502
        %v6508 = vunpack.c.l.s4 1966171168
        %v6509 = vunpack.c.0.s8 %v6508
        %v6510 = vlaneseq
        %v6511 = vshrl.u32 %v6510, 7
        %v6512 = vsub.s32 %v6509, %v6511
        %v6513 = vrot.slane %v6503, %v6512
        %v6515 = vunpack.c.l.s4 1966171168
        %v6516 = vunpack.c.0.s8 %v6515
        %v6517 = vlaneseq
        %v6518 = vshrl.u32 %v6517, 7
        %v6519 = vsub.s32 %v6516, %v6518
        %v6520 = vrot.slane %v6504, %v6519
        %v6522 = vunpack.c.l.s4 1966171168
        %v6523 = vunpack.c.0.s8 %v6522
        %v6524 = vlaneseq
        %v6525 = vshrl.u32 %v6524, 7
        %v6526 = vsub.s32 %v6523, %v6525
        %v6527 = vrot.slane %v6505, %v6526
        %v6529 = vunpack.c.l.s4 1966171168
        %v6530 = vunpack.c.0.s8 %v6529
        %v6531 = vlaneseq
        %v6532 = vshrl.u32 %v6531, 7
        %v6533 = vsub.s32 %v6530, %v6532
        %v6534 = vrot.slane %v6506, %v6533
        %v6535 = vcombine.low %v6513, %v6527
        %v6536 = vcombine.high %v6513, %v6527
        %v6537 = vcombine.low %v6520, %v6534
        %v6538 = vcombine.low %v5625, %v5633
        %v6539 = vcombine.low %v5635, %v5618
        %v6540 = vcombine.low %v5632, %v5634
        %v6541 = vcombine.low %v5677, %v5691
        %v6543 = vunpack.c.l.s4 1966171168
        %v6544 = vunpack.c.0.s8 %v6543
        %v6545 = vlaneseq
        %v6546 = vshrl.u32 %v6545, 7
        %v6547 = vsub.s32 %v6544, %v6546
        %v6548 = vrot.slane %v6538, %v6547
        %v6550 = vunpack.c.l.s4 1966171168
        %v6551 = vunpack.c.0.s8 %v6550
        %v6552 = vlaneseq
        %v6553 = vshrl.u32 %v6552, 7
        %v6554 = vsub.s32 %v6551, %v6553
        %v6555 = vrot.slane %v6539, %v6554
        %v6557 = vunpack.c.l.s4 1966171168
        %v6558 = vunpack.c.0.s8 %v6557
        %v6559 = vlaneseq
        %v6560 = vshrl.u32 %v6559, 7
        %v6561 = vsub.s32 %v6558, %v6560
        %v6562 = vrot.slane %v6540, %v6561
        %v6564 = vunpack.c.l.s4 1966171168
        %v6565 = vunpack.c.0.s8 %v6564
        %v6566 = vlaneseq
        %v6567 = vshrl.u32 %v6566, 7
        %v6568 = vsub.s32 %v6565, %v6567
        %v6569 = vrot.slane %v6541, %v6568
        %v6570 = vcombine.low %v6548, %v6555
        %v6571 = vcombine.high %v6548, %v6555
        %v6572 = vcombine.low %v6562, %v6569
        %v6573 = vcombine.high %v6562, %v6569
        %v6575 = vunpack.c.l.s4 1966171168
        %v6576 = vunpack.c.0.s8 %v6575
        %v6577 = vlaneseq
        %v6578 = vshrl.u32 %v6577, 7
        %v6579 = vsub.s32 %v6576, %v6578
        %v6580 = vrot.slane %v6570, %v6579
        %v6582 = vunpack.c.l.s4 1966171168
        %v6583 = vunpack.c.0.s8 %v6582
        %v6584 = vlaneseq
        %v6585 = vshrl.u32 %v6584, 7
        %v6586 = vsub.s32 %v6583, %v6585
        %v6587 = vrot.slane %v6571, %v6586
        %v6589 = vunpack.c.l.s4 1966171168
        %v6590 = vunpack.c.0.s8 %v6589
        %v6591 = vlaneseq
        %v6592 = vshrl.u32 %v6591, 7
        %v6593 = vsub.s32 %v6590, %v6592
        %v6594 = vrot.slane %v6572, %v6593
        %v6596 = vunpack.c.l.s4 1966171168
        %v6597 = vunpack.c.0.s8 %v6596
        %v6598 = vlaneseq
        %v6599 = vshrl.u32 %v6598, 7
        %v6600 = vsub.s32 %v6597, %v6599
        %v6601 = vrot.slane %v6573, %v6600
        %v6602 = vcombine.low %v6580, %v6594
        %v6603 = vcombine.high %v6580, %v6594
        %v6604 = vcombine.low %v6587, %v6601
        %v6605 = vcombine.low %v5699, %v5701
        %v6606 = vcombine.low %v5684, %v5698
        %v6607 = vcombine.low %v5700, %v5743
        %v6608 = vcombine.low %v5757, %v5765
        %v6610 = vunpack.c.l.s4 1966171168
        %v6611 = vunpack.c.0.s8 %v6610
        %v6612 = vlaneseq
        %v6613 = vshrl.u32 %v6612, 7
        %v6614 = vsub.s32 %v6611, %v6613
        %v6615 = vrot.slane %v6605, %v6614
        %v6617 = vunpack.c.l.s4 1966171168
        %v6618 = vunpack.c.0.s8 %v6617
        %v6619 = vlaneseq
        %v6620 = vshrl.u32 %v6619, 7
        %v6621 = vsub.s32 %v6618, %v6620
        %v6622 = vrot.slane %v6606, %v6621
        %v6624 = vunpack.c.l.s4 1966171168
        %v6625 = vunpack.c.0.s8 %v6624
        %v6626 = vlaneseq
        %v6627 = vshrl.u32 %v6626, 7
        %v6628 = vsub.s32 %v6625, %v6627
        %v6629 = vrot.slane %v6607, %v6628
        %v6631 = vunpack.c.l.s4 1966171168
        %v6632 = vunpack.c.0.s8 %v6631
        %v6633 = vlaneseq
        %v6634 = vshrl.u32 %v6633, 7
        %v6635 = vsub.s32 %v6632, %v6634
        %v6636 = vrot.slane %v6608, %v6635
        %v6637 = vcombine.low %v6615, %v6622
        %v6638 = vcombine.high %v6615, %v6622
        %v6639 = vcombine.low %v6629, %v6636
        %v6640 = vcombine.high %v6629, %v6636
        %v6642 = vunpack.c.l.s4 1966171168
        %v6643 = vunpack.c.0.s8 %v6642
        %v6644 = vlaneseq
        %v6645 = vshrl.u32 %v6644, 7
        %v6646 = vsub.s32 %v6643, %v6645
        %v6647 = vrot.slane %v6637, %v6646
        %v6649 = vunpack.c.l.s4 1966171168
        %v6650 = vunpack.c.0.s8 %v6649
        %v6651 = vlaneseq
        %v6652 = vshrl.u32 %v6651, 7
        %v6653 = vsub.s32 %v6650, %v6652
        %v6654 = vrot.slane %v6638, %v6653
        %v6656 = vunpack.c.l.s4 1966171168
        %v6657 = vunpack.c.0.s8 %v6656
        %v6658 = vlaneseq
        %v6659 = vshrl.u32 %v6658, 7
        %v6660 = vsub.s32 %v6657, %v6659
        %v6661 = vrot.slane %v6639, %v6660
        %v6663 = vunpack.c.l.s4 1966171168
        %v6664 = vunpack.c.0.s8 %v6663
        %v6665 = vlaneseq
        %v6666 = vshrl.u32 %v6665, 7
        %v6667 = vsub.s32 %v6664, %v6666
        %v6668 = vrot.slane %v6640, %v6667
        %v6669 = vcombine.low %v6647, %v6661
        %v6670 = vcombine.high %v6647, %v6661
        %v6671 = vcombine.low %v6654, %v6668
        %v6672 = vcombine.low %v5767, %v5750
        %v6673 = vcombine.low %v5764, %v5766
        %v6674 = vcombine.low %v5809, %v5823
        %v6675 = vcombine.low %v5831, %v5833
        %v6677 = vunpack.c.l.s4 1966171168
        %v6678 = vunpack.c.0.s8 %v6677
        %v6679 = vlaneseq
        %v6680 = vshrl.u32 %v6679, 7
        %v6681 = vsub.s32 %v6678, %v6680
        %v6682 = vrot.slane %v6672, %v6681
        %v6684 = vunpack.c.l.s4 1966171168
        %v6685 = vunpack.c.0.s8 %v6684
        %v6686 = vlaneseq
        %v6687 = vshrl.u32 %v6686, 7
        %v6688 = vsub.s32 %v6685, %v6687
        %v6689 = vrot.slane %v6673, %v6688
        %v6691 = vunpack.c.l.s4 1966171168
        %v6692 = vunpack.c.0.s8 %v6691
        %v6693 = vlaneseq
        %v6694 = vshrl.u32 %v6693, 7
        %v6695 = vsub.s32 %v6692, %v6694
        %v6696 = vrot.slane %v6674, %v6695
        %v6698 = vunpack.c.l.s4 1966171168
        %v6699 = vunpack.c.0.s8 %v6698
        %v6700 = vlaneseq
        %v6701 = vshrl.u32 %v6700, 7
        %v6702 = vsub.s32 %v6699, %v6701
        %v6703 = vrot.slane %v6675, %v6702
        %v6704 = vcombine.low %v6682, %v6689
        %v6705 = vcombine.high %v6682, %v6689
        %v6706 = vcombine.low %v6696, %v6703
        %v6707 = vcombine.high %v6696, %v6703
        %v6709 = vunpack.c.l.s4 1966171168
        %v6710 = vunpack.c.0.s8 %v6709
        %v6711 = vlaneseq
        %v6712 = vshrl.u32 %v6711, 7
        %v6713 = vsub.s32 %v6710, %v6712
        %v6714 = vrot.slane %v6704, %v6713
        %v6716 = vunpack.c.l.s4 1966171168
        %v6717 = vunpack.c.0.s8 %v6716
        %v6718 = vlaneseq
        %v6719 = vshrl.u32 %v6718, 7
        %v6720 = vsub.s32 %v6717, %v6719
        %v6721 = vrot.slane %v6705, %v6720
        %v6723 = vunpack.c.l.s4 1966171168
        %v6724 = vunpack.c.0.s8 %v6723
        %v6725 = vlaneseq
        %v6726 = vshrl.u32 %v6725, 7
        %v6727 = vsub.s32 %v6724, %v6726
        %v6728 = vrot.slane %v6706, %v6727
        %v6730 = vunpack.c.l.s4 1966171168
        %v6731 = vunpack.c.0.s8 %v6730
        %v6732 = vlaneseq
        %v6733 = vshrl.u32 %v6732, 7
        %v6734 = vsub.s32 %v6731, %v6733
        %v6735 = vrot.slane %v6707, %v6734
        %v6736 = vcombine.low %v6714, %v6728
        %v6737 = vcombine.high %v6714, %v6728
        %v6738 = vcombine.low %v6721, %v6735
        %v6739 = vcombine.low %v5816, %v5830
        %v6740 = vcombine.low %v5832, %v5875
        %v6741 = vcombine.low %v5889, %v5897
        %v6742 = vcombine.low %v5899, %v5882
        %v6744 = vunpack.c.l.s4 1966171168
        %v6745 = vunpack.c.0.s8 %v6744
        %v6746 = vlaneseq
        %v6747 = vshrl.u32 %v6746, 7
        %v6748 = vsub.s32 %v6745, %v6747
        %v6749 = vrot.slane %v6739, %v6748
        %v6751 = vunpack.c.l.s4 1966171168
        %v6752 = vunpack.c.0.s8 %v6751
        %v6753 = vlaneseq
        %v6754 = vshrl.u32 %v6753, 7
        %v6755 = vsub.s32 %v6752, %v6754
        %v6756 = vrot.slane %v6740, %v6755
        %v6758 = vunpack.c.l.s4 1966171168
        %v6759 = vunpack.c.0.s8 %v6758
        %v6760 = vlaneseq
        %v6761 = vshrl.u32 %v6760, 7
        %v6762 = vsub.s32 %v6759, %v6761
        %v6763 = vrot.slane %v6741, %v6762
        %v6765 = vunpack.c.l.s4 1966171168
        %v6766 = vunpack.c.0.s8 %v6765
        %v6767 = vlaneseq
        %v6768 = vshrl.u32 %v6767, 7
        %v6769 = vsub.s32 %v6766, %v6768
        %v6770 = vrot.slane %v6742, %v6769
        %v6771 = vcombine.low %v6749, %v6756
        %v6772 = vcombine.high %v6749, %v6756
        %v6773 = vcombine.low %v6763, %v6770
        %v6774 = vcombine.high %v6763, %v6770
        %v6776 = vunpack.c.l.s4 1966171168
        %v6777 = vunpack.c.0.s8 %v6776
        %v6778 = vlaneseq
        %v6779 = vshrl.u32 %v6778, 7
        %v6780 = vsub.s32 %v6777, %v6779
        %v6781 = vrot.slane %v6771, %v6780
        %v6783 = vunpack.c.l.s4 1966171168
        %v6784 = vunpack.c.0.s8 %v6783
        %v6785 = vlaneseq
        %v6786 = vshrl.u32 %v6785, 7
        %v6787 = vsub.s32 %v6784, %v6786
        %v6788 = vrot.slane %v6772, %v6787
        %v6790 = vunpack.c.l.s4 1966171168
        %v6791 = vunpack.c.0.s8 %v6790
        %v6792 = vlaneseq
        %v6793 = vshrl.u32 %v6792, 7
        %v6794 = vsub.s32 %v6791, %v6793
        %v6795 = vrot.slane %v6773, %v6794
        %v6797 = vunpack.c.l.s4 1966171168
        %v6798 = vunpack.c.0.s8 %v6797
        %v6799 = vlaneseq
        %v6800 = vshrl.u32 %v6799, 7
        %v6801 = vsub.s32 %v6798, %v6800
        %v6802 = vrot.slane %v6774, %v6801
        %v6803 = vcombine.low %v6781, %v6795
        %v6804 = vcombine.high %v6781, %v6795
        %v6805 = vcombine.low %v6788, %v6802
        %v6806 = vcombine.low %v5896, %v5898
        %v6807 = vcombine.low %v5941, %v5955
        %v6808 = vcombine.low %v5963, %v5965
        %v6809 = vcombine.low %v5948, %v5962
        %v6811 = vunpack.c.l.s4 1966171168
        %v6812 = vunpack.c.0.s8 %v6811
        %v6813 = vlaneseq
        %v6814 = vshrl.u32 %v6813, 7
        %v6815 = vsub.s32 %v6812, %v6814
        %v6816 = vrot.slane %v6806, %v6815
        %v6818 = vunpack.c.l.s4 1966171168
        %v6819 = vunpack.c.0.s8 %v6818
        %v6820 = vlaneseq
        %v6821 = vshrl.u32 %v6820, 7
        %v6822 = vsub.s32 %v6819, %v6821
        %v6823 = vrot.slane %v6807, %v6822
        %v6825 = vunpack.c.l.s4 1966171168
        %v6826 = vunpack.c.0.s8 %v6825
        %v6827 = vlaneseq
        %v6828 = vshrl.u32 %v6827, 7
        %v6829 = vsub.s32 %v6826, %v6828
        %v6830 = vrot.slane %v6808, %v6829
        %v6832 = vunpack.c.l.s4 1966171168
        %v6833 = vunpack.c.0.s8 %v6832
        %v6834 = vlaneseq
        %v6835 = vshrl.u32 %v6834, 7
        %v6836 = vsub.s32 %v6833, %v6835
        %v6837 = vrot.slane %v6809, %v6836
        %v6838 = vcombine.low %v6816, %v6823
        %v6839 = vcombine.high %v6816, %v6823
        %v6840 = vcombine.low %v6830, %v6837
        %v6841 = vcombine.high %v6830, %v6837
        %v6843 = vunpack.c.l.s4 1966171168
        %v6844 = vunpack.c.0.s8 %v6843
        %v6845 = vlaneseq
        %v6846 = vshrl.u32 %v6845, 7
        %v6847 = vsub.s32 %v6844, %v6846
        %v6848 = vrot.slane %v6838, %v6847
        %v6850 = vunpack.c.l.s4 1966171168
        %v6851 = vunpack.c.0.s8 %v6850
        %v6852 = vlaneseq
        %v6853 = vshrl.u32 %v6852, 7
        %v6854 = vsub.s32 %v6851, %v6853
        %v6855 = vrot.slane %v6839, %v6854
        %v6857 = vunpack.c.l.s4 1966171168
        %v6858 = vunpack.c.0.s8 %v6857
        %v6859 = vlaneseq
        %v6860 = vshrl.u32 %v6859, 7
        %v6861 = vsub.s32 %v6858, %v6860
        %v6862 = vrot.slane %v6840, %v6861
        %v6864 = vunpack.c.l.s4 1966171168
        %v6865 = vunpack.c.0.s8 %v6864
        %v6866 = vlaneseq
        %v6867 = vshrl.u32 %v6866, 7
        %v6868 = vsub.s32 %v6865, %v6867
        %v6869 = vrot.slane %v6841, %v6868
        %v6870 = vcombine.low %v6848, %v6862
        %v6871 = vcombine.high %v6848, %v6862
        %v6872 = vcombine.low %v6855, %v6869
        %v6873 = vcombine.low %v5964, %v6007
        %v6874 = vcombine.low %v6021, %v6029
        %v6875 = vcombine.low %v6031, %v6014
        %v6876 = vcombine.low %v6028, %v6030
        %v6878 = vunpack.c.l.s4 1966171168
        %v6879 = vunpack.c.0.s8 %v6878
        %v6880 = vlaneseq
        %v6881 = vshrl.u32 %v6880, 7
        %v6882 = vsub.s32 %v6879, %v6881
        %v6883 = vrot.slane %v6873, %v6882
        %v6885 = vunpack.c.l.s4 1966171168
        %v6886 = vunpack.c.0.s8 %v6885
        %v6887 = vlaneseq
        %v6888 = vshrl.u32 %v6887, 7
        %v6889 = vsub.s32 %v6886, %v6888
        %v6890 = vrot.slane %v6874, %v6889
        %v6892 = vunpack.c.l.s4 1966171168
        %v6893 = vunpack.c.0.s8 %v6892
        %v6894 = vlaneseq
        %v6895 = vshrl.u32 %v6894, 7
        %v6896 = vsub.s32 %v6893, %v6895
        %v6897 = vrot.slane %v6875, %v6896
        %v6899 = vunpack.c.l.s4 1966171168
        %v6900 = vunpack.c.0.s8 %v6899
        %v6901 = vlaneseq
        %v6902 = vshrl.u32 %v6901, 7
        %v6903 = vsub.s32 %v6900, %v6902
        %v6904 = vrot.slane %v6876, %v6903
        %v6905 = vcombine.low %v6883, %v6890
        %v6906 = vcombine.high %v6883, %v6890
        %v6907 = vcombine.low %v6897, %v6904
        %v6908 = vcombine.high %v6897, %v6904
        %v6910 = vunpack.c.l.s4 1966171168
        %v6911 = vunpack.c.0.s8 %v6910
        %v6912 = vlaneseq
        %v6913 = vshrl.u32 %v6912, 7
        %v6914 = vsub.s32 %v6911, %v6913
        %v6915 = vrot.slane %v6905, %v6914
        %v6917 = vunpack.c.l.s4 1966171168
        %v6918 = vunpack.c.0.s8 %v6917
        %v6919 = vlaneseq
        %v6920 = vshrl.u32 %v6919, 7
        %v6921 = vsub.s32 %v6918, %v6920
        %v6922 = vrot.slane %v6906, %v6921
        %v6924 = vunpack.c.l.s4 1966171168
        %v6925 = vunpack.c.0.s8 %v6924
        %v6926 = vlaneseq
        %v6927 = vshrl.u32 %v6926, 7
        %v6928 = vsub.s32 %v6925, %v6927
        %v6929 = vrot.slane %v6907, %v6928
        %v6931 = vunpack.c.l.s4 1966171168
        %v6932 = vunpack.c.0.s8 %v6931
        %v6933 = vlaneseq
        %v6934 = vshrl.u32 %v6933, 7
        %v6935 = vsub.s32 %v6932, %v6934
        %v6936 = vrot.slane %v6908, %v6935
        %v6937 = vcombine.low %v6915, %v6929
        %v6938 = vcombine.high %v6915, %v6929
        %v6939 = vcombine.low %v6922, %v6936
        %v6940 = vcombine.low %v6073, %v6087
        %v6941 = vcombine.low %v6095, %v6097
        %v6942 = vcombine.low %v6080, %v6094
        %v6943 = vcombine.low %v6096, %v6139
        %v6945 = vunpack.c.l.s4 1966171168
        %v6946 = vunpack.c.0.s8 %v6945
        %v6947 = vlaneseq
        %v6948 = vshrl.u32 %v6947, 7
        %v6949 = vsub.s32 %v6946, %v6948
        %v6950 = vrot.slane %v6940, %v6949
        %v6952 = vunpack.c.l.s4 1966171168
        %v6953 = vunpack.c.0.s8 %v6952
        %v6954 = vlaneseq
        %v6955 = vshrl.u32 %v6954, 7
        %v6956 = vsub.s32 %v6953, %v6955
        %v6957 = vrot.slane %v6941, %v6956
        %v6959 = vunpack.c.l.s4 1966171168
        %v6960 = vunpack.c.0.s8 %v6959
        %v6961 = vlaneseq
        %v6962 = vshrl.u32 %v6961, 7
        %v6963 = vsub.s32 %v6960, %v6962
        %v6964 = vrot.slane %v6942, %v6963
        %v6966 = vunpack.c.l.s4 1966171168
        %v6967 = vunpack.c.0.s8 %v6966
        %v6968 = vlaneseq
        %v6969 = vshrl.u32 %v6968, 7
        %v6970 = vsub.s32 %v6967, %v6969
        %v6971 = vrot.slane %v6943, %v6970
        %v6972 = vcombine.low %v6950, %v6957
        %v6973 = vcombine.high %v6950, %v6957
        %v6974 = vcombine.low %v6964, %v6971
        %v6975 = vcombine.high %v6964, %v6971
        %v6977 = vunpack.c.l.s4 1966171168
        %v6978 = vunpack.c.0.s8 %v6977
        %v6979 = vlaneseq
        %v6980 = vshrl.u32 %v6979, 7
        %v6981 = vsub.s32 %v6978, %v6980
        %v6982 = vrot.slane %v6972, %v6981
        %v6984 = vunpack.c.l.s4 1966171168
        %v6985 = vunpack.c.0.s8 %v6984
        %v6986 = vlaneseq
        %v6987 = vshrl.u32 %v6986, 7
        %v6988 = vsub.s32 %v6985, %v6987
        %v6989 = vrot.slane %v6973, %v6988
        %v6991 = vunpack.c.l.s4 1966171168
        %v6992 = vunpack.c.0.s8 %v6991
        %v6993 = vlaneseq
        %v6994 = vshrl.u32 %v6993, 7
        %v6995 = vsub.s32 %v6992, %v6994
        %v6996 = vrot.slane %v6974, %v6995
        %v6998 = vunpack.c.l.s4 1966171168
        %v6999 = vunpack.c.0.s8 %v6998
        %v7000 = vlaneseq
        %v7001 = vshrl.u32 %v7000, 7
        %v7002 = vsub.s32 %v6999, %v7001
        %v7003 = vrot.slane %v6975, %v7002
        %v7004 = vcombine.low %v6982, %v6996
        %v7005 = vcombine.high %v6982, %v6996
        %v7006 = vcombine.low %v6989, %v7003
        %v7007 = vcombine.low %v6153, %v6161
        %v7008 = vcombine.low %v6163, %v6146
        %v7009 = vcombine.low %v6160, %v6162
        %v7010 = vcombine.low %v6205, %v6219
        %v7012 = vunpack.c.l.s4 1966171168
        %v7013 = vunpack.c.0.s8 %v7012
        %v7014 = vlaneseq
        %v7015 = vshrl.u32 %v7014, 7
        %v7016 = vsub.s32 %v7013, %v7015
        %v7017 = vrot.slane %v7007, %v7016
        %v7019 = vunpack.c.l.s4 1966171168
        %v7020 = vunpack.c.0.s8 %v7019
        %v7021 = vlaneseq
        %v7022 = vshrl.u32 %v7021, 7
        %v7023 = vsub.s32 %v7020, %v7022
        %v7024 = vrot.slane %v7008, %v7023
        %v7026 = vunpack.c.l.s4 1966171168
        %v7027 = vunpack.c.0.s8 %v7026
        %v7028 = vlaneseq
        %v7029 = vshrl.u32 %v7028, 7
        %v7030 = vsub.s32 %v7027, %v7029
        %v7031 = vrot.slane %v7009, %v7030
        %v7033 = vunpack.c.l.s4 1966171168
        %v7034 = vunpack.c.0.s8 %v7033
        %v7035 = vlaneseq
        %v7036 = vshrl.u32 %v7035, 7
        %v7037 = vsub.s32 %v7034, %v7036
        %v7038 = vrot.slane %v7010, %v7037
        %v7039 = vcombine.low %v7017, %v7024
        %v7040 = vcombine.high %v7017, %v7024
        %v7041 = vcombine.low %v7031, %v7038
        %v7042 = vcombine.high %v7031, %v7038
        %v7044 = vunpack.c.l.s4 1966171168
        %v7045 = vunpack.c.0.s8 %v7044
        %v7046 = vlaneseq
        %v7047 = vshrl.u32 %v7046, 7
        %v7048 = vsub.s32 %v7045, %v7047
        %v7049 = vrot.slane %v7039, %v7048
        %v7051 = vunpack.c.l.s4 1966171168
        %v7052 = vunpack.c.0.s8 %v7051
        %v7053 = vlaneseq
        %v7054 = vshrl.u32 %v7053, 7
        %v7055 = vsub.s32 %v7052, %v7054
        %v7056 = vrot.slane %v7040, %v7055
        %v7058 = vunpack.c.l.s4 1966171168
        %v7059 = vunpack.c.0.s8 %v7058
        %v7060 = vlaneseq
        %v7061 = vshrl.u32 %v7060, 7
        %v7062 = vsub.s32 %v7059, %v7061
        %v7063 = vrot.slane %v7041, %v7062
        %v7065 = vunpack.c.l.s4 1966171168
        %v7066 = vunpack.c.0.s8 %v7065
        %v7067 = vlaneseq
        %v7068 = vshrl.u32 %v7067, 7
        %v7069 = vsub.s32 %v7066, %v7068
        %v7070 = vrot.slane %v7042, %v7069
        %v7071 = vcombine.low %v7049, %v7063
        %v7072 = vcombine.high %v7049, %v7063
        %v7073 = vcombine.low %v7056, %v7070
        %v7074 = vcombine.low %v6227, %v6229
        %v7075 = vcombine.low %v6212, %v6226
        %v7076 = vcombine.low %v6228, %v6271
        %v7077 = vcombine.low %v6285, %v6293
        %v7079 = vunpack.c.l.s4 1966171168
        %v7080 = vunpack.c.0.s8 %v7079
        %v7081 = vlaneseq
        %v7082 = vshrl.u32 %v7081, 7
        %v7083 = vsub.s32 %v7080, %v7082
        %v7084 = vrot.slane %v7074, %v7083
        %v7086 = vunpack.c.l.s4 1966171168
        %v7087 = vunpack.c.0.s8 %v7086
        %v7088 = vlaneseq
        %v7089 = vshrl.u32 %v7088, 7
        %v7090 = vsub.s32 %v7087, %v7089
        %v7091 = vrot.slane %v7075, %v7090
        %v7093 = vunpack.c.l.s4 1966171168
        %v7094 = vunpack.c.0.s8 %v7093
        %v7095 = vlaneseq
        %v7096 = vshrl.u32 %v7095, 7
        %v7097 = vsub.s32 %v7094, %v7096
        %v7098 = vrot.slane %v7076, %v7097
        %v7100 = vunpack.c.l.s4 1966171168
        %v7101 = vunpack.c.0.s8 %v7100
        %v7102 = vlaneseq
        %v7103 = vshrl.u32 %v7102, 7
        %v7104 = vsub.s32 %v7101, %v7103
        %v7105 = vrot.slane %v7077, %v7104
        %v7106 = vcombine.low %v7084, %v7091
        %v7107 = vcombine.high %v7084, %v7091
        %v7108 = vcombine.low %v7098, %v7105
        %v7109 = vcombine.high %v7098, %v7105
        %v7111 = vunpack.c.l.s4 1966171168
        %v7112 = vunpack.c.0.s8 %v7111
        %v7113 = vlaneseq
        %v7114 = vshrl.u32 %v7113, 7
        %v7115 = vsub.s32 %v7112, %v7114
        %v7116 = vrot.slane %v7106, %v7115
        %v7118 = vunpack.c.l.s4 1966171168
        %v7119 = vunpack.c.0.s8 %v7118
        %v7120 = vlaneseq
        %v7121 = vshrl.u32 %v7120, 7
        %v7122 = vsub.s32 %v7119, %v7121
        %v7123 = vrot.slane %v7107, %v7122
        %v7125 = vunpack.c.l.s4 1966171168
        %v7126 = vunpack.c.0.s8 %v7125
        %v7127 = vlaneseq
        %v7128 = vshrl.u32 %v7127, 7
        %v7129 = vsub.s32 %v7126, %v7128
        %v7130 = vrot.slane %v7108, %v7129
        %v7132 = vunpack.c.l.s4 1966171168
        %v7133 = vunpack.c.0.s8 %v7132
        %v7134 = vlaneseq
        %v7135 = vshrl.u32 %v7134, 7
        %v7136 = vsub.s32 %v7133, %v7135
        %v7137 = vrot.slane %v7109, %v7136
        %v7138 = vcombine.low %v7116, %v7130
        %v7139 = vcombine.high %v7116, %v7130
        %v7140 = vcombine.low %v7123, %v7137
        %v7141 = vcombine.low %v6295, %v6278
        %v7142 = vcombine.low %v6292, %v6294
        %v7143 = vcombine.low %v6337, %v6351
        %v7144 = vcombine.low %v6359, %v6361
        %v7146 = vunpack.c.l.s4 1966171168
        %v7147 = vunpack.c.0.s8 %v7146
        %v7148 = vlaneseq
        %v7149 = vshrl.u32 %v7148, 7
        %v7150 = vsub.s32 %v7147, %v7149
        %v7151 = vrot.slane %v7141, %v7150
        %v7153 = vunpack.c.l.s4 1966171168
        %v7154 = vunpack.c.0.s8 %v7153
        %v7155 = vlaneseq
        %v7156 = vshrl.u32 %v7155, 7
        %v7157 = vsub.s32 %v7154, %v7156
        %v7158 = vrot.slane %v7142, %v7157
        %v7160 = vunpack.c.l.s4 1966171168
        %v7161 = vunpack.c.0.s8 %v7160
        %v7162 = vlaneseq
        %v7163 = vshrl.u32 %v7162, 7
        %v7164 = vsub.s32 %v7161, %v7163
        %v7165 = vrot.slane %v7143, %v7164
        %v7167 = vunpack.c.l.s4 1966171168
        %v7168 = vunpack.c.0.s8 %v7167
        %v7169 = vlaneseq
        %v7170 = vshrl.u32 %v7169, 7
        %v7171 = vsub.s32 %v7168, %v7170
        %v7172 = vrot.slane %v7144, %v7171
        %v7173 = vcombine.low %v7151, %v7158
        %v7174 = vcombine.high %v7151, %v7158
        %v7175 = vcombine.low %v7165, %v7172
        %v7176 = vcombine.high %v7165, %v7172
        %v7178 = vunpack.c.l.s4 1966171168
        %v7179 = vunpack.c.0.s8 %v7178
        %v7180 = vlaneseq
        %v7181 = vshrl.u32 %v7180, 7
        %v7182 = vsub.s32 %v7179, %v7181
        %v7183 = vrot.slane %v7173, %v7182
        %v7185 = vunpack.c.l.s4 1966171168
        %v7186 = vunpack.c.0.s8 %v7185
        %v7187 = vlaneseq
        %v7188 = vshrl.u32 %v7187, 7
        %v7189 = vsub.s32 %v7186, %v7188
        %v7190 = vrot.slane %v7174, %v7189
        %v7192 = vunpack.c.l.s4 1966171168
        %v7193 = vunpack.c.0.s8 %v7192
        %v7194 = vlaneseq
        %v7195 = vshrl.u32 %v7194, 7
        %v7196 = vsub.s32 %v7193, %v7195
        %v7197 = vrot.slane %v7175, %v7196
        %v7199 = vunpack.c.l.s4 1966171168
        %v7200 = vunpack.c.0.s8 %v7199
        %v7201 = vlaneseq
        %v7202 = vshrl.u32 %v7201, 7
        %v7203 = vsub.s32 %v7200, %v7202
        %v7204 = vrot.slane %v7176, %v7203
        %v7205 = vcombine.low %v7183, %v7197
        %v7206 = vcombine.high %v7183, %v7197
        %v7207 = vcombine.low %v7190, %v7204
        %v7208 = vcombine.low %v6344, %v6358
        %v7209 = vcombine.low %v6360, %v6403
        %v7210 = vcombine.low %v6417, %v6425
        %v7211 = vcombine.low %v6427, %v6410
        %v7213 = vunpack.c.l.s4 1966171168
        %v7214 = vunpack.c.0.s8 %v7213
        %v7215 = vlaneseq
        %v7216 = vshrl.u32 %v7215, 7
        %v7217 = vsub.s32 %v7214, %v7216
        %v7218 = vrot.slane %v7208, %v7217
        %v7220 = vunpack.c.l.s4 1966171168
        %v7221 = vunpack.c.0.s8 %v7220
        %v7222 = vlaneseq
        %v7223 = vshrl.u32 %v7222, 7
        %v7224 = vsub.s32 %v7221, %v7223
        %v7225 = vrot.slane %v7209, %v7224
        %v7227 = vunpack.c.l.s4 1966171168
        %v7228 = vunpack.c.0.s8 %v7227
        %v7229 = vlaneseq
        %v7230 = vshrl.u32 %v7229, 7
        %v7231 = vsub.s32 %v7228, %v7230
        %v7232 = vrot.slane %v7210, %v7231
        %v7234 = vunpack.c.l.s4 1966171168
        %v7235 = vunpack.c.0.s8 %v7234
        %v7236 = vlaneseq
        %v7237 = vshrl.u32 %v7236, 7
        %v7238 = vsub.s32 %v7235, %v7237
        %v7239 = vrot.slane %v7211, %v7238
        %v7240 = vcombine.low %v7218, %v7225
        %v7241 = vcombine.high %v7218, %v7225
        %v7242 = vcombine.low %v7232, %v7239
        %v7243 = vcombine.high %v7232, %v7239
        %v7245 = vunpack.c.l.s4 1966171168
        %v7246 = vunpack.c.0.s8 %v7245
        %v7247 = vlaneseq
        %v7248 = vshrl.u32 %v7247, 7
        %v7249 = vsub.s32 %v7246, %v7248
        %v7250 = vrot.slane %v7240, %v7249
        %v7252 = vunpack.c.l.s4 1966171168
        %v7253 = vunpack.c.0.s8 %v7252
        %v7254 = vlaneseq
        %v7255 = vshrl.u32 %v7254, 7
        %v7256 = vsub.s32 %v7253, %v7255
        %v7257 = vrot.slane %v7241, %v7256
        %v7259 = vunpack.c.l.s4 1966171168
        %v7260 = vunpack.c.0.s8 %v7259
        %v7261 = vlaneseq
        %v7262 = vshrl.u32 %v7261, 7
        %v7263 = vsub.s32 %v7260, %v7262
        %v7264 = vrot.slane %v7242, %v7263
        %v7266 = vunpack.c.l.s4 1966171168
        %v7267 = vunpack.c.0.s8 %v7266
        %v7268 = vlaneseq
        %v7269 = vshrl.u32 %v7268, 7
        %v7270 = vsub.s32 %v7267, %v7269
        %v7271 = vrot.slane %v7243, %v7270
        %v7272 = vcombine.low %v7250, %v7264
        %v7273 = vcombine.high %v7250, %v7264
        %v7274 = vcombine.low %v7257, %v7271
        %v7275 = vcombine.low %v6424, %v6426
        %v7277 = vunpack.c.l.s4 1966171168
        %v7278 = vunpack.c.0.s8 %v7277
        %v7279 = vlaneseq
        %v7280 = vshrl.u32 %v7279, 7
        %v7281 = vsub.s32 %v7278, %v7280
        %v7282 = vrot.slane %v7275, %v7281
        %v7283 = vcombine.high %v7282, %v7282
        %v7285 = vunpack.c.l.s4 1966171168
        %v7286 = vunpack.c.0.s8 %v7285
        %v7287 = vlaneseq
        %v7288 = vshrl.u32 %v7287, 7
        %v7289 = vsub.s32 %v7286, %v7288
        %v7290 = vrot.slane %v7282, %v7289
        %v7292 = vunpack.c.l.s4 1966171168
        %v7293 = vunpack.c.0.s8 %v7292
        %v7294 = vlaneseq
        %v7295 = vshrl.u32 %v7294, 7
        %v7296 = vsub.s32 %v7293, %v7295
        %v7297 = vrot.slane %v7283, %v7296
        %v7298 = vcombine.high %v7290, %v7290
        %v7361 = vunpack.c.l.b16 %v6428
        %v7362 = vunpack.c.l.b16 %v6429
        %v7363 = vunpack.c.l.b16 %v6430
        %v7364 = vunpack.c.l.b16 %v6431
        %v7365 = vunpack.c.l.b16 %v6432
        %v7366 = vunpack.c.l.b16 %v6433
        %v7367 = vunpack.c.l.b16 %v6434
        %v7368 = vunpack.c.l.b16 %v6435
        %v7369 = vunpack.c.l.b16 %v6436
        %v7370 = vunpack.c.l.b16 %v6437
        %v7371 = vunpack.c.l.b16 %v6438
        %v7372 = vunpack.c.l.b16 %v6439
        %v7373 = vunpack.c.l.b16 %v6440
        %v7374 = vunpack.c.l.b16 %v6441
        %v7375 = vunpack.c.l.b16 %v6442
        %v7376 = vunpack.c.l.b16 %v6443
        %v7377 = vunpack.c.l.b16 %v6444
        %v7378 = vunpack.c.l.b16 %v6445
        %v7379 = vunpack.c.l.b16 %v6446
        %v7380 = vunpack.c.l.b16 %v6447
        %v7381 = vunpack.c.l.b16 %v6448
        %v7382 = vunpack.c.l.b16 %v6449
        %v7383 = vunpack.c.l.b16 %v6450
        %v7384 = vunpack.c.l.b16 %v6451
        %v7385 = vunpack.c.l.b16 %v6452
        %v7386 = vunpack.c.l.b16 %v6453
        %v7387 = vunpack.c.l.b16 %v6454
        %v7388 = vunpack.c.l.b16 %v6455
        %v7389 = vunpack.c.l.b16 %v6456
        %v7390 = vunpack.c.l.b16 %v6457
        %v7391 = vunpack.c.l.b16 %v6458
        %v7392 = vunpack.c.l.b16 %v6459
        %v7393 = vunpack.c.l.b16 %v6460
        %v7394 = vunpack.c.l.b16 %v6461
        %v7395 = vunpack.c.l.b16 %v6462
        %v7396 = vunpack.c.l.b16 %v6463
        %v7397 = vpack.c.b16 %v7362, %v7361
        %v7398 = vpack.c.b16 %v7364, %v7363
        %v7399 = vpack.c.b16 %v7366, %v7365
        %v7400 = vpack.c.b16 %v7368, %v7367
        %v7401 = vpack.c.b16 %v7370, %v7369
        %v7402 = vpack.c.b16 %v7372, %v7371
        %v7403 = vpack.c.b16 %v7374, %v7373
        %v7404 = vpack.c.b16 %v7376, %v7375
        %v7405 = vpack.c.b16 %v7378, %v7377
        %v7406 = vpack.c.b16 %v7380, %v7379
        %v7407 = vpack.c.b16 %v7382, %v7381
        %v7408 = vpack.c.b16 %v7384, %v7383
        %v7409 = vpack.c.b16 %v7386, %v7385
        %v7410 = vpack.c.b16 %v7388, %v7387
        %v7411 = vpack.c.b16 %v7390, %v7389
        %v7412 = vpack.c.b16 %v7392, %v7391
        %v7413 = vpack.c.b16 %v7394, %v7393
        %v7414 = vpack.c.b16 %v7396, %v7395
        %v7434 = vsel %vm3541, %v6536, 0
        %v7437 = vsel %vm3541, %v6603, 0
        %v7440 = vsel %vm3541, %v6670, 0
        %v7443 = vsel %vm3541, %v6737, 0
        %v7446 = vsel %vm3541, %v6804, 0
        %v7449 = vsel %vm3541, %v6871, 0
        %v7452 = vsel %vm3541, %v6938, 0
        %v7455 = vsel %vm3541, %v7005, 0
        %v7458 = vsel %vm3541, %v7072, 0
        %v7461 = vsel %vm3541, %v7139, 0
        %v7464 = vsel %vm3541, %v7206, 0
        %v7467 = vsel %vm3541, %v7273, 0
        %v7470 = vsel %vm3541, %v7298, 0
        %7472 = vmatprep.subr.bf16.mxu0 0
        %7473 = vmatpush1.bf16.msra.mxu0 %v7397
        %7474 = vmatprep.subr.bf16.mxu0 0
        %7475 = vmatpush1.bf16.msra.mxu0 %v7398
        %7476 = vmatprep.subr.bf16.mxu0 0
        %7477 = vmatpush1.bf16.msra.mxu0 %v7399
        %7478 = vmatprep.subr.bf16.mxu0 0
        %7479 = vmatpush1.bf16.msra.mxu0 %v7400
        %7480 = vmatprep.subr.bf16.mxu0 0
        %7481 = vmatpush1.bf16.msra.mxu0 %v7401
        %7482 = vmatprep.subr.bf16.mxu0 0
        %7483 = vmatpush1.bf16.msra.mxu0 %v7402
        %7484 = vmatprep.subr.bf16.mxu0 0
        %7485 = vmatpush1.bf16.msra.mxu0 %v7403
        %7486 = vmatprep.subr.bf16.mxu0 0
        %7487 = vmatpush1.bf16.msra.mxu0 %v7404
        %7488 = vmatprep.subr.bf16.mxu0 0
        %7489 = vmatpush1.bf16.msra.mxu0 %v7405
        %7490 = vmatprep.subr.bf16.mxu0 0
        %7491 = vmatpush1.bf16.msra.mxu0 %v7406
        %7492 = vmatprep.subr.bf16.mxu0 0
        %7493 = vmatpush1.bf16.msra.mxu0 %v7407
        %7494 = vmatprep.subr.bf16.mxu0 0
        %7495 = vmatpush1.bf16.msra.mxu0 %v7408
        %7496 = vmatprep.subr.bf16.mxu0 0
        %7497 = vmatpush1.bf16.msra.mxu0 %v7409
        %7498 = vmatprep.subr.bf16.mxu0 0
        %7499 = vmatpush1.bf16.msra.mxu0 %v7410
        %7500 = vmatprep.subr.bf16.mxu0 0
        %7501 = vmatpush1.bf16.msra.mxu0 %v7411
        %7502 = vmatprep.subr.bf16.mxu0 0
        %7503 = vmatpush1.bf16.msra.mxu0 %v7412
        %7504 = vmatprep.mubr.bf16.mxu0 %v6537
        %7505 = vmatmul.mubr.bf16.gmra.mrb[0].mxu0 %v6535
        %v7506 = vpop.f32.mrb[0].mxu0
        %v7507 = vadd.f32 %v6469, %v7506
        %v7508 = vpop.f32.mrb[0].mxu0
        %v7509 = vpop.f32.mrb[0].mxu0
        %v7510 = vadd.f32 %v6469, %v7509
        %v7511 = vpop.f32.mrb[0].mxu0
        %7512 = vmatprep.mubr.bf16.mxu0 %v6604
        %7513 = vmatmul.mubr.bf16.gmra.mrb[0].mxu0 %v6602
        %v7514 = vpop.f32.mrb[0].mxu0
        %v7515 = vadd.f32 %v6469, %v7514
        %v7516 = vpop.f32.mrb[0].mxu0
        %v7517 = vpop.f32.mrb[0].mxu0
        %v7518 = vadd.f32 %v6469, %v7517
        %v7519 = vpop.f32.mrb[0].mxu0
        %7520 = vmatprep.mubr.bf16.mxu0 %v6671
        %7521 = vmatmul.mubr.bf16.gmra.mrb[0].mxu0 %v6669
        %v7522 = vpop.f32.mrb[0].mxu0
        %v7523 = vadd.f32 %v6469, %v7522
        %v7524 = vpop.f32.mrb[0].mxu0
        %v7525 = vpop.f32.mrb[0].mxu0
        %v7526 = vadd.f32 %v6469, %v7525
        %v7527 = vpop.f32.mrb[0].mxu0
        %7528 = vmatprep.mubr.bf16.mxu0 %v6738
        %7529 = vmatmul.mubr.bf16.gmra.mrb[0].mxu0 %v6736
        %v7530 = vpop.f32.mrb[0].mxu0
        %v7531 = vadd.f32 %v6469, %v7530
        %v7532 = vpop.f32.mrb[0].mxu0
        %v7533 = vpop.f32.mrb[0].mxu0
        %v7534 = vadd.f32 %v6469, %v7533
        %v7535 = vpop.f32.mrb[0].mxu0
        %7536 = vmatprep.mubr.bf16.mxu0 %v6805
        %7537 = vmatmul.mubr.bf16.gmra.mrb[0].mxu0 %v6803
        %v7538 = vpop.f32.mrb[0].mxu0
        %v7539 = vadd.f32 %v6469, %v7538
        %v7540 = vpop.f32.mrb[0].mxu0
        %v7541 = vpop.f32.mrb[0].mxu0
        %v7542 = vadd.f32 %v6469, %v7541
        %v7543 = vpop.f32.mrb[0].mxu0
        %7544 = vmatprep.mubr.bf16.mxu0 %v6872
        %7545 = vmatmul.mubr.bf16.gmra.mrb[0].mxu0 %v6870
        %v7546 = vpop.f32.mrb[0].mxu0
        %v7547 = vadd.f32 %v6469, %v7546
        %v7548 = vpop.f32.mrb[0].mxu0
        %v7549 = vpop.f32.mrb[0].mxu0
        %v7550 = vadd.f32 %v6469, %v7549
        %v7551 = vpop.f32.mrb[0].mxu0
        %7552 = vmatprep.mubr.bf16.mxu0 %v6939
        %7553 = vmatmul.mubr.bf16.gmra.mrb[0].mxu0 %v6937
        %v7554 = vpop.f32.mrb[0].mxu0
        %v7555 = vadd.f32 %v6469, %v7554
        %v7556 = vpop.f32.mrb[0].mxu0
        %v7557 = vpop.f32.mrb[0].mxu0
        %v7558 = vadd.f32 %v6469, %v7557
        %v7559 = vpop.f32.mrb[0].mxu0
        %7560 = vmatprep.mubr.bf16.mxu0 %v7006
        %7561 = vmatmul.mubr.bf16.gmra.mrb[0].mxu0 %v7004
        %v7562 = vpop.f32.mrb[0].mxu0
        %v7563 = vadd.f32 %v6469, %v7562
        %v7564 = vpop.f32.mrb[0].mxu0
        %v7565 = vpop.f32.mrb[0].mxu0
        %v7566 = vadd.f32 %v6469, %v7565
        %v7567 = vpop.f32.mrb[0].mxu0
        %7568 = vmatprep.mubr.bf16.mxu0 %v7073
        %7569 = vmatmul.mubr.bf16.gmra.mrb[0].mxu0 %v7071
        %v7570 = vpop.f32.mrb[0].mxu0
        %v7571 = vadd.f32 %v6469, %v7570
        %v7572 = vpop.f32.mrb[0].mxu0
        %v7573 = vpop.f32.mrb[0].mxu0
        %v7574 = vadd.f32 %v6469, %v7573
        %v7575 = vpop.f32.mrb[0].mxu0
        %7576 = vmatprep.mubr.bf16.mxu0 %v7140
        %7577 = vmatmul.mubr.bf16.gmra.mrb[0].mxu0 %v7138
        %v7578 = vpop.f32.mrb[0].mxu0
        %v7579 = vadd.f32 %v6469, %v7578
        %v7580 = vpop.f32.mrb[0].mxu0
        %v7581 = vpop.f32.mrb[0].mxu0
        %v7582 = vadd.f32 %v6469, %v7581
        %v7583 = vpop.f32.mrb[0].mxu0
        %7584 = vmatprep.mubr.bf16.mxu0 %v7207
        %7585 = vmatmul.mubr.bf16.gmra.mrb[0].mxu0 %v7205
        %v7586 = vpop.f32.mrb[0].mxu0
        %v7587 = vadd.f32 %v6469, %v7586
        %v7588 = vpop.f32.mrb[0].mxu0
        %v7589 = vpop.f32.mrb[0].mxu0
        %v7590 = vadd.f32 %v6469, %v7589
        %v7591 = vpop.f32.mrb[0].mxu0
        %7592 = vmatprep.mubr.bf16.mxu0 %v7274
        %7593 = vmatmul.mubr.bf16.gmra.mrb[0].mxu0 %v7272
        %v7594 = vpop.f32.mrb[0].mxu0
        %v7595 = vadd.f32 %v6469, %v7594
        %v7596 = vpop.f32.mrb[0].mxu0
        %v7597 = vpop.f32.mrb[0].mxu0
        %v7598 = vadd.f32 %v6469, %v7597
        %v7599 = vpop.f32.mrb[0].mxu0
        %7600 = vmatprep.mubr.bf16.mxu0 %v7297
        %7601 = vmatmul.mubr.bf16.gmra.mrb[0].mxu0 %v7290
        %v7602 = vpop.f32.mrb[0].mxu0
        %v7603 = vadd.f32 %v6469, %v7602
        %v7604 = vpop.f32.mrb[0].mxu0
        %v7605 = vpop.f32.mrb[0].mxu0
        %v7606 = vpop.f32.mrb[0].mxu0
        %7607 = vdwg.mxu0
        %7608 = vmatprep.subr.bf16.mxu0 0
        %7609 = vmatpush1.bf16.msra.mxu0 %v7413
        %7610 = vmatprep.subr.bf16.mxu0 0
        %7611 = vmatpush1.bf16.msra.mxu0 %v7414
        %7612 = vmatprep.subr.bf16.mxu0 0
        %7613 = vmatpush1.bf16.msra.mxu0 0
        %7614 = vmatprep.subr.bf16.mxu0 0
        %7615 = vmatpush1.bf16.msra.mxu0 0
        %7616 = vmatprep.subr.bf16.mxu0 0
        %7617 = vmatpush1.bf16.msra.mxu0 0
        %7618 = vmatprep.subr.bf16.mxu0 0
        %7619 = vmatpush1.bf16.msra.mxu0 0
        %7620 = vmatprep.subr.bf16.mxu0 0
        %7621 = vmatpush1.bf16.msra.mxu0 0
        %7622 = vmatprep.subr.bf16.mxu0 0
        %7623 = vmatpush1.bf16.msra.mxu0 0
        %7624 = vmatprep.subr.bf16.mxu0 0
        %7625 = vmatpush1.bf16.msra.mxu0 0
        %7626 = vmatprep.subr.bf16.mxu0 0
        %7627 = vmatpush1.bf16.msra.mxu0 0
        %7628 = vmatprep.subr.bf16.mxu0 0
        %7629 = vmatpush1.bf16.msra.mxu0 0
        %7630 = vmatprep.subr.bf16.mxu0 0
        %7631 = vmatpush1.bf16.msra.mxu0 0
        %7632 = vmatprep.subr.bf16.mxu0 0
        %7633 = vmatpush1.bf16.msra.mxu0 0
        %7634 = vmatprep.subr.bf16.mxu0 0
        %7635 = vmatpush1.bf16.msra.mxu0 0
        %7636 = vmatprep.subr.bf16.mxu0 0
        %7637 = vmatpush1.bf16.msra.mxu0 0
        %7638 = vmatprep.subr.bf16.mxu0 0
        %7639 = vmatpush1.bf16.msra.mxu0 0
        %7640 = vmatprep.mubr.bf16.mxu0 0
        %7641 = vmatmul.mubr.bf16.gmra.mrb[0].mxu0 %v7434
        %v7642 = vpop.f32.mrb[0].mxu0
        %v7643 = vadd.f32 %v7507, %v7642
        %v7644 = vpop.f32.mrb[0].mxu0
        %v7645 = vpop.f32.mrb[0].mxu0
        %v7646 = vadd.f32 %v7510, %v7645
        %v7647 = vpop.f32.mrb[0].mxu0
        %7648 = vmatprep.mubr.bf16.mxu0 0
        %7649 = vmatmul.mubr.bf16.gmra.mrb[0].mxu0 %v7437
        %v7650 = vpop.f32.mrb[0].mxu0
        %v7651 = vadd.f32 %v7515, %v7650
        %v7652 = vpop.f32.mrb[0].mxu0
        %v7653 = vpop.f32.mrb[0].mxu0
        %v7654 = vadd.f32 %v7518, %v7653
        %v7655 = vpop.f32.mrb[0].mxu0
        %7656 = vmatprep.mubr.bf16.mxu0 0
        %7657 = vmatmul.mubr.bf16.gmra.mrb[0].mxu0 %v7440
        %v7658 = vpop.f32.mrb[0].mxu0
        %v7659 = vadd.f32 %v7523, %v7658
        %v7660 = vpop.f32.mrb[0].mxu0
        %v7661 = vpop.f32.mrb[0].mxu0
        %v7662 = vadd.f32 %v7526, %v7661
        %v7663 = vpop.f32.mrb[0].mxu0
        %7664 = vmatprep.mubr.bf16.mxu0 0
        %7665 = vmatmul.mubr.bf16.gmra.mrb[0].mxu0 %v7443
        %v7666 = vpop.f32.mrb[0].mxu0
        %v7667 = vadd.f32 %v7531, %v7666
        %v7668 = vpop.f32.mrb[0].mxu0
        %v7669 = vpop.f32.mrb[0].mxu0
        %v7670 = vadd.f32 %v7534, %v7669
        %v7671 = vpop.f32.mrb[0].mxu0
        %7672 = vmatprep.mubr.bf16.mxu0 0
        %7673 = vmatmul.mubr.bf16.gmra.mrb[0].mxu0 %v7446
        %v7674 = vpop.f32.mrb[0].mxu0
        %v7675 = vadd.f32 %v7539, %v7674
        %v7676 = vpop.f32.mrb[0].mxu0
        %v7677 = vpop.f32.mrb[0].mxu0
        %v7678 = vadd.f32 %v7542, %v7677
        %v7679 = vpop.f32.mrb[0].mxu0
        %7680 = vmatprep.mubr.bf16.mxu0 0
        %7681 = vmatmul.mubr.bf16.gmra.mrb[0].mxu0 %v7449
        %v7682 = vpop.f32.mrb[0].mxu0
        %v7683 = vadd.f32 %v7547, %v7682
        %v7684 = vpop.f32.mrb[0].mxu0
        %v7685 = vpop.f32.mrb[0].mxu0
        %v7686 = vadd.f32 %v7550, %v7685
        %v7687 = vpop.f32.mrb[0].mxu0
        %7688 = vmatprep.mubr.bf16.mxu0 0
        %7689 = vmatmul.mubr.bf16.gmra.mrb[0].mxu0 %v7452
        %v7690 = vpop.f32.mrb[0].mxu0
        %v7691 = vadd.f32 %v7555, %v7690
        %v7692 = vpop.f32.mrb[0].mxu0
        %v7693 = vpop.f32.mrb[0].mxu0
        %v7694 = vadd.f32 %v7558, %v7693
        %v7695 = vpop.f32.mrb[0].mxu0
        %7696 = vmatprep.mubr.bf16.mxu0 0
        %7697 = vmatmul.mubr.bf16.gmra.mrb[0].mxu0 %v7455
        %v7698 = vpop.f32.mrb[0].mxu0
        %v7699 = vadd.f32 %v7563, %v7698
        %v7700 = vpop.f32.mrb[0].mxu0
        %v7701 = vpop.f32.mrb[0].mxu0
        %v7702 = vadd.f32 %v7566, %v7701
        %v7703 = vpop.f32.mrb[0].mxu0
        %7704 = vmatprep.mubr.bf16.mxu0 0
        %7705 = vmatmul.mubr.bf16.gmra.mrb[0].mxu0 %v7458
        %v7706 = vpop.f32.mrb[0].mxu0
        %v7707 = vadd.f32 %v7571, %v7706
        %v7708 = vpop.f32.mrb[0].mxu0
        %v7709 = vpop.f32.mrb[0].mxu0
        %v7710 = vadd.f32 %v7574, %v7709
        %v7711 = vpop.f32.mrb[0].mxu0
        %7712 = vmatprep.mubr.bf16.mxu0 0
        %7713 = vmatmul.mubr.bf16.gmra.mrb[0].mxu0 %v7461
        %v7714 = vpop.f32.mrb[0].mxu0
        %v7715 = vadd.f32 %v7579, %v7714
        %v7716 = vpop.f32.mrb[0].mxu0
        %v7717 = vpop.f32.mrb[0].mxu0
        %v7718 = vadd.f32 %v7582, %v7717
        %v7719 = vpop.f32.mrb[0].mxu0
        %7720 = vmatprep.mubr.bf16.mxu0 0
        %7721 = vmatmul.mubr.bf16.gmra.mrb[0].mxu0 %v7464
        %v7722 = vpop.f32.mrb[0].mxu0
        %v7723 = vadd.f32 %v7587, %v7722
        %v7724 = vpop.f32.mrb[0].mxu0
        %v7725 = vpop.f32.mrb[0].mxu0
        %v7726 = vadd.f32 %v7590, %v7725
        %v7727 = vpop.f32.mrb[0].mxu0
        %7728 = vmatprep.mubr.bf16.mxu0 0
        %7729 = vmatmul.mubr.bf16.gmra.mrb[0].mxu0 %v7467
        %v7730 = vpop.f32.mrb[0].mxu0
        %v7731 = vadd.f32 %v7595, %v7730
        %v7732 = vpop.f32.mrb[0].mxu0
        %v7733 = vpop.f32.mrb[0].mxu0
        %v7734 = vadd.f32 %v7598, %v7733
        %v7735 = vpop.f32.mrb[0].mxu0
        %7736 = vmatprep.mubr.bf16.mxu0 0
        %7737 = vmatmul.mubr.bf16.gmra.mrb[0].mxu0 %v7470
        %v7738 = vpop.f32.mrb[0].mxu0
        %v7739 = vadd.f32 %v7603, %v7738
        %v7740 = vpop.f32.mrb[0].mxu0
        %v7741 = vpop.f32.mrb[0].mxu0
        %v7742 = vpop.f32.mrb[0].mxu0
        %7743 = vdwg.mxu0
        %v7744 = vmax.f32 %v7643, 0.0
        %v7745 = vmax.f32 %v7646, 0.0
        %v7746 = vmax.f32 %v7651, 0.0
        %v7747 = vmax.f32 %v7654, 0.0
        %v7748 = vmax.f32 %v7659, 0.0
        %v7749 = vmax.f32 %v7662, 0.0
        %v7750 = vmax.f32 %v7667, 0.0
        %v7751 = vmax.f32 %v7670, 0.0
        %v7752 = vmax.f32 %v7675, 0.0
        %v7753 = vmax.f32 %v7678, 0.0
        %v7754 = vmax.f32 %v7683, 0.0
        %v7755 = vmax.f32 %v7686, 0.0
        %v7756 = vmax.f32 %v7691, 0.0
        %v7757 = vmax.f32 %v7694, 0.0
        %v7758 = vmax.f32 %v7699, 0.0
        %v7759 = vmax.f32 %v7702, 0.0
        %v7760 = vmax.f32 %v7707, 0.0
        %v7761 = vmax.f32 %v7710, 0.0
        %v7762 = vmax.f32 %v7715, 0.0
        %v7763 = vmax.f32 %v7718, 0.0
        %v7764 = vmax.f32 %v7723, 0.0
        %v7765 = vmax.f32 %v7726, 0.0
        %v7766 = vmax.f32 %v7731, 0.0
        %v7767 = vmax.f32 %v7734, 0.0
        %v7768 = vmax.f32 %v7739, 0.0
        %v7794 = vcombine.high %v7744, %v7744
        %v7796 = vunpack.c.l.s4 1983009808
        %v7797 = vunpack.c.0.s8 %v7796
        %v7798 = vlaneseq
        %v7799 = vshrl.u32 %v7798, 7
        %v7800 = vsub.s32 %v7797, %v7799
        %v7801 = vrot.slane %v7744, %v7800
        %v7803 = vunpack.c.l.s4 1983009808
        %v7804 = vunpack.c.0.s8 %v7803
        %v7805 = vlaneseq
        %v7806 = vshrl.u32 %v7805, 7
        %v7807 = vsub.s32 %v7804, %v7806
        %v7808 = vrot.slane %v7794, %v7807
        %v7809 = vcombine.high %v7801, %v7801
        %v7810 = vcombine.high %v7808, %v7808
        %v7811 = vcombine.high %v7745, %v7745
        %v7813 = vunpack.c.l.s4 1983009808
        %v7814 = vunpack.c.0.s8 %v7813
        %v7815 = vlaneseq
        %v7816 = vshrl.u32 %v7815, 7
        %v7817 = vsub.s32 %v7814, %v7816
        %v7818 = vrot.slane %v7745, %v7817
        %v7820 = vunpack.c.l.s4 1983009808
        %v7821 = vunpack.c.0.s8 %v7820
        %v7822 = vlaneseq
        %v7823 = vshrl.u32 %v7822, 7
        %v7824 = vsub.s32 %v7821, %v7823
        %v7825 = vrot.slane %v7811, %v7824
        %v7826 = vcombine.high %v7818, %v7818
        %v7827 = vcombine.high %v7825, %v7825
        %v7828 = vcombine.high %v7746, %v7746
        %v7830 = vunpack.c.l.s4 1983009808
        %v7831 = vunpack.c.0.s8 %v7830
        %v7832 = vlaneseq
        %v7833 = vshrl.u32 %v7832, 7
        %v7834 = vsub.s32 %v7831, %v7833
        %v7835 = vrot.slane %v7746, %v7834
        %v7837 = vunpack.c.l.s4 1983009808
        %v7838 = vunpack.c.0.s8 %v7837
        %v7839 = vlaneseq
        %v7840 = vshrl.u32 %v7839, 7
        %v7841 = vsub.s32 %v7838, %v7840
        %v7842 = vrot.slane %v7828, %v7841
        %v7843 = vcombine.high %v7835, %v7835
        %v7844 = vcombine.high %v7842, %v7842
        %v7845 = vcombine.high %v7747, %v7747
        %v7847 = vunpack.c.l.s4 1983009808
        %v7848 = vunpack.c.0.s8 %v7847
        %v7849 = vlaneseq
        %v7850 = vshrl.u32 %v7849, 7
        %v7851 = vsub.s32 %v7848, %v7850
        %v7852 = vrot.slane %v7747, %v7851
        %v7854 = vunpack.c.l.s4 1983009808
        %v7855 = vunpack.c.0.s8 %v7854
        %v7856 = vlaneseq
        %v7857 = vshrl.u32 %v7856, 7
        %v7858 = vsub.s32 %v7855, %v7857
        %v7859 = vrot.slane %v7845, %v7858
        %v7860 = vcombine.high %v7852, %v7852
        %v7861 = vcombine.high %v7859, %v7859
        %v7862 = vcombine.high %v7748, %v7748
        %v7864 = vunpack.c.l.s4 1983009808
        %v7865 = vunpack.c.0.s8 %v7864
        %v7866 = vlaneseq
        %v7867 = vshrl.u32 %v7866, 7
        %v7868 = vsub.s32 %v7865, %v7867
        %v7869 = vrot.slane %v7748, %v7868
        %v7871 = vunpack.c.l.s4 1983009808
        %v7872 = vunpack.c.0.s8 %v7871
        %v7873 = vlaneseq
        %v7874 = vshrl.u32 %v7873, 7
        %v7875 = vsub.s32 %v7872, %v7874
        %v7876 = vrot.slane %v7862, %v7875
        %v7877 = vcombine.high %v7869, %v7869
        %v7878 = vcombine.high %v7876, %v7876
        %v7879 = vcombine.high %v7749, %v7749
        %v7881 = vunpack.c.l.s4 1983009808
        %v7882 = vunpack.c.0.s8 %v7881
        %v7883 = vlaneseq
        %v7884 = vshrl.u32 %v7883, 7
        %v7885 = vsub.s32 %v7882, %v7884
        %v7886 = vrot.slane %v7749, %v7885
        %v7888 = vunpack.c.l.s4 1983009808
        %v7889 = vunpack.c.0.s8 %v7888
        %v7890 = vlaneseq
        %v7891 = vshrl.u32 %v7890, 7
        %v7892 = vsub.s32 %v7889, %v7891
        %v7893 = vrot.slane %v7879, %v7892
        %v7894 = vcombine.high %v7886, %v7886
        %v7895 = vcombine.high %v7893, %v7893
        %v7896 = vcombine.high %v7750, %v7750
        %v7898 = vunpack.c.l.s4 1983009808
        %v7899 = vunpack.c.0.s8 %v7898
        %v7900 = vlaneseq
        %v7901 = vshrl.u32 %v7900, 7
        %v7902 = vsub.s32 %v7899, %v7901
        %v7903 = vrot.slane %v7750, %v7902
        %v7905 = vunpack.c.l.s4 1983009808
        %v7906 = vunpack.c.0.s8 %v7905
        %v7907 = vlaneseq
        %v7908 = vshrl.u32 %v7907, 7
        %v7909 = vsub.s32 %v7906, %v7908
        %v7910 = vrot.slane %v7896, %v7909
        %v7911 = vcombine.high %v7903, %v7903
        %v7912 = vcombine.high %v7910, %v7910
        %v7913 = vcombine.high %v7751, %v7751
        %v7915 = vunpack.c.l.s4 1983009808
        %v7916 = vunpack.c.0.s8 %v7915
        %v7917 = vlaneseq
        %v7918 = vshrl.u32 %v7917, 7
        %v7919 = vsub.s32 %v7916, %v7918
        %v7920 = vrot.slane %v7751, %v7919
        %v7922 = vunpack.c.l.s4 1983009808
        %v7923 = vunpack.c.0.s8 %v7922
        %v7924 = vlaneseq
        %v7925 = vshrl.u32 %v7924, 7
        %v7926 = vsub.s32 %v7923, %v7925
        %v7927 = vrot.slane %v7913, %v7926
        %v7928 = vcombine.high %v7920, %v7920
        %v7929 = vcombine.high %v7927, %v7927
        %v7930 = vcombine.high %v7752, %v7752
        %v7932 = vunpack.c.l.s4 1983009808
        %v7933 = vunpack.c.0.s8 %v7932
        %v7934 = vlaneseq
        %v7935 = vshrl.u32 %v7934, 7
        %v7936 = vsub.s32 %v7933, %v7935
        %v7937 = vrot.slane %v7752, %v7936
        %v7939 = vunpack.c.l.s4 1983009808
        %v7940 = vunpack.c.0.s8 %v7939
        %v7941 = vlaneseq
        %v7942 = vshrl.u32 %v7941, 7
        %v7943 = vsub.s32 %v7940, %v7942
        %v7944 = vrot.slane %v7930, %v7943
        %v7945 = vcombine.high %v7937, %v7937
        %v7946 = vcombine.high %v7944, %v7944
        %v7947 = vcombine.high %v7753, %v7753
        %v7949 = vunpack.c.l.s4 1983009808
        %v7950 = vunpack.c.0.s8 %v7949
        %v7951 = vlaneseq
        %v7952 = vshrl.u32 %v7951, 7
        %v7953 = vsub.s32 %v7950, %v7952
        %v7954 = vrot.slane %v7753, %v7953
        %v7956 = vunpack.c.l.s4 1983009808
        %v7957 = vunpack.c.0.s8 %v7956
        %v7958 = vlaneseq
        %v7959 = vshrl.u32 %v7958, 7
        %v7960 = vsub.s32 %v7957, %v7959
        %v7961 = vrot.slane %v7947, %v7960
        %v7962 = vcombine.high %v7954, %v7954
        %v7963 = vcombine.high %v7961, %v7961
        %v7964 = vcombine.high %v7754, %v7754
        %v7966 = vunpack.c.l.s4 1983009808
        %v7967 = vunpack.c.0.s8 %v7966
        %v7968 = vlaneseq
        %v7969 = vshrl.u32 %v7968, 7
        %v7970 = vsub.s32 %v7967, %v7969
        %v7971 = vrot.slane %v7754, %v7970
        %v7973 = vunpack.c.l.s4 1983009808
        %v7974 = vunpack.c.0.s8 %v7973
        %v7975 = vlaneseq
        %v7976 = vshrl.u32 %v7975, 7
        %v7977 = vsub.s32 %v7974, %v7976
        %v7978 = vrot.slane %v7964, %v7977
        %v7979 = vcombine.high %v7971, %v7971
        %v7980 = vcombine.high %v7978, %v7978
        %v7981 = vcombine.high %v7755, %v7755
        %v7983 = vunpack.c.l.s4 1983009808
        %v7984 = vunpack.c.0.s8 %v7983
        %v7985 = vlaneseq
        %v7986 = vshrl.u32 %v7985, 7
        %v7987 = vsub.s32 %v7984, %v7986
        %v7988 = vrot.slane %v7755, %v7987
        %v7990 = vunpack.c.l.s4 1983009808
        %v7991 = vunpack.c.0.s8 %v7990
        %v7992 = vlaneseq
        %v7993 = vshrl.u32 %v7992, 7
        %v7994 = vsub.s32 %v7991, %v7993
        %v7995 = vrot.slane %v7981, %v7994
        %v7996 = vcombine.high %v7988, %v7988
        %v7997 = vcombine.high %v7995, %v7995
        %v7998 = vcombine.high %v7756, %v7756
        %v8000 = vunpack.c.l.s4 1983009808
        %v8001 = vunpack.c.0.s8 %v8000
        %v8002 = vlaneseq
        %v8003 = vshrl.u32 %v8002, 7
        %v8004 = vsub.s32 %v8001, %v8003
        %v8005 = vrot.slane %v7756, %v8004
        %v8007 = vunpack.c.l.s4 1983009808
        %v8008 = vunpack.c.0.s8 %v8007
        %v8009 = vlaneseq
        %v8010 = vshrl.u32 %v8009, 7
        %v8011 = vsub.s32 %v8008, %v8010
        %v8012 = vrot.slane %v7998, %v8011
        %v8013 = vcombine.high %v8005, %v8005
        %v8014 = vcombine.high %v8012, %v8012
        %v8015 = vcombine.high %v7757, %v7757
        %v8017 = vunpack.c.l.s4 1983009808
        %v8018 = vunpack.c.0.s8 %v8017
        %v8019 = vlaneseq
        %v8020 = vshrl.u32 %v8019, 7
        %v8021 = vsub.s32 %v8018, %v8020
        %v8022 = vrot.slane %v7757, %v8021
        %v8024 = vunpack.c.l.s4 1983009808
        %v8025 = vunpack.c.0.s8 %v8024
        %v8026 = vlaneseq
        %v8027 = vshrl.u32 %v8026, 7
        %v8028 = vsub.s32 %v8025, %v8027
        %v8029 = vrot.slane %v8015, %v8028
        %v8030 = vcombine.high %v8022, %v8022
        %v8031 = vcombine.high %v8029, %v8029
        %v8032 = vcombine.high %v7758, %v7758
        %v8034 = vunpack.c.l.s4 1983009808
        %v8035 = vunpack.c.0.s8 %v8034
        %v8036 = vlaneseq
        %v8037 = vshrl.u32 %v8036, 7
        %v8038 = vsub.s32 %v8035, %v8037
        %v8039 = vrot.slane %v7758, %v8038
        %v8041 = vunpack.c.l.s4 1983009808
        %v8042 = vunpack.c.0.s8 %v8041
        %v8043 = vlaneseq
        %v8044 = vshrl.u32 %v8043, 7
        %v8045 = vsub.s32 %v8042, %v8044
        %v8046 = vrot.slane %v8032, %v8045
        %v8047 = vcombine.high %v8039, %v8039
        %v8048 = vcombine.high %v8046, %v8046
        %v8049 = vcombine.high %v7759, %v7759
        %v8051 = vunpack.c.l.s4 1983009808
        %v8052 = vunpack.c.0.s8 %v8051
        %v8053 = vlaneseq
        %v8054 = vshrl.u32 %v8053, 7
        %v8055 = vsub.s32 %v8052, %v8054
        %v8056 = vrot.slane %v7759, %v8055
        %v8058 = vunpack.c.l.s4 1983009808
        %v8059 = vunpack.c.0.s8 %v8058
        %v8060 = vlaneseq
        %v8061 = vshrl.u32 %v8060, 7
        %v8062 = vsub.s32 %v8059, %v8061
        %v8063 = vrot.slane %v8049, %v8062
        %v8064 = vcombine.high %v8056, %v8056
        %v8065 = vcombine.high %v8063, %v8063
        %v8066 = vcombine.high %v7760, %v7760
        %v8068 = vunpack.c.l.s4 1983009808
        %v8069 = vunpack.c.0.s8 %v8068
        %v8070 = vlaneseq
        %v8071 = vshrl.u32 %v8070, 7
        %v8072 = vsub.s32 %v8069, %v8071
        %v8073 = vrot.slane %v7760, %v8072
        %v8075 = vunpack.c.l.s4 1983009808
        %v8076 = vunpack.c.0.s8 %v8075
        %v8077 = vlaneseq
        %v8078 = vshrl.u32 %v8077, 7
        %v8079 = vsub.s32 %v8076, %v8078
        %v8080 = vrot.slane %v8066, %v8079
        %v8081 = vcombine.high %v8073, %v8073
        %v8082 = vcombine.high %v8080, %v8080
        %v8083 = vcombine.high %v7761, %v7761
        %v8085 = vunpack.c.l.s4 1983009808
        %v8086 = vunpack.c.0.s8 %v8085
        %v8087 = vlaneseq
        %v8088 = vshrl.u32 %v8087, 7
        %v8089 = vsub.s32 %v8086, %v8088
        %v8090 = vrot.slane %v7761, %v8089
        %v8092 = vunpack.c.l.s4 1983009808
        %v8093 = vunpack.c.0.s8 %v8092
        %v8094 = vlaneseq
        %v8095 = vshrl.u32 %v8094, 7
        %v8096 = vsub.s32 %v8093, %v8095
        %v8097 = vrot.slane %v8083, %v8096
        %v8098 = vcombine.high %v8090, %v8090
        %v8099 = vcombine.high %v8097, %v8097
        %v8100 = vcombine.high %v7762, %v7762
        %v8102 = vunpack.c.l.s4 1983009808
        %v8103 = vunpack.c.0.s8 %v8102
        %v8104 = vlaneseq
        %v8105 = vshrl.u32 %v8104, 7
        %v8106 = vsub.s32 %v8103, %v8105
        %v8107 = vrot.slane %v7762, %v8106
        %v8109 = vunpack.c.l.s4 1983009808
        %v8110 = vunpack.c.0.s8 %v8109
        %v8111 = vlaneseq
        %v8112 = vshrl.u32 %v8111, 7
        %v8113 = vsub.s32 %v8110, %v8112
        %v8114 = vrot.slane %v8100, %v8113
        %v8115 = vcombine.high %v8107, %v8107
        %v8116 = vcombine.high %v8114, %v8114
        %v8117 = vcombine.high %v7763, %v7763
        %v8119 = vunpack.c.l.s4 1983009808
        %v8120 = vunpack.c.0.s8 %v8119
        %v8121 = vlaneseq
        %v8122 = vshrl.u32 %v8121, 7
        %v8123 = vsub.s32 %v8120, %v8122
        %v8124 = vrot.slane %v7763, %v8123
        %v8126 = vunpack.c.l.s4 1983009808
        %v8127 = vunpack.c.0.s8 %v8126
        %v8128 = vlaneseq
        %v8129 = vshrl.u32 %v8128, 7
        %v8130 = vsub.s32 %v8127, %v8129
        %v8131 = vrot.slane %v8117, %v8130
        %v8132 = vcombine.high %v8124, %v8124
        %v8133 = vcombine.high %v8131, %v8131
        %v8134 = vcombine.high %v7764, %v7764
        %v8136 = vunpack.c.l.s4 1983009808
        %v8137 = vunpack.c.0.s8 %v8136
        %v8138 = vlaneseq
        %v8139 = vshrl.u32 %v8138, 7
        %v8140 = vsub.s32 %v8137, %v8139
        %v8141 = vrot.slane %v7764, %v8140
        %v8143 = vunpack.c.l.s4 1983009808
        %v8144 = vunpack.c.0.s8 %v8143
        %v8145 = vlaneseq
        %v8146 = vshrl.u32 %v8145, 7
        %v8147 = vsub.s32 %v8144, %v8146
        %v8148 = vrot.slane %v8134, %v8147
        %v8149 = vcombine.high %v8141, %v8141
        %v8150 = vcombine.high %v8148, %v8148
        %v8151 = vcombine.high %v7765, %v7765
        %v8153 = vunpack.c.l.s4 1983009808
        %v8154 = vunpack.c.0.s8 %v8153
        %v8155 = vlaneseq
        %v8156 = vshrl.u32 %v8155, 7
        %v8157 = vsub.s32 %v8154, %v8156
        %v8158 = vrot.slane %v7765, %v8157
        %v8160 = vunpack.c.l.s4 1983009808
        %v8161 = vunpack.c.0.s8 %v8160
        %v8162 = vlaneseq
        %v8163 = vshrl.u32 %v8162, 7
        %v8164 = vsub.s32 %v8161, %v8163
        %v8165 = vrot.slane %v8151, %v8164
        %v8166 = vcombine.high %v8158, %v8158
        %v8167 = vcombine.high %v8165, %v8165
        %v8168 = vcombine.high %v7766, %v7766
        %v8170 = vunpack.c.l.s4 1983009808
        %v8171 = vunpack.c.0.s8 %v8170
        %v8172 = vlaneseq
        %v8173 = vshrl.u32 %v8172, 7
        %v8174 = vsub.s32 %v8171, %v8173
        %v8175 = vrot.slane %v7766, %v8174
        %v8177 = vunpack.c.l.s4 1983009808
        %v8178 = vunpack.c.0.s8 %v8177
        %v8179 = vlaneseq
        %v8180 = vshrl.u32 %v8179, 7
        %v8181 = vsub.s32 %v8178, %v8180
        %v8182 = vrot.slane %v8168, %v8181
        %v8183 = vcombine.high %v8175, %v8175
        %v8184 = vcombine.high %v8182, %v8182
        %v8185 = vcombine.high %v7767, %v7767
        %v8187 = vunpack.c.l.s4 1983009808
        %v8188 = vunpack.c.0.s8 %v8187
        %v8189 = vlaneseq
        %v8190 = vshrl.u32 %v8189, 7
        %v8191 = vsub.s32 %v8188, %v8190
        %v8192 = vrot.slane %v7767, %v8191
        %v8194 = vunpack.c.l.s4 1983009808
        %v8195 = vunpack.c.0.s8 %v8194
        %v8196 = vlaneseq
        %v8197 = vshrl.u32 %v8196, 7
        %v8198 = vsub.s32 %v8195, %v8197
        %v8199 = vrot.slane %v8185, %v8198
        %v8200 = vcombine.high %v8192, %v8192
        %v8201 = vcombine.high %v8199, %v8199
        %v8203 = vunpack.c.l.s4 1983009808
        %v8204 = vunpack.c.0.s8 %v8203
        %v8205 = vlaneseq
        %v8206 = vshrl.u32 %v8205, 7
        %v8207 = vsub.s32 %v8204, %v8206
        %v8208 = vrot.slane %v7768, %v8207
        %v8209 = vcombine.high %v8208, %v8208
        %v8308 = vmax.f32 %v7801, %v7827
        %v8309 = vmax.f32 %v7809, %v7835
        %v8310 = vmax.f32 %v7808, %v7843
        %v8311 = vmax.f32 %v7810, %v7842
        %v8312 = vmax.f32 %v7818, %v7844
        %v8313 = vmax.f32 %v7826, %v7852
        %v8314 = vmax.f32 %v7825, %v7860
        %v8315 = vmax.f32 %v7859, %v7894
        %v8316 = vmax.f32 %v7861, %v7893
        %v8317 = vmax.f32 %v7869, %v7895
        %v8318 = vmax.f32 %v7877, %v7903
        %v8319 = vmax.f32 %v7876, %v7911
        %v8320 = vmax.f32 %v7878, %v7910
        %v8321 = vmax.f32 %v7886, %v7912
        %v8322 = vmax.f32 %v7920, %v7946
        %v8323 = vmax.f32 %v7928, %v7954
        %v8324 = vmax.f32 %v7927, %v7962
        %v8325 = vmax.f32 %v7929, %v7961
        %v8326 = vmax.f32 %v7937, %v7963
        %v8327 = vmax.f32 %v7945, %v7971
        %v8328 = vmax.f32 %v7944, %v7979
        %v8329 = vmax.f32 %v7978, %v8013
        %v8330 = vmax.f32 %v7980, %v8012
        %v8331 = vmax.f32 %v7988, %v8014
        %v8332 = vmax.f32 %v7996, %v8022
        %v8333 = vmax.f32 %v7995, %v8030
        %v8334 = vmax.f32 %v7997, %v8029
        %v8335 = vmax.f32 %v8005, %v8031
        %v8336 = vmax.f32 %v8039, %v8065
        %v8337 = vmax.f32 %v8047, %v8073
        %v8338 = vmax.f32 %v8046, %v8081
        %v8339 = vmax.f32 %v8048, %v8080
        %v8340 = vmax.f32 %v8056, %v8082
        %v8341 = vmax.f32 %v8064, %v8090
        %v8342 = vmax.f32 %v8063, %v8098
        %v8343 = vmax.f32 %v8097, %v8132
        %v8344 = vmax.f32 %v8099, %v8131
        %v8345 = vmax.f32 %v8107, %v8133
        %v8346 = vmax.f32 %v8115, %v8141
        %v8347 = vmax.f32 %v8114, %v8149
        %v8348 = vmax.f32 %v8116, %v8148
        %v8349 = vmax.f32 %v8124, %v8150
        %v8350 = vmax.f32 %v8158, %v8184
        %v8351 = vmax.f32 %v8166, %v8192
        %v8352 = vmax.f32 %v8165, %v8200
        %v8353 = vmax.f32 %v8167, %v8199
        %v8354 = vmax.f32 %v8175, %v8201
        %v8355 = vmax.f32 %v8183, %v8208
        %v8356 = vmax.f32 %v8182, %v8209
        %v8406 = vrot.slane %v8308, 7
        %v8407 = vrot.slane %v8406, 2
        %v8408 = vrot.slane %v8309, 7
        %v8409 = vrot.slane %v8408, 2
        %v8410 = vrot.slane %v8310, 7
        %v8411 = vrot.slane %v8410, 2
        %v8412 = vrot.slane %v8311, 7
        %v8413 = vrot.slane %v8412, 2
        %v8414 = vrot.slane %v8312, 7
        %v8415 = vrot.slane %v8414, 2
        %v8416 = vrot.slane %v8313, 7
        %v8417 = vrot.slane %v8416, 2
        %v8418 = vrot.slane %v8314, 7
        %v8419 = vrot.slane %v8418, 2
        %v8420 = vrot.slane %v8315, 7
        %v8421 = vrot.slane %v8420, 2
        %v8422 = vrot.slane %v8316, 7
        %v8423 = vrot.slane %v8422, 2
        %v8424 = vrot.slane %v8317, 7
        %v8425 = vrot.slane %v8424, 2
        %v8426 = vrot.slane %v8318, 7
        %v8427 = vrot.slane %v8426, 2
        %v8428 = vrot.slane %v8319, 7
        %v8429 = vrot.slane %v8428, 2
        %v8430 = vrot.slane %v8320, 7
        %v8431 = vrot.slane %v8430, 2
        %v8432 = vrot.slane %v8321, 7
        %v8433 = vrot.slane %v8432, 2
        %v8434 = vrot.slane %v8322, 7
        %v8435 = vrot.slane %v8434, 2
        %v8436 = vrot.slane %v8323, 7
        %v8437 = vrot.slane %v8436, 2
        %v8438 = vrot.slane %v8324, 7
        %v8439 = vrot.slane %v8438, 2
        %v8440 = vrot.slane %v8325, 7
        %v8441 = vrot.slane %v8440, 2
        %v8442 = vrot.slane %v8326, 7
        %v8443 = vrot.slane %v8442, 2
        %v8444 = vrot.slane %v8327, 7
        %v8445 = vrot.slane %v8444, 2
        %v8446 = vrot.slane %v8328, 7
        %v8447 = vrot.slane %v8446, 2
        %v8448 = vrot.slane %v8329, 7
        %v8449 = vrot.slane %v8448, 2
        %v8450 = vrot.slane %v8330, 7
        %v8451 = vrot.slane %v8450, 2
        %v8452 = vrot.slane %v8331, 7
        %v8453 = vrot.slane %v8452, 2
        %v8454 = vrot.slane %v8332, 7
        %v8455 = vrot.slane %v8454, 2
        %v8456 = vrot.slane %v8333, 7
        %v8457 = vrot.slane %v8456, 2
        %v8458 = vrot.slane %v8334, 7
        %v8459 = vrot.slane %v8458, 2
        %v8460 = vrot.slane %v8335, 7
        %v8461 = vrot.slane %v8460, 2
        %v8462 = vrot.slane %v8336, 7
        %v8463 = vrot.slane %v8462, 2
        %v8464 = vrot.slane %v8337, 7
        %v8465 = vrot.slane %v8464, 2
        %v8466 = vrot.slane %v8338, 7
        %v8467 = vrot.slane %v8466, 2
        %v8468 = vrot.slane %v8339, 7
        %v8469 = vrot.slane %v8468, 2
        %v8470 = vrot.slane %v8340, 7
        %v8471 = vrot.slane %v8470, 2
        %v8472 = vrot.slane %v8341, 7
        %v8473 = vrot.slane %v8472, 2
        %v8474 = vrot.slane %v8342, 7
        %v8475 = vrot.slane %v8474, 2
        %v8476 = vrot.slane %v8343, 7
        %v8477 = vrot.slane %v8476, 2
        %v8478 = vrot.slane %v8344, 7
        %v8479 = vrot.slane %v8478, 2
        %v8480 = vrot.slane %v8345, 7
        %v8481 = vrot.slane %v8480, 2
        %v8482 = vrot.slane %v8346, 7
        %v8483 = vrot.slane %v8482, 2
        %v8484 = vrot.slane %v8347, 7
        %v8485 = vrot.slane %v8484, 2
        %v8486 = vrot.slane %v8348, 7
        %v8487 = vrot.slane %v8486, 2
        %v8488 = vrot.slane %v8349, 7
        %v8489 = vrot.slane %v8488, 2
        %v8490 = vrot.slane %v8350, 7
        %v8491 = vrot.slane %v8490, 2
        %v8492 = vrot.slane %v8351, 7
        %v8493 = vrot.slane %v8492, 2
        %v8494 = vrot.slane %v8352, 7
        %v8495 = vrot.slane %v8494, 2
        %v8496 = vrot.slane %v8353, 7
        %v8497 = vrot.slane %v8496, 2
        %v8498 = vrot.slane %v8354, 7
        %v8499 = vrot.slane %v8498, 2
        %v8500 = vrot.slane %v8355, 7
        %v8501 = vrot.slane %v8500, 2
        %v8502 = vrot.slane %v8356, 7
        %v8503 = vrot.slane %v8502, 2
        %v8553 = vmax.f32 %v8308, %v8407
        %v8554 = vmax.f32 %v8309, %v8409
        %v8555 = vmax.f32 %v8310, %v8411
        %v8556 = vmax.f32 %v8311, %v8413
        %v8557 = vmax.f32 %v8312, %v8415
        %v8558 = vmax.f32 %v8313, %v8417
        %v8559 = vmax.f32 %v8314, %v8419
        %v8560 = vmax.f32 %v8315, %v8421
        %v8561 = vmax.f32 %v8316, %v8423
        %v8562 = vmax.f32 %v8317, %v8425
        %v8563 = vmax.f32 %v8318, %v8427
        %v8564 = vmax.f32 %v8319, %v8429
        %v8565 = vmax.f32 %v8320, %v8431
        %v8566 = vmax.f32 %v8321, %v8433
        %v8567 = vmax.f32 %v8322, %v8435
        %v8568 = vmax.f32 %v8323, %v8437
        %v8569 = vmax.f32 %v8324, %v8439
        %v8570 = vmax.f32 %v8325, %v8441
        %v8571 = vmax.f32 %v8326, %v8443
        %v8572 = vmax.f32 %v8327, %v8445
        %v8573 = vmax.f32 %v8328, %v8447
        %v8574 = vmax.f32 %v8329, %v8449
        %v8575 = vmax.f32 %v8330, %v8451
        %v8576 = vmax.f32 %v8331, %v8453
        %v8577 = vmax.f32 %v8332, %v8455
        %v8578 = vmax.f32 %v8333, %v8457
        %v8579 = vmax.f32 %v8334, %v8459
        %v8580 = vmax.f32 %v8335, %v8461
        %v8581 = vmax.f32 %v8336, %v8463
        %v8582 = vmax.f32 %v8337, %v8465
        %v8583 = vmax.f32 %v8338, %v8467
        %v8584 = vmax.f32 %v8339, %v8469
        %v8585 = vmax.f32 %v8340, %v8471
        %v8586 = vmax.f32 %v8341, %v8473
        %v8587 = vmax.f32 %v8342, %v8475
        %v8588 = vmax.f32 %v8343, %v8477
        %v8589 = vmax.f32 %v8344, %v8479
        %v8590 = vmax.f32 %v8345, %v8481
        %v8591 = vmax.f32 %v8346, %v8483
        %v8592 = vmax.f32 %v8347, %v8485
        %v8593 = vmax.f32 %v8348, %v8487
        %v8594 = vmax.f32 %v8349, %v8489
        %v8595 = vmax.f32 %v8350, %v8491
        %v8596 = vmax.f32 %v8351, %v8493
        %v8597 = vmax.f32 %v8352, %v8495
        %v8598 = vmax.f32 %v8353, %v8497
        %v8599 = vmax.f32 %v8354, %v8499
        %v8600 = vmax.f32 %v8355, %v8501
        %v8601 = vmax.f32 %v8356, %v8503
        %v8602 = vpack.c.bf16 %v8553, %v8553
        %v8603 = vpack.c.bf16 %v8554, %v8554
        %v8604 = vpack.c.bf16 %v8555, %v8555
        %v8605 = vpack.c.bf16 %v8556, %v8556
        %v8606 = vpack.c.bf16 %v8557, %v8557
        %v8607 = vpack.c.bf16 %v8558, %v8558
        %v8608 = vpack.c.bf16 %v8559, %v8559
        %v8609 = vpack.c.bf16 %v8560, %v8560
        %v8610 = vpack.c.bf16 %v8561, %v8561
        %v8611 = vpack.c.bf16 %v8562, %v8562
        %v8612 = vpack.c.bf16 %v8563, %v8563
        %v8613 = vpack.c.bf16 %v8564, %v8564
        %v8614 = vpack.c.bf16 %v8565, %v8565
        %v8615 = vpack.c.bf16 %v8566, %v8566
        %v8616 = vpack.c.bf16 %v8567, %v8567
        %v8617 = vpack.c.bf16 %v8568, %v8568
        %v8618 = vpack.c.bf16 %v8569, %v8569
        %v8619 = vpack.c.bf16 %v8570, %v8570
        %v8620 = vpack.c.bf16 %v8571, %v8571
        %v8621 = vpack.c.bf16 %v8572, %v8572
        %v8622 = vpack.c.bf16 %v8573, %v8573
        %v8623 = vpack.c.bf16 %v8574, %v8574
        %v8624 = vpack.c.bf16 %v8575, %v8575
        %v8625 = vpack.c.bf16 %v8576, %v8576
        %v8626 = vpack.c.bf16 %v8577, %v8577
        %v8627 = vpack.c.bf16 %v8578, %v8578
        %v8628 = vpack.c.bf16 %v8579, %v8579
        %v8629 = vpack.c.bf16 %v8580, %v8580
        %v8630 = vpack.c.bf16 %v8581, %v8581
        %v8631 = vpack.c.bf16 %v8582, %v8582
        %v8632 = vpack.c.bf16 %v8583, %v8583
        %v8633 = vpack.c.bf16 %v8584, %v8584
        %v8634 = vpack.c.bf16 %v8585, %v8585
        %v8635 = vpack.c.bf16 %v8586, %v8586
        %v8636 = vpack.c.bf16 %v8587, %v8587
        %v8637 = vpack.c.bf16 %v8588, %v8588
        %v8638 = vpack.c.bf16 %v8589, %v8589
        %v8639 = vpack.c.bf16 %v8590, %v8590
        %v8640 = vpack.c.bf16 %v8591, %v8591
        %v8641 = vpack.c.bf16 %v8592, %v8592
        %v8642 = vpack.c.bf16 %v8593, %v8593
        %v8643 = vpack.c.bf16 %v8594, %v8594
        %v8644 = vpack.c.bf16 %v8595, %v8595
        %v8645 = vpack.c.bf16 %v8596, %v8596
        %v8646 = vpack.c.bf16 %v8597, %v8597
        %v8647 = vpack.c.bf16 %v8598, %v8598
        %v8648 = vpack.c.bf16 %v8599, %v8599
        %v8649 = vpack.c.bf16 %v8600, %v8600
        %v8650 = vpack.c.bf16 %v8601, %v8601
        %v8700 = vunpack.c.l.b16 %v8602
        %v8701 = vunpack.c.l.b16 %v8603
        %v8702 = vunpack.c.l.b16 %v8604
        %v8703 = vunpack.c.l.b16 %v8605
        %v8704 = vunpack.c.l.b16 %v8606
        %v8705 = vunpack.c.l.b16 %v8607
        %v8706 = vunpack.c.l.b16 %v8608
        %v8707 = vunpack.c.l.b16 %v8609
        %v8708 = vunpack.c.l.b16 %v8610
        %v8709 = vunpack.c.l.b16 %v8611
        %v8710 = vunpack.c.l.b16 %v8612
        %v8711 = vunpack.c.l.b16 %v8613
        %v8712 = vunpack.c.l.b16 %v8614
        %v8713 = vunpack.c.l.b16 %v8615
        %v8714 = vunpack.c.l.b16 %v8616
        %v8715 = vunpack.c.l.b16 %v8617
        %v8716 = vunpack.c.l.b16 %v8618
        %v8717 = vunpack.c.l.b16 %v8619
        %v8718 = vunpack.c.l.b16 %v8620
        %v8719 = vunpack.c.l.b16 %v8621
        %v8720 = vunpack.c.l.b16 %v8622
        %v8721 = vunpack.c.l.b16 %v8623
        %v8722 = vunpack.c.l.b16 %v8624
        %v8723 = vunpack.c.l.b16 %v8625
        %v8724 = vunpack.c.l.b16 %v8626
        %v8725 = vunpack.c.l.b16 %v8627
        %v8726 = vunpack.c.l.b16 %v8628
        %v8727 = vunpack.c.l.b16 %v8629
        %v8728 = vunpack.c.l.b16 %v8630
        %v8729 = vunpack.c.l.b16 %v8631
        %v8730 = vunpack.c.l.b16 %v8632
        %v8731 = vunpack.c.l.b16 %v8633
        %v8732 = vunpack.c.l.b16 %v8634
        %v8733 = vunpack.c.l.b16 %v8635
        %v8734 = vunpack.c.l.b16 %v8636
        %v8735 = vunpack.c.l.b16 %v8637
        %v8736 = vunpack.c.l.b16 %v8638
        %v8737 = vunpack.c.l.b16 %v8639
        %v8738 = vunpack.c.l.b16 %v8640
        %v8739 = vunpack.c.l.b16 %v8641
        %v8740 = vunpack.c.l.b16 %v8642
        %v8741 = vunpack.c.l.b16 %v8643
        %v8742 = vunpack.c.l.b16 %v8644
        %v8743 = vunpack.c.l.b16 %v8645
        %v8744 = vunpack.c.l.b16 %v8646
        %v8745 = vunpack.c.l.b16 %v8647
        %v8746 = vunpack.c.l.b16 %v8648
        %v8747 = vunpack.c.l.b16 %v8649
        %v8748 = vunpack.c.l.b16 %v8650
        %v8749 = vpack.c.b16 %v8700, %v8700
        %v8750 = vpack.c.b16 %v8701, %v8701
        %v8751 = vpack.c.b16 %v8702, %v8702
        %v8752 = vpack.c.b16 %v8703, %v8703
        %v8753 = vpack.c.b16 %v8704, %v8704
        %v8754 = vpack.c.b16 %v8705, %v8705
        %v8755 = vpack.c.b16 %v8706, %v8706
        %v8756 = vpack.c.b16 %v8707, %v8707
        %v8757 = vpack.c.b16 %v8708, %v8708
        %v8758 = vpack.c.b16 %v8709, %v8709
        %v8759 = vpack.c.b16 %v8710, %v8710
        %v8760 = vpack.c.b16 %v8711, %v8711
        %v8761 = vpack.c.b16 %v8712, %v8712
        %v8762 = vpack.c.b16 %v8713, %v8713
        %v8763 = vpack.c.b16 %v8714, %v8714
        %v8764 = vpack.c.b16 %v8715, %v8715
        %v8765 = vpack.c.b16 %v8716, %v8716
        %v8766 = vpack.c.b16 %v8717, %v8717
        %v8767 = vpack.c.b16 %v8718, %v8718
        %v8768 = vpack.c.b16 %v8719, %v8719
        %v8769 = vpack.c.b16 %v8720, %v8720
        %v8770 = vpack.c.b16 %v8721, %v8721
        %v8771 = vpack.c.b16 %v8722, %v8722
        %v8772 = vpack.c.b16 %v8723, %v8723
        %v8773 = vpack.c.b16 %v8724, %v8724
        %v8774 = vpack.c.b16 %v8725, %v8725
        %v8775 = vpack.c.b16 %v8726, %v8726
        %v8776 = vpack.c.b16 %v8727, %v8727
        %v8777 = vpack.c.b16 %v8728, %v8728
        %v8778 = vpack.c.b16 %v8729, %v8729
        %v8779 = vpack.c.b16 %v8730, %v8730
        %v8780 = vpack.c.b16 %v8731, %v8731
        %v8781 = vpack.c.b16 %v8732, %v8732
        %v8782 = vpack.c.b16 %v8733, %v8733
        %v8783 = vpack.c.b16 %v8734, %v8734
        %v8784 = vpack.c.b16 %v8735, %v8735
        %v8785 = vpack.c.b16 %v8736, %v8736
        %v8786 = vpack.c.b16 %v8737, %v8737
        %v8787 = vpack.c.b16 %v8738, %v8738
        %v8788 = vpack.c.b16 %v8739, %v8739
        %v8789 = vpack.c.b16 %v8740, %v8740
        %v8790 = vpack.c.b16 %v8741, %v8741
        %v8791 = vpack.c.b16 %v8742, %v8742
        %v8792 = vpack.c.b16 %v8743, %v8743
        %v8793 = vpack.c.b16 %v8744, %v8744
        %v8794 = vpack.c.b16 %v8745, %v8745
        %v8795 = vpack.c.b16 %v8746, %v8746
        %v8796 = vpack.c.b16 %v8747, %v8747
        %v8797 = vpack.c.b16 %v8748, %v8748
        %v8798 = vunpack.c.l.b16 %v8749
        %v8799 = vunpack.c.l.b16 %v8750
        %v8800 = vunpack.c.l.b16 %v8751
        %v8801 = vunpack.c.l.b16 %v8752
        %v8802 = vunpack.c.l.b16 %v8753
        %v8803 = vunpack.c.l.b16 %v8754
        %v8804 = vunpack.c.l.b16 %v8755
        %v8805 = vunpack.c.l.b16 %v8756
        %v8806 = vunpack.c.l.b16 %v8757
        %v8807 = vunpack.c.l.b16 %v8758
        %v8808 = vunpack.c.l.b16 %v8759
        %v8809 = vunpack.c.l.b16 %v8760
        %v8810 = vunpack.c.l.b16 %v8761
        %v8811 = vunpack.c.l.b16 %v8762
        %v8812 = vunpack.c.l.b16 %v8763
        %v8813 = vunpack.c.l.b16 %v8764
        %v8814 = vunpack.c.l.b16 %v8765
        %v8815 = vunpack.c.l.b16 %v8766
        %v8816 = vunpack.c.l.b16 %v8767
        %v8817 = vunpack.c.l.b16 %v8768
        %v8818 = vunpack.c.l.b16 %v8769
        %v8819 = vunpack.c.l.b16 %v8770
        %v8820 = vunpack.c.l.b16 %v8771
        %v8821 = vunpack.c.l.b16 %v8772
        %v8822 = vunpack.c.l.b16 %v8773
        %v8823 = vunpack.c.l.b16 %v8774
        %v8824 = vunpack.c.l.b16 %v8775
        %v8825 = vunpack.c.l.b16 %v8776
        %v8826 = vunpack.c.l.b16 %v8777
        %v8827 = vunpack.c.l.b16 %v8778
        %v8828 = vunpack.c.l.b16 %v8779
        %v8829 = vunpack.c.l.b16 %v8780
        %v8830 = vunpack.c.l.b16 %v8781
        %v8831 = vunpack.c.l.b16 %v8782
        %v8832 = vunpack.c.l.b16 %v8783
        %v8833 = vunpack.c.l.b16 %v8784
        %v8834 = vunpack.c.l.b16 %v8785
        %v8835 = vunpack.c.l.b16 %v8786
        %v8836 = vunpack.c.l.b16 %v8787
        %v8837 = vunpack.c.l.b16 %v8788
        %v8838 = vunpack.c.l.b16 %v8789
        %v8839 = vunpack.c.l.b16 %v8790
        %v8840 = vunpack.c.l.b16 %v8791
        %v8841 = vunpack.c.l.b16 %v8792
        %v8842 = vunpack.c.l.b16 %v8793
        %v8843 = vunpack.c.l.b16 %v8794
        %v8844 = vunpack.c.l.b16 %v8795
        %v8845 = vunpack.c.l.b16 %v8796
        %v8846 = vunpack.c.l.b16 %v8797
        %v8847 = vrot.slane %v8799, 7
        %v8848 = vsel %vm4166, %v8847, %v8798
        %v8849 = vrot.slane %v8800, 6
        %v8850 = vsel %vm4148, %v8849, %v8848
        %v8851 = vrot.slane %v8801, 5
        %v8852 = vsel %vm4151, %v8851, %v8850
        %v8853 = vrot.slane %v8802, 4
        %v8854 = vsel %vm4154, %v8853, %v8852
        %v8855 = vrot.slane %v8803, 3
        %v8856 = vsel %vm4157, %v8855, %v8854
        %v8857 = vrot.slane %v8804, 2
        %v8858 = vsel %vm4160, %v8857, %v8856
        %v8859 = vrot.slane %v8805, 1
        %v8860 = vsel %vm4163, %v8859, %v8858
        %v8861 = vrot.slane %v8807, 7
        %v8862 = vsel %vm4166, %v8861, %v8806
        %v8863 = vrot.slane %v8808, 6
        %v8864 = vsel %vm4148, %v8863, %v8862
        %v8865 = vrot.slane %v8809, 5
        %v8866 = vsel %vm4151, %v8865, %v8864
        %v8867 = vrot.slane %v8810, 4
        %v8868 = vsel %vm4154, %v8867, %v8866
        %v8869 = vrot.slane %v8811, 3
        %v8870 = vsel %vm4157, %v8869, %v8868
        %v8871 = vrot.slane %v8812, 2
        %v8872 = vsel %vm4160, %v8871, %v8870
        %v8873 = vrot.slane %v8813, 1
        %v8874 = vsel %vm4163, %v8873, %v8872
        %v8875 = vrot.slane %v8815, 7
        %v8876 = vsel %vm4166, %v8875, %v8814
        %v8877 = vrot.slane %v8816, 6
        %v8878 = vsel %vm4148, %v8877, %v8876
        %v8879 = vrot.slane %v8817, 5
        %v8880 = vsel %vm4151, %v8879, %v8878
        %v8881 = vrot.slane %v8818, 4
        %v8882 = vsel %vm4154, %v8881, %v8880
        %v8883 = vrot.slane %v8819, 3
        %v8884 = vsel %vm4157, %v8883, %v8882
        %v8885 = vrot.slane %v8820, 2
        %v8886 = vsel %vm4160, %v8885, %v8884
        %v8887 = vrot.slane %v8821, 1
        %v8888 = vsel %vm4163, %v8887, %v8886
        %v8889 = vrot.slane %v8823, 7
        %v8890 = vsel %vm4166, %v8889, %v8822
        %v8891 = vrot.slane %v8824, 6
        %v8892 = vsel %vm4148, %v8891, %v8890
        %v8893 = vrot.slane %v8825, 5
        %v8894 = vsel %vm4151, %v8893, %v8892
        %v8895 = vrot.slane %v8826, 4
        %v8896 = vsel %vm4154, %v8895, %v8894
        %v8897 = vrot.slane %v8827, 3
        %v8898 = vsel %vm4157, %v8897, %v8896
        %v8899 = vrot.slane %v8828, 2
        %v8900 = vsel %vm4160, %v8899, %v8898
        %v8901 = vrot.slane %v8829, 1
        %v8902 = vsel %vm4163, %v8901, %v8900
        %v8903 = vrot.slane %v8831, 7
        %v8904 = vsel %vm4166, %v8903, %v8830
        %v8905 = vrot.slane %v8832, 6
        %v8906 = vsel %vm4148, %v8905, %v8904
        %v8907 = vrot.slane %v8833, 5
        %v8908 = vsel %vm4151, %v8907, %v8906
        %v8909 = vrot.slane %v8834, 4
        %v8910 = vsel %vm4154, %v8909, %v8908
        %v8911 = vrot.slane %v8835, 3
        %v8912 = vsel %vm4157, %v8911, %v8910
        %v8913 = vrot.slane %v8836, 2
        %v8914 = vsel %vm4160, %v8913, %v8912
        %v8915 = vrot.slane %v8837, 1
        %v8916 = vsel %vm4163, %v8915, %v8914
        %v8917 = vrot.slane %v8839, 7
        %v8918 = vsel %vm4166, %v8917, %v8838
        %v8919 = vrot.slane %v8840, 6
        %v8920 = vsel %vm4148, %v8919, %v8918
        %v8921 = vrot.slane %v8841, 5
        %v8922 = vsel %vm4151, %v8921, %v8920
        %v8923 = vrot.slane %v8842, 4
        %v8924 = vsel %vm4154, %v8923, %v8922
        %v8925 = vrot.slane %v8843, 3
        %v8926 = vsel %vm4157, %v8925, %v8924
        %v8927 = vrot.slane %v8844, 2
        %v8928 = vsel %vm4160, %v8927, %v8926
        %v8929 = vrot.slane %v8845, 1
        %v8930 = vsel %vm4163, %v8929, %v8928
        %v8931 = vpack.c.b16 %v8860, %v8860
        %v8932 = vpack.c.b16 %v8874, %v8874
        %v8933 = vpack.c.b16 %v8888, %v8888
        %v8934 = vpack.c.b16 %v8902, %v8902
        %v8935 = vpack.c.b16 %v8916, %v8916
        %v8936 = vpack.c.b16 %v8930, %v8930
        %v8937 = vpack.c.b16 %v8846, %v8846
        %vm8945 = vcmask 519168
        %8946 = vst.msk [vmem:[%s250] sm:$0xf] %vm8945, %v8931
        %8947 = vst.msk [vmem:[%s250 + $0x4] sm:$0xf] %vm8945, %v8932
        %8948 = vst.msk [vmem:[%s250 + $0x8] sm:$0xf] %vm8945, %v8933
        %8949 = vst.msk [vmem:[%s250 + $0xc] sm:$0xf] %vm8945, %v8934
        %8950 = vst.msk [vmem:[%s250 + $0x10] sm:$0xf] %vm8945, %v8935
        %8951 = vst.msk [vmem:[%s250 + $0x14] sm:$0xf] %vm8945, %v8936
        %vm8952 = vcmask 516096
        %vm8953 = vsmask.f32 256
        %vm8954 = vmand %vm8952, %vm8953
        %v8955 = vld [vmem:[%s250 + $0x18] sm:$0x1]
        %v8956 = vsel %vm8954, %v8937, %v8955
        %8957 = vst [vmem:[%s250 + $0x18] sm:$0x1] %v8956
        %p8958 = scmp.lt.s32.totalorder %s18, 1
        %s8959 = scalar_select %p8958, %s18, 1
        %s8960 = smul.addr %s8959, 7
        %s8961 = smul.addr %s8960, 4
        %s8962 = scalar_lea.vmem %s5, %s8961
        // Predicated region
        $region49: #{net_forward.2} parent=39 // pred_check
          %p8963 = pneg %p146
        $region50: #{net_forward.2} parent=39 // pred_check_branch
          %8965 = sbr.rel (%p8963) target = $region52
        $region51: #{net_forward.2} parent=39 // pred_region
          _
        $region52: #{net_forward.2} parent=39 // pred_fallthru
          _
      $region40: #{net_forward.2} parent=5 // pred_fallthru
        _
      %p8966 = scmp.le.s32.totalorder 2, %s13
      // Predicated region
      $region53: #{net_forward.2} parent=5 // pred_check
        %p8967 = pneg %p8966
      $region54: #{net_forward.2} parent=5 // pred_check_branch
        %8969 = sbr.rel (%p8967) target = $region56
      $region55: #{net_forward.2} parent=5 // pred_region
        %s8970 = ssub.s32 %s13, 2
        // Predicated region
        $region57: #{net_forward.2} parent=55 // pred_check
          %p8971 = pneg %p152
        $region58: #{net_forward.2} parent=55 // pred_check_branch
          %8973 = sbr.rel (%p8971) target = $region60
        $region59: #{net_forward.2} parent=55 // pred_region
          %p8974 = scmp.lt.s32.totalorder %s19, 1
          %s8975 = scalar_select %p8974, %s19, 1
          %s8976 = smul.addr %s8975, 7
          %s8977 = smul.addr %s8976, 4
          %s8978 = scalar_lea.vmem %s5, %s8977
        $region60: #{net_forward.2} parent=55 // pred_fallthru
          _
      $region56: #{net_forward.2} parent=5 // pred_fallthru
        _
    $region6: #{net_forward.2} parent=1 // loop_footer
      %s17 = sadd.s32 1, %s13
    $region7: #{net_forward.2} parent=1 // loop_footer_branch
      %12 = sbr.rel target = $region3
    $region8: #{net_forward.2} parent=1 // loop_exit
      _
    %8979 = vsyncpa [#allocation4], 1
    %s8980 = scalar_lea.sflag [#allocation4], 1
    %8981 = vsyncpa %s8980, 1
    %8982 = vsyncpa [#allocation6], 1

</llo_original>
